<compile_context>
chip_gen: v6e
topology: v6e:2x2x1
jax: 0.10.0
libtpu: 0.0.40
codegen_flags: <defaults>
</compile_context>

<pallas_src>
import functools

import jax
import jax.numpy as jnp
from jax.experimental import pallas as pl
from jax.experimental.pallas import tpu as pltpu


# ----------------------------------------------------------------------------
# Pallas kernels
# ----------------------------------------------------------------------------
def _conv_bn_kernel(a_ref, w_ref, b_ref, s_ref, t_ref, o_ref):
    """[tm, K]bf16 @ [K, N]bf16 -> f32, + bias, ReLU, BN affine (f32)."""
    acc = jnp.dot(a_ref[...], w_ref[...], preferred_element_type=jnp.float32)
    acc = jnp.maximum(acc + b_ref[...], 0.0)
    o_ref[...] = (acc * s_ref[...] + t_ref[...]).astype(o_ref.dtype)


def _conv_bn_pool_kernel(a_ref, w_ref, b_ref, s_ref, t_ref, o_ref):
    """Conv + bias + ReLU + BN affine for the 4 pool-window corners, then a
    4-way elementwise max == Conv -> ReLU -> BN -> MaxPool2d(2)."""
    w = w_ref[...]
    b = b_ref[...]
    s = s_ref[...]
    t = t_ref[...]

    def corner(idx):
        acc = jnp.dot(a_ref[idx], w, preferred_element_type=jnp.float32)
        return jnp.maximum(acc + b, 0.0) * s + t

    r = jnp.maximum(jnp.maximum(corner(0), corner(1)),
                    jnp.maximum(corner(2), corner(3)))
    o_ref[...] = r.astype(o_ref.dtype)


def _conv_lstm_kernel(a_ref, wi_ref, wj_ref, wf_ref, wo_ref,
                      bi_ref, bj_ref, bf_ref, bo_ref, c_ref,
                      nc_ref, nh_ref, *, forget_bias):
    """Fused ConvLSTM: gate conv (4 matmuls) + sigmoid/tanh cell update."""
    a = a_ref[...]
    gi = jnp.dot(a, wi_ref[...], preferred_element_type=jnp.float32) + bi_ref[...]
    gj = jnp.dot(a, wj_ref[...], preferred_element_type=jnp.float32) + bj_ref[...]
    gf = jnp.dot(a, wf_ref[...], preferred_element_type=jnp.float32) + bf_ref[...]
    go = jnp.dot(a, wo_ref[...], preferred_element_type=jnp.float32) + bo_ref[...]
    c = c_ref[...]
    new_c = c * jax.nn.sigmoid(gf + forget_bias) + jax.nn.sigmoid(gi) * jnp.tanh(gj)
    nc_ref[...] = new_c
    nh_ref[...] = jnp.tanh(new_c) * jax.nn.sigmoid(go)


# ----------------------------------------------------------------------------
# Wrappers (glue: padding / im2col / reshapes)
# ----------------------------------------------------------------------------
def _block_rows(M):
    """Split M rows into <=2 row blocks (2 'parallel' blocks -> both TCs on
    v7x), block rows rounded up to a multiple of 8."""
    nb = 2 if M >= 16 else 1
    t = pl.cdiv(M, nb)
    t = pl.cdiv(t, 8) * 8
    return nb, t


def im2col(x, k, stride, pad):
    """x: NHWC -> ([B, Ho, Wo, k*k*C], (Ho, Wo))."""
    B, H, W, C = x.shape
    xp = jnp.pad(x, ((0, 0), (pad, pad), (pad, pad), (0, 0)))
    Ho = (H + 2 * pad - k) // stride + 1
    Wo = (W + 2 * pad - k) // stride + 1
    cols = []
    for di in range(k):
        for dj in range(k):
            cols.append(xp[:, di:di + stride * Ho:stride,
                           dj:dj + stride * Wo:stride, :])
    p = jnp.stack(cols, axis=3)  # [B, Ho, Wo, k*k, C]
    return p.reshape(B, Ho, Wo, k * k * C), (Ho, Wo)


def _bn_operands(b, scale, shift, n):
    return (b.reshape(1, n).astype(jnp.float32),
            scale.reshape(1, n).astype(jnp.float32),
            shift.reshape(1, n).astype(jnp.float32))


def conv_bn(x, w, b, scale, shift, *, k, stride, pad):
    """Conv2d -> ReLU -> BN affine, NHWC in / NHWC out."""
    B = x.shape[0]
    cout = w.shape[-1]
    patches, (Ho, Wo) = im2col(x, k, stride, pad)
    K = patches.shape[-1]
    M = B * Ho * Wo
    a = patches.reshape(M, K).astype(jnp.bfloat16)

    nb, tm = _block_rows(M)
    m_pad = nb * tm
    if m_pad != M:
        a = jnp.pad(a, ((0, m_pad - M), (0, 0)))
    b2, s2, t2 = _bn_operands(b, scale, shift, cout)

    out = pl.pallas_call(
        _conv_bn_kernel,
        out_shape=jax.ShapeDtypeStruct((m_pad, cout), jnp.float32),
        grid_spec=pltpu.PrefetchScalarGridSpec(
            num_scalar_prefetch=0,
            grid=(nb,),
            in_specs=[
                pl.BlockSpec((tm, K), lambda i: (i, 0)),
                pl.BlockSpec((K, cout), lambda i: (0, 0)),
                pl.BlockSpec((1, cout), lambda i: (0, 0)),
                pl.BlockSpec((1, cout), lambda i: (0, 0)),
                pl.BlockSpec((1, cout), lambda i: (0, 0)),
            ],
            out_specs=pl.BlockSpec((tm, cout), lambda i: (i, 0)),
        ),
        compiler_params=pltpu.CompilerParams(
            dimension_semantics=("parallel",)),
    )(a, w.reshape(K, cout).astype(jnp.bfloat16), b2, s2, t2)
    return out[:M].reshape(B, Ho, Wo, cout)


def conv_bn_pool(x, w, b, scale, shift, *, k, stride, pad):
    """Conv2d -> ReLU -> BN affine -> MaxPool2d(2), fused into one kernel.

    The wrapper splits the im2col rows into the 4 pool-window corners
    [4, B*Hp*Wp, K]; the kernel does 4 matmuls + epilogues and maxes them.
    """
    B = x.shape[0]
    cout = w.shape[-1]
    patches, (Ho, Wo) = im2col(x, k, stride, pad)
    K = patches.shape[-1]
    Hp, Wp = Ho // 2, Wo // 2
    p = patches[:, :Hp * 2, :Wp * 2, :].reshape(B, Hp, 2, Wp, 2, K)
    p = jnp.transpose(p, (2, 4, 0, 1, 3, 5)).reshape(4, B * Hp * Wp, K)
    p = p.astype(jnp.bfloat16)

    Mp = B * Hp * Wp
    nb, tm = _block_rows(Mp)
    m_pad = nb * tm
    if m_pad != Mp:
        p = jnp.pad(p, ((0, 0), (0, m_pad - Mp), (0, 0)))
    b2, s2, t2 = _bn_operands(b, scale, shift, cout)

    out = pl.pallas_call(
        _conv_bn_pool_kernel,
        out_shape=jax.ShapeDtypeStruct((m_pad, cout), jnp.float32),
        grid_spec=pltpu.PrefetchScalarGridSpec(
            num_scalar_prefetch=0,
            grid=(nb,),
            in_specs=[
                pl.BlockSpec((4, tm, K), lambda i: (0, i, 0)),
                pl.BlockSpec((K, cout), lambda i: (0, 0)),
                pl.BlockSpec((1, cout), lambda i: (0, 0)),
                pl.BlockSpec((1, cout), lambda i: (0, 0)),
                pl.BlockSpec((1, cout), lambda i: (0, 0)),
            ],
            out_specs=pl.BlockSpec((tm, cout), lambda i: (i, 0)),
        ),
        compiler_params=pltpu.CompilerParams(
            dimension_semantics=("parallel",)),
    )(p, w.reshape(K, cout).astype(jnp.bfloat16), b2, s2, t2)
    return out[:Mp].reshape(B, Hp, Wp, cout)


def conv_lstm(x, state, w, b, V, forget_bias=1.0):
    """ConvLSTM cell (kernel 5, padding 2), x/state NHWC.  Conv + gates fused."""
    B, H, W, _ = x.shape
    if state is None:
        c = jnp.zeros((B, H, W, V), jnp.float32)
        h = jnp.zeros((B, H, W, V), jnp.float32)
    else:
        c, h = state
    xh = jnp.concatenate([x, h], axis=-1)                 # cat(inputs, h)
    k = w.shape[0]
    patches, (Ho, Wo) = im2col(xh, k, 1, 2)               # Ho == H, Wo == W
    K = patches.shape[-1]
    M = B * Ho * Wo
    a = patches.reshape(M, K).astype(jnp.bfloat16)
    c_flat = c.reshape(M, V).astype(jnp.float32)

    nb, tm = _block_rows(M)
    m_pad = nb * tm
    if m_pad != M:
        a = jnp.pad(a, ((0, m_pad - M), (0, 0)))
        c_flat = jnp.pad(c_flat, ((0, m_pad - M), (0, 0)))

    w2 = w.reshape(K, 4 * V).astype(jnp.bfloat16)
    ws = [w2[:, g * V:(g + 1) * V] for g in range(4)]          # i, j, f, o
    bs = [b[g * V:(g + 1) * V].reshape(1, V).astype(jnp.float32) for g in range(4)]

    new_c, new_h = pl.pallas_call(
        functools.partial(_conv_lstm_kernel, forget_bias=forget_bias),
        out_shape=(jax.ShapeDtypeStruct((m_pad, V), jnp.float32),
                   jax.ShapeDtypeStruct((m_pad, V), jnp.float32)),
        grid_spec=pltpu.PrefetchScalarGridSpec(
            num_scalar_prefetch=0,
            grid=(nb,),
            in_specs=[pl.BlockSpec((tm, K), lambda i: (i, 0))]
                    + [pl.BlockSpec((K, V), lambda i: (0, 0))] * 4
                    + [pl.BlockSpec((1, V), lambda i: (0, 0))] * 4
                    + [pl.BlockSpec((tm, V), lambda i: (i, 0))],
            out_specs=[pl.BlockSpec((tm, V), lambda i: (i, 0)),
                       pl.BlockSpec((tm, V), lambda i: (i, 0))],
        ),
        compiler_params=pltpu.CompilerParams(
            dimension_semantics=("parallel",)),
    )(a, *ws, *bs, c_flat)

    new_c = new_c[:M].reshape(B, Ho, Wo, V)
    new_h = new_h[:M].reshape(B, Ho, Wo, V)
    return new_h, (new_c, new_h)


# ----------------------------------------------------------------------------
# vibro_feat forward
# ----------------------------------------------------------------------------
def vibro_feat_forward(params, vibro, state, *, V):
    # Repeat(dim=1, 128): [B, 1, T, 3] -> [B, 128, T, 3]
    x = jnp.tile(vibro.astype(jnp.float32), (1, 128, 1, 1))
    # Permute([0,3,1,2]) gives NCHW [B,3,128,T]; the repeated tensor is already
    # the NHWC equivalent [B, H=128, W=T, C=3], so no transpose is needed.
    x = conv_bn(x, params['w1'], params['b1'],
                params['bn1_scale'], params['bn1_shift'],
                k=5, stride=2, pad=2)
    x = conv_bn_pool(x, params['w2'], params['b2'],
                     params['bn2_scale'], params['bn2_shift'],
                     k=3, stride=1, pad=1)
    x = conv_bn_pool(x, params['w3'], params['b3'],
                     params['bn3_scale'], params['bn3_shift'],
                     k=3, stride=2, pad=1)
    if state is not None:                         # state follows PyTorch NCHW
        c, h = state
        state = (jnp.transpose(c, (0, 2, 3, 1)), jnp.transpose(h, (0, 2, 3, 1)))
    feat, (new_c, new_h) = conv_lstm(x, state, params['wl'], params['bl'], V)
    to_nchw = lambda t: jnp.transpose(t, (0, 3, 1, 2))   # back to PyTorch NCHW
    return to_nchw(feat), (to_nchw(new_c), to_nchw(new_h))


# ----------------------------------------------------------------------------
# Deterministic parameter init (matches PyTorch Conv2d default init shapes)
# ----------------------------------------------------------------------------
def init_conv(key, k, cin, cout):
    kw, kb = jax.random.split(key)
    fan_in = cin * k * k
    bound = 1.0 / (fan_in ** 0.5)
    w = jax.random.uniform(kw, (k, k, cin, cout), jnp.float32, -bound, bound)
    b = jax.random.uniform(kb, (cout,), jnp.float32, -bound, bound)
    return w, b


def make_params(key, V):
    ks = jax.random.split(key, 4)
    params = {}
    params['w1'], params['b1'] = init_conv(ks[0], 5, 3, 16)
    params['w2'], params['b2'] = init_conv(ks[1], 3, 16, 16)
    params['w3'], params['b3'] = init_conv(ks[2], 3, 16, V)
    params['wl'], params['bl'] = init_conv(ks[3], 5, 2 * V, 4 * V)
    # BatchNorm2d folded into a per-channel affine using default running stats
    # (gamma=1, beta=0, mean=0, var=1, eps=1e-5), i.e. inference semantics.
    # Order in the kernels is Conv -> (+bias) -> ReLU -> BN affine, matching the
    # PyTorch Sequential (vconv -> vrelu -> vbn).
    # TODO(synk): training-mode batch statistics (per-batch mean/var) are not
    # reproduced here.
    eps = 1e-5
    for name, c in (('bn1', 16), ('bn2', 16), ('bn3', V)):
        gamma = jnp.ones((c,), jnp.float32)
        beta = jnp.zeros((c,), jnp.float32)
        mean = jnp.zeros((c,), jnp.float32)
        var = jnp.ones((c,), jnp.float32)
        scale = gamma / jnp.sqrt(var + eps)
        params[f'{name}_scale'] = scale
        params[f'{name}_shift'] = beta - mean * scale
    return params


if __name__ == "__main__":
    key = jax.random.PRNGKey(0)
    kp, kx = jax.random.split(key)
    VIBRO_LAYER = 8
    B, T = 2, 32
    params = make_params(kp, VIBRO_LAYER)
    # vibro input: [B, 1, T, 3]  (Repeat on dim 1 expands 1 -> 128)
    vibro = jax.random.normal(kx, (B, 1, T, 3), jnp.float32)

    fwd = jax.jit(functools.partial(vibro_feat_forward, V=VIBRO_LAYER))
    feat, (new_c, new_h) = fwd(params, vibro, None)
    jax.block_until_ready((feat, new_c, new_h))

    assert feat.shape == (B, VIBRO_LAYER, 8, T // 16), feat.shape
    assert new_c.shape == feat.shape and new_h.shape == feat.shape
    print("KERNEL_OK")
</pallas_src>

<mosaic_0001>
module attributes {stable_mosaic.version = 11 : i64} {
  func.func @_conv_bn_kernel(%arg0: i32, %arg1: memref<1024x75xbf16, #tpu.memory_space<vmem>>, %arg2: memref<75x16xbf16, #tpu.memory_space<vmem>>, %arg3: memref<1x16xf32, #tpu.memory_space<vmem>>, %arg4: memref<1x16xf32, #tpu.memory_space<vmem>>, %arg5: memref<1x16xf32, #tpu.memory_space<vmem>>, %arg6: memref<1024x16xf32, #tpu.memory_space<vmem>>) attributes {dimension_semantics = [#tpu.dimension_semantics<parallel>], iteration_bounds = array<i64: 2>, scalar_prefetch = 0 : i64, scratch_operands = 0 : i64, tpu.core_type = #tpu.core_type<tc>, window_params = [{transform_indices = @transform_0, window_bounds = array<i64: 1024, 75>}, {pipeline_mode = #tpu.pipeline_mode<synchronous>, transform_indices = @transform_1, window_bounds = array<i64: 75, 16>}, {pipeline_mode = #tpu.pipeline_mode<synchronous>, transform_indices = @transform_2, window_bounds = array<i64: 1, 16>}, {pipeline_mode = #tpu.pipeline_mode<synchronous>, transform_indices = @transform_3, window_bounds = array<i64: 1, 16>}, {pipeline_mode = #tpu.pipeline_mode<synchronous>, transform_indices = @transform_4, window_bounds = array<i64: 1, 16>}, {transform_indices = @transform_5, window_bounds = array<i64: 1024, 16>}]} {
    %c0 = arith.constant 0 : index
    %c0_0 = arith.constant 0 : index
    %0 = vector.load %arg1[%c0, %c0_0] : memref<1024x75xbf16, #tpu.memory_space<vmem>>, vector<1024x75xbf16>
    %c0_1 = arith.constant 0 : index
    %c0_2 = arith.constant 0 : index
    %1 = vector.load %arg2[%c0_1, %c0_2] : memref<75x16xbf16, #tpu.memory_space<vmem>>, vector<75x16xbf16>
    %cst = arith.constant dense<0.000000e+00> : vector<1024x16xf32>
    %2 = tpu.matmul %0, %1, %cst {dimension_numbers = #tpu.dot_dimension_numbers<[1], [0], [0], [1], [0, 0, 1, 1], [], []>} : vector<1024x75xbf16>, vector<75x16xbf16>, vector<1024x16xf32> -> vector<1024x16xf32>
    %c0_3 = arith.constant 0 : index
    %c0_4 = arith.constant 0 : index
    %3 = vector.load %arg3[%c0_3, %c0_4] : memref<1x16xf32, #tpu.memory_space<vmem>>, vector<1x16xf32>
    %4 = vector.broadcast %3 : vector<1x16xf32> to vector<1024x16xf32>
    %5 = arith.addf %2, %4 : vector<1024x16xf32>
    %cst_5 = arith.constant 0.000000e+00 : f32
    %6 = vector.broadcast %cst_5 : f32 to vector<1024x16xf32>
    %7 = arith.maximumf %5, %6 : vector<1024x16xf32>
    %c0_6 = arith.constant 0 : index
    %c0_7 = arith.constant 0 : index
    %8 = vector.load %arg4[%c0_6, %c0_7] : memref<1x16xf32, #tpu.memory_space<vmem>>, vector<1x16xf32>
    %9 = vector.broadcast %8 : vector<1x16xf32> to vector<1024x16xf32>
    %10 = arith.mulf %7, %9 : vector<1024x16xf32>
    %c0_8 = arith.constant 0 : index
    %c0_9 = arith.constant 0 : index
    %11 = vector.load %arg5[%c0_8, %c0_9] : memref<1x16xf32, #tpu.memory_space<vmem>>, vector<1x16xf32>
    %12 = vector.broadcast %11 : vector<1x16xf32> to vector<1024x16xf32>
    %13 = arith.addf %10, %12 : vector<1024x16xf32>
    %c0_10 = arith.constant 0 : index
    %c0_11 = arith.constant 0 : index
    %14 = vector.load %arg6[%c0_10, %c0_11] : memref<1024x16xf32, #tpu.memory_space<vmem>>, vector<1024x16xf32>
    tpu.vector_store %arg6[%c0_10, %c0_11], %13 {strides = array<i32>} : memref<1024x16xf32, #tpu.memory_space<vmem>>, vector<1024x16xf32>,
    return
  }
  func.func @transform_0(%arg0: i32) -> (i32, i32) {
    %c0_i32 = arith.constant 0 : i32
    %c0_i32_0 = arith.constant 0 : i32
    return %arg0, %c0_i32 : i32, i32
  }
  func.func @transform_1(%arg0: i32) -> (i32, i32) {
    %c0_i32 = arith.constant 0 : i32
    %c0_i32_0 = arith.constant 0 : i32
    %c0_i32_1 = arith.constant 0 : i32
    return %c0_i32, %c0_i32_0 : i32, i32
  }
  func.func @transform_2(%arg0: i32) -> (i32, i32) {
    %c0_i32 = arith.constant 0 : i32
    %c0_i32_0 = arith.constant 0 : i32
    %c0_i32_1 = arith.constant 0 : i32
    return %c0_i32, %c0_i32_0 : i32, i32
  }
  func.func @transform_3(%arg0: i32) -> (i32, i32) {
    %c0_i32 = arith.constant 0 : i32
    %c0_i32_0 = arith.constant 0 : i32
    %c0_i32_1 = arith.constant 0 : i32
    return %c0_i32, %c0_i32_0 : i32, i32
  }
  func.func @transform_4(%arg0: i32) -> (i32, i32) {
    %c0_i32 = arith.constant 0 : i32
    %c0_i32_0 = arith.constant 0 : i32
    %c0_i32_1 = arith.constant 0 : i32
    return %c0_i32, %c0_i32_0 : i32, i32
  }
  func.func @transform_5(%arg0: i32) -> (i32, i32) {
    %c0_i32 = arith.constant 0 : i32
    %c0_i32_0 = arith.constant 0 : i32
    return %arg0, %c0_i32 : i32, i32
  }
}

module attributes {stable_mosaic.version = 11 : i64} {
  func.func @_conv_bn_pool_kernel(%arg0: i32, %arg1: memref<4x256x144xbf16, #tpu.memory_space<vmem>>, %arg2: memref<144x16xbf16, #tpu.memory_space<vmem>>, %arg3: memref<1x16xf32, #tpu.memory_space<vmem>>, %arg4: memref<1x16xf32, #tpu.memory_space<vmem>>, %arg5: memref<1x16xf32, #tpu.memory_space<vmem>>, %arg6: memref<256x16xf32, #tpu.memory_space<vmem>>) attributes {dimension_semantics = [#tpu.dimension_semantics<parallel>], iteration_bounds = array<i64: 2>, scalar_prefetch = 0 : i64, scratch_operands = 0 : i64, tpu.core_type = #tpu.core_type<tc>, window_params = [{transform_indices = @transform_0, window_bounds = array<i64: 4, 256, 144>}, {pipeline_mode = #tpu.pipeline_mode<synchronous>, transform_indices = @transform_1, window_bounds = array<i64: 144, 16>}, {pipeline_mode = #tpu.pipeline_mode<synchronous>, transform_indices = @transform_2, window_bounds = array<i64: 1, 16>}, {pipeline_mode = #tpu.pipeline_mode<synchronous>, transform_indices = @transform_3, window_bounds = array<i64: 1, 16>}, {pipeline_mode = #tpu.pipeline_mode<synchronous>, transform_indices = @transform_4, window_bounds = array<i64: 1, 16>}, {transform_indices = @transform_5, window_bounds = array<i64: 256, 16>}]} {
    %c0 = arith.constant 0 : index
    %c0_0 = arith.constant 0 : index
    %0 = vector.load %arg2[%c0, %c0_0] : memref<144x16xbf16, #tpu.memory_space<vmem>>, vector<144x16xbf16>
    %c0_1 = arith.constant 0 : index
    %c0_2 = arith.constant 0 : index
    %1 = vector.load %arg3[%c0_1, %c0_2] : memref<1x16xf32, #tpu.memory_space<vmem>>, vector<1x16xf32>
    %c0_3 = arith.constant 0 : index
    %c0_4 = arith.constant 0 : index
    %2 = vector.load %arg4[%c0_3, %c0_4] : memref<1x16xf32, #tpu.memory_space<vmem>>, vector<1x16xf32>
    %c0_5 = arith.constant 0 : index
    %c0_6 = arith.constant 0 : index
    %3 = vector.load %arg5[%c0_5, %c0_6] : memref<1x16xf32, #tpu.memory_space<vmem>>, vector<1x16xf32>
    %c0_7 = arith.constant 0 : index
    %c0_8 = arith.constant 0 : index
    %c0_9 = arith.constant 0 : index
    %4 = vector.load %arg1[%c0_7, %c0_8, %c0_9] : memref<4x256x144xbf16, #tpu.memory_space<vmem>>, vector<1x256x144xbf16>
    %5 = vector.shape_cast %4 : vector<1x256x144xbf16> to vector<256x144xbf16>
    %cst = arith.constant dense<0.000000e+00> : vector<256x16xf32>
    %6 = tpu.matmul %5, %0, %cst {dimension_numbers = #tpu.dot_dimension_numbers<[1], [0], [0], [1], [0, 0, 1, 1], [], []>} : vector<256x144xbf16>, vector<144x16xbf16>, vector<256x16xf32> -> vector<256x16xf32>
    %7 = vector.broadcast %1 : vector<1x16xf32> to vector<256x16xf32>
    %8 = arith.addf %6, %7 : vector<256x16xf32>
    %cst_10 = arith.constant 0.000000e+00 : f32
    %9 = vector.broadcast %cst_10 : f32 to vector<256x16xf32>
    %10 = arith.maximumf %8, %9 : vector<256x16xf32>
    %11 = vector.broadcast %2 : vector<1x16xf32> to vector<256x16xf32>
    %12 = arith.mulf %10, %11 : vector<256x16xf32>
    %13 = vector.broadcast %3 : vector<1x16xf32> to vector<256x16xf32>
    %14 = arith.addf %12, %13 : vector<256x16xf32>
    %c1 = arith.constant 1 : index
    %c0_11 = arith.constant 0 : index
    %c0_12 = arith.constant 0 : index
    %15 = vector.load %arg1[%c1, %c0_11, %c0_12] : memref<4x256x144xbf16, #tpu.memory_space<vmem>>, vector<1x256x144xbf16>
    %16 = vector.shape_cast %15 : vector<1x256x144xbf16> to vector<256x144xbf16>
    %cst_13 = arith.constant dense<0.000000e+00> : vector<256x16xf32>
    %17 = tpu.matmul %16, %0, %cst_13 {dimension_numbers = #tpu.dot_dimension_numbers<[1], [0], [0], [1], [0, 0, 1, 1], [], []>} : vector<256x144xbf16>, vector<144x16xbf16>, vector<256x16xf32> -> vector<256x16xf32>
    %18 = vector.broadcast %1 : vector<1x16xf32> to vector<256x16xf32>
    %19 = arith.addf %17, %18 : vector<256x16xf32>
    %cst_14 = arith.constant 0.000000e+00 : f32
    %20 = vector.broadcast %cst_14 : f32 to vector<256x16xf32>
    %21 = arith.maximumf %19, %20 : vector<256x16xf32>
    %22 = vector.broadcast %2 : vector<1x16xf32> to vector<256x16xf32>
    %23 = arith.mulf %21, %22 : vector<256x16xf32>
    %24 = vector.broadcast %3 : vector<1x16xf32> to vector<256x16xf32>
    %25 = arith.addf %23, %24 : vector<256x16xf32>
    %26 = arith.maximumf %14, %25 : vector<256x16xf32>
    %c2 = arith.constant 2 : index
    %c0_15 = arith.constant 0 : index
    %c0_16 = arith.constant 0 : index
    %27 = vector.load %arg1[%c2, %c0_15, %c0_16] : memref<4x256x144xbf16, #tpu.memory_space<vmem>>, vector<1x256x144xbf16>
    %28 = vector.shape_cast %27 : vector<1x256x144xbf16> to vector<256x144xbf16>
    %cst_17 = arith.constant dense<0.000000e+00> : vector<256x16xf32>
    %29 = tpu.matmul %28, %0, %cst_17 {dimension_numbers = #tpu.dot_dimension_numbers<[1], [0], [0], [1], [0, 0, 1, 1], [], []>} : vector<256x144xbf16>, vector<144x16xbf16>, vector<256x16xf32> -> vector<256x16xf32>
    %30 = vector.broadcast %1 : vector<1x16xf32> to vector<256x16xf32>
    %31 = arith.addf %29, %30 : vector<256x16xf32>
    %cst_18 = arith.constant 0.000000e+00 : f32
    %32 = vector.broadcast %cst_18 : f32 to vector<256x16xf32>
    %33 = arith.maximumf %31, %32 : vector<256x16xf32>
    %34 = vector.broadcast %2 : vector<1x16xf32> to vector<256x16xf32>
    %35 = arith.mulf %33, %34 : vector<256x16xf32>
    %36 = vector.broadcast %3 : vector<1x16xf32> to vector<256x16xf32>
    %37 = arith.addf %35, %36 : vector<256x16xf32>
    %c3 = arith.constant 3 : index
    %c0_19 = arith.constant 0 : index
    %c0_20 = arith.constant 0 : index
    %38 = vector.load %arg1[%c3, %c0_19, %c0_20] : memref<4x256x144xbf16, #tpu.memory_space<vmem>>, vector<1x256x144xbf16>
    %39 = vector.shape_cast %38 : vector<1x256x144xbf16> to vector<256x144xbf16>
    %cst_21 = arith.constant dense<0.000000e+00> : vector<256x16xf32>
    %40 = tpu.matmul %39, %0, %cst_21 {dimension_numbers = #tpu.dot_dimension_numbers<[1], [0], [0], [1], [0, 0, 1, 1], [], []>} : vector<256x144xbf16>, vector<144x16xbf16>, vector<256x16xf32> -> vector<256x16xf32>
    %41 = vector.broadcast %1 : vector<1x16xf32> to vector<256x16xf32>
    %42 = arith.addf %40, %41 : vector<256x16xf32>
    %cst_22 = arith.constant 0.000000e+00 : f32
    %43 = vector.broadcast %cst_22 : f32 to vector<256x16xf32>
    %44 = arith.maximumf %42, %43 : vector<256x16xf32>
    %45 = vector.broadcast %2 : vector<1x16xf32> to vector<256x16xf32>
    %46 = arith.mulf %44, %45 : vector<256x16xf32>
    %47 = vector.broadcast %3 : vector<1x16xf32> to vector<256x16xf32>
    %48 = arith.addf %46, %47 : vector<256x16xf32>
    %49 = arith.maximumf %37, %48 : vector<256x16xf32>
    %50 = arith.maximumf %26, %49 : vector<256x16xf32>
    %c0_23 = arith.constant 0 : index
    %c0_24 = arith.constant 0 : index
    %51 = vector.load %arg6[%c0_23, %c0_24] : memref<256x16xf32, #tpu.memory_space<vmem>>, vector<256x16xf32>
    tpu.vector_store %arg6[%c0_23, %c0_24], %50 {strides = array<i32>} : memref<256x16xf32, #tpu.memory_space<vmem>>, vector<256x16xf32>,
    return
  }
  func.func @transform_0(%arg0: i32) -> (i32, i32, i32) {
    %c0_i32 = arith.constant 0 : i32
    %c0_i32_0 = arith.constant 0 : i32
    %c0_i32_1 = arith.constant 0 : i32
    return %c0_i32, %arg0, %c0_i32_0 : i32, i32, i32
  }
  func.func @transform_1(%arg0: i32) -> (i32, i32) {
    %c0_i32 = arith.constant 0 : i32
    %c0_i32_0 = arith.constant 0 : i32
    %c0_i32_1 = arith.constant 0 : i32
    return %c0_i32, %c0_i32_0 : i32, i32
  }
  func.func @transform_2(%arg0: i32) -> (i32, i32) {
    %c0_i32 = arith.constant 0 : i32
    %c0_i32_0 = arith.constant 0 : i32
    %c0_i32_1 = arith.constant 0 : i32
    return %c0_i32, %c0_i32_0 : i32, i32
  }
  func.func @transform_3(%arg0: i32) -> (i32, i32) {
    %c0_i32 = arith.constant 0 : i32
    %c0_i32_0 = arith.constant 0 : i32
    %c0_i32_1 = arith.constant 0 : i32
    return %c0_i32, %c0_i32_0 : i32, i32
  }
  func.func @transform_4(%arg0: i32) -> (i32, i32) {
    %c0_i32 = arith.constant 0 : i32
    %c0_i32_0 = arith.constant 0 : i32
    %c0_i32_1 = arith.constant 0 : i32
    return %c0_i32, %c0_i32_0 : i32, i32
  }
  func.func @transform_5(%arg0: i32) -> (i32, i32) {
    %c0_i32 = arith.constant 0 : i32
    %c0_i32_0 = arith.constant 0 : i32
    return %arg0, %c0_i32 : i32, i32
  }
}

module attributes {stable_mosaic.version = 11 : i64} {
  func.func @_conv_bn_pool_kernel(%arg0: i32, %arg1: memref<4x16x144xbf16, #tpu.memory_space<vmem>>, %arg2: memref<144x8xbf16, #tpu.memory_space<vmem>>, %arg3: memref<1x8xf32, #tpu.memory_space<vmem>>, %arg4: memref<1x8xf32, #tpu.memory_space<vmem>>, %arg5: memref<1x8xf32, #tpu.memory_space<vmem>>, %arg6: memref<16x8xf32, #tpu.memory_space<vmem>>) attributes {dimension_semantics = [#tpu.dimension_semantics<parallel>], iteration_bounds = array<i64: 2>, scalar_prefetch = 0 : i64, scratch_operands = 0 : i64, tpu.core_type = #tpu.core_type<tc>, window_params = [{transform_indices = @transform_0, window_bounds = array<i64: 4, 16, 144>}, {pipeline_mode = #tpu.pipeline_mode<synchronous>, transform_indices = @transform_1, window_bounds = array<i64: 144, 8>}, {pipeline_mode = #tpu.pipeline_mode<synchronous>, transform_indices = @transform_2, window_bounds = array<i64: 1, 8>}, {pipeline_mode = #tpu.pipeline_mode<synchronous>, transform_indices = @transform_3, window_bounds = array<i64: 1, 8>}, {pipeline_mode = #tpu.pipeline_mode<synchronous>, transform_indices = @transform_4, window_bounds = array<i64: 1, 8>}, {transform_indices = @transform_5, window_bounds = array<i64: 16, 8>}]} {
    %c0 = arith.constant 0 : index
    %c0_0 = arith.constant 0 : index
    %0 = vector.load %arg2[%c0, %c0_0] : memref<144x8xbf16, #tpu.memory_space<vmem>>, vector<144x8xbf16>
    %c0_1 = arith.constant 0 : index
    %c0_2 = arith.constant 0 : index
    %1 = vector.load %arg3[%c0_1, %c0_2] : memref<1x8xf32, #tpu.memory_space<vmem>>, vector<1x8xf32>
    %c0_3 = arith.constant 0 : index
    %c0_4 = arith.constant 0 : index
    %2 = vector.load %arg4[%c0_3, %c0_4] : memref<1x8xf32, #tpu.memory_space<vmem>>, vector<1x8xf32>
    %c0_5 = arith.constant 0 : index
    %c0_6 = arith.constant 0 : index
    %3 = vector.load %arg5[%c0_5, %c0_6] : memref<1x8xf32, #tpu.memory_space<vmem>>, vector<1x8xf32>
    %c0_7 = arith.constant 0 : index
    %c0_8 = arith.constant 0 : index
    %c0_9 = arith.constant 0 : index
    %4 = vector.load %arg1[%c0_7, %c0_8, %c0_9] : memref<4x16x144xbf16, #tpu.memory_space<vmem>>, vector<1x16x144xbf16>
    %5 = vector.shape_cast %4 : vector<1x16x144xbf16> to vector<16x144xbf16>
    %cst = arith.constant dense<0.000000e+00> : vector<16x8xf32>
    %6 = tpu.matmul %5, %0, %cst {dimension_numbers = #tpu.dot_dimension_numbers<[1], [0], [0], [1], [0, 0, 1, 1], [], []>} : vector<16x144xbf16>, vector<144x8xbf16>, vector<16x8xf32> -> vector<16x8xf32>
    %7 = vector.broadcast %1 : vector<1x8xf32> to vector<16x8xf32>
    %8 = arith.addf %6, %7 : vector<16x8xf32>
    %cst_10 = arith.constant 0.000000e+00 : f32
    %9 = vector.broadcast %cst_10 : f32 to vector<16x8xf32>
    %10 = arith.maximumf %8, %9 : vector<16x8xf32>
    %11 = vector.broadcast %2 : vector<1x8xf32> to vector<16x8xf32>
    %12 = arith.mulf %10, %11 : vector<16x8xf32>
    %13 = vector.broadcast %3 : vector<1x8xf32> to vector<16x8xf32>
    %14 = arith.addf %12, %13 : vector<16x8xf32>
    %c1 = arith.constant 1 : index
    %c0_11 = arith.constant 0 : index
    %c0_12 = arith.constant 0 : index
    %15 = vector.load %arg1[%c1, %c0_11, %c0_12] : memref<4x16x144xbf16, #tpu.memory_space<vmem>>, vector<1x16x144xbf16>
    %16 = vector.shape_cast %15 : vector<1x16x144xbf16> to vector<16x144xbf16>
    %cst_13 = arith.constant dense<0.000000e+00> : vector<16x8xf32>
    %17 = tpu.matmul %16, %0, %cst_13 {dimension_numbers = #tpu.dot_dimension_numbers<[1], [0], [0], [1], [0, 0, 1, 1], [], []>} : vector<16x144xbf16>, vector<144x8xbf16>, vector<16x8xf32> -> vector<16x8xf32>
    %18 = vector.broadcast %1 : vector<1x8xf32> to vector<16x8xf32>
    %19 = arith.addf %17, %18 : vector<16x8xf32>
    %cst_14 = arith.constant 0.000000e+00 : f32
    %20 = vector.broadcast %cst_14 : f32 to vector<16x8xf32>
    %21 = arith.maximumf %19, %20 : vector<16x8xf32>
    %22 = vector.broadcast %2 : vector<1x8xf32> to vector<16x8xf32>
    %23 = arith.mulf %21, %22 : vector<16x8xf32>
    %24 = vector.broadcast %3 : vector<1x8xf32> to vector<16x8xf32>
    %25 = arith.addf %23, %24 : vector<16x8xf32>
    %26 = arith.maximumf %14, %25 : vector<16x8xf32>
    %c2 = arith.constant 2 : index
    %c0_15 = arith.constant 0 : index
    %c0_16 = arith.constant 0 : index
    %27 = vector.load %arg1[%c2, %c0_15, %c0_16] : memref<4x16x144xbf16, #tpu.memory_space<vmem>>, vector<1x16x144xbf16>
    %28 = vector.shape_cast %27 : vector<1x16x144xbf16> to vector<16x144xbf16>
    %cst_17 = arith.constant dense<0.000000e+00> : vector<16x8xf32>
    %29 = tpu.matmul %28, %0, %cst_17 {dimension_numbers = #tpu.dot_dimension_numbers<[1], [0], [0], [1], [0, 0, 1, 1], [], []>} : vector<16x144xbf16>, vector<144x8xbf16>, vector<16x8xf32> -> vector<16x8xf32>
    %30 = vector.broadcast %1 : vector<1x8xf32> to vector<16x8xf32>
    %31 = arith.addf %29, %30 : vector<16x8xf32>
    %cst_18 = arith.constant 0.000000e+00 : f32
    %32 = vector.broadcast %cst_18 : f32 to vector<16x8xf32>
    %33 = arith.maximumf %31, %32 : vector<16x8xf32>
    %34 = vector.broadcast %2 : vector<1x8xf32> to vector<16x8xf32>
    %35 = arith.mulf %33, %34 : vector<16x8xf32>
    %36 = vector.broadcast %3 : vector<1x8xf32> to vector<16x8xf32>
    %37 = arith.addf %35, %36 : vector<16x8xf32>
    %c3 = arith.constant 3 : index
    %c0_19 = arith.constant 0 : index
    %c0_20 = arith.constant 0 : index
    %38 = vector.load %arg1[%c3, %c0_19, %c0_20] : memref<4x16x144xbf16, #tpu.memory_space<vmem>>, vector<1x16x144xbf16>
    %39 = vector.shape_cast %38 : vector<1x16x144xbf16> to vector<16x144xbf16>
    %cst_21 = arith.constant dense<0.000000e+00> : vector<16x8xf32>
    %40 = tpu.matmul %39, %0, %cst_21 {dimension_numbers = #tpu.dot_dimension_numbers<[1], [0], [0], [1], [0, 0, 1, 1], [], []>} : vector<16x144xbf16>, vector<144x8xbf16>, vector<16x8xf32> -> vector<16x8xf32>
    %41 = vector.broadcast %1 : vector<1x8xf32> to vector<16x8xf32>
    %42 = arith.addf %40, %41 : vector<16x8xf32>
    %cst_22 = arith.constant 0.000000e+00 : f32
    %43 = vector.broadcast %cst_22 : f32 to vector<16x8xf32>
    %44 = arith.maximumf %42, %43 : vector<16x8xf32>
    %45 = vector.broadcast %2 : vector<1x8xf32> to vector<16x8xf32>
    %46 = arith.mulf %44, %45 : vector<16x8xf32>
    %47 = vector.broadcast %3 : vector<1x8xf32> to vector<16x8xf32>
    %48 = arith.addf %46, %47 : vector<16x8xf32>
    %49 = arith.maximumf %37, %48 : vector<16x8xf32>
    %50 = arith.maximumf %26, %49 : vector<16x8xf32>
    %c0_23 = arith.constant 0 : index
    %c0_24 = arith.constant 0 : index
    %51 = vector.load %arg6[%c0_23, %c0_24] : memref<16x8xf32, #tpu.memory_space<vmem>>, vector<16x8xf32>
    tpu.vector_store %arg6[%c0_23, %c0_24], %50 {strides = array<i32>} : memref<16x8xf32, #tpu.memory_space<vmem>>, vector<16x8xf32>,
    return
  }
  func.func @transform_0(%arg0: i32) -> (i32, i32, i32) {
    %c0_i32 = arith.constant 0 : i32
    %c0_i32_0 = arith.constant 0 : i32
    %c0_i32_1 = arith.constant 0 : i32
    return %c0_i32, %arg0, %c0_i32_0 : i32, i32, i32
  }
  func.func @transform_1(%arg0: i32) -> (i32, i32) {
    %c0_i32 = arith.constant 0 : i32
    %c0_i32_0 = arith.constant 0 : i32
    %c0_i32_1 = arith.constant 0 : i32
    return %c0_i32, %c0_i32_0 : i32, i32
  }
  func.func @transform_2(%arg0: i32) -> (i32, i32) {
    %c0_i32 = arith.constant 0 : i32
    %c0_i32_0 = arith.constant 0 : i32
    %c0_i32_1 = arith.constant 0 : i32
    return %c0_i32, %c0_i32_0 : i32, i32
  }
  func.func @transform_3(%arg0: i32) -> (i32, i32) {
    %c0_i32 = arith.constant 0 : i32
    %c0_i32_0 = arith.constant 0 : i32
    %c0_i32_1 = arith.constant 0 : i32
    return %c0_i32, %c0_i32_0 : i32, i32
  }
  func.func @transform_4(%arg0: i32) -> (i32, i32) {
    %c0_i32 = arith.constant 0 : i32
    %c0_i32_0 = arith.constant 0 : i32
    %c0_i32_1 = arith.constant 0 : i32
    return %c0_i32, %c0_i32_0 : i32, i32
  }
  func.func @transform_5(%arg0: i32) -> (i32, i32) {
    %c0_i32 = arith.constant 0 : i32
    %c0_i32_0 = arith.constant 0 : i32
    return %arg0, %c0_i32 : i32, i32
  }
}

module attributes {stable_mosaic.version = 11 : i64} {
  func.func @_conv_lstm_kernel(%arg0: i32, %arg1: memref<16x400xbf16, #tpu.memory_space<vmem>>, %arg2: memref<400x8xbf16, #tpu.memory_space<vmem>>, %arg3: memref<400x8xbf16, #tpu.memory_space<vmem>>, %arg4: memref<400x8xbf16, #tpu.memory_space<vmem>>, %arg5: memref<400x8xbf16, #tpu.memory_space<vmem>>, %arg6: memref<1x8xf32, #tpu.memory_space<vmem>>, %arg7: memref<1x8xf32, #tpu.memory_space<vmem>>, %arg8: memref<1x8xf32, #tpu.memory_space<vmem>>, %arg9: memref<1x8xf32, #tpu.memory_space<vmem>>, %arg10: memref<16x8xf32, #tpu.memory_space<vmem>>, %arg11: memref<16x8xf32, #tpu.memory_space<vmem>>, %arg12: memref<16x8xf32, #tpu.memory_space<vmem>>) attributes {dimension_semantics = [#tpu.dimension_semantics<parallel>], iteration_bounds = array<i64: 2>, scalar_prefetch = 0 : i64, scratch_operands = 0 : i64, tpu.core_type = #tpu.core_type<tc>, window_params = [{transform_indices = @transform_0, window_bounds = array<i64: 16, 400>}, {pipeline_mode = #tpu.pipeline_mode<synchronous>, transform_indices = @transform_1, window_bounds = array<i64: 400, 8>}, {pipeline_mode = #tpu.pipeline_mode<synchronous>, transform_indices = @transform_2, window_bounds = array<i64: 400, 8>}, {pipeline_mode = #tpu.pipeline_mode<synchronous>, transform_indices = @transform_3, window_bounds = array<i64: 400, 8>}, {pipeline_mode = #tpu.pipeline_mode<synchronous>, transform_indices = @transform_4, window_bounds = array<i64: 400, 8>}, {pipeline_mode = #tpu.pipeline_mode<synchronous>, transform_indices = @transform_5, window_bounds = array<i64: 1, 8>}, {pipeline_mode = #tpu.pipeline_mode<synchronous>, transform_indices = @transform_6, window_bounds = array<i64: 1, 8>}, {pipeline_mode = #tpu.pipeline_mode<synchronous>, transform_indices = @transform_7, window_bounds = array<i64: 1, 8>}, {pipeline_mode = #tpu.pipeline_mode<synchronous>, transform_indices = @transform_8, window_bounds = array<i64: 1, 8>}, {transform_indices = @transform_9, window_bounds = array<i64: 16, 8>}, {transform_indices = @transform_10, window_bounds = array<i64: 16, 8>}, {transform_indices = @transform_11, window_bounds = array<i64: 16, 8>}]} {
    %c0 = arith.constant 0 : index
    %c0_0 = arith.constant 0 : index
    %0 = vector.load %arg1[%c0, %c0_0] : memref<16x400xbf16, #tpu.memory_space<vmem>>, vector<16x400xbf16>
    %c0_1 = arith.constant 0 : index
    %c0_2 = arith.constant 0 : index
    %1 = vector.load %arg2[%c0_1, %c0_2] : memref<400x8xbf16, #tpu.memory_space<vmem>>, vector<400x8xbf16>
    %cst = arith.constant dense<0.000000e+00> : vector<16x8xf32>
    %2 = tpu.matmul %0, %1, %cst {dimension_numbers = #tpu.dot_dimension_numbers<[1], [0], [0], [1], [0, 0, 1, 1], [], []>} : vector<16x400xbf16>, vector<400x8xbf16>, vector<16x8xf32> -> vector<16x8xf32>
    %c0_3 = arith.constant 0 : index
    %c0_4 = arith.constant 0 : index
    %3 = vector.load %arg6[%c0_3, %c0_4] : memref<1x8xf32, #tpu.memory_space<vmem>>, vector<1x8xf32>
    %4 = vector.broadcast %3 : vector<1x8xf32> to vector<16x8xf32>
    %5 = arith.addf %2, %4 : vector<16x8xf32>
    %c0_5 = arith.constant 0 : index
    %c0_6 = arith.constant 0 : index
    %6 = vector.load %arg3[%c0_5, %c0_6] : memref<400x8xbf16, #tpu.memory_space<vmem>>, vector<400x8xbf16>
    %cst_7 = arith.constant dense<0.000000e+00> : vector<16x8xf32>
    %7 = tpu.matmul %0, %6, %cst_7 {dimension_numbers = #tpu.dot_dimension_numbers<[1], [0], [0], [1], [0, 0, 1, 1], [], []>} : vector<16x400xbf16>, vector<400x8xbf16>, vector<16x8xf32> -> vector<16x8xf32>
    %c0_8 = arith.constant 0 : index
    %c0_9 = arith.constant 0 : index
    %8 = vector.load %arg7[%c0_8, %c0_9] : memref<1x8xf32, #tpu.memory_space<vmem>>, vector<1x8xf32>
    %9 = vector.broadcast %8 : vector<1x8xf32> to vector<16x8xf32>
    %10 = arith.addf %7, %9 : vector<16x8xf32>
    %c0_10 = arith.constant 0 : index
    %c0_11 = arith.constant 0 : index
    %11 = vector.load %arg4[%c0_10, %c0_11] : memref<400x8xbf16, #tpu.memory_space<vmem>>, vector<400x8xbf16>
    %cst_12 = arith.constant dense<0.000000e+00> : vector<16x8xf32>
    %12 = tpu.matmul %0, %11, %cst_12 {dimension_numbers = #tpu.dot_dimension_numbers<[1], [0], [0], [1], [0, 0, 1, 1], [], []>} : vector<16x400xbf16>, vector<400x8xbf16>, vector<16x8xf32> -> vector<16x8xf32>
    %c0_13 = arith.constant 0 : index
    %c0_14 = arith.constant 0 : index
    %13 = vector.load %arg8[%c0_13, %c0_14] : memref<1x8xf32, #tpu.memory_space<vmem>>, vector<1x8xf32>
    %14 = vector.broadcast %13 : vector<1x8xf32> to vector<16x8xf32>
    %15 = arith.addf %12, %14 : vector<16x8xf32>
    %c0_15 = arith.constant 0 : index
    %c0_16 = arith.constant 0 : index
    %16 = vector.load %arg5[%c0_15, %c0_16] : memref<400x8xbf16, #tpu.memory_space<vmem>>, vector<400x8xbf16>
    %cst_17 = arith.constant dense<0.000000e+00> : vector<16x8xf32>
    %17 = tpu.matmul %0, %16, %cst_17 {dimension_numbers = #tpu.dot_dimension_numbers<[1], [0], [0], [1], [0, 0, 1, 1], [], []>} : vector<16x400xbf16>, vector<400x8xbf16>, vector<16x8xf32> -> vector<16x8xf32>
    %c0_18 = arith.constant 0 : index
    %c0_19 = arith.constant 0 : index
    %18 = vector.load %arg9[%c0_18, %c0_19] : memref<1x8xf32, #tpu.memory_space<vmem>>, vector<1x8xf32>
    %19 = vector.broadcast %18 : vector<1x8xf32> to vector<16x8xf32>
    %20 = arith.addf %17, %19 : vector<16x8xf32>
    %c0_20 = arith.constant 0 : index
    %c0_21 = arith.constant 0 : index
    %21 = vector.load %arg10[%c0_20, %c0_21] : memref<16x8xf32, #tpu.memory_space<vmem>>, vector<16x8xf32>
    %cst_22 = arith.constant 1.000000e+00 : f32
    %22 = vector.broadcast %cst_22 : f32 to vector<16x8xf32>
    %23 = arith.addf %15, %22 : vector<16x8xf32>
    %24 = arith.negf %23 : vector<16x8xf32>
    %25 = math.exp %24 : vector<16x8xf32>
    %cst_23 = arith.constant 1.000000e+00 : f32
    %26 = vector.broadcast %cst_23 : f32 to vector<16x8xf32>
    %27 = arith.addf %26, %25 : vector<16x8xf32>
    %28 = arith.divf %26, %27 : vector<16x8xf32>
    %29 = arith.mulf %21, %28 : vector<16x8xf32>
    %30 = arith.negf %5 : vector<16x8xf32>
    %31 = math.exp %30 : vector<16x8xf32>
    %cst_24 = arith.constant 1.000000e+00 : f32
    %32 = vector.broadcast %cst_24 : f32 to vector<16x8xf32>
    %33 = arith.addf %32, %31 : vector<16x8xf32>
    %34 = arith.divf %32, %33 : vector<16x8xf32>
    %35 = math.tanh %10 : vector<16x8xf32>
    %36 = arith.mulf %34, %35 : vector<16x8xf32>
    %37 = arith.addf %29, %36 : vector<16x8xf32>
    %c0_25 = arith.constant 0 : index
    %c0_26 = arith.constant 0 : index
    %38 = vector.load %arg11[%c0_25, %c0_26] : memref<16x8xf32, #tpu.memory_space<vmem>>, vector<16x8xf32>
    tpu.vector_store %arg11[%c0_25, %c0_26], %37 {strides = array<i32>} : memref<16x8xf32, #tpu.memory_space<vmem>>, vector<16x8xf32>,
    %39 = math.tanh %37 : vector<16x8xf32>
    %40 = arith.negf %20 : vector<16x8xf32>
    %41 = math.exp %40 : vector<16x8xf32>
    %cst_27 = arith.constant 1.000000e+00 : f32
    %42 = vector.broadcast %cst_27 : f32 to vector<16x8xf32>
    %43 = arith.addf %42, %41 : vector<16x8xf32>
    %44 = arith.divf %42, %43 : vector<16x8xf32>
    %45 = arith.mulf %39, %44 : vector<16x8xf32>
    %c0_28 = arith.constant 0 : index
    %c0_29 = arith.constant 0 : index
    %46 = vector.load %arg12[%c0_28, %c0_29] : memref<16x8xf32, #tpu.memory_space<vmem>>, vector<16x8xf32>
    tpu.vector_store %arg12[%c0_28, %c0_29], %45 {strides = array<i32>} : memref<16x8xf32, #tpu.memory_space<vmem>>, vector<16x8xf32>,
    return
  }
  func.func @transform_0(%arg0: i32) -> (i32, i32) {
    %c0_i32 = arith.constant 0 : i32
    %c0_i32_0 = arith.constant 0 : i32
    return %arg0, %c0_i32 : i32, i32
  }
  func.func @transform_1(%arg0: i32) -> (i32, i32) {
    %c0_i32 = arith.constant 0 : i32
    %c0_i32_0 = arith.constant 0 : i32
    %c0_i32_1 = arith.constant 0 : i32
    return %c0_i32, %c0_i32_0 : i32, i32
  }
  func.func @transform_2(%arg0: i32) -> (i32, i32) {
    %c0_i32 = arith.constant 0 : i32
    %c0_i32_0 = arith.constant 0 : i32
    %c0_i32_1 = arith.constant 0 : i32
    return %c0_i32, %c0_i32_0 : i32, i32
  }
  func.func @transform_3(%arg0: i32) -> (i32, i32) {
    %c0_i32 = arith.constant 0 : i32
    %c0_i32_0 = arith.constant 0 : i32
    %c0_i32_1 = arith.constant 0 : i32
    return %c0_i32, %c0_i32_0 : i32, i32
  }
  func.func @transform_4(%arg0: i32) -> (i32, i32) {
    %c0_i32 = arith.constant 0 : i32
    %c0_i32_0 = arith.constant 0 : i32
    %c0_i32_1 = arith.constant 0 : i32
    return %c0_i32, %c0_i32_0 : i32, i32
  }
  func.func @transform_5(%arg0: i32) -> (i32, i32) {
    %c0_i32 = arith.constant 0 : i32
    %c0_i32_0 = arith.constant 0 : i32
    %c0_i32_1 = arith.constant 0 : i32
    return %c0_i32, %c0_i32_0 : i32, i32
  }
  func.func @transform_6(%arg0: i32) -> (i32, i32) {
    %c0_i32 = arith.constant 0 : i32
    %c0_i32_0 = arith.constant 0 : i32
    %c0_i32_1 = arith.constant 0 : i32
    return %c0_i32, %c0_i32_0 : i32, i32
  }
  func.func @transform_7(%arg0: i32) -> (i32, i32) {
    %c0_i32 = arith.constant 0 : i32
    %c0_i32_0 = arith.constant 0 : i32
    %c0_i32_1 = arith.constant 0 : i32
    return %c0_i32, %c0_i32_0 : i32, i32
  }
  func.func @transform_8(%arg0: i32) -> (i32, i32) {
    %c0_i32 = arith.constant 0 : i32
    %c0_i32_0 = arith.constant 0 : i32
    %c0_i32_1 = arith.constant 0 : i32
    return %c0_i32, %c0_i32_0 : i32, i32
  }
  func.func @transform_9(%arg0: i32) -> (i32, i32) {
    %c0_i32 = arith.constant 0 : i32
    %c0_i32_0 = arith.constant 0 : i32
    return %arg0, %c0_i32 : i32, i32
  }
  func.func @transform_10(%arg0: i32) -> (i32, i32) {
    %c0_i32 = arith.constant 0 : i32
    %c0_i32_0 = arith.constant 0 : i32
    return %arg0, %c0_i32 : i32, i32
  }
  func.func @transform_11(%arg0: i32) -> (i32, i32) {
    %c0_i32 = arith.constant 0 : i32
    %c0_i32_0 = arith.constant 0 : i32
    return %arg0, %c0_i32 : i32, i32
  }
}

</mosaic_0001>

<llo_original>
// kernel: vibro_feat_forward.4
$region0: #{vibro_feat_forward.4}
  #allocation0 [shape = 'u32[]', space=smem, size = 0x4, offset = 0x4, fixed_abs, tag = 'smem constant byte address 0x4 - core index']
  #allocation1 [shape = 'u32[144,128]{1,0:T(1,128)}', space=vmem, size = 0x12000, scoped, tag = 'internal scratch']
  %s0 = inlined_call_operand.vmem [shape: bf16[2048,75], index: 0, kind: input, shape index: {}]
  %s1 = inlined_call_operand.vmem [shape: bf16[75,16], index: 1, kind: input, shape index: {}]
  %s2 = inlined_call_operand.vmem [shape: f32[1,16], index: 2, kind: input, shape index: {}]
  %s3 = inlined_call_operand.vmem [shape: f32[1,16], index: 3, kind: input, shape index: {}]
  %s4 = inlined_call_operand.vmem [shape: f32[1,16], index: 4, kind: input, shape index: {}]
  %s5 = inlined_call_operand.vmem [shape: f32[2048,16], index: 5, kind: output, shape index: {}]
  %s6 = sld [smem:[#allocation0]]
  $region53: #{vibro_feat_forward.4} parent=0
    _
  %s8 = ssub.s32 1, %s6
  %s9 = scalar_select 0, %s8, %s6
  loop: start=0, step=1, limit=4
  $region2: #{vibro_feat_forward.4} parent=0 // loop_pre_header
    _
  $region3: #{vibro_feat_forward.4} parent=0 // loop_header
    %s11 = sphi 0, %s15
    %p12 = scmp.ge.s32.totalorder %s11, 4
    %s21 = sphi 0, %s23
    %s24 = sphi 0, %s21
    %s25 = sphi 0, %s24
    %s41 = sphi 0, %s25
    %s45 = sphi 0, %s45
    %s47 = sphi 0, %s45
    %s48 = sphi 0, %s47
    %s62 = sphi 0, %s48
    %s66 = sphi 0, %s66
    %s68 = sphi 0, %s66
    %s69 = sphi 0, %s68
    %s83 = sphi 0, %s69
    %s87 = sphi 0, %s87
    %s89 = sphi 0, %s87
    %s90 = sphi 0, %s89
    %s104 = sphi 0, %s90
    %s108 = sphi 0, %s108
    %s110 = sphi 0, %s108
    %s111 = sphi 0, %s110
    %s125 = sphi 0, %s111
    %s131 = sphi 0, %s133
    %s134 = sphi 0, %s131
    %s135 = sphi 0, %s134
    %s151 = sphi 0, %s135
  $region4: #{vibro_feat_forward.4} parent=0 // loop_header_branch
    %14 = sbr.rel (%p12) target = $region8
  $region5: #{vibro_feat_forward.4} parent=0 // loop_body
    %s16 = ssub.s32 %s11, 1
    %s17 = ssub.s32 %s11, 2
    %s18 = sadd.s32 %s11, 1
    %s19 = ssub.s32 %s11, %s18
    %p20 = scmp.eq.s32.totalorder %s19, 0
    %s22 = sadd.s32 %s21, 1
    %s23 = scalar_select %p20, %s21, %s22
    %p26 = pneg %p20
    %p27 = scmp.eq.s32.totalorder %s11, 1
    %p28 = por %p26, %p27
    %p29 = scmp.ne.s32.totalorder %s21, %s24
    %p30 = scmp.eq.s32.totalorder %s11, 0
    %p31 = por %p29, %p30
    %p32 = scmp.ne.s32.totalorder %s21, %s24
    %p33 = scmp.eq.s32.totalorder %s16, 1
    %p34 = por %p32, %p33
    %p35 = scmp.ne.s32.totalorder %s24, %s25
    %p36 = scmp.eq.s32.totalorder %s16, 0
    %p37 = por %p35, %p36
    %p38 = scmp.ne.s32.totalorder %s24, %s25
    %p39 = scmp.eq.s32.totalorder %s17, 1
    %p40 = por %p38, %p39
    %p42 = scmp.ne.s32.totalorder %s25, %s41
    %p43 = scmp.eq.s32.totalorder %s17, 0
    %p44 = por %p42, %p43
    %s46 = sadd.s32 %s45, 1
    %p49 = scmp.eq.s32.totalorder %s11, 1
    %p50 = scmp.ne.s32.totalorder %s45, %s47
    %p51 = scmp.eq.s32.totalorder %s11, 0
    %p52 = por %p50, %p51
    %p53 = scmp.ne.s32.totalorder %s45, %s47
    %p54 = scmp.eq.s32.totalorder %s16, 1
    %p55 = por %p53, %p54
    %p56 = scmp.ne.s32.totalorder %s47, %s48
    %p57 = scmp.eq.s32.totalorder %s16, 0
    %p58 = por %p56, %p57
    %p59 = scmp.ne.s32.totalorder %s47, %s48
    %p60 = scmp.eq.s32.totalorder %s17, 1
    %p61 = por %p59, %p60
    %p63 = scmp.ne.s32.totalorder %s48, %s62
    %p64 = scmp.eq.s32.totalorder %s17, 0
    %p65 = por %p63, %p64
    %s67 = sadd.s32 %s66, 1
    %p70 = scmp.eq.s32.totalorder %s11, 1
    %p71 = scmp.ne.s32.totalorder %s66, %s68
    %p72 = scmp.eq.s32.totalorder %s11, 0
    %p73 = por %p71, %p72
    %p74 = scmp.ne.s32.totalorder %s66, %s68
    %p75 = scmp.eq.s32.totalorder %s16, 1
    %p76 = por %p74, %p75
    %p77 = scmp.ne.s32.totalorder %s68, %s69
    %p78 = scmp.eq.s32.totalorder %s16, 0
    %p79 = por %p77, %p78
    %p80 = scmp.ne.s32.totalorder %s68, %s69
    %p81 = scmp.eq.s32.totalorder %s17, 1
    %p82 = por %p80, %p81
    %p84 = scmp.ne.s32.totalorder %s69, %s83
    %p85 = scmp.eq.s32.totalorder %s17, 0
    %p86 = por %p84, %p85
    %s88 = sadd.s32 %s87, 1
    %p91 = scmp.eq.s32.totalorder %s11, 1
    %p92 = scmp.ne.s32.totalorder %s87, %s89
    %p93 = scmp.eq.s32.totalorder %s11, 0
    %p94 = por %p92, %p93
    %p95 = scmp.ne.s32.totalorder %s87, %s89
    %p96 = scmp.eq.s32.totalorder %s16, 1
    %p97 = por %p95, %p96
    %p98 = scmp.ne.s32.totalorder %s89, %s90
    %p99 = scmp.eq.s32.totalorder %s16, 0
    %p100 = por %p98, %p99
    %p101 = scmp.ne.s32.totalorder %s89, %s90
    %p102 = scmp.eq.s32.totalorder %s17, 1
    %p103 = por %p101, %p102
    %p105 = scmp.ne.s32.totalorder %s90, %s104
    %p106 = scmp.eq.s32.totalorder %s17, 0
    %p107 = por %p105, %p106
    %s109 = sadd.s32 %s108, 1
    %p112 = scmp.eq.s32.totalorder %s11, 1
    %p113 = scmp.ne.s32.totalorder %s108, %s110
    %p114 = scmp.eq.s32.totalorder %s11, 0
    %p115 = por %p113, %p114
    %p116 = scmp.ne.s32.totalorder %s108, %s110
    %p117 = scmp.eq.s32.totalorder %s16, 1
    %p118 = por %p116, %p117
    %p119 = scmp.ne.s32.totalorder %s110, %s111
    %p120 = scmp.eq.s32.totalorder %s16, 0
    %p121 = por %p119, %p120
    %p122 = scmp.ne.s32.totalorder %s110, %s111
    %p123 = scmp.eq.s32.totalorder %s17, 1
    %p124 = por %p122, %p123
    %p126 = scmp.ne.s32.totalorder %s111, %s125
    %p127 = scmp.eq.s32.totalorder %s17, 0
    %p128 = por %p126, %p127
    %s129 = ssub.s32 %s11, %s18
    %p130 = scmp.eq.s32.totalorder %s129, 0
    %s132 = sadd.s32 %s131, 1
    %s133 = scalar_select %p130, %s131, %s132
    %p136 = pneg %p130
    %p137 = scmp.eq.s32.totalorder %s11, 1
    %p138 = por %p136, %p137
    %p139 = scmp.ne.s32.totalorder %s131, %s134
    %p140 = scmp.eq.s32.totalorder %s11, 0
    %p141 = por %p139, %p140
    %p142 = scmp.ne.s32.totalorder %s131, %s134
    %p143 = scmp.eq.s32.totalorder %s16, 1
    %p144 = por %p142, %p143
    %p145 = scmp.ne.s32.totalorder %s134, %s135
    %p146 = scmp.eq.s32.totalorder %s16, 0
    %p147 = por %p145, %p146
    %p148 = scmp.ne.s32.totalorder %s134, %s135
    %p149 = scmp.eq.s32.totalorder %s17, 1
    %p150 = por %p148, %p149
    %p152 = scmp.ne.s32.totalorder %s135, %s151
    %p153 = scmp.eq.s32.totalorder %s17, 0
    %p154 = por %p152, %p153
    %p155 = scmp.le.s32.totalorder 1, %s11
    %p156 = scmp.lt.s32.totalorder %s11, 3
    %p157 = pnand %p155, %p156
    %p158 = pneg %p157
    // Predicated region
    $region9: #{vibro_feat_forward.4} parent=5 // pred_check
      _
    $region10: #{vibro_feat_forward.4} parent=5 // pred_check_branch
      %160 = sbr.rel (%p157) target = $region12
    $region11: #{vibro_feat_forward.4} parent=5 // pred_region
      %s161 = ssub.s32 %s11, 1
      // Predicated region
      $region13: #{vibro_feat_forward.4} parent=11 // pred_check
        %p162 = pneg %p58
      $region14: #{vibro_feat_forward.4} parent=11 // pred_check_branch
        %164 = sbr.rel (%p162) target = $region16
      $region15: #{vibro_feat_forward.4} parent=11 // pred_region
        _
      $region16: #{vibro_feat_forward.4} parent=11 // pred_fallthru
        _
      // Predicated region
      $region17: #{vibro_feat_forward.4} parent=11 // pred_check
        %p165 = pneg %p79
      $region18: #{vibro_feat_forward.4} parent=11 // pred_check_branch
        %167 = sbr.rel (%p165) target = $region20
      $region19: #{vibro_feat_forward.4} parent=11 // pred_region
        _
      $region20: #{vibro_feat_forward.4} parent=11 // pred_fallthru
        _
      // Predicated region
      $region21: #{vibro_feat_forward.4} parent=11 // pred_check
        %p168 = pneg %p100
      $region22: #{vibro_feat_forward.4} parent=11 // pred_check_branch
        %170 = sbr.rel (%p168) target = $region24
      $region23: #{vibro_feat_forward.4} parent=11 // pred_region
        _
      $region24: #{vibro_feat_forward.4} parent=11 // pred_fallthru
        _
      // Predicated region
      $region25: #{vibro_feat_forward.4} parent=11 // pred_check
        %p171 = pneg %p121
      $region26: #{vibro_feat_forward.4} parent=11 // pred_check_branch
        %173 = sbr.rel (%p171) target = $region28
      $region27: #{vibro_feat_forward.4} parent=11 // pred_region
        _
      $region28: #{vibro_feat_forward.4} parent=11 // pred_fallthru
        _
    $region12: #{vibro_feat_forward.4} parent=5 // pred_fallthru
      _
    %p174 = scmp.lt.s32.totalorder %s11, 2
    // Predicated region
    $region29: #{vibro_feat_forward.4} parent=5 // pred_check
      %p175 = pneg %p174
    $region30: #{vibro_feat_forward.4} parent=5 // pred_check_branch
      %177 = sbr.rel (%p175) target = $region32
    $region31: #{vibro_feat_forward.4} parent=5 // pred_region
      // Predicated region
      $region33: #{vibro_feat_forward.4} parent=31 // pred_check
        %p178 = pneg %p31
      $region34: #{vibro_feat_forward.4} parent=31 // pred_check_branch
        %180 = sbr.rel (%p178) target = $region36
      $region35: #{vibro_feat_forward.4} parent=31 // pred_region
        %s181 = smul.u32 128, %s11
        %p182 = scmp.lt.s32.totalorder %s181, 255
        %s183 = scalar_select %p182, %s181, 255
        %s184 = smul.addr %s183, 4
        %s185 = scalar_lea.vmem %s0, %s184
        %s186 = smul.u32 128, %s11
      $region36: #{vibro_feat_forward.4} parent=31 // pred_fallthru
        _
    $region32: #{vibro_feat_forward.4} parent=5 // pred_fallthru
      _
    %p187 = scmp.le.s32.totalorder 1, %s11
    %p188 = scmp.lt.s32.totalorder %s11, 3
    %p189 = pnand %p187, %p188
    %p190 = pneg %p189
    // Predicated region
    $region37: #{vibro_feat_forward.4} parent=5 // pred_check
      _
    $region38: #{vibro_feat_forward.4} parent=5 // pred_check_branch
      %192 = sbr.rel (%p189) target = $region40
    $region39: #{vibro_feat_forward.4} parent=5 // pred_region
      %s193 = ssub.s32 %s11, 1
      %s194 = smul.u32 128, %s16
      %p195 = scmp.lt.s32.totalorder %s194, 255
      %s196 = scalar_select %p195, %s194, 255
      %s197 = smul.addr %s196, 4
      %s198 = scalar_lea.vmem %s0, %s197
      %p199 = pneg %p37
      %p200 = pneg %p34
      %p201 = pneg %p58
      %p202 = pneg %p55
      %p203 = pneg %p79
      %p204 = pneg %p76
      %p205 = pneg %p100
      %p206 = pneg %p97
      %p207 = pneg %p121
      %p208 = pneg %p118
      %p209 = pneg %p147
      %p210 = pneg %p144
      %s211 = smul.u32 128, %s16
      %p212 = scmp.lt.s32.totalorder %s211, 255
      %s213 = scalar_select %p212, %s211, 255
      %s214 = smul.addr %s213, 8
      %s215 = scalar_lea.vmem %s5, %s214
      %s216 = smul.u32 128, %s16
      %p217 = scmp.lt.s32.totalorder %s216, 255
      %s218 = scalar_select %p217, %s216, 255
      %s219 = smul.addr %s218, 4
      %s220 = scalar_lea.vmem %s0, %s219
      %s221 = smul.u32 128, %s16
      %s222 = smul.u32 128, %s16
      %p223 = scmp.lt.s32.totalorder %s222, 255
      %s224 = scalar_select %p223, %s222, 255
      %s225 = smul.addr %s224, 8
      %s226 = scalar_lea.vmem %s5, %s225
      %s227 = smul.u32 128, %s16
      %v229 = vld [vmem:[%s220] sm:$0xf]
      %v230 = vld [vmem:[%s220 + $0x4] sm:$0xf]
      %v231 = vld [vmem:[%s220 + $0x8] sm:$0xf]
      %v232 = vld [vmem:[%s220 + $0xc] sm:$0xf]
      %v233 = vld [vmem:[%s220 + $0x10] sm:$0xf]
      %v234 = vld [vmem:[%s220 + $0x14] sm:$0xf]
      %v235 = vld [vmem:[%s220 + $0x18] sm:$0xf]
      %v236 = vld [vmem:[%s220 + $0x1c] sm:$0xf]
      %v237 = vld [vmem:[%s220 + $0x20] sm:$0xf]
      %v238 = vld [vmem:[%s220 + $0x24] sm:$0xf]
      %v239 = vld [vmem:[%s220 + $0x28] sm:$0xf]
      %v240 = vld [vmem:[%s220 + $0x2c] sm:$0xf]
      %v241 = vld [vmem:[%s220 + $0x30] sm:$0xf]
      %v242 = vld [vmem:[%s220 + $0x34] sm:$0xf]
      %v243 = vld [vmem:[%s220 + $0x38] sm:$0xf]
      %v244 = vld [vmem:[%s220 + $0x3c] sm:$0xf]
      %v245 = vld [vmem:[%s220 + $0x40] sm:$0xf]
      %v246 = vld [vmem:[%s220 + $0x44] sm:$0xf]
      %v247 = vld [vmem:[%s220 + $0x48] sm:$0xf]
      %v248 = vld [vmem:[%s220 + $0x4c] sm:$0xf]
      %v249 = vld [vmem:[%s220 + $0x50] sm:$0xf]
      %v250 = vld [vmem:[%s220 + $0x54] sm:$0xf]
      %v251 = vld [vmem:[%s220 + $0x58] sm:$0xf]
      %v252 = vld [vmem:[%s220 + $0x5c] sm:$0xf]
      %v253 = vld [vmem:[%s220 + $0x60] sm:$0xf]
      %v254 = vld [vmem:[%s220 + $0x64] sm:$0xf]
      %v255 = vld [vmem:[%s220 + $0x68] sm:$0xf]
      %v256 = vld [vmem:[%s220 + $0x6c] sm:$0xf]
      %v257 = vld [vmem:[%s220 + $0x70] sm:$0xf]
      %v258 = vld [vmem:[%s220 + $0x74] sm:$0xf]
      %v259 = vld [vmem:[%s220 + $0x78] sm:$0xf]
      %v260 = vld [vmem:[%s220 + $0x7c] sm:$0xf]
      %v261 = vld [vmem:[%s220 + $0x80] sm:$0xf]
      %v262 = vld [vmem:[%s220 + $0x84] sm:$0xf]
      %v263 = vld [vmem:[%s220 + $0x88] sm:$0xf]
      %v264 = vld [vmem:[%s220 + $0x8c] sm:$0xf]
      %v265 = vld [vmem:[%s220 + $0x90] sm:$0xf]
      %v266 = vld [vmem:[%s220 + $0x94] sm:$0xf]
      %v267 = vld [vmem:[%s220 + $0x98] sm:$0xf]
      %v268 = vld [vmem:[%s220 + $0x9c] sm:$0xf]
      %v269 = vld [vmem:[%s220 + $0xa0] sm:$0xf]
      %v270 = vld [vmem:[%s220 + $0xa4] sm:$0xf]
      %v271 = vld [vmem:[%s220 + $0xa8] sm:$0xf]
      %v272 = vld [vmem:[%s220 + $0xac] sm:$0xf]
      %v273 = vld [vmem:[%s220 + $0xb0] sm:$0xf]
      %v274 = vld [vmem:[%s220 + $0xb4] sm:$0xf]
      %v275 = vld [vmem:[%s220 + $0xb8] sm:$0xf]
      %v276 = vld [vmem:[%s220 + $0xbc] sm:$0xf]
      %v277 = vld [vmem:[%s220 + $0xc0] sm:$0xf]
      %v278 = vld [vmem:[%s220 + $0xc4] sm:$0xf]
      %v279 = vld [vmem:[%s220 + $0xc8] sm:$0xf]
      %v280 = vld [vmem:[%s220 + $0xcc] sm:$0xf]
      %v281 = vld [vmem:[%s220 + $0xd0] sm:$0xf]
      %v282 = vld [vmem:[%s220 + $0xd4] sm:$0xf]
      %v283 = vld [vmem:[%s220 + $0xd8] sm:$0xf]
      %v284 = vld [vmem:[%s220 + $0xdc] sm:$0xf]
      %v285 = vld [vmem:[%s220 + $0xe0] sm:$0xf]
      %v286 = vld [vmem:[%s220 + $0xe4] sm:$0xf]
      %v287 = vld [vmem:[%s220 + $0xe8] sm:$0xf]
      %v288 = vld [vmem:[%s220 + $0xec] sm:$0xf]
      %v289 = vld [vmem:[%s220 + $0xf0] sm:$0xf]
      %v290 = vld [vmem:[%s220 + $0xf4] sm:$0xf]
      %v291 = vld [vmem:[%s220 + $0xf8] sm:$0xf]
      %v292 = vld [vmem:[%s220 + $0xfc] sm:$0xf]
      %v293 = vld [vmem:[%s220 + $0x100] sm:$0xf]
      %v294 = vld [vmem:[%s220 + $0x104] sm:$0xf]
      %v295 = vld [vmem:[%s220 + $0x108] sm:$0xf]
      %v296 = vld [vmem:[%s220 + $0x10c] sm:$0xf]
      %v297 = vld [vmem:[%s220 + $0x110] sm:$0xf]
      %v298 = vld [vmem:[%s220 + $0x114] sm:$0xf]
      %v299 = vld [vmem:[%s220 + $0x118] sm:$0xf]
      %v300 = vld [vmem:[%s220 + $0x11c] sm:$0xf]
      %v301 = vld [vmem:[%s220 + $0x120] sm:$0xf]
      %v302 = vld [vmem:[%s220 + $0x124] sm:$0xf]
      %v303 = vld [vmem:[%s220 + $0x128] sm:$0xf]
      %v304 = vld [vmem:[%s220 + $0x12c] sm:$0xf]
      %v305 = vld [vmem:[%s220 + $0x130] sm:$0xf]
      %v306 = vld [vmem:[%s220 + $0x134] sm:$0xf]
      %v307 = vld [vmem:[%s220 + $0x138] sm:$0xf]
      %v308 = vld [vmem:[%s220 + $0x13c] sm:$0xf]
      %v309 = vld [vmem:[%s220 + $0x140] sm:$0xf]
      %v310 = vld [vmem:[%s220 + $0x144] sm:$0xf]
      %v311 = vld [vmem:[%s220 + $0x148] sm:$0xf]
      %v312 = vld [vmem:[%s220 + $0x14c] sm:$0xf]
      %v313 = vld [vmem:[%s220 + $0x150] sm:$0xf]
      %v314 = vld [vmem:[%s220 + $0x154] sm:$0xf]
      %v315 = vld [vmem:[%s220 + $0x158] sm:$0xf]
      %v316 = vld [vmem:[%s220 + $0x15c] sm:$0xf]
      %v317 = vld [vmem:[%s220 + $0x160] sm:$0xf]
      %v318 = vld [vmem:[%s220 + $0x164] sm:$0xf]
      %v319 = vld [vmem:[%s220 + $0x168] sm:$0xf]
      %v320 = vld [vmem:[%s220 + $0x16c] sm:$0xf]
      %v321 = vld [vmem:[%s220 + $0x170] sm:$0xf]
      %v322 = vld [vmem:[%s220 + $0x174] sm:$0xf]
      %v323 = vld [vmem:[%s220 + $0x178] sm:$0xf]
      %v324 = vld [vmem:[%s220 + $0x17c] sm:$0xf]
      %v325 = vld [vmem:[%s220 + $0x180] sm:$0xf]
      %v326 = vld [vmem:[%s220 + $0x184] sm:$0xf]
      %v327 = vld [vmem:[%s220 + $0x188] sm:$0xf]
      %v328 = vld [vmem:[%s220 + $0x18c] sm:$0xf]
      %v329 = vld [vmem:[%s220 + $0x190] sm:$0xf]
      %v330 = vld [vmem:[%s220 + $0x194] sm:$0xf]
      %v331 = vld [vmem:[%s220 + $0x198] sm:$0xf]
      %v332 = vld [vmem:[%s220 + $0x19c] sm:$0xf]
      %v333 = vld [vmem:[%s220 + $0x1a0] sm:$0xf]
      %v334 = vld [vmem:[%s220 + $0x1a4] sm:$0xf]
      %v335 = vld [vmem:[%s220 + $0x1a8] sm:$0xf]
      %v336 = vld [vmem:[%s220 + $0x1ac] sm:$0xf]
      %v337 = vld [vmem:[%s220 + $0x1b0] sm:$0xf]
      %v338 = vld [vmem:[%s220 + $0x1b4] sm:$0xf]
      %v339 = vld [vmem:[%s220 + $0x1b8] sm:$0xf]
      %v340 = vld [vmem:[%s220 + $0x1bc] sm:$0xf]
      %v341 = vld [vmem:[%s220 + $0x1c0] sm:$0xf]
      %v342 = vld [vmem:[%s220 + $0x1c4] sm:$0xf]
      %v343 = vld [vmem:[%s220 + $0x1c8] sm:$0xf]
      %v344 = vld [vmem:[%s220 + $0x1cc] sm:$0xf]
      %v345 = vld [vmem:[%s220 + $0x1d0] sm:$0xf]
      %v346 = vld [vmem:[%s220 + $0x1d4] sm:$0xf]
      %v347 = vld [vmem:[%s220 + $0x1d8] sm:$0xf]
      %v348 = vld [vmem:[%s220 + $0x1dc] sm:$0xf]
      %v349 = vld [vmem:[%s220 + $0x1e0] sm:$0xf]
      %v350 = vld [vmem:[%s220 + $0x1e4] sm:$0xf]
      %v351 = vld [vmem:[%s220 + $0x1e8] sm:$0xf]
      %v352 = vld [vmem:[%s220 + $0x1ec] sm:$0xf]
      %v353 = vld [vmem:[%s220 + $0x1f0] sm:$0xf]
      %v354 = vld [vmem:[%s220 + $0x1f4] sm:$0xf]
      %v355 = vld [vmem:[%s220 + $0x1f8] sm:$0xf]
      %v356 = vld [vmem:[%s220 + $0x1fc] sm:$0xf]
      %v357 = vld [vmem:[%s1] sm:$0xf]
      %v358 = vld [vmem:[%s1 + $0x4] sm:$0xf]
      %v359 = vld [vmem:[%s1 + $0x8] sm:$0xf]
      %v360 = vld [vmem:[%s1 + $0xc] sm:$0xf]
      %v361 = vld [vmem:[%s1 + $0x10] sm:$0xf]
      %v362 = vld [vmem:[%s1 + $0x14] sm:$0xf]
      %v363 = vld [vmem:[%s1 + $0x18] sm:$0xf]
      %v364 = vld [vmem:[%s1 + $0x1c] sm:$0xf]
      %v365 = vld [vmem:[%s1 + $0x20] sm:$0xf]
      %v366 = vld [vmem:[%s1 + $0x24] sm:$0x3]
      %v367 = vld [vmem:[%s2] sm:$0x1]
      %v369 = vlaneseq
      %v370 = vshrl.u32 %v369, 7
      %v371 = vsub.s32 0, %v370
      %v372 = vrot.slane %v367, %v371
      %v502 = vunpack.c.l.b16 %v229
      %v503 = vunpack.c.l.b16 %v230
      %v504 = vunpack.c.l.b16 %v231
      %v505 = vunpack.c.l.b16 %v232
      %v506 = vunpack.c.l.b16 %v233
      %v507 = vunpack.c.l.b16 %v234
      %v508 = vunpack.c.l.b16 %v235
      %v509 = vunpack.c.l.b16 %v236
      %v510 = vunpack.c.l.b16 %v237
      %v511 = vunpack.c.l.b16 %v238
      %v512 = vunpack.c.l.b16 %v239
      %v513 = vunpack.c.l.b16 %v240
      %v514 = vunpack.c.l.b16 %v241
      %v515 = vunpack.c.l.b16 %v242
      %v516 = vunpack.c.l.b16 %v243
      %v517 = vunpack.c.l.b16 %v244
      %v518 = vunpack.c.l.b16 %v245
      %v519 = vunpack.c.l.b16 %v246
      %v520 = vunpack.c.l.b16 %v247
      %v521 = vunpack.c.l.b16 %v248
      %v522 = vunpack.c.l.b16 %v249
      %v523 = vunpack.c.l.b16 %v250
      %v524 = vunpack.c.l.b16 %v251
      %v525 = vunpack.c.l.b16 %v252
      %v526 = vunpack.c.l.b16 %v253
      %v527 = vunpack.c.l.b16 %v254
      %v528 = vunpack.c.l.b16 %v255
      %v529 = vunpack.c.l.b16 %v256
      %v530 = vunpack.c.l.b16 %v257
      %v531 = vunpack.c.l.b16 %v258
      %v532 = vunpack.c.l.b16 %v259
      %v533 = vunpack.c.l.b16 %v260
      %v534 = vunpack.c.l.b16 %v261
      %v535 = vunpack.c.l.b16 %v262
      %v536 = vunpack.c.l.b16 %v263
      %v537 = vunpack.c.l.b16 %v264
      %v538 = vunpack.c.l.b16 %v265
      %v539 = vunpack.c.l.b16 %v266
      %v540 = vunpack.c.l.b16 %v267
      %v541 = vunpack.c.l.b16 %v268
      %v542 = vunpack.c.l.b16 %v269
      %v543 = vunpack.c.l.b16 %v270
      %v544 = vunpack.c.l.b16 %v271
      %v545 = vunpack.c.l.b16 %v272
      %v546 = vunpack.c.l.b16 %v273
      %v547 = vunpack.c.l.b16 %v274
      %v548 = vunpack.c.l.b16 %v275
      %v549 = vunpack.c.l.b16 %v276
      %v550 = vunpack.c.l.b16 %v277
      %v551 = vunpack.c.l.b16 %v278
      %v552 = vunpack.c.l.b16 %v279
      %v553 = vunpack.c.l.b16 %v280
      %v554 = vunpack.c.l.b16 %v281
      %v555 = vunpack.c.l.b16 %v282
      %v556 = vunpack.c.l.b16 %v283
      %v557 = vunpack.c.l.b16 %v284
      %v558 = vunpack.c.l.b16 %v285
      %v559 = vunpack.c.l.b16 %v286
      %v560 = vunpack.c.l.b16 %v287
      %v561 = vunpack.c.l.b16 %v288
      %v562 = vunpack.c.l.b16 %v289
      %v563 = vunpack.c.l.b16 %v290
      %v564 = vunpack.c.l.b16 %v291
      %v565 = vunpack.c.l.b16 %v292
      %v566 = vunpack.c.l.b16 %v293
      %v567 = vunpack.c.l.b16 %v294
      %v568 = vunpack.c.l.b16 %v295
      %v569 = vunpack.c.l.b16 %v296
      %v570 = vunpack.c.l.b16 %v297
      %v571 = vunpack.c.l.b16 %v298
      %v572 = vunpack.c.l.b16 %v299
      %v573 = vunpack.c.l.b16 %v300
      %v574 = vunpack.c.l.b16 %v301
      %v575 = vunpack.c.l.b16 %v302
      %v576 = vunpack.c.l.b16 %v303
      %v577 = vunpack.c.l.b16 %v304
      %v578 = vunpack.c.l.b16 %v305
      %v579 = vunpack.c.l.b16 %v306
      %v580 = vunpack.c.l.b16 %v307
      %v581 = vunpack.c.l.b16 %v308
      %v582 = vunpack.c.l.b16 %v309
      %v583 = vunpack.c.l.b16 %v310
      %v584 = vunpack.c.l.b16 %v311
      %v585 = vunpack.c.l.b16 %v312
      %v586 = vunpack.c.l.b16 %v313
      %v587 = vunpack.c.l.b16 %v314
      %v588 = vunpack.c.l.b16 %v315
      %v589 = vunpack.c.l.b16 %v316
      %v590 = vunpack.c.l.b16 %v317
      %v591 = vunpack.c.l.b16 %v318
      %v592 = vunpack.c.l.b16 %v319
      %v593 = vunpack.c.l.b16 %v320
      %v594 = vunpack.c.l.b16 %v321
      %v595 = vunpack.c.l.b16 %v322
      %v596 = vunpack.c.l.b16 %v323
      %v597 = vunpack.c.l.b16 %v324
      %v598 = vunpack.c.l.b16 %v325
      %v599 = vunpack.c.l.b16 %v326
      %v600 = vunpack.c.l.b16 %v327
      %v601 = vunpack.c.l.b16 %v328
      %v602 = vunpack.c.l.b16 %v329
      %v603 = vunpack.c.l.b16 %v330
      %v604 = vunpack.c.l.b16 %v331
      %v605 = vunpack.c.l.b16 %v332
      %v606 = vunpack.c.l.b16 %v333
      %v607 = vunpack.c.l.b16 %v334
      %v608 = vunpack.c.l.b16 %v335
      %v609 = vunpack.c.l.b16 %v336
      %v610 = vunpack.c.l.b16 %v337
      %v611 = vunpack.c.l.b16 %v338
      %v612 = vunpack.c.l.b16 %v339
      %v613 = vunpack.c.l.b16 %v340
      %v614 = vunpack.c.l.b16 %v341
      %v615 = vunpack.c.l.b16 %v342
      %v616 = vunpack.c.l.b16 %v343
      %v617 = vunpack.c.l.b16 %v344
      %v618 = vunpack.c.l.b16 %v345
      %v619 = vunpack.c.l.b16 %v346
      %v620 = vunpack.c.l.b16 %v347
      %v621 = vunpack.c.l.b16 %v348
      %v622 = vunpack.c.l.b16 %v349
      %v623 = vunpack.c.l.b16 %v350
      %v624 = vunpack.c.l.b16 %v351
      %v625 = vunpack.c.l.b16 %v352
      %v626 = vunpack.c.l.b16 %v353
      %v627 = vunpack.c.l.b16 %v354
      %v628 = vunpack.c.l.b16 %v355
      %v629 = vunpack.c.l.b16 %v356
      %v630 = vpack.c.b16 %v503, %v502
      %v631 = vpack.c.b16 %v505, %v504
      %v632 = vpack.c.b16 %v507, %v506
      %v633 = vpack.c.b16 %v509, %v508
      %v634 = vpack.c.b16 %v511, %v510
      %v635 = vpack.c.b16 %v513, %v512
      %v636 = vpack.c.b16 %v515, %v514
      %v637 = vpack.c.b16 %v517, %v516
      %v638 = vpack.c.b16 %v519, %v518
      %v639 = vpack.c.b16 %v521, %v520
      %v640 = vpack.c.b16 %v523, %v522
      %v641 = vpack.c.b16 %v525, %v524
      %v642 = vpack.c.b16 %v527, %v526
      %v643 = vpack.c.b16 %v529, %v528
      %v644 = vpack.c.b16 %v531, %v530
      %v645 = vpack.c.b16 %v533, %v532
      %v646 = vpack.c.b16 %v535, %v534
      %v647 = vpack.c.b16 %v537, %v536
      %v648 = vpack.c.b16 %v539, %v538
      %v649 = vpack.c.b16 %v541, %v540
      %v650 = vpack.c.b16 %v543, %v542
      %v651 = vpack.c.b16 %v545, %v544
      %v652 = vpack.c.b16 %v547, %v546
      %v653 = vpack.c.b16 %v549, %v548
      %v654 = vpack.c.b16 %v551, %v550
      %v655 = vpack.c.b16 %v553, %v552
      %v656 = vpack.c.b16 %v555, %v554
      %v657 = vpack.c.b16 %v557, %v556
      %v658 = vpack.c.b16 %v559, %v558
      %v659 = vpack.c.b16 %v561, %v560
      %v660 = vpack.c.b16 %v563, %v562
      %v661 = vpack.c.b16 %v565, %v564
      %v662 = vpack.c.b16 %v567, %v566
      %v663 = vpack.c.b16 %v569, %v568
      %v664 = vpack.c.b16 %v571, %v570
      %v665 = vpack.c.b16 %v573, %v572
      %v666 = vpack.c.b16 %v575, %v574
      %v667 = vpack.c.b16 %v577, %v576
      %v668 = vpack.c.b16 %v579, %v578
      %v669 = vpack.c.b16 %v581, %v580
      %v670 = vpack.c.b16 %v583, %v582
      %v671 = vpack.c.b16 %v585, %v584
      %v672 = vpack.c.b16 %v587, %v586
      %v673 = vpack.c.b16 %v589, %v588
      %v674 = vpack.c.b16 %v591, %v590
      %v675 = vpack.c.b16 %v593, %v592
      %v676 = vpack.c.b16 %v595, %v594
      %v677 = vpack.c.b16 %v597, %v596
      %v678 = vpack.c.b16 %v599, %v598
      %v679 = vpack.c.b16 %v601, %v600
      %v680 = vpack.c.b16 %v603, %v602
      %v681 = vpack.c.b16 %v605, %v604
      %v682 = vpack.c.b16 %v607, %v606
      %v683 = vpack.c.b16 %v609, %v608
      %v684 = vpack.c.b16 %v611, %v610
      %v685 = vpack.c.b16 %v613, %v612
      %v686 = vpack.c.b16 %v615, %v614
      %v687 = vpack.c.b16 %v617, %v616
      %v688 = vpack.c.b16 %v619, %v618
      %v689 = vpack.c.b16 %v621, %v620
      %v690 = vpack.c.b16 %v623, %v622
      %v691 = vpack.c.b16 %v625, %v624
      %v692 = vpack.c.b16 %v627, %v626
      %v693 = vpack.c.b16 %v629, %v628
      %v704 = vunpack.c.l.b16 %v357
      %v705 = vunpack.c.l.b16 %v358
      %v706 = vunpack.c.l.b16 %v359
      %v707 = vunpack.c.l.b16 %v360
      %v708 = vunpack.c.l.b16 %v361
      %v709 = vunpack.c.l.b16 %v362
      %v710 = vunpack.c.l.b16 %v363
      %v711 = vunpack.c.l.b16 %v364
      %v712 = vunpack.c.l.b16 %v365
      %v713 = vunpack.c.l.b16 %v366
      %v714 = vpack.c.b16 %v705, %v704
      %v715 = vpack.c.b16 %v707, %v706
      %v716 = vpack.c.b16 %v709, %v708
      %v717 = vpack.c.b16 %v711, %v710
      %v718 = vpack.c.b16 %v713, %v712
      %vm723 = vcmask 613376
      %v725 = vsel %vm723, %v630, 0
      %v728 = vsel %vm723, %v631, 0
      %v731 = vsel %vm723, %v632, 0
      %v734 = vsel %vm723, %v633, 0
      %v737 = vsel %vm723, %v634, 0
      %v740 = vsel %vm723, %v635, 0
      %v743 = vsel %vm723, %v636, 0
      %v746 = vsel %vm723, %v637, 0
      %v749 = vsel %vm723, %v638, 0
      %v752 = vsel %vm723, %v639, 0
      %v755 = vsel %vm723, %v640, 0
      %v758 = vsel %vm723, %v641, 0
      %v761 = vsel %vm723, %v642, 0
      %v764 = vsel %vm723, %v643, 0
      %v767 = vsel %vm723, %v644, 0
      %v770 = vsel %vm723, %v645, 0
      %v773 = vsel %vm723, %v646, 0
      %v776 = vsel %vm723, %v647, 0
      %v779 = vsel %vm723, %v648, 0
      %v782 = vsel %vm723, %v649, 0
      %v785 = vsel %vm723, %v650, 0
      %v788 = vsel %vm723, %v651, 0
      %v791 = vsel %vm723, %v652, 0
      %v794 = vsel %vm723, %v653, 0
      %v797 = vsel %vm723, %v654, 0
      %v800 = vsel %vm723, %v655, 0
      %v803 = vsel %vm723, %v656, 0
      %v806 = vsel %vm723, %v657, 0
      %v809 = vsel %vm723, %v658, 0
      %v812 = vsel %vm723, %v659, 0
      %v815 = vsel %vm723, %v660, 0
      %v818 = vsel %vm723, %v661, 0
      %v821 = vsel %vm723, %v662, 0
      %v824 = vsel %vm723, %v663, 0
      %v827 = vsel %vm723, %v664, 0
      %v830 = vsel %vm723, %v665, 0
      %v833 = vsel %vm723, %v666, 0
      %v836 = vsel %vm723, %v667, 0
      %v839 = vsel %vm723, %v668, 0
      %v842 = vsel %vm723, %v669, 0
      %v845 = vsel %vm723, %v670, 0
      %v848 = vsel %vm723, %v671, 0
      %v851 = vsel %vm723, %v672, 0
      %v854 = vsel %vm723, %v673, 0
      %v857 = vsel %vm723, %v674, 0
      %v860 = vsel %vm723, %v675, 0
      %v863 = vsel %vm723, %v676, 0
      %v866 = vsel %vm723, %v677, 0
      %v869 = vsel %vm723, %v678, 0
      %v872 = vsel %vm723, %v679, 0
      %v875 = vsel %vm723, %v680, 0
      %v878 = vsel %vm723, %v681, 0
      %v881 = vsel %vm723, %v682, 0
      %v884 = vsel %vm723, %v683, 0
      %v887 = vsel %vm723, %v684, 0
      %v890 = vsel %vm723, %v685, 0
      %v893 = vsel %vm723, %v686, 0
      %v896 = vsel %vm723, %v687, 0
      %v899 = vsel %vm723, %v688, 0
      %v902 = vsel %vm723, %v689, 0
      %v905 = vsel %vm723, %v690, 0
      %v908 = vsel %vm723, %v691, 0
      %v911 = vsel %vm723, %v692, 0
      %v914 = vsel %vm723, %v693, 0
      %vm916 = vcmask 1044480
      %vm917 = vcmask 1045504
      %v918 = vsel %vm916, 4294967295, 65535
      %v919 = vsel %vm917, %v918, 0
      %v921 = vand.u32 %v718, %v919
      %923 = vmatprep.subr.bf16.mxu0 0
      %924 = vmatpush1.bf16.msra.mxu0 0
      %925 = vmatprep.subr.bf16.mxu0 0
      %926 = vmatpush1.bf16.msra.mxu0 0
      %927 = vmatprep.subr.bf16.mxu0 0
      %928 = vmatpush1.bf16.msra.mxu0 0
      %929 = vmatprep.subr.bf16.mxu0 0
      %930 = vmatpush1.bf16.msra.mxu0 %v921
      %931 = vmatprep.subr.bf16.mxu0 0
      %932 = vmatpush1.bf16.msra.mxu0 %v717
      %933 = vmatprep.subr.bf16.mxu0 0
      %934 = vmatpush1.bf16.msra.mxu0 %v716
      %935 = vmatprep.subr.bf16.mxu0 0
      %936 = vmatpush1.bf16.msra.mxu0 %v715
      %937 = vmatprep.subr.bf16.mxu0 0
      %938 = vmatpush1.bf16.msra.mxu0 %v714
      %939 = vmatprep.subr.bf16.mxu0 0
      %940 = vmatpush2.bf16.msra.mxu0 0
      %941 = vmatprep.subr.bf16.mxu0 0
      %942 = vmatpush2.bf16.msra.mxu0 0
      %943 = vmatprep.subr.bf16.mxu0 0
      %944 = vmatpush2.bf16.msra.mxu0 0
      %945 = vmatprep.subr.bf16.mxu0 0
      %946 = vmatpush2.bf16.msra.mxu0 0
      %947 = vmatprep.subr.bf16.mxu0 0
      %948 = vmatpush2.bf16.msra.mxu0 0
      %949 = vmatprep.subr.bf16.mxu0 0
      %950 = vmatpush2.bf16.msra.mxu0 0
      %951 = vmatprep.subr.bf16.mxu0 0
      %952 = vmatpush2.bf16.msra.mxu0 0
      %953 = vmatprep.subr.bf16.mxu0 0
      %954 = vmatpush2.bf16.msra.mxu0 0
      %955 = vmatprep.mubr.bf16.mxu0 0
      %956 = vmatmul.mubr.bf16.gmra.mxu0 %v725
      %v957 = vpop.f32.mrf.mxu0
      %v958 = vadd.f32 %v372, %v957
      %v959 = vpop.f32.mrf.mxu0
      %v960 = vpop.f32.mrf.mxu0
      %v961 = vadd.f32 %v372, %v960
      %v962 = vpop.f32.mrf.mxu0
      %963 = vmatprep.mubr.bf16.mxu0 0
      %964 = vmatmul.mubr.bf16.gmra.mxu0 %v728
      %v965 = vpop.f32.mrf.mxu0
      %v966 = vadd.f32 %v372, %v965
      %v967 = vpop.f32.mrf.mxu0
      %v968 = vpop.f32.mrf.mxu0
      %v969 = vadd.f32 %v372, %v968
      %v970 = vpop.f32.mrf.mxu0
      %971 = vmatprep.mubr.bf16.mxu0 0
      %972 = vmatmul.mubr.bf16.gmra.mxu0 %v731
      %v973 = vpop.f32.mrf.mxu0
      %v974 = vadd.f32 %v372, %v973
      %v975 = vpop.f32.mrf.mxu0
      %v976 = vpop.f32.mrf.mxu0
      %v977 = vadd.f32 %v372, %v976
      %v978 = vpop.f32.mrf.mxu0
      %979 = vmatprep.mubr.bf16.mxu0 0
      %980 = vmatmul.mubr.bf16.gmra.mxu0 %v734
      %v981 = vpop.f32.mrf.mxu0
      %v982 = vadd.f32 %v372, %v981
      %v983 = vpop.f32.mrf.mxu0
      %v984 = vpop.f32.mrf.mxu0
      %v985 = vadd.f32 %v372, %v984
      %v986 = vpop.f32.mrf.mxu0
      %987 = vmatprep.mubr.bf16.mxu0 0
      %988 = vmatmul.mubr.bf16.gmra.mxu0 %v737
      %v989 = vpop.f32.mrf.mxu0
      %v990 = vadd.f32 %v372, %v989
      %v991 = vpop.f32.mrf.mxu0
      %v992 = vpop.f32.mrf.mxu0
      %v993 = vadd.f32 %v372, %v992
      %v994 = vpop.f32.mrf.mxu0
      %995 = vmatprep.mubr.bf16.mxu0 0
      %996 = vmatmul.mubr.bf16.gmra.mxu0 %v740
      %v997 = vpop.f32.mrf.mxu0
      %v998 = vadd.f32 %v372, %v997
      %v999 = vpop.f32.mrf.mxu0
      %v1000 = vpop.f32.mrf.mxu0
      %v1001 = vadd.f32 %v372, %v1000
      %v1002 = vpop.f32.mrf.mxu0
      %1003 = vmatprep.mubr.bf16.mxu0 0
      %1004 = vmatmul.mubr.bf16.gmra.mxu0 %v743
      %v1005 = vpop.f32.mrf.mxu0
      %v1006 = vadd.f32 %v372, %v1005
      %v1007 = vpop.f32.mrf.mxu0
      %v1008 = vpop.f32.mrf.mxu0
      %v1009 = vadd.f32 %v372, %v1008
      %v1010 = vpop.f32.mrf.mxu0
      %1011 = vmatprep.mubr.bf16.mxu0 0
      %1012 = vmatmul.mubr.bf16.gmra.mxu0 %v746
      %v1013 = vpop.f32.mrf.mxu0
      %v1014 = vadd.f32 %v372, %v1013
      %v1015 = vpop.f32.mrf.mxu0
      %v1016 = vpop.f32.mrf.mxu0
      %v1017 = vadd.f32 %v372, %v1016
      %v1018 = vpop.f32.mrf.mxu0
      %1019 = vmatprep.mubr.bf16.mxu0 0
      %1020 = vmatmul.mubr.bf16.gmra.mxu0 %v749
      %v1021 = vpop.f32.mrf.mxu0
      %v1022 = vadd.f32 %v372, %v1021
      %v1023 = vpop.f32.mrf.mxu0
      %v1024 = vpop.f32.mrf.mxu0
      %v1025 = vadd.f32 %v372, %v1024
      %v1026 = vpop.f32.mrf.mxu0
      %1027 = vmatprep.mubr.bf16.mxu0 0
      %1028 = vmatmul.mubr.bf16.gmra.mxu0 %v752
      %v1029 = vpop.f32.mrf.mxu0
      %v1030 = vadd.f32 %v372, %v1029
      %v1031 = vpop.f32.mrf.mxu0
      %v1032 = vpop.f32.mrf.mxu0
      %v1033 = vadd.f32 %v372, %v1032
      %v1034 = vpop.f32.mrf.mxu0
      %1035 = vmatprep.mubr.bf16.mxu0 0
      %1036 = vmatmul.mubr.bf16.gmra.mxu0 %v755
      %v1037 = vpop.f32.mrf.mxu0
      %v1038 = vadd.f32 %v372, %v1037
      %v1039 = vpop.f32.mrf.mxu0
      %v1040 = vpop.f32.mrf.mxu0
      %v1041 = vadd.f32 %v372, %v1040
      %v1042 = vpop.f32.mrf.mxu0
      %1043 = vmatprep.mubr.bf16.mxu0 0
      %1044 = vmatmul.mubr.bf16.gmra.mxu0 %v758
      %v1045 = vpop.f32.mrf.mxu0
      %v1046 = vadd.f32 %v372, %v1045
      %v1047 = vpop.f32.mrf.mxu0
      %v1048 = vpop.f32.mrf.mxu0
      %v1049 = vadd.f32 %v372, %v1048
      %v1050 = vpop.f32.mrf.mxu0
      %1051 = vmatprep.mubr.bf16.mxu0 0
      %1052 = vmatmul.mubr.bf16.gmra.mxu0 %v761
      %v1053 = vpop.f32.mrf.mxu0
      %v1054 = vadd.f32 %v372, %v1053
      %v1055 = vpop.f32.mrf.mxu0
      %v1056 = vpop.f32.mrf.mxu0
      %v1057 = vadd.f32 %v372, %v1056
      %v1058 = vpop.f32.mrf.mxu0
      %1059 = vmatprep.mubr.bf16.mxu0 0
      %1060 = vmatmul.mubr.bf16.gmra.mxu0 %v764
      %v1061 = vpop.f32.mrf.mxu0
      %v1062 = vadd.f32 %v372, %v1061
      %v1063 = vpop.f32.mrf.mxu0
      %v1064 = vpop.f32.mrf.mxu0
      %v1065 = vadd.f32 %v372, %v1064
      %v1066 = vpop.f32.mrf.mxu0
      %1067 = vmatprep.mubr.bf16.mxu0 0
      %1068 = vmatmul.mubr.bf16.gmra.mxu0 %v767
      %v1069 = vpop.f32.mrf.mxu0
      %v1070 = vadd.f32 %v372, %v1069
      %v1071 = vpop.f32.mrf.mxu0
      %v1072 = vpop.f32.mrf.mxu0
      %v1073 = vadd.f32 %v372, %v1072
      %v1074 = vpop.f32.mrf.mxu0
      %1075 = vmatprep.mubr.bf16.mxu0 0
      %1076 = vmatmul.mubr.bf16.gmra.mxu0 %v770
      %v1077 = vpop.f32.mrf.mxu0
      %v1078 = vadd.f32 %v372, %v1077
      %v1079 = vpop.f32.mrf.mxu0
      %v1080 = vpop.f32.mrf.mxu0
      %v1081 = vadd.f32 %v372, %v1080
      %v1082 = vpop.f32.mrf.mxu0
      %1083 = vmatprep.mubr.bf16.mxu0 0
      %1084 = vmatmul.mubr.bf16.gmra.mxu0 %v773
      %v1085 = vpop.f32.mrf.mxu0
      %v1086 = vadd.f32 %v372, %v1085
      %v1087 = vpop.f32.mrf.mxu0
      %v1088 = vpop.f32.mrf.mxu0
      %v1089 = vadd.f32 %v372, %v1088
      %v1090 = vpop.f32.mrf.mxu0
      %1091 = vmatprep.mubr.bf16.mxu0 0
      %1092 = vmatmul.mubr.bf16.gmra.mxu0 %v776
      %v1093 = vpop.f32.mrf.mxu0
      %v1094 = vadd.f32 %v372, %v1093
      %v1095 = vpop.f32.mrf.mxu0
      %v1096 = vpop.f32.mrf.mxu0
      %v1097 = vadd.f32 %v372, %v1096
      %v1098 = vpop.f32.mrf.mxu0
      %1099 = vmatprep.mubr.bf16.mxu0 0
      %1100 = vmatmul.mubr.bf16.gmra.mxu0 %v779
      %v1101 = vpop.f32.mrf.mxu0
      %v1102 = vadd.f32 %v372, %v1101
      %v1103 = vpop.f32.mrf.mxu0
      %v1104 = vpop.f32.mrf.mxu0
      %v1105 = vadd.f32 %v372, %v1104
      %v1106 = vpop.f32.mrf.mxu0
      %1107 = vmatprep.mubr.bf16.mxu0 0
      %1108 = vmatmul.mubr.bf16.gmra.mxu0 %v782
      %v1109 = vpop.f32.mrf.mxu0
      %v1110 = vadd.f32 %v372, %v1109
      %v1111 = vpop.f32.mrf.mxu0
      %v1112 = vpop.f32.mrf.mxu0
      %v1113 = vadd.f32 %v372, %v1112
      %v1114 = vpop.f32.mrf.mxu0
      %1115 = vmatprep.mubr.bf16.mxu0 0
      %1116 = vmatmul.mubr.bf16.gmra.mxu0 %v785
      %v1117 = vpop.f32.mrf.mxu0
      %v1118 = vadd.f32 %v372, %v1117
      %v1119 = vpop.f32.mrf.mxu0
      %v1120 = vpop.f32.mrf.mxu0
      %v1121 = vadd.f32 %v372, %v1120
      %v1122 = vpop.f32.mrf.mxu0
      %1123 = vmatprep.mubr.bf16.mxu0 0
      %1124 = vmatmul.mubr.bf16.gmra.mxu0 %v788
      %v1125 = vpop.f32.mrf.mxu0
      %v1126 = vadd.f32 %v372, %v1125
      %v1127 = vpop.f32.mrf.mxu0
      %v1128 = vpop.f32.mrf.mxu0
      %v1129 = vadd.f32 %v372, %v1128
      %v1130 = vpop.f32.mrf.mxu0
      %1131 = vmatprep.mubr.bf16.mxu0 0
      %1132 = vmatmul.mubr.bf16.gmra.mxu0 %v791
      %v1133 = vpop.f32.mrf.mxu0
      %v1134 = vadd.f32 %v372, %v1133
      %v1135 = vpop.f32.mrf.mxu0
      %v1136 = vpop.f32.mrf.mxu0
      %v1137 = vadd.f32 %v372, %v1136
      %v1138 = vpop.f32.mrf.mxu0
      %1139 = vmatprep.mubr.bf16.mxu0 0
      %1140 = vmatmul.mubr.bf16.gmra.mxu0 %v794
      %v1141 = vpop.f32.mrf.mxu0
      %v1142 = vadd.f32 %v372, %v1141
      %v1143 = vpop.f32.mrf.mxu0
      %v1144 = vpop.f32.mrf.mxu0
      %v1145 = vadd.f32 %v372, %v1144
      %v1146 = vpop.f32.mrf.mxu0
      %1147 = vmatprep.mubr.bf16.mxu0 0
      %1148 = vmatmul.mubr.bf16.gmra.mxu0 %v797
      %v1149 = vpop.f32.mrf.mxu0
      %v1150 = vadd.f32 %v372, %v1149
      %v1151 = vpop.f32.mrf.mxu0
      %v1152 = vpop.f32.mrf.mxu0
      %v1153 = vadd.f32 %v372, %v1152
      %v1154 = vpop.f32.mrf.mxu0
      %1155 = vmatprep.mubr.bf16.mxu0 0
      %1156 = vmatmul.mubr.bf16.gmra.mxu0 %v800
      %v1157 = vpop.f32.mrf.mxu0
      %v1158 = vadd.f32 %v372, %v1157
      %v1159 = vpop.f32.mrf.mxu0
      %v1160 = vpop.f32.mrf.mxu0
      %v1161 = vadd.f32 %v372, %v1160
      %v1162 = vpop.f32.mrf.mxu0
      %1163 = vmatprep.mubr.bf16.mxu0 0
      %1164 = vmatmul.mubr.bf16.gmra.mxu0 %v803
      %v1165 = vpop.f32.mrf.mxu0
      %v1166 = vadd.f32 %v372, %v1165
      %v1167 = vpop.f32.mrf.mxu0
      %v1168 = vpop.f32.mrf.mxu0
      %v1169 = vadd.f32 %v372, %v1168
      %v1170 = vpop.f32.mrf.mxu0
      %1171 = vmatprep.mubr.bf16.mxu0 0
      %1172 = vmatmul.mubr.bf16.gmra.mxu0 %v806
      %v1173 = vpop.f32.mrf.mxu0
      %v1174 = vadd.f32 %v372, %v1173
      %v1175 = vpop.f32.mrf.mxu0
      %v1176 = vpop.f32.mrf.mxu0
      %v1177 = vadd.f32 %v372, %v1176
      %v1178 = vpop.f32.mrf.mxu0
      %1179 = vmatprep.mubr.bf16.mxu0 0
      %1180 = vmatmul.mubr.bf16.gmra.mxu0 %v809
      %v1181 = vpop.f32.mrf.mxu0
      %v1182 = vadd.f32 %v372, %v1181
      %v1183 = vpop.f32.mrf.mxu0
      %v1184 = vpop.f32.mrf.mxu0
      %v1185 = vadd.f32 %v372, %v1184
      %v1186 = vpop.f32.mrf.mxu0
      %1187 = vmatprep.mubr.bf16.mxu0 0
      %1188 = vmatmul.mubr.bf16.gmra.mxu0 %v812
      %v1189 = vpop.f32.mrf.mxu0
      %v1190 = vadd.f32 %v372, %v1189
      %v1191 = vpop.f32.mrf.mxu0
      %v1192 = vpop.f32.mrf.mxu0
      %v1193 = vadd.f32 %v372, %v1192
      %v1194 = vpop.f32.mrf.mxu0
      %1195 = vmatprep.mubr.bf16.mxu0 0
      %1196 = vmatmul.mubr.bf16.gmra.mxu0 %v815
      %v1197 = vpop.f32.mrf.mxu0
      %v1198 = vadd.f32 %v372, %v1197
      %v1199 = vpop.f32.mrf.mxu0
      %v1200 = vpop.f32.mrf.mxu0
      %v1201 = vadd.f32 %v372, %v1200
      %v1202 = vpop.f32.mrf.mxu0
      %1203 = vmatprep.mubr.bf16.mxu0 0
      %1204 = vmatmul.mubr.bf16.gmra.mxu0 %v818
      %v1205 = vpop.f32.mrf.mxu0
      %v1206 = vadd.f32 %v372, %v1205
      %v1207 = vpop.f32.mrf.mxu0
      %v1208 = vpop.f32.mrf.mxu0
      %v1209 = vadd.f32 %v372, %v1208
      %v1210 = vpop.f32.mrf.mxu0
      %1211 = vmatprep.mubr.bf16.mxu0 0
      %1212 = vmatmul.mubr.bf16.gmra.mxu0 %v821
      %v1213 = vpop.f32.mrf.mxu0
      %v1214 = vadd.f32 %v372, %v1213
      %v1215 = vpop.f32.mrf.mxu0
      %v1216 = vpop.f32.mrf.mxu0
      %v1217 = vadd.f32 %v372, %v1216
      %v1218 = vpop.f32.mrf.mxu0
      %1219 = vmatprep.mubr.bf16.mxu0 0
      %1220 = vmatmul.mubr.bf16.gmra.mxu0 %v824
      %v1221 = vpop.f32.mrf.mxu0
      %v1222 = vadd.f32 %v372, %v1221
      %v1223 = vpop.f32.mrf.mxu0
      %v1224 = vpop.f32.mrf.mxu0
      %v1225 = vadd.f32 %v372, %v1224
      %v1226 = vpop.f32.mrf.mxu0
      %1227 = vmatprep.mubr.bf16.mxu0 0
      %1228 = vmatmul.mubr.bf16.gmra.mxu0 %v827
      %v1229 = vpop.f32.mrf.mxu0
      %v1230 = vadd.f32 %v372, %v1229
      %v1231 = vpop.f32.mrf.mxu0
      %v1232 = vpop.f32.mrf.mxu0
      %v1233 = vadd.f32 %v372, %v1232
      %v1234 = vpop.f32.mrf.mxu0
      %1235 = vmatprep.mubr.bf16.mxu0 0
      %1236 = vmatmul.mubr.bf16.gmra.mxu0 %v830
      %v1237 = vpop.f32.mrf.mxu0
      %v1238 = vadd.f32 %v372, %v1237
      %v1239 = vpop.f32.mrf.mxu0
      %v1240 = vpop.f32.mrf.mxu0
      %v1241 = vadd.f32 %v372, %v1240
      %v1242 = vpop.f32.mrf.mxu0
      %1243 = vmatprep.mubr.bf16.mxu0 0
      %1244 = vmatmul.mubr.bf16.gmra.mxu0 %v833
      %v1245 = vpop.f32.mrf.mxu0
      %v1246 = vadd.f32 %v372, %v1245
      %v1247 = vpop.f32.mrf.mxu0
      %v1248 = vpop.f32.mrf.mxu0
      %v1249 = vadd.f32 %v372, %v1248
      %v1250 = vpop.f32.mrf.mxu0
      %1251 = vmatprep.mubr.bf16.mxu0 0
      %1252 = vmatmul.mubr.bf16.gmra.mxu0 %v836
      %v1253 = vpop.f32.mrf.mxu0
      %v1254 = vadd.f32 %v372, %v1253
      %v1255 = vpop.f32.mrf.mxu0
      %v1256 = vpop.f32.mrf.mxu0
      %v1257 = vadd.f32 %v372, %v1256
      %v1258 = vpop.f32.mrf.mxu0
      %1259 = vmatprep.mubr.bf16.mxu0 0
      %1260 = vmatmul.mubr.bf16.gmra.mxu0 %v839
      %v1261 = vpop.f32.mrf.mxu0
      %v1262 = vadd.f32 %v372, %v1261
      %v1263 = vpop.f32.mrf.mxu0
      %v1264 = vpop.f32.mrf.mxu0
      %v1265 = vadd.f32 %v372, %v1264
      %v1266 = vpop.f32.mrf.mxu0
      %1267 = vmatprep.mubr.bf16.mxu0 0
      %1268 = vmatmul.mubr.bf16.gmra.mxu0 %v842
      %v1269 = vpop.f32.mrf.mxu0
      %v1270 = vadd.f32 %v372, %v1269
      %v1271 = vpop.f32.mrf.mxu0
      %v1272 = vpop.f32.mrf.mxu0
      %v1273 = vadd.f32 %v372, %v1272
      %v1274 = vpop.f32.mrf.mxu0
      %1275 = vmatprep.mubr.bf16.mxu0 0
      %1276 = vmatmul.mubr.bf16.gmra.mxu0 %v845
      %v1277 = vpop.f32.mrf.mxu0
      %v1278 = vadd.f32 %v372, %v1277
      %v1279 = vpop.f32.mrf.mxu0
      %v1280 = vpop.f32.mrf.mxu0
      %v1281 = vadd.f32 %v372, %v1280
      %v1282 = vpop.f32.mrf.mxu0
      %1283 = vmatprep.mubr.bf16.mxu0 0
      %1284 = vmatmul.mubr.bf16.gmra.mxu0 %v848
      %v1285 = vpop.f32.mrf.mxu0
      %v1286 = vadd.f32 %v372, %v1285
      %v1287 = vpop.f32.mrf.mxu0
      %v1288 = vpop.f32.mrf.mxu0
      %v1289 = vadd.f32 %v372, %v1288
      %v1290 = vpop.f32.mrf.mxu0
      %1291 = vmatprep.mubr.bf16.mxu0 0
      %1292 = vmatmul.mubr.bf16.gmra.mxu0 %v851
      %v1293 = vpop.f32.mrf.mxu0
      %v1294 = vadd.f32 %v372, %v1293
      %v1295 = vpop.f32.mrf.mxu0
      %v1296 = vpop.f32.mrf.mxu0
      %v1297 = vadd.f32 %v372, %v1296
      %v1298 = vpop.f32.mrf.mxu0
      %1299 = vmatprep.mubr.bf16.mxu0 0
      %1300 = vmatmul.mubr.bf16.gmra.mxu0 %v854
      %v1301 = vpop.f32.mrf.mxu0
      %v1302 = vadd.f32 %v372, %v1301
      %v1303 = vpop.f32.mrf.mxu0
      %v1304 = vpop.f32.mrf.mxu0
      %v1305 = vadd.f32 %v372, %v1304
      %v1306 = vpop.f32.mrf.mxu0
      %1307 = vmatprep.mubr.bf16.mxu0 0
      %1308 = vmatmul.mubr.bf16.gmra.mxu0 %v857
      %v1309 = vpop.f32.mrf.mxu0
      %v1310 = vadd.f32 %v372, %v1309
      %v1311 = vpop.f32.mrf.mxu0
      %v1312 = vpop.f32.mrf.mxu0
      %v1313 = vadd.f32 %v372, %v1312
      %v1314 = vpop.f32.mrf.mxu0
      %1315 = vmatprep.mubr.bf16.mxu0 0
      %1316 = vmatmul.mubr.bf16.gmra.mxu0 %v860
      %v1317 = vpop.f32.mrf.mxu0
      %v1318 = vadd.f32 %v372, %v1317
      %v1319 = vpop.f32.mrf.mxu0
      %v1320 = vpop.f32.mrf.mxu0
      %v1321 = vadd.f32 %v372, %v1320
      %v1322 = vpop.f32.mrf.mxu0
      %1323 = vmatprep.mubr.bf16.mxu0 0
      %1324 = vmatmul.mubr.bf16.gmra.mxu0 %v863
      %v1325 = vpop.f32.mrf.mxu0
      %v1326 = vadd.f32 %v372, %v1325
      %v1327 = vpop.f32.mrf.mxu0
      %v1328 = vpop.f32.mrf.mxu0
      %v1329 = vadd.f32 %v372, %v1328
      %v1330 = vpop.f32.mrf.mxu0
      %1331 = vmatprep.mubr.bf16.mxu0 0
      %1332 = vmatmul.mubr.bf16.gmra.mxu0 %v866
      %v1333 = vpop.f32.mrf.mxu0
      %v1334 = vadd.f32 %v372, %v1333
      %v1335 = vpop.f32.mrf.mxu0
      %v1336 = vpop.f32.mrf.mxu0
      %v1337 = vadd.f32 %v372, %v1336
      %v1338 = vpop.f32.mrf.mxu0
      %1339 = vmatprep.mubr.bf16.mxu0 0
      %1340 = vmatmul.mubr.bf16.gmra.mxu0 %v869
      %v1341 = vpop.f32.mrf.mxu0
      %v1342 = vadd.f32 %v372, %v1341
      %v1343 = vpop.f32.mrf.mxu0
      %v1344 = vpop.f32.mrf.mxu0
      %v1345 = vadd.f32 %v372, %v1344
      %v1346 = vpop.f32.mrf.mxu0
      %1347 = vmatprep.mubr.bf16.mxu0 0
      %1348 = vmatmul.mubr.bf16.gmra.mxu0 %v872
      %v1349 = vpop.f32.mrf.mxu0
      %v1350 = vadd.f32 %v372, %v1349
      %v1351 = vpop.f32.mrf.mxu0
      %v1352 = vpop.f32.mrf.mxu0
      %v1353 = vadd.f32 %v372, %v1352
      %v1354 = vpop.f32.mrf.mxu0
      %1355 = vmatprep.mubr.bf16.mxu0 0
      %1356 = vmatmul.mubr.bf16.gmra.mxu0 %v875
      %v1357 = vpop.f32.mrf.mxu0
      %v1358 = vadd.f32 %v372, %v1357
      %v1359 = vpop.f32.mrf.mxu0
      %v1360 = vpop.f32.mrf.mxu0
      %v1361 = vadd.f32 %v372, %v1360
      %v1362 = vpop.f32.mrf.mxu0
      %1363 = vmatprep.mubr.bf16.mxu0 0
      %1364 = vmatmul.mubr.bf16.gmra.mxu0 %v878
      %v1365 = vpop.f32.mrf.mxu0
      %v1366 = vadd.f32 %v372, %v1365
      %v1367 = vpop.f32.mrf.mxu0
      %v1368 = vpop.f32.mrf.mxu0
      %v1369 = vadd.f32 %v372, %v1368
      %v1370 = vpop.f32.mrf.mxu0
      %1371 = vmatprep.mubr.bf16.mxu0 0
      %1372 = vmatmul.mubr.bf16.gmra.mxu0 %v881
      %v1373 = vpop.f32.mrf.mxu0
      %v1374 = vadd.f32 %v372, %v1373
      %v1375 = vpop.f32.mrf.mxu0
      %v1376 = vpop.f32.mrf.mxu0
      %v1377 = vadd.f32 %v372, %v1376
      %v1378 = vpop.f32.mrf.mxu0
      %1379 = vmatprep.mubr.bf16.mxu0 0
      %1380 = vmatmul.mubr.bf16.gmra.mxu0 %v884
      %v1381 = vpop.f32.mrf.mxu0
      %v1382 = vadd.f32 %v372, %v1381
      %v1383 = vpop.f32.mrf.mxu0
      %v1384 = vpop.f32.mrf.mxu0
      %v1385 = vadd.f32 %v372, %v1384
      %v1386 = vpop.f32.mrf.mxu0
      %1387 = vmatprep.mubr.bf16.mxu0 0
      %1388 = vmatmul.mubr.bf16.gmra.mxu0 %v887
      %v1389 = vpop.f32.mrf.mxu0
      %v1390 = vadd.f32 %v372, %v1389
      %v1391 = vpop.f32.mrf.mxu0
      %v1392 = vpop.f32.mrf.mxu0
      %v1393 = vadd.f32 %v372, %v1392
      %v1394 = vpop.f32.mrf.mxu0
      %1395 = vmatprep.mubr.bf16.mxu0 0
      %1396 = vmatmul.mubr.bf16.gmra.mxu0 %v890
      %v1397 = vpop.f32.mrf.mxu0
      %v1398 = vadd.f32 %v372, %v1397
      %v1399 = vpop.f32.mrf.mxu0
      %v1400 = vpop.f32.mrf.mxu0
      %v1401 = vadd.f32 %v372, %v1400
      %v1402 = vpop.f32.mrf.mxu0
      %1403 = vmatprep.mubr.bf16.mxu0 0
      %1404 = vmatmul.mubr.bf16.gmra.mxu0 %v893
      %v1405 = vpop.f32.mrf.mxu0
      %v1406 = vadd.f32 %v372, %v1405
      %v1407 = vpop.f32.mrf.mxu0
      %v1408 = vpop.f32.mrf.mxu0
      %v1409 = vadd.f32 %v372, %v1408
      %v1410 = vpop.f32.mrf.mxu0
      %1411 = vmatprep.mubr.bf16.mxu0 0
      %1412 = vmatmul.mubr.bf16.gmra.mxu0 %v896
      %v1413 = vpop.f32.mrf.mxu0
      %v1414 = vadd.f32 %v372, %v1413
      %v1415 = vpop.f32.mrf.mxu0
      %v1416 = vpop.f32.mrf.mxu0
      %v1417 = vadd.f32 %v372, %v1416
      %v1418 = vpop.f32.mrf.mxu0
      %1419 = vmatprep.mubr.bf16.mxu0 0
      %1420 = vmatmul.mubr.bf16.gmra.mxu0 %v899
      %v1421 = vpop.f32.mrf.mxu0
      %v1422 = vadd.f32 %v372, %v1421
      %v1423 = vpop.f32.mrf.mxu0
      %v1424 = vpop.f32.mrf.mxu0
      %v1425 = vadd.f32 %v372, %v1424
      %v1426 = vpop.f32.mrf.mxu0
      %1427 = vmatprep.mubr.bf16.mxu0 0
      %1428 = vmatmul.mubr.bf16.gmra.mxu0 %v902
      %v1429 = vpop.f32.mrf.mxu0
      %v1430 = vadd.f32 %v372, %v1429
      %v1431 = vpop.f32.mrf.mxu0
      %v1432 = vpop.f32.mrf.mxu0
      %v1433 = vadd.f32 %v372, %v1432
      %v1434 = vpop.f32.mrf.mxu0
      %1435 = vmatprep.mubr.bf16.mxu0 0
      %1436 = vmatmul.mubr.bf16.gmra.mxu0 %v905
      %v1437 = vpop.f32.mrf.mxu0
      %v1438 = vadd.f32 %v372, %v1437
      %v1439 = vpop.f32.mrf.mxu0
      %v1440 = vpop.f32.mrf.mxu0
      %v1441 = vadd.f32 %v372, %v1440
      %v1442 = vpop.f32.mrf.mxu0
      %1443 = vmatprep.mubr.bf16.mxu0 0
      %1444 = vmatmul.mubr.bf16.gmra.mxu0 %v908
      %v1445 = vpop.f32.mrf.mxu0
      %v1446 = vadd.f32 %v372, %v1445
      %v1447 = vpop.f32.mrf.mxu0
      %v1448 = vpop.f32.mrf.mxu0
      %v1449 = vadd.f32 %v372, %v1448
      %v1450 = vpop.f32.mrf.mxu0
      %1451 = vmatprep.mubr.bf16.mxu0 0
      %1452 = vmatmul.mubr.bf16.gmra.mxu0 %v911
      %v1453 = vpop.f32.mrf.mxu0
      %v1454 = vadd.f32 %v372, %v1453
      %v1455 = vpop.f32.mrf.mxu0
      %v1456 = vpop.f32.mrf.mxu0
      %v1457 = vadd.f32 %v372, %v1456
      %v1458 = vpop.f32.mrf.mxu0
      %1459 = vmatprep.mubr.bf16.mxu0 0
      %1460 = vmatmul.mubr.bf16.gmra.mxu0 %v914
      %v1461 = vpop.f32.mrf.mxu0
      %v1462 = vadd.f32 %v372, %v1461
      %v1463 = vpop.f32.mrf.mxu0
      %v1464 = vpop.f32.mrf.mxu0
      %v1465 = vadd.f32 %v372, %v1464
      %v1466 = vpop.f32.mrf.mxu0
      %1467 = vdwg.mxu0
      %v1468 = vmax.f32 %v958, 0.0
      %v1469 = vmax.f32 %v961, 0.0
      %v1470 = vmax.f32 %v966, 0.0
      %v1471 = vmax.f32 %v969, 0.0
      %v1472 = vmax.f32 %v974, 0.0
      %v1473 = vmax.f32 %v977, 0.0
      %v1474 = vmax.f32 %v982, 0.0
      %v1475 = vmax.f32 %v985, 0.0
      %v1476 = vmax.f32 %v990, 0.0
      %v1477 = vmax.f32 %v993, 0.0
      %v1478 = vmax.f32 %v998, 0.0
      %v1479 = vmax.f32 %v1001, 0.0
      %v1480 = vmax.f32 %v1006, 0.0
      %v1481 = vmax.f32 %v1009, 0.0
      %v1482 = vmax.f32 %v1014, 0.0
      %v1483 = vmax.f32 %v1017, 0.0
      %v1484 = vmax.f32 %v1022, 0.0
      %v1485 = vmax.f32 %v1025, 0.0
      %v1486 = vmax.f32 %v1030, 0.0
      %v1487 = vmax.f32 %v1033, 0.0
      %v1488 = vmax.f32 %v1038, 0.0
      %v1489 = vmax.f32 %v1041, 0.0
      %v1490 = vmax.f32 %v1046, 0.0
      %v1491 = vmax.f32 %v1049, 0.0
      %v1492 = vmax.f32 %v1054, 0.0
      %v1493 = vmax.f32 %v1057, 0.0
      %v1494 = vmax.f32 %v1062, 0.0
      %v1495 = vmax.f32 %v1065, 0.0
      %v1496 = vmax.f32 %v1070, 0.0
      %v1497 = vmax.f32 %v1073, 0.0
      %v1498 = vmax.f32 %v1078, 0.0
      %v1499 = vmax.f32 %v1081, 0.0
      %v1500 = vmax.f32 %v1086, 0.0
      %v1501 = vmax.f32 %v1089, 0.0
      %v1502 = vmax.f32 %v1094, 0.0
      %v1503 = vmax.f32 %v1097, 0.0
      %v1504 = vmax.f32 %v1102, 0.0
      %v1505 = vmax.f32 %v1105, 0.0
      %v1506 = vmax.f32 %v1110, 0.0
      %v1507 = vmax.f32 %v1113, 0.0
      %v1508 = vmax.f32 %v1118, 0.0
      %v1509 = vmax.f32 %v1121, 0.0
      %v1510 = vmax.f32 %v1126, 0.0
      %v1511 = vmax.f32 %v1129, 0.0
      %v1512 = vmax.f32 %v1134, 0.0
      %v1513 = vmax.f32 %v1137, 0.0
      %v1514 = vmax.f32 %v1142, 0.0
      %v1515 = vmax.f32 %v1145, 0.0
      %v1516 = vmax.f32 %v1150, 0.0
      %v1517 = vmax.f32 %v1153, 0.0
      %v1518 = vmax.f32 %v1158, 0.0
      %v1519 = vmax.f32 %v1161, 0.0
      %v1520 = vmax.f32 %v1166, 0.0
      %v1521 = vmax.f32 %v1169, 0.0
      %v1522 = vmax.f32 %v1174, 0.0
      %v1523 = vmax.f32 %v1177, 0.0
      %v1524 = vmax.f32 %v1182, 0.0
      %v1525 = vmax.f32 %v1185, 0.0
      %v1526 = vmax.f32 %v1190, 0.0
      %v1527 = vmax.f32 %v1193, 0.0
      %v1528 = vmax.f32 %v1198, 0.0
      %v1529 = vmax.f32 %v1201, 0.0
      %v1530 = vmax.f32 %v1206, 0.0
      %v1531 = vmax.f32 %v1209, 0.0
      %v1532 = vmax.f32 %v1214, 0.0
      %v1533 = vmax.f32 %v1217, 0.0
      %v1534 = vmax.f32 %v1222, 0.0
      %v1535 = vmax.f32 %v1225, 0.0
      %v1536 = vmax.f32 %v1230, 0.0
      %v1537 = vmax.f32 %v1233, 0.0
      %v1538 = vmax.f32 %v1238, 0.0
      %v1539 = vmax.f32 %v1241, 0.0
      %v1540 = vmax.f32 %v1246, 0.0
      %v1541 = vmax.f32 %v1249, 0.0
      %v1542 = vmax.f32 %v1254, 0.0
      %v1543 = vmax.f32 %v1257, 0.0
      %v1544 = vmax.f32 %v1262, 0.0
      %v1545 = vmax.f32 %v1265, 0.0
      %v1546 = vmax.f32 %v1270, 0.0
      %v1547 = vmax.f32 %v1273, 0.0
      %v1548 = vmax.f32 %v1278, 0.0
      %v1549 = vmax.f32 %v1281, 0.0
      %v1550 = vmax.f32 %v1286, 0.0
      %v1551 = vmax.f32 %v1289, 0.0
      %v1552 = vmax.f32 %v1294, 0.0
      %v1553 = vmax.f32 %v1297, 0.0
      %v1554 = vmax.f32 %v1302, 0.0
      %v1555 = vmax.f32 %v1305, 0.0
      %v1556 = vmax.f32 %v1310, 0.0
      %v1557 = vmax.f32 %v1313, 0.0
      %v1558 = vmax.f32 %v1318, 0.0
      %v1559 = vmax.f32 %v1321, 0.0
      %v1560 = vmax.f32 %v1326, 0.0
      %v1561 = vmax.f32 %v1329, 0.0
      %v1562 = vmax.f32 %v1334, 0.0
      %v1563 = vmax.f32 %v1337, 0.0
      %v1564 = vmax.f32 %v1342, 0.0
      %v1565 = vmax.f32 %v1345, 0.0
      %v1566 = vmax.f32 %v1350, 0.0
      %v1567 = vmax.f32 %v1353, 0.0
      %v1568 = vmax.f32 %v1358, 0.0
      %v1569 = vmax.f32 %v1361, 0.0
      %v1570 = vmax.f32 %v1366, 0.0
      %v1571 = vmax.f32 %v1369, 0.0
      %v1572 = vmax.f32 %v1374, 0.0
      %v1573 = vmax.f32 %v1377, 0.0
      %v1574 = vmax.f32 %v1382, 0.0
      %v1575 = vmax.f32 %v1385, 0.0
      %v1576 = vmax.f32 %v1390, 0.0
      %v1577 = vmax.f32 %v1393, 0.0
      %v1578 = vmax.f32 %v1398, 0.0
      %v1579 = vmax.f32 %v1401, 0.0
      %v1580 = vmax.f32 %v1406, 0.0
      %v1581 = vmax.f32 %v1409, 0.0
      %v1582 = vmax.f32 %v1414, 0.0
      %v1583 = vmax.f32 %v1417, 0.0
      %v1584 = vmax.f32 %v1422, 0.0
      %v1585 = vmax.f32 %v1425, 0.0
      %v1586 = vmax.f32 %v1430, 0.0
      %v1587 = vmax.f32 %v1433, 0.0
      %v1588 = vmax.f32 %v1438, 0.0
      %v1589 = vmax.f32 %v1441, 0.0
      %v1590 = vmax.f32 %v1446, 0.0
      %v1591 = vmax.f32 %v1449, 0.0
      %v1592 = vmax.f32 %v1454, 0.0
      %v1593 = vmax.f32 %v1457, 0.0
      %v1594 = vmax.f32 %v1462, 0.0
      %v1595 = vmax.f32 %v1465, 0.0
      %v1596 = vld [vmem:[%s3] sm:$0x1]
      %v1598 = vlaneseq
      %v1599 = vshrl.u32 %v1598, 7
      %v1600 = vsub.s32 0, %v1599
      %v1601 = vrot.slane %v1596, %v1600
      %v1603 = vmul.f32 %v1468, %v1601
      %v1604 = vmul.f32 %v1469, %v1601
      %v1605 = vmul.f32 %v1470, %v1601
      %v1606 = vmul.f32 %v1471, %v1601
      %v1607 = vmul.f32 %v1472, %v1601
      %v1608 = vmul.f32 %v1473, %v1601
      %v1609 = vmul.f32 %v1474, %v1601
      %v1610 = vmul.f32 %v1475, %v1601
      %v1611 = vmul.f32 %v1476, %v1601
      %v1612 = vmul.f32 %v1477, %v1601
      %v1613 = vmul.f32 %v1478, %v1601
      %v1614 = vmul.f32 %v1479, %v1601
      %v1615 = vmul.f32 %v1480, %v1601
      %v1616 = vmul.f32 %v1481, %v1601
      %v1617 = vmul.f32 %v1482, %v1601
      %v1618 = vmul.f32 %v1483, %v1601
      %v1619 = vmul.f32 %v1484, %v1601
      %v1620 = vmul.f32 %v1485, %v1601
      %v1621 = vmul.f32 %v1486, %v1601
      %v1622 = vmul.f32 %v1487, %v1601
      %v1623 = vmul.f32 %v1488, %v1601
      %v1624 = vmul.f32 %v1489, %v1601
      %v1625 = vmul.f32 %v1490, %v1601
      %v1626 = vmul.f32 %v1491, %v1601
      %v1627 = vmul.f32 %v1492, %v1601
      %v1628 = vmul.f32 %v1493, %v1601
      %v1629 = vmul.f32 %v1494, %v1601
      %v1630 = vmul.f32 %v1495, %v1601
      %v1631 = vmul.f32 %v1496, %v1601
      %v1632 = vmul.f32 %v1497, %v1601
      %v1633 = vmul.f32 %v1498, %v1601
      %v1634 = vmul.f32 %v1499, %v1601
      %v1635 = vmul.f32 %v1500, %v1601
      %v1636 = vmul.f32 %v1501, %v1601
      %v1637 = vmul.f32 %v1502, %v1601
      %v1638 = vmul.f32 %v1503, %v1601
      %v1639 = vmul.f32 %v1504, %v1601
      %v1640 = vmul.f32 %v1505, %v1601
      %v1641 = vmul.f32 %v1506, %v1601
      %v1642 = vmul.f32 %v1507, %v1601
      %v1643 = vmul.f32 %v1508, %v1601
      %v1644 = vmul.f32 %v1509, %v1601
      %v1645 = vmul.f32 %v1510, %v1601
      %v1646 = vmul.f32 %v1511, %v1601
      %v1647 = vmul.f32 %v1512, %v1601
      %v1648 = vmul.f32 %v1513, %v1601
      %v1649 = vmul.f32 %v1514, %v1601
      %v1650 = vmul.f32 %v1515, %v1601
      %v1651 = vmul.f32 %v1516, %v1601
      %v1652 = vmul.f32 %v1517, %v1601
      %v1653 = vmul.f32 %v1518, %v1601
      %v1654 = vmul.f32 %v1519, %v1601
      %v1655 = vmul.f32 %v1520, %v1601
      %v1656 = vmul.f32 %v1521, %v1601
      %v1657 = vmul.f32 %v1522, %v1601
      %v1658 = vmul.f32 %v1523, %v1601
      %v1659 = vmul.f32 %v1524, %v1601
      %v1660 = vmul.f32 %v1525, %v1601
      %v1661 = vmul.f32 %v1526, %v1601
      %v1662 = vmul.f32 %v1527, %v1601
      %v1663 = vmul.f32 %v1528, %v1601
      %v1664 = vmul.f32 %v1529, %v1601
      %v1665 = vmul.f32 %v1530, %v1601
      %v1666 = vmul.f32 %v1531, %v1601
      %v1667 = vmul.f32 %v1532, %v1601
      %v1668 = vmul.f32 %v1533, %v1601
      %v1669 = vmul.f32 %v1534, %v1601
      %v1670 = vmul.f32 %v1535, %v1601
      %v1671 = vmul.f32 %v1536, %v1601
      %v1672 = vmul.f32 %v1537, %v1601
      %v1673 = vmul.f32 %v1538, %v1601
      %v1674 = vmul.f32 %v1539, %v1601
      %v1675 = vmul.f32 %v1540, %v1601
      %v1676 = vmul.f32 %v1541, %v1601
      %v1677 = vmul.f32 %v1542, %v1601
      %v1678 = vmul.f32 %v1543, %v1601
      %v1679 = vmul.f32 %v1544, %v1601
      %v1680 = vmul.f32 %v1545, %v1601
      %v1681 = vmul.f32 %v1546, %v1601
      %v1682 = vmul.f32 %v1547, %v1601
      %v1683 = vmul.f32 %v1548, %v1601
      %v1684 = vmul.f32 %v1549, %v1601
      %v1685 = vmul.f32 %v1550, %v1601
      %v1686 = vmul.f32 %v1551, %v1601
      %v1687 = vmul.f32 %v1552, %v1601
      %v1688 = vmul.f32 %v1553, %v1601
      %v1689 = vmul.f32 %v1554, %v1601
      %v1690 = vmul.f32 %v1555, %v1601
      %v1691 = vmul.f32 %v1556, %v1601
      %v1692 = vmul.f32 %v1557, %v1601
      %v1693 = vmul.f32 %v1558, %v1601
      %v1694 = vmul.f32 %v1559, %v1601
      %v1695 = vmul.f32 %v1560, %v1601
      %v1696 = vmul.f32 %v1561, %v1601
      %v1697 = vmul.f32 %v1562, %v1601
      %v1698 = vmul.f32 %v1563, %v1601
      %v1699 = vmul.f32 %v1564, %v1601
      %v1700 = vmul.f32 %v1565, %v1601
      %v1701 = vmul.f32 %v1566, %v1601
      %v1702 = vmul.f32 %v1567, %v1601
      %v1703 = vmul.f32 %v1568, %v1601
      %v1704 = vmul.f32 %v1569, %v1601
      %v1705 = vmul.f32 %v1570, %v1601
      %v1706 = vmul.f32 %v1571, %v1601
      %v1707 = vmul.f32 %v1572, %v1601
      %v1708 = vmul.f32 %v1573, %v1601
      %v1709 = vmul.f32 %v1574, %v1601
      %v1710 = vmul.f32 %v1575, %v1601
      %v1711 = vmul.f32 %v1576, %v1601
      %v1712 = vmul.f32 %v1577, %v1601
      %v1713 = vmul.f32 %v1578, %v1601
      %v1714 = vmul.f32 %v1579, %v1601
      %v1715 = vmul.f32 %v1580, %v1601
      %v1716 = vmul.f32 %v1581, %v1601
      %v1717 = vmul.f32 %v1582, %v1601
      %v1718 = vmul.f32 %v1583, %v1601
      %v1719 = vmul.f32 %v1584, %v1601
      %v1720 = vmul.f32 %v1585, %v1601
      %v1721 = vmul.f32 %v1586, %v1601
      %v1722 = vmul.f32 %v1587, %v1601
      %v1723 = vmul.f32 %v1588, %v1601
      %v1724 = vmul.f32 %v1589, %v1601
      %v1725 = vmul.f32 %v1590, %v1601
      %v1726 = vmul.f32 %v1591, %v1601
      %v1727 = vmul.f32 %v1592, %v1601
      %v1728 = vmul.f32 %v1593, %v1601
      %v1729 = vmul.f32 %v1594, %v1601
      %v1730 = vmul.f32 %v1595, %v1601
      %v1731 = vld [vmem:[%s4] sm:$0x1]
      %v1733 = vlaneseq
      %v1734 = vshrl.u32 %v1733, 7
      %v1735 = vsub.s32 0, %v1734
      %v1736 = vrot.slane %v1731, %v1735
      %v1738 = vadd.f32 %v1603, %v1736
      %v1739 = vadd.f32 %v1604, %v1736
      %v1740 = vadd.f32 %v1605, %v1736
      %v1741 = vadd.f32 %v1606, %v1736
      %v1742 = vadd.f32 %v1607, %v1736
      %v1743 = vadd.f32 %v1608, %v1736
      %v1744 = vadd.f32 %v1609, %v1736
      %v1745 = vadd.f32 %v1610, %v1736
      %v1746 = vadd.f32 %v1611, %v1736
      %v1747 = vadd.f32 %v1612, %v1736
      %v1748 = vadd.f32 %v1613, %v1736
      %v1749 = vadd.f32 %v1614, %v1736
      %v1750 = vadd.f32 %v1615, %v1736
      %v1751 = vadd.f32 %v1616, %v1736
      %v1752 = vadd.f32 %v1617, %v1736
      %v1753 = vadd.f32 %v1618, %v1736
      %v1754 = vadd.f32 %v1619, %v1736
      %v1755 = vadd.f32 %v1620, %v1736
      %v1756 = vadd.f32 %v1621, %v1736
      %v1757 = vadd.f32 %v1622, %v1736
      %v1758 = vadd.f32 %v1623, %v1736
      %v1759 = vadd.f32 %v1624, %v1736
      %v1760 = vadd.f32 %v1625, %v1736
      %v1761 = vadd.f32 %v1626, %v1736
      %v1762 = vadd.f32 %v1627, %v1736
      %v1763 = vadd.f32 %v1628, %v1736
      %v1764 = vadd.f32 %v1629, %v1736
      %v1765 = vadd.f32 %v1630, %v1736
      %v1766 = vadd.f32 %v1631, %v1736
      %v1767 = vadd.f32 %v1632, %v1736
      %v1768 = vadd.f32 %v1633, %v1736
      %v1769 = vadd.f32 %v1634, %v1736
      %v1770 = vadd.f32 %v1635, %v1736
      %v1771 = vadd.f32 %v1636, %v1736
      %v1772 = vadd.f32 %v1637, %v1736
      %v1773 = vadd.f32 %v1638, %v1736
      %v1774 = vadd.f32 %v1639, %v1736
      %v1775 = vadd.f32 %v1640, %v1736
      %v1776 = vadd.f32 %v1641, %v1736
      %v1777 = vadd.f32 %v1642, %v1736
      %v1778 = vadd.f32 %v1643, %v1736
      %v1779 = vadd.f32 %v1644, %v1736
      %v1780 = vadd.f32 %v1645, %v1736
      %v1781 = vadd.f32 %v1646, %v1736
      %v1782 = vadd.f32 %v1647, %v1736
      %v1783 = vadd.f32 %v1648, %v1736
      %v1784 = vadd.f32 %v1649, %v1736
      %v1785 = vadd.f32 %v1650, %v1736
      %v1786 = vadd.f32 %v1651, %v1736
      %v1787 = vadd.f32 %v1652, %v1736
      %v1788 = vadd.f32 %v1653, %v1736
      %v1789 = vadd.f32 %v1654, %v1736
      %v1790 = vadd.f32 %v1655, %v1736
      %v1791 = vadd.f32 %v1656, %v1736
      %v1792 = vadd.f32 %v1657, %v1736
      %v1793 = vadd.f32 %v1658, %v1736
      %v1794 = vadd.f32 %v1659, %v1736
      %v1795 = vadd.f32 %v1660, %v1736
      %v1796 = vadd.f32 %v1661, %v1736
      %v1797 = vadd.f32 %v1662, %v1736
      %v1798 = vadd.f32 %v1663, %v1736
      %v1799 = vadd.f32 %v1664, %v1736
      %v1800 = vadd.f32 %v1665, %v1736
      %v1801 = vadd.f32 %v1666, %v1736
      %v1802 = vadd.f32 %v1667, %v1736
      %v1803 = vadd.f32 %v1668, %v1736
      %v1804 = vadd.f32 %v1669, %v1736
      %v1805 = vadd.f32 %v1670, %v1736
      %v1806 = vadd.f32 %v1671, %v1736
      %v1807 = vadd.f32 %v1672, %v1736
      %v1808 = vadd.f32 %v1673, %v1736
      %v1809 = vadd.f32 %v1674, %v1736
      %v1810 = vadd.f32 %v1675, %v1736
      %v1811 = vadd.f32 %v1676, %v1736
      %v1812 = vadd.f32 %v1677, %v1736
      %v1813 = vadd.f32 %v1678, %v1736
      %v1814 = vadd.f32 %v1679, %v1736
      %v1815 = vadd.f32 %v1680, %v1736
      %v1816 = vadd.f32 %v1681, %v1736
      %v1817 = vadd.f32 %v1682, %v1736
      %v1818 = vadd.f32 %v1683, %v1736
      %v1819 = vadd.f32 %v1684, %v1736
      %v1820 = vadd.f32 %v1685, %v1736
      %v1821 = vadd.f32 %v1686, %v1736
      %v1822 = vadd.f32 %v1687, %v1736
      %v1823 = vadd.f32 %v1688, %v1736
      %v1824 = vadd.f32 %v1689, %v1736
      %v1825 = vadd.f32 %v1690, %v1736
      %v1826 = vadd.f32 %v1691, %v1736
      %v1827 = vadd.f32 %v1692, %v1736
      %v1828 = vadd.f32 %v1693, %v1736
      %v1829 = vadd.f32 %v1694, %v1736
      %v1830 = vadd.f32 %v1695, %v1736
      %v1831 = vadd.f32 %v1696, %v1736
      %v1832 = vadd.f32 %v1697, %v1736
      %v1833 = vadd.f32 %v1698, %v1736
      %v1834 = vadd.f32 %v1699, %v1736
      %v1835 = vadd.f32 %v1700, %v1736
      %v1836 = vadd.f32 %v1701, %v1736
      %v1837 = vadd.f32 %v1702, %v1736
      %v1838 = vadd.f32 %v1703, %v1736
      %v1839 = vadd.f32 %v1704, %v1736
      %v1840 = vadd.f32 %v1705, %v1736
      %v1841 = vadd.f32 %v1706, %v1736
      %v1842 = vadd.f32 %v1707, %v1736
      %v1843 = vadd.f32 %v1708, %v1736
      %v1844 = vadd.f32 %v1709, %v1736
      %v1845 = vadd.f32 %v1710, %v1736
      %v1846 = vadd.f32 %v1711, %v1736
      %v1847 = vadd.f32 %v1712, %v1736
      %v1848 = vadd.f32 %v1713, %v1736
      %v1849 = vadd.f32 %v1714, %v1736
      %v1850 = vadd.f32 %v1715, %v1736
      %v1851 = vadd.f32 %v1716, %v1736
      %v1852 = vadd.f32 %v1717, %v1736
      %v1853 = vadd.f32 %v1718, %v1736
      %v1854 = vadd.f32 %v1719, %v1736
      %v1855 = vadd.f32 %v1720, %v1736
      %v1856 = vadd.f32 %v1721, %v1736
      %v1857 = vadd.f32 %v1722, %v1736
      %v1858 = vadd.f32 %v1723, %v1736
      %v1859 = vadd.f32 %v1724, %v1736
      %v1860 = vadd.f32 %v1725, %v1736
      %v1861 = vadd.f32 %v1726, %v1736
      %v1862 = vadd.f32 %v1727, %v1736
      %v1863 = vadd.f32 %v1728, %v1736
      %v1864 = vadd.f32 %v1729, %v1736
      %v1865 = vadd.f32 %v1730, %v1736
      %vm1866 = vcmask 130048
      %1867 = vst.msk [vmem:[%s226] sm:$0xff] %vm1866, %v1738
      %1868 = vst.msk [vmem:[%s226 + $0x8] sm:$0xff] %vm1866, %v1739
      %1869 = vst.msk [vmem:[%s226 + $0x10] sm:$0xff] %vm1866, %v1740
      %1870 = vst.msk [vmem:[%s226 + $0x18] sm:$0xff] %vm1866, %v1741
      %1871 = vst.msk [vmem:[%s226 + $0x20] sm:$0xff] %vm1866, %v1742
      %1872 = vst.msk [vmem:[%s226 + $0x28] sm:$0xff] %vm1866, %v1743
      %1873 = vst.msk [vmem:[%s226 + $0x30] sm:$0xff] %vm1866, %v1744
      %1874 = vst.msk [vmem:[%s226 + $0x38] sm:$0xff] %vm1866, %v1745
      %1875 = vst.msk [vmem:[%s226 + $0x40] sm:$0xff] %vm1866, %v1746
      %1876 = vst.msk [vmem:[%s226 + $0x48] sm:$0xff] %vm1866, %v1747
      %1877 = vst.msk [vmem:[%s226 + $0x50] sm:$0xff] %vm1866, %v1748
      %1878 = vst.msk [vmem:[%s226 + $0x58] sm:$0xff] %vm1866, %v1749
      %1879 = vst.msk [vmem:[%s226 + $0x60] sm:$0xff] %vm1866, %v1750
      %1880 = vst.msk [vmem:[%s226 + $0x68] sm:$0xff] %vm1866, %v1751
      %1881 = vst.msk [vmem:[%s226 + $0x70] sm:$0xff] %vm1866, %v1752
      %1882 = vst.msk [vmem:[%s226 + $0x78] sm:$0xff] %vm1866, %v1753
      %1883 = vst.msk [vmem:[%s226 + $0x80] sm:$0xff] %vm1866, %v1754
      %1884 = vst.msk [vmem:[%s226 + $0x88] sm:$0xff] %vm1866, %v1755
      %1885 = vst.msk [vmem:[%s226 + $0x90] sm:$0xff] %vm1866, %v1756
      %1886 = vst.msk [vmem:[%s226 + $0x98] sm:$0xff] %vm1866, %v1757
      %1887 = vst.msk [vmem:[%s226 + $0xa0] sm:$0xff] %vm1866, %v1758
      %1888 = vst.msk [vmem:[%s226 + $0xa8] sm:$0xff] %vm1866, %v1759
      %1889 = vst.msk [vmem:[%s226 + $0xb0] sm:$0xff] %vm1866, %v1760
      %1890 = vst.msk [vmem:[%s226 + $0xb8] sm:$0xff] %vm1866, %v1761
      %1891 = vst.msk [vmem:[%s226 + $0xc0] sm:$0xff] %vm1866, %v1762
      %1892 = vst.msk [vmem:[%s226 + $0xc8] sm:$0xff] %vm1866, %v1763
      %1893 = vst.msk [vmem:[%s226 + $0xd0] sm:$0xff] %vm1866, %v1764
      %1894 = vst.msk [vmem:[%s226 + $0xd8] sm:$0xff] %vm1866, %v1765
      %1895 = vst.msk [vmem:[%s226 + $0xe0] sm:$0xff] %vm1866, %v1766
      %1896 = vst.msk [vmem:[%s226 + $0xe8] sm:$0xff] %vm1866, %v1767
      %1897 = vst.msk [vmem:[%s226 + $0xf0] sm:$0xff] %vm1866, %v1768
      %1898 = vst.msk [vmem:[%s226 + $0xf8] sm:$0xff] %vm1866, %v1769
      %1899 = vst.msk [vmem:[%s226 + $0x100] sm:$0xff] %vm1866, %v1770
      %1900 = vst.msk [vmem:[%s226 + $0x108] sm:$0xff] %vm1866, %v1771
      %1901 = vst.msk [vmem:[%s226 + $0x110] sm:$0xff] %vm1866, %v1772
      %1902 = vst.msk [vmem:[%s226 + $0x118] sm:$0xff] %vm1866, %v1773
      %1903 = vst.msk [vmem:[%s226 + $0x120] sm:$0xff] %vm1866, %v1774
      %1904 = vst.msk [vmem:[%s226 + $0x128] sm:$0xff] %vm1866, %v1775
      %1905 = vst.msk [vmem:[%s226 + $0x130] sm:$0xff] %vm1866, %v1776
      %1906 = vst.msk [vmem:[%s226 + $0x138] sm:$0xff] %vm1866, %v1777
      %1907 = vst.msk [vmem:[%s226 + $0x140] sm:$0xff] %vm1866, %v1778
      %1908 = vst.msk [vmem:[%s226 + $0x148] sm:$0xff] %vm1866, %v1779
      %1909 = vst.msk [vmem:[%s226 + $0x150] sm:$0xff] %vm1866, %v1780
      %1910 = vst.msk [vmem:[%s226 + $0x158] sm:$0xff] %vm1866, %v1781
      %1911 = vst.msk [vmem:[%s226 + $0x160] sm:$0xff] %vm1866, %v1782
      %1912 = vst.msk [vmem:[%s226 + $0x168] sm:$0xff] %vm1866, %v1783
      %1913 = vst.msk [vmem:[%s226 + $0x170] sm:$0xff] %vm1866, %v1784
      %1914 = vst.msk [vmem:[%s226 + $0x178] sm:$0xff] %vm1866, %v1785
      %1915 = vst.msk [vmem:[%s226 + $0x180] sm:$0xff] %vm1866, %v1786
      %1916 = vst.msk [vmem:[%s226 + $0x188] sm:$0xff] %vm1866, %v1787
      %1917 = vst.msk [vmem:[%s226 + $0x190] sm:$0xff] %vm1866, %v1788
      %1918 = vst.msk [vmem:[%s226 + $0x198] sm:$0xff] %vm1866, %v1789
      %1919 = vst.msk [vmem:[%s226 + $0x1a0] sm:$0xff] %vm1866, %v1790
      %1920 = vst.msk [vmem:[%s226 + $0x1a8] sm:$0xff] %vm1866, %v1791
      %1921 = vst.msk [vmem:[%s226 + $0x1b0] sm:$0xff] %vm1866, %v1792
      %1922 = vst.msk [vmem:[%s226 + $0x1b8] sm:$0xff] %vm1866, %v1793
      %1923 = vst.msk [vmem:[%s226 + $0x1c0] sm:$0xff] %vm1866, %v1794
      %1924 = vst.msk [vmem:[%s226 + $0x1c8] sm:$0xff] %vm1866, %v1795
      %1925 = vst.msk [vmem:[%s226 + $0x1d0] sm:$0xff] %vm1866, %v1796
      %1926 = vst.msk [vmem:[%s226 + $0x1d8] sm:$0xff] %vm1866, %v1797
      %1927 = vst.msk [vmem:[%s226 + $0x1e0] sm:$0xff] %vm1866, %v1798
      %1928 = vst.msk [vmem:[%s226 + $0x1e8] sm:$0xff] %vm1866, %v1799
      %1929 = vst.msk [vmem:[%s226 + $0x1f0] sm:$0xff] %vm1866, %v1800
      %1930 = vst.msk [vmem:[%s226 + $0x1f8] sm:$0xff] %vm1866, %v1801
      %1931 = vst.msk [vmem:[%s226 + $0x200] sm:$0xff] %vm1866, %v1802
      %1932 = vst.msk [vmem:[%s226 + $0x208] sm:$0xff] %vm1866, %v1803
      %1933 = vst.msk [vmem:[%s226 + $0x210] sm:$0xff] %vm1866, %v1804
      %1934 = vst.msk [vmem:[%s226 + $0x218] sm:$0xff] %vm1866, %v1805
      %1935 = vst.msk [vmem:[%s226 + $0x220] sm:$0xff] %vm1866, %v1806
      %1936 = vst.msk [vmem:[%s226 + $0x228] sm:$0xff] %vm1866, %v1807
      %1937 = vst.msk [vmem:[%s226 + $0x230] sm:$0xff] %vm1866, %v1808
      %1938 = vst.msk [vmem:[%s226 + $0x238] sm:$0xff] %vm1866, %v1809
      %1939 = vst.msk [vmem:[%s226 + $0x240] sm:$0xff] %vm1866, %v1810
      %1940 = vst.msk [vmem:[%s226 + $0x248] sm:$0xff] %vm1866, %v1811
      %1941 = vst.msk [vmem:[%s226 + $0x250] sm:$0xff] %vm1866, %v1812
      %1942 = vst.msk [vmem:[%s226 + $0x258] sm:$0xff] %vm1866, %v1813
      %1943 = vst.msk [vmem:[%s226 + $0x260] sm:$0xff] %vm1866, %v1814
      %1944 = vst.msk [vmem:[%s226 + $0x268] sm:$0xff] %vm1866, %v1815
      %1945 = vst.msk [vmem:[%s226 + $0x270] sm:$0xff] %vm1866, %v1816
      %1946 = vst.msk [vmem:[%s226 + $0x278] sm:$0xff] %vm1866, %v1817
      %1947 = vst.msk [vmem:[%s226 + $0x280] sm:$0xff] %vm1866, %v1818
      %1948 = vst.msk [vmem:[%s226 + $0x288] sm:$0xff] %vm1866, %v1819
      %1949 = vst.msk [vmem:[%s226 + $0x290] sm:$0xff] %vm1866, %v1820
      %1950 = vst.msk [vmem:[%s226 + $0x298] sm:$0xff] %vm1866, %v1821
      %1951 = vst.msk [vmem:[%s226 + $0x2a0] sm:$0xff] %vm1866, %v1822
      %1952 = vst.msk [vmem:[%s226 + $0x2a8] sm:$0xff] %vm1866, %v1823
      %1953 = vst.msk [vmem:[%s226 + $0x2b0] sm:$0xff] %vm1866, %v1824
      %1954 = vst.msk [vmem:[%s226 + $0x2b8] sm:$0xff] %vm1866, %v1825
      %1955 = vst.msk [vmem:[%s226 + $0x2c0] sm:$0xff] %vm1866, %v1826
      %1956 = vst.msk [vmem:[%s226 + $0x2c8] sm:$0xff] %vm1866, %v1827
      %1957 = vst.msk [vmem:[%s226 + $0x2d0] sm:$0xff] %vm1866, %v1828
      %1958 = vst.msk [vmem:[%s226 + $0x2d8] sm:$0xff] %vm1866, %v1829
      %1959 = vst.msk [vmem:[%s226 + $0x2e0] sm:$0xff] %vm1866, %v1830
      %1960 = vst.msk [vmem:[%s226 + $0x2e8] sm:$0xff] %vm1866, %v1831
      %1961 = vst.msk [vmem:[%s226 + $0x2f0] sm:$0xff] %vm1866, %v1832
      %1962 = vst.msk [vmem:[%s226 + $0x2f8] sm:$0xff] %vm1866, %v1833
      %1963 = vst.msk [vmem:[%s226 + $0x300] sm:$0xff] %vm1866, %v1834
      %1964 = vst.msk [vmem:[%s226 + $0x308] sm:$0xff] %vm1866, %v1835
      %1965 = vst.msk [vmem:[%s226 + $0x310] sm:$0xff] %vm1866, %v1836
      %1966 = vst.msk [vmem:[%s226 + $0x318] sm:$0xff] %vm1866, %v1837
      %1967 = vst.msk [vmem:[%s226 + $0x320] sm:$0xff] %vm1866, %v1838
      %1968 = vst.msk [vmem:[%s226 + $0x328] sm:$0xff] %vm1866, %v1839
      %1969 = vst.msk [vmem:[%s226 + $0x330] sm:$0xff] %vm1866, %v1840
      %1970 = vst.msk [vmem:[%s226 + $0x338] sm:$0xff] %vm1866, %v1841
      %1971 = vst.msk [vmem:[%s226 + $0x340] sm:$0xff] %vm1866, %v1842
      %1972 = vst.msk [vmem:[%s226 + $0x348] sm:$0xff] %vm1866, %v1843
      %1973 = vst.msk [vmem:[%s226 + $0x350] sm:$0xff] %vm1866, %v1844
      %1974 = vst.msk [vmem:[%s226 + $0x358] sm:$0xff] %vm1866, %v1845
      %1975 = vst.msk [vmem:[%s226 + $0x360] sm:$0xff] %vm1866, %v1846
      %1976 = vst.msk [vmem:[%s226 + $0x368] sm:$0xff] %vm1866, %v1847
      %1977 = vst.msk [vmem:[%s226 + $0x370] sm:$0xff] %vm1866, %v1848
      %1978 = vst.msk [vmem:[%s226 + $0x378] sm:$0xff] %vm1866, %v1849
      %1979 = vst.msk [vmem:[%s226 + $0x380] sm:$0xff] %vm1866, %v1850
      %1980 = vst.msk [vmem:[%s226 + $0x388] sm:$0xff] %vm1866, %v1851
      %1981 = vst.msk [vmem:[%s226 + $0x390] sm:$0xff] %vm1866, %v1852
      %1982 = vst.msk [vmem:[%s226 + $0x398] sm:$0xff] %vm1866, %v1853
      %1983 = vst.msk [vmem:[%s226 + $0x3a0] sm:$0xff] %vm1866, %v1854
      %1984 = vst.msk [vmem:[%s226 + $0x3a8] sm:$0xff] %vm1866, %v1855
      %1985 = vst.msk [vmem:[%s226 + $0x3b0] sm:$0xff] %vm1866, %v1856
      %1986 = vst.msk [vmem:[%s226 + $0x3b8] sm:$0xff] %vm1866, %v1857
      %1987 = vst.msk [vmem:[%s226 + $0x3c0] sm:$0xff] %vm1866, %v1858
      %1988 = vst.msk [vmem:[%s226 + $0x3c8] sm:$0xff] %vm1866, %v1859
      %1989 = vst.msk [vmem:[%s226 + $0x3d0] sm:$0xff] %vm1866, %v1860
      %1990 = vst.msk [vmem:[%s226 + $0x3d8] sm:$0xff] %vm1866, %v1861
      %1991 = vst.msk [vmem:[%s226 + $0x3e0] sm:$0xff] %vm1866, %v1862
      %1992 = vst.msk [vmem:[%s226 + $0x3e8] sm:$0xff] %vm1866, %v1863
      %1993 = vst.msk [vmem:[%s226 + $0x3f0] sm:$0xff] %vm1866, %v1864
      %1994 = vst.msk [vmem:[%s226 + $0x3f8] sm:$0xff] %vm1866, %v1865
      %s1995 = smul.u32 128, %s16
      %p1996 = scmp.lt.s32.totalorder %s1995, 255
      %s1997 = scalar_select %p1996, %s1995, 255
      %s1998 = smul.addr %s1997, 8
      %s1999 = scalar_lea.vmem %s5, %s1998
      // Predicated region
      $region41: #{vibro_feat_forward.4} parent=39 // pred_check
        %p2000 = pneg %p144
      $region42: #{vibro_feat_forward.4} parent=39 // pred_check_branch
        %2002 = sbr.rel (%p2000) target = $region44
      $region43: #{vibro_feat_forward.4} parent=39 // pred_region
        %s2003 = smul.u32 128, %s16
      $region44: #{vibro_feat_forward.4} parent=39 // pred_fallthru
        _
    $region40: #{vibro_feat_forward.4} parent=5 // pred_fallthru
      _
    %p2004 = scmp.le.s32.totalorder 2, %s11
    // Predicated region
    $region45: #{vibro_feat_forward.4} parent=5 // pred_check
      %p2005 = pneg %p2004
    $region46: #{vibro_feat_forward.4} parent=5 // pred_check_branch
      %2007 = sbr.rel (%p2005) target = $region48
    $region47: #{vibro_feat_forward.4} parent=5 // pred_region
      %s2008 = ssub.s32 %s11, 2
      // Predicated region
      $region49: #{vibro_feat_forward.4} parent=47 // pred_check
        %p2009 = pneg %p150
      $region50: #{vibro_feat_forward.4} parent=47 // pred_check_branch
        %2011 = sbr.rel (%p2009) target = $region52
      $region51: #{vibro_feat_forward.4} parent=47 // pred_region
        %s2012 = smul.u32 128, %s17
        %p2013 = scmp.lt.s32.totalorder %s2012, 255
        %s2014 = scalar_select %p2013, %s2012, 255
        %s2015 = smul.addr %s2014, 8
        %s2016 = scalar_lea.vmem %s5, %s2015
      $region52: #{vibro_feat_forward.4} parent=47 // pred_fallthru
        _
    $region48: #{vibro_feat_forward.4} parent=5 // pred_fallthru
      _
  $region6: #{vibro_feat_forward.4} parent=0 // loop_footer
    %s15 = sadd.s32 1, %s11
  $region7: #{vibro_feat_forward.4} parent=0 // loop_footer_branch
    %10 = sbr.rel target = $region3
  $region8: #{vibro_feat_forward.4} parent=0 // loop_exit
    _

// kernel: vibro_feat_forward.5
$region0: #{vibro_feat_forward.5}
  #allocation0 [shape = 'u32[]', space=smem, size = 0x4, offset = 0x4, fixed_abs, tag = 'smem constant byte address 0x4 - core index']
  #allocation1 [shape = 'u32[144,128]{1,0:T(1,128)}', space=vmem, size = 0x12000, scoped, tag = 'internal scratch']
  %s0 = inlined_call_operand.vmem [shape: bf16[4,512,144], index: 0, kind: input, shape index: {}]
  %s1 = inlined_call_operand.vmem [shape: bf16[144,16], index: 1, kind: input, shape index: {}]
  %s2 = inlined_call_operand.vmem [shape: f32[1,16], index: 2, kind: input, shape index: {}]
  %s3 = inlined_call_operand.vmem [shape: f32[1,16], index: 3, kind: input, shape index: {}]
  %s4 = inlined_call_operand.vmem [shape: f32[1,16], index: 4, kind: input, shape index: {}]
  %s5 = inlined_call_operand.vmem [shape: f32[512,16], index: 5, kind: output, shape index: {}]
  %s6 = sld [smem:[#allocation0]]
  $region91: #{vibro_feat_forward.5} parent=0
    _
  %s8 = ssub.s32 1, %s6
  %s9 = scalar_select 0, %s8, %s6
  $region1: #{vibro_feat_forward.5} parent=0
    #allocation2 [shape = 'u8[1048576]{0}', space=vmem, size = 0x100000, scoped, tag = 'input window, operand 0']
    loop: start=0, step=1, limit=4
    $region2: #{vibro_feat_forward.5} parent=1 // loop_pre_header
      _
    $region3: #{vibro_feat_forward.5} parent=1 // loop_header
      %s11 = sphi 0, %s15
      %p12 = scmp.ge.s32.totalorder %s11, 4
      %s21 = sphi 0, %s23
      %s24 = sphi 0, %s21
      %s25 = sphi 0, %s24
      %s41 = sphi 0, %s25
      %s45 = sphi 0, %s45
      %s47 = sphi 0, %s45
      %s48 = sphi 0, %s47
      %s62 = sphi 0, %s48
      %s66 = sphi 0, %s66
      %s68 = sphi 0, %s66
      %s69 = sphi 0, %s68
      %s83 = sphi 0, %s69
      %s87 = sphi 0, %s87
      %s89 = sphi 0, %s87
      %s90 = sphi 0, %s89
      %s104 = sphi 0, %s90
      %s108 = sphi 0, %s108
      %s110 = sphi 0, %s108
      %s111 = sphi 0, %s110
      %s125 = sphi 0, %s111
      %s131 = sphi 0, %s133
      %s134 = sphi 0, %s131
      %s135 = sphi 0, %s134
      %s151 = sphi 0, %s135
    $region4: #{vibro_feat_forward.5} parent=1 // loop_header_branch
      %14 = sbr.rel (%p12) target = $region8
    $region5: #{vibro_feat_forward.5} parent=1 // loop_body
      %s16 = ssub.s32 %s11, 1
      %s17 = ssub.s32 %s11, 2
      %s18 = sadd.s32 %s11, 1
      %s19 = ssub.s32 %s11, %s18
      %p20 = scmp.eq.s32.totalorder %s19, 0
      %s22 = sadd.s32 %s21, 1
      %s23 = scalar_select %p20, %s21, %s22
      %p26 = pneg %p20
      %p27 = scmp.eq.s32.totalorder %s11, 1
      %p28 = por %p26, %p27
      %p29 = scmp.ne.s32.totalorder %s21, %s24
      %p30 = scmp.eq.s32.totalorder %s11, 0
      %p31 = por %p29, %p30
      %p32 = scmp.ne.s32.totalorder %s21, %s24
      %p33 = scmp.eq.s32.totalorder %s16, 1
      %p34 = por %p32, %p33
      %p35 = scmp.ne.s32.totalorder %s24, %s25
      %p36 = scmp.eq.s32.totalorder %s16, 0
      %p37 = por %p35, %p36
      %p38 = scmp.ne.s32.totalorder %s24, %s25
      %p39 = scmp.eq.s32.totalorder %s17, 1
      %p40 = por %p38, %p39
      %p42 = scmp.ne.s32.totalorder %s25, %s41
      %p43 = scmp.eq.s32.totalorder %s17, 0
      %p44 = por %p42, %p43
      %s46 = sadd.s32 %s45, 1
      %p49 = scmp.eq.s32.totalorder %s11, 1
      %p50 = scmp.ne.s32.totalorder %s45, %s47
      %p51 = scmp.eq.s32.totalorder %s11, 0
      %p52 = por %p50, %p51
      %p53 = scmp.ne.s32.totalorder %s45, %s47
      %p54 = scmp.eq.s32.totalorder %s16, 1
      %p55 = por %p53, %p54
      %p56 = scmp.ne.s32.totalorder %s47, %s48
      %p57 = scmp.eq.s32.totalorder %s16, 0
      %p58 = por %p56, %p57
      %p59 = scmp.ne.s32.totalorder %s47, %s48
      %p60 = scmp.eq.s32.totalorder %s17, 1
      %p61 = por %p59, %p60
      %p63 = scmp.ne.s32.totalorder %s48, %s62
      %p64 = scmp.eq.s32.totalorder %s17, 0
      %p65 = por %p63, %p64
      %s67 = sadd.s32 %s66, 1
      %p70 = scmp.eq.s32.totalorder %s11, 1
      %p71 = scmp.ne.s32.totalorder %s66, %s68
      %p72 = scmp.eq.s32.totalorder %s11, 0
      %p73 = por %p71, %p72
      %p74 = scmp.ne.s32.totalorder %s66, %s68
      %p75 = scmp.eq.s32.totalorder %s16, 1
      %p76 = por %p74, %p75
      %p77 = scmp.ne.s32.totalorder %s68, %s69
      %p78 = scmp.eq.s32.totalorder %s16, 0
      %p79 = por %p77, %p78
      %p80 = scmp.ne.s32.totalorder %s68, %s69
      %p81 = scmp.eq.s32.totalorder %s17, 1
      %p82 = por %p80, %p81
      %p84 = scmp.ne.s32.totalorder %s69, %s83
      %p85 = scmp.eq.s32.totalorder %s17, 0
      %p86 = por %p84, %p85
      %s88 = sadd.s32 %s87, 1
      %p91 = scmp.eq.s32.totalorder %s11, 1
      %p92 = scmp.ne.s32.totalorder %s87, %s89
      %p93 = scmp.eq.s32.totalorder %s11, 0
      %p94 = por %p92, %p93
      %p95 = scmp.ne.s32.totalorder %s87, %s89
      %p96 = scmp.eq.s32.totalorder %s16, 1
      %p97 = por %p95, %p96
      %p98 = scmp.ne.s32.totalorder %s89, %s90
      %p99 = scmp.eq.s32.totalorder %s16, 0
      %p100 = por %p98, %p99
      %p101 = scmp.ne.s32.totalorder %s89, %s90
      %p102 = scmp.eq.s32.totalorder %s17, 1
      %p103 = por %p101, %p102
      %p105 = scmp.ne.s32.totalorder %s90, %s104
      %p106 = scmp.eq.s32.totalorder %s17, 0
      %p107 = por %p105, %p106
      %s109 = sadd.s32 %s108, 1
      %p112 = scmp.eq.s32.totalorder %s11, 1
      %p113 = scmp.ne.s32.totalorder %s108, %s110
      %p114 = scmp.eq.s32.totalorder %s11, 0
      %p115 = por %p113, %p114
      %p116 = scmp.ne.s32.totalorder %s108, %s110
      %p117 = scmp.eq.s32.totalorder %s16, 1
      %p118 = por %p116, %p117
      %p119 = scmp.ne.s32.totalorder %s110, %s111
      %p120 = scmp.eq.s32.totalorder %s16, 0
      %p121 = por %p119, %p120
      %p122 = scmp.ne.s32.totalorder %s110, %s111
      %p123 = scmp.eq.s32.totalorder %s17, 1
      %p124 = por %p122, %p123
      %p126 = scmp.ne.s32.totalorder %s111, %s125
      %p127 = scmp.eq.s32.totalorder %s17, 0
      %p128 = por %p126, %p127
      %s129 = ssub.s32 %s11, %s18
      %p130 = scmp.eq.s32.totalorder %s129, 0
      %s132 = sadd.s32 %s131, 1
      %s133 = scalar_select %p130, %s131, %s132
      %p136 = pneg %p130
      %p137 = scmp.eq.s32.totalorder %s11, 1
      %p138 = por %p136, %p137
      %p139 = scmp.ne.s32.totalorder %s131, %s134
      %p140 = scmp.eq.s32.totalorder %s11, 0
      %p141 = por %p139, %p140
      %p142 = scmp.ne.s32.totalorder %s131, %s134
      %p143 = scmp.eq.s32.totalorder %s16, 1
      %p144 = por %p142, %p143
      %p145 = scmp.ne.s32.totalorder %s134, %s135
      %p146 = scmp.eq.s32.totalorder %s16, 0
      %p147 = por %p145, %p146
      %p148 = scmp.ne.s32.totalorder %s134, %s135
      %p149 = scmp.eq.s32.totalorder %s17, 1
      %p150 = por %p148, %p149
      %p152 = scmp.ne.s32.totalorder %s135, %s151
      %p153 = scmp.eq.s32.totalorder %s17, 0
      %p154 = por %p152, %p153
      %p155 = scmp.le.s32.totalorder 1, %s11
      %p156 = scmp.lt.s32.totalorder %s11, 3
      %p157 = pnand %p155, %p156
      %p158 = pneg %p157
      // Predicated region
      $region9: #{vibro_feat_forward.5} parent=5 // pred_check
        _
      $region10: #{vibro_feat_forward.5} parent=5 // pred_check_branch
        %160 = sbr.rel (%p157) target = $region12
      $region11: #{vibro_feat_forward.5} parent=5 // pred_region
        %s161 = ssub.s32 %s11, 1
        // Predicated region
        $region13: #{vibro_feat_forward.5} parent=11 // pred_check
          %p162 = pneg %p58
        $region14: #{vibro_feat_forward.5} parent=11 // pred_check_branch
          %164 = sbr.rel (%p162) target = $region16
        $region15: #{vibro_feat_forward.5} parent=11 // pred_region
          _
        $region16: #{vibro_feat_forward.5} parent=11 // pred_fallthru
          _
        // Predicated region
        $region17: #{vibro_feat_forward.5} parent=11 // pred_check
          %p165 = pneg %p79
        $region18: #{vibro_feat_forward.5} parent=11 // pred_check_branch
          %167 = sbr.rel (%p165) target = $region20
        $region19: #{vibro_feat_forward.5} parent=11 // pred_region
          _
        $region20: #{vibro_feat_forward.5} parent=11 // pred_fallthru
          _
        // Predicated region
        $region21: #{vibro_feat_forward.5} parent=11 // pred_check
          %p168 = pneg %p100
        $region22: #{vibro_feat_forward.5} parent=11 // pred_check_branch
          %170 = sbr.rel (%p168) target = $region24
        $region23: #{vibro_feat_forward.5} parent=11 // pred_region
          _
        $region24: #{vibro_feat_forward.5} parent=11 // pred_fallthru
          _
        // Predicated region
        $region25: #{vibro_feat_forward.5} parent=11 // pred_check
          %p171 = pneg %p121
        $region26: #{vibro_feat_forward.5} parent=11 // pred_check_branch
          %173 = sbr.rel (%p171) target = $region28
        $region27: #{vibro_feat_forward.5} parent=11 // pred_region
          _
        $region28: #{vibro_feat_forward.5} parent=11 // pred_fallthru
          _
      $region12: #{vibro_feat_forward.5} parent=5 // pred_fallthru
        _
      %p174 = scmp.lt.s32.totalorder %s11, 2
      // Predicated region
      $region29: #{vibro_feat_forward.5} parent=5 // pred_check
        %p175 = pneg %p174
      $region30: #{vibro_feat_forward.5} parent=5 // pred_check_branch
        %177 = sbr.rel (%p175) target = $region32
      $region31: #{vibro_feat_forward.5} parent=5 // pred_region
        // Predicated region
        $region33: #{vibro_feat_forward.5} parent=31 // pred_check
          %p178 = pneg %p31
        $region34: #{vibro_feat_forward.5} parent=31 // pred_check_branch
          %180 = sbr.rel (%p178) target = $region36
        $region35: #{vibro_feat_forward.5} parent=31 // pred_region
          %s181 = sand.u32 %s21, 1
          %s182 = sand.u32 %s21, 1
          %s183 = smul.addr %s182, 1024
          %s184 = scalar_lea.vmem [#allocation2], %s183
          %s185 = smul.u32 32, %s11
          %s186 = smul.addr %s185, 2
          %s187 = smul.addr %s186, 4
          %s188 = scalar_lea.vmem %s0, %s187
          // Predicated region
          $region37: #{vibro_feat_forward.5} parent=35 // pred_check
            _
          $region38: #{vibro_feat_forward.5} parent=35 // pred_check_branch
            %190 = sbr.rel (0) target = $region40
          $region39: #{vibro_feat_forward.5} parent=35 // pred_region
            // Predicated region
            $region41: #{vibro_feat_forward.5} parent=39 // pred_check
              _
            $region42: #{vibro_feat_forward.5} parent=39 // pred_check_branch
              %192 = sbr.rel (0) target = $region44
            $region43: #{vibro_feat_forward.5} parent=39 // pred_region
              // Predicated region
              $region56: #{vibro_feat_forward.5} parent=43 // pred_check
                _
              $region57: #{vibro_feat_forward.5} parent=43 // pred_check_branch
                %462 = sbr.rel (0) target = $region59
              $region58: #{vibro_feat_forward.5} parent=43 // pred_region
                loop: start=0, step=1, limit=1
                $region60: #{vibro_feat_forward.5} parent=58 // loop_pre_header
                  _
                $region61: #{vibro_feat_forward.5} parent=58 // loop_header
                  %s464 = sphi 0, %s468
                  %p465 = scmp.ge.s32.totalorder %s464, 1
                  %s469 = sphi %s188, %s188
                  %s470 = sphi %s184, %s184
                $region62: #{vibro_feat_forward.5} parent=58 // loop_header_branch
                  %467 = sbr.rel (%p465) target = $region66
                $region63: #{vibro_feat_forward.5} parent=58 // loop_body
                  %v471 = vld [vmem:[%s469] sm:$0xff]
                  %472 = vst [vmem:[%s470] sm:$0xff] %v471
                  %v473 = vld [vmem:[%s469 + $0x8] sm:$0xff]
                  %474 = vst [vmem:[%s470 + $0x8] sm:$0xff] %v473
                  %v475 = vld [vmem:[%s469 + $0x10] sm:$0xff]
                  %476 = vst [vmem:[%s470 + $0x10] sm:$0xff] %v475
                  %v477 = vld [vmem:[%s469 + $0x18] sm:$0xff]
                  %478 = vst [vmem:[%s470 + $0x18] sm:$0xff] %v477
                  %v479 = vld [vmem:[%s469 + $0x20] sm:$0xff]
                  %480 = vst [vmem:[%s470 + $0x20] sm:$0xff] %v479
                  %v481 = vld [vmem:[%s469 + $0x28] sm:$0xff]
                  %482 = vst [vmem:[%s470 + $0x28] sm:$0xff] %v481
                  %v483 = vld [vmem:[%s469 + $0x30] sm:$0xff]
                  %484 = vst [vmem:[%s470 + $0x30] sm:$0xff] %v483
                  %v485 = vld [vmem:[%s469 + $0x38] sm:$0xff]
                  %486 = vst [vmem:[%s470 + $0x38] sm:$0xff] %v485
                  %v487 = vld [vmem:[%s469 + $0x40] sm:$0xff]
                  %488 = vst [vmem:[%s470 + $0x40] sm:$0xff] %v487
                  %v489 = vld [vmem:[%s469 + $0x48] sm:$0xff]
                  %490 = vst [vmem:[%s470 + $0x48] sm:$0xff] %v489
                  %v491 = vld [vmem:[%s469 + $0x50] sm:$0xff]
                  %492 = vst [vmem:[%s470 + $0x50] sm:$0xff] %v491
                  %v493 = vld [vmem:[%s469 + $0x58] sm:$0xff]
                  %494 = vst [vmem:[%s470 + $0x58] sm:$0xff] %v493
                  %v495 = vld [vmem:[%s469 + $0x60] sm:$0xff]
                  %496 = vst [vmem:[%s470 + $0x60] sm:$0xff] %v495
                  %v497 = vld [vmem:[%s469 + $0x68] sm:$0xff]
                  %498 = vst [vmem:[%s470 + $0x68] sm:$0xff] %v497
                  %v499 = vld [vmem:[%s469 + $0x70] sm:$0xff]
                  %500 = vst [vmem:[%s470 + $0x70] sm:$0xff] %v499
                  %v501 = vld [vmem:[%s469 + $0x78] sm:$0xff]
                  %502 = vst [vmem:[%s470 + $0x78] sm:$0xff] %v501
                  %v503 = vld [vmem:[%s469 + $0x80] sm:$0xff]
                  %504 = vst [vmem:[%s470 + $0x80] sm:$0xff] %v503
                  %v505 = vld [vmem:[%s469 + $0x88] sm:$0xff]
                  %506 = vst [vmem:[%s470 + $0x88] sm:$0xff] %v505
                  %v507 = vld [vmem:[%s469 + $0x90] sm:$0xff]
                  %508 = vst [vmem:[%s470 + $0x90] sm:$0xff] %v507
                  %v509 = vld [vmem:[%s469 + $0x98] sm:$0xff]
                  %510 = vst [vmem:[%s470 + $0x98] sm:$0xff] %v509
                  %v511 = vld [vmem:[%s469 + $0xa0] sm:$0xff]
                  %512 = vst [vmem:[%s470 + $0xa0] sm:$0xff] %v511
                  %v513 = vld [vmem:[%s469 + $0xa8] sm:$0xff]
                  %514 = vst [vmem:[%s470 + $0xa8] sm:$0xff] %v513
                  %v515 = vld [vmem:[%s469 + $0xb0] sm:$0xff]
                  %516 = vst [vmem:[%s470 + $0xb0] sm:$0xff] %v515
                  %v517 = vld [vmem:[%s469 + $0xb8] sm:$0xff]
                  %518 = vst [vmem:[%s470 + $0xb8] sm:$0xff] %v517
                  %v519 = vld [vmem:[%s469 + $0xc0] sm:$0xff]
                  %520 = vst [vmem:[%s470 + $0xc0] sm:$0xff] %v519
                  %v521 = vld [vmem:[%s469 + $0xc8] sm:$0xff]
                  %522 = vst [vmem:[%s470 + $0xc8] sm:$0xff] %v521
                  %v523 = vld [vmem:[%s469 + $0xd0] sm:$0xff]
                  %524 = vst [vmem:[%s470 + $0xd0] sm:$0xff] %v523
                  %v525 = vld [vmem:[%s469 + $0xd8] sm:$0xff]
                  %526 = vst [vmem:[%s470 + $0xd8] sm:$0xff] %v525
                  %v527 = vld [vmem:[%s469 + $0xe0] sm:$0xff]
                  %528 = vst [vmem:[%s470 + $0xe0] sm:$0xff] %v527
                  %v529 = vld [vmem:[%s469 + $0xe8] sm:$0xff]
                  %530 = vst [vmem:[%s470 + $0xe8] sm:$0xff] %v529
                  %v531 = vld [vmem:[%s469 + $0xf0] sm:$0xff]
                  %532 = vst [vmem:[%s470 + $0xf0] sm:$0xff] %v531
                  %v533 = vld [vmem:[%s469 + $0xf8] sm:$0xff]
                  %534 = vst [vmem:[%s470 + $0xf8] sm:$0xff] %v533
                  %v535 = vld [vmem:[%s469 + $0x200] sm:$0xff]
                  %536 = vst [vmem:[%s470 + $0x100] sm:$0xff] %v535
                  %v537 = vld [vmem:[%s469 + $0x208] sm:$0xff]
                  %538 = vst [vmem:[%s470 + $0x108] sm:$0xff] %v537
                  %v539 = vld [vmem:[%s469 + $0x210] sm:$0xff]
                  %540 = vst [vmem:[%s470 + $0x110] sm:$0xff] %v539
                  %v541 = vld [vmem:[%s469 + $0x218] sm:$0xff]
                  %542 = vst [vmem:[%s470 + $0x118] sm:$0xff] %v541
                  %v543 = vld [vmem:[%s469 + $0x220] sm:$0xff]
                  %544 = vst [vmem:[%s470 + $0x120] sm:$0xff] %v543
                  %v545 = vld [vmem:[%s469 + $0x228] sm:$0xff]
                  %546 = vst [vmem:[%s470 + $0x128] sm:$0xff] %v545
                  %v547 = vld [vmem:[%s469 + $0x230] sm:$0xff]
                  %548 = vst [vmem:[%s470 + $0x130] sm:$0xff] %v547
                  %v549 = vld [vmem:[%s469 + $0x238] sm:$0xff]
                  %550 = vst [vmem:[%s470 + $0x138] sm:$0xff] %v549
                  %v551 = vld [vmem:[%s469 + $0x240] sm:$0xff]
                  %552 = vst [vmem:[%s470 + $0x140] sm:$0xff] %v551
                  %v553 = vld [vmem:[%s469 + $0x248] sm:$0xff]
                  %554 = vst [vmem:[%s470 + $0x148] sm:$0xff] %v553
                  %v555 = vld [vmem:[%s469 + $0x250] sm:$0xff]
                  %556 = vst [vmem:[%s470 + $0x150] sm:$0xff] %v555
                  %v557 = vld [vmem:[%s469 + $0x258] sm:$0xff]
                  %558 = vst [vmem:[%s470 + $0x158] sm:$0xff] %v557
                  %v559 = vld [vmem:[%s469 + $0x260] sm:$0xff]
                  %560 = vst [vmem:[%s470 + $0x160] sm:$0xff] %v559
                  %v561 = vld [vmem:[%s469 + $0x268] sm:$0xff]
                  %562 = vst [vmem:[%s470 + $0x168] sm:$0xff] %v561
                  %v563 = vld [vmem:[%s469 + $0x270] sm:$0xff]
                  %564 = vst [vmem:[%s470 + $0x170] sm:$0xff] %v563
                  %v565 = vld [vmem:[%s469 + $0x278] sm:$0xff]
                  %566 = vst [vmem:[%s470 + $0x178] sm:$0xff] %v565
                  %v567 = vld [vmem:[%s469 + $0x280] sm:$0xff]
                  %568 = vst [vmem:[%s470 + $0x180] sm:$0xff] %v567
                  %v569 = vld [vmem:[%s469 + $0x288] sm:$0xff]
                  %570 = vst [vmem:[%s470 + $0x188] sm:$0xff] %v569
                  %v571 = vld [vmem:[%s469 + $0x290] sm:$0xff]
                  %572 = vst [vmem:[%s470 + $0x190] sm:$0xff] %v571
                  %v573 = vld [vmem:[%s469 + $0x298] sm:$0xff]
                  %574 = vst [vmem:[%s470 + $0x198] sm:$0xff] %v573
                  %v575 = vld [vmem:[%s469 + $0x2a0] sm:$0xff]
                  %576 = vst [vmem:[%s470 + $0x1a0] sm:$0xff] %v575
                  %v577 = vld [vmem:[%s469 + $0x2a8] sm:$0xff]
                  %578 = vst [vmem:[%s470 + $0x1a8] sm:$0xff] %v577
                  %v579 = vld [vmem:[%s469 + $0x2b0] sm:$0xff]
                  %580 = vst [vmem:[%s470 + $0x1b0] sm:$0xff] %v579
                  %v581 = vld [vmem:[%s469 + $0x2b8] sm:$0xff]
                  %582 = vst [vmem:[%s470 + $0x1b8] sm:$0xff] %v581
                  %v583 = vld [vmem:[%s469 + $0x2c0] sm:$0xff]
                  %584 = vst [vmem:[%s470 + $0x1c0] sm:$0xff] %v583
                  %v585 = vld [vmem:[%s469 + $0x2c8] sm:$0xff]
                  %586 = vst [vmem:[%s470 + $0x1c8] sm:$0xff] %v585
                  %v587 = vld [vmem:[%s469 + $0x2d0] sm:$0xff]
                  %588 = vst [vmem:[%s470 + $0x1d0] sm:$0xff] %v587
                  %v589 = vld [vmem:[%s469 + $0x2d8] sm:$0xff]
                  %590 = vst [vmem:[%s470 + $0x1d8] sm:$0xff] %v589
                  %v591 = vld [vmem:[%s469 + $0x2e0] sm:$0xff]
                  %592 = vst [vmem:[%s470 + $0x1e0] sm:$0xff] %v591
                  %v593 = vld [vmem:[%s469 + $0x2e8] sm:$0xff]
                  %594 = vst [vmem:[%s470 + $0x1e8] sm:$0xff] %v593
                  %v595 = vld [vmem:[%s469 + $0x2f0] sm:$0xff]
                  %596 = vst [vmem:[%s470 + $0x1f0] sm:$0xff] %v595
                  %v597 = vld [vmem:[%s469 + $0x2f8] sm:$0xff]
                  %598 = vst [vmem:[%s470 + $0x1f8] sm:$0xff] %v597
                  %v599 = vld [vmem:[%s469 + $0x400] sm:$0xff]
                  %600 = vst [vmem:[%s470 + $0x200] sm:$0xff] %v599
                  %v601 = vld [vmem:[%s469 + $0x408] sm:$0xff]
                  %602 = vst [vmem:[%s470 + $0x208] sm:$0xff] %v601
                  %v603 = vld [vmem:[%s469 + $0x410] sm:$0xff]
                  %604 = vst [vmem:[%s470 + $0x210] sm:$0xff] %v603
                  %v605 = vld [vmem:[%s469 + $0x418] sm:$0xff]
                  %606 = vst [vmem:[%s470 + $0x218] sm:$0xff] %v605
                  %v607 = vld [vmem:[%s469 + $0x420] sm:$0xff]
                  %608 = vst [vmem:[%s470 + $0x220] sm:$0xff] %v607
                  %v609 = vld [vmem:[%s469 + $0x428] sm:$0xff]
                  %610 = vst [vmem:[%s470 + $0x228] sm:$0xff] %v609
                  %v611 = vld [vmem:[%s469 + $0x430] sm:$0xff]
                  %612 = vst [vmem:[%s470 + $0x230] sm:$0xff] %v611
                  %v613 = vld [vmem:[%s469 + $0x438] sm:$0xff]
                  %614 = vst [vmem:[%s470 + $0x238] sm:$0xff] %v613
                  %v615 = vld [vmem:[%s469 + $0x440] sm:$0xff]
                  %616 = vst [vmem:[%s470 + $0x240] sm:$0xff] %v615
                  %v617 = vld [vmem:[%s469 + $0x448] sm:$0xff]
                  %618 = vst [vmem:[%s470 + $0x248] sm:$0xff] %v617
                  %v619 = vld [vmem:[%s469 + $0x450] sm:$0xff]
                  %620 = vst [vmem:[%s470 + $0x250] sm:$0xff] %v619
                  %v621 = vld [vmem:[%s469 + $0x458] sm:$0xff]
                  %622 = vst [vmem:[%s470 + $0x258] sm:$0xff] %v621
                  %v623 = vld [vmem:[%s469 + $0x460] sm:$0xff]
                  %624 = vst [vmem:[%s470 + $0x260] sm:$0xff] %v623
                  %v625 = vld [vmem:[%s469 + $0x468] sm:$0xff]
                  %626 = vst [vmem:[%s470 + $0x268] sm:$0xff] %v625
                  %v627 = vld [vmem:[%s469 + $0x470] sm:$0xff]
                  %628 = vst [vmem:[%s470 + $0x270] sm:$0xff] %v627
                  %v629 = vld [vmem:[%s469 + $0x478] sm:$0xff]
                  %630 = vst [vmem:[%s470 + $0x278] sm:$0xff] %v629
                  %v631 = vld [vmem:[%s469 + $0x480] sm:$0xff]
                  %632 = vst [vmem:[%s470 + $0x280] sm:$0xff] %v631
                  %v633 = vld [vmem:[%s469 + $0x488] sm:$0xff]
                  %634 = vst [vmem:[%s470 + $0x288] sm:$0xff] %v633
                  %v635 = vld [vmem:[%s469 + $0x490] sm:$0xff]
                  %636 = vst [vmem:[%s470 + $0x290] sm:$0xff] %v635
                  %v637 = vld [vmem:[%s469 + $0x498] sm:$0xff]
                  %638 = vst [vmem:[%s470 + $0x298] sm:$0xff] %v637
                  %v639 = vld [vmem:[%s469 + $0x4a0] sm:$0xff]
                  %640 = vst [vmem:[%s470 + $0x2a0] sm:$0xff] %v639
                  %v641 = vld [vmem:[%s469 + $0x4a8] sm:$0xff]
                  %642 = vst [vmem:[%s470 + $0x2a8] sm:$0xff] %v641
                  %v643 = vld [vmem:[%s469 + $0x4b0] sm:$0xff]
                  %644 = vst [vmem:[%s470 + $0x2b0] sm:$0xff] %v643
                  %v645 = vld [vmem:[%s469 + $0x4b8] sm:$0xff]
                  %646 = vst [vmem:[%s470 + $0x2b8] sm:$0xff] %v645
                  %v647 = vld [vmem:[%s469 + $0x4c0] sm:$0xff]
                  %648 = vst [vmem:[%s470 + $0x2c0] sm:$0xff] %v647
                  %v649 = vld [vmem:[%s469 + $0x4c8] sm:$0xff]
                  %650 = vst [vmem:[%s470 + $0x2c8] sm:$0xff] %v649
                  %v651 = vld [vmem:[%s469 + $0x4d0] sm:$0xff]
                  %652 = vst [vmem:[%s470 + $0x2d0] sm:$0xff] %v651
                  %v653 = vld [vmem:[%s469 + $0x4d8] sm:$0xff]
                  %654 = vst [vmem:[%s470 + $0x2d8] sm:$0xff] %v653
                  %v655 = vld [vmem:[%s469 + $0x4e0] sm:$0xff]
                  %656 = vst [vmem:[%s470 + $0x2e0] sm:$0xff] %v655
                  %v657 = vld [vmem:[%s469 + $0x4e8] sm:$0xff]
                  %658 = vst [vmem:[%s470 + $0x2e8] sm:$0xff] %v657
                  %v659 = vld [vmem:[%s469 + $0x4f0] sm:$0xff]
                  %660 = vst [vmem:[%s470 + $0x2f0] sm:$0xff] %v659
                  %v661 = vld [vmem:[%s469 + $0x4f8] sm:$0xff]
                  %662 = vst [vmem:[%s470 + $0x2f8] sm:$0xff] %v661
                  %v663 = vld [vmem:[%s469 + $0x600] sm:$0xff]
                  %664 = vst [vmem:[%s470 + $0x300] sm:$0xff] %v663
                  %v665 = vld [vmem:[%s469 + $0x608] sm:$0xff]
                  %666 = vst [vmem:[%s470 + $0x308] sm:$0xff] %v665
                  %v667 = vld [vmem:[%s469 + $0x610] sm:$0xff]
                  %668 = vst [vmem:[%s470 + $0x310] sm:$0xff] %v667
                  %v669 = vld [vmem:[%s469 + $0x618] sm:$0xff]
                  %670 = vst [vmem:[%s470 + $0x318] sm:$0xff] %v669
                  %v671 = vld [vmem:[%s469 + $0x620] sm:$0xff]
                  %672 = vst [vmem:[%s470 + $0x320] sm:$0xff] %v671
                  %v673 = vld [vmem:[%s469 + $0x628] sm:$0xff]
                  %674 = vst [vmem:[%s470 + $0x328] sm:$0xff] %v673
                  %v675 = vld [vmem:[%s469 + $0x630] sm:$0xff]
                  %676 = vst [vmem:[%s470 + $0x330] sm:$0xff] %v675
                  %v677 = vld [vmem:[%s469 + $0x638] sm:$0xff]
                  %678 = vst [vmem:[%s470 + $0x338] sm:$0xff] %v677
                  %v679 = vld [vmem:[%s469 + $0x640] sm:$0xff]
                  %680 = vst [vmem:[%s470 + $0x340] sm:$0xff] %v679
                  %v681 = vld [vmem:[%s469 + $0x648] sm:$0xff]
                  %682 = vst [vmem:[%s470 + $0x348] sm:$0xff] %v681
                  %v683 = vld [vmem:[%s469 + $0x650] sm:$0xff]
                  %684 = vst [vmem:[%s470 + $0x350] sm:$0xff] %v683
                  %v685 = vld [vmem:[%s469 + $0x658] sm:$0xff]
                  %686 = vst [vmem:[%s470 + $0x358] sm:$0xff] %v685
                  %v687 = vld [vmem:[%s469 + $0x660] sm:$0xff]
                  %688 = vst [vmem:[%s470 + $0x360] sm:$0xff] %v687
                  %v689 = vld [vmem:[%s469 + $0x668] sm:$0xff]
                  %690 = vst [vmem:[%s470 + $0x368] sm:$0xff] %v689
                  %v691 = vld [vmem:[%s469 + $0x670] sm:$0xff]
                  %692 = vst [vmem:[%s470 + $0x370] sm:$0xff] %v691
                  %v693 = vld [vmem:[%s469 + $0x678] sm:$0xff]
                  %694 = vst [vmem:[%s470 + $0x378] sm:$0xff] %v693
                  %v695 = vld [vmem:[%s469 + $0x680] sm:$0xff]
                  %696 = vst [vmem:[%s470 + $0x380] sm:$0xff] %v695
                  %v697 = vld [vmem:[%s469 + $0x688] sm:$0xff]
                  %698 = vst [vmem:[%s470 + $0x388] sm:$0xff] %v697
                  %v699 = vld [vmem:[%s469 + $0x690] sm:$0xff]
                  %700 = vst [vmem:[%s470 + $0x390] sm:$0xff] %v699
                  %v701 = vld [vmem:[%s469 + $0x698] sm:$0xff]
                  %702 = vst [vmem:[%s470 + $0x398] sm:$0xff] %v701
                  %v703 = vld [vmem:[%s469 + $0x6a0] sm:$0xff]
                  %704 = vst [vmem:[%s470 + $0x3a0] sm:$0xff] %v703
                  %v705 = vld [vmem:[%s469 + $0x6a8] sm:$0xff]
                  %706 = vst [vmem:[%s470 + $0x3a8] sm:$0xff] %v705
                  %v707 = vld [vmem:[%s469 + $0x6b0] sm:$0xff]
                  %708 = vst [vmem:[%s470 + $0x3b0] sm:$0xff] %v707
                  %v709 = vld [vmem:[%s469 + $0x6b8] sm:$0xff]
                  %710 = vst [vmem:[%s470 + $0x3b8] sm:$0xff] %v709
                  %v711 = vld [vmem:[%s469 + $0x6c0] sm:$0xff]
                  %712 = vst [vmem:[%s470 + $0x3c0] sm:$0xff] %v711
                  %v713 = vld [vmem:[%s469 + $0x6c8] sm:$0xff]
                  %714 = vst [vmem:[%s470 + $0x3c8] sm:$0xff] %v713
                  %v715 = vld [vmem:[%s469 + $0x6d0] sm:$0xff]
                  %716 = vst [vmem:[%s470 + $0x3d0] sm:$0xff] %v715
                  %v717 = vld [vmem:[%s469 + $0x6d8] sm:$0xff]
                  %718 = vst [vmem:[%s470 + $0x3d8] sm:$0xff] %v717
                  %v719 = vld [vmem:[%s469 + $0x6e0] sm:$0xff]
                  %720 = vst [vmem:[%s470 + $0x3e0] sm:$0xff] %v719
                  %v721 = vld [vmem:[%s469 + $0x6e8] sm:$0xff]
                  %722 = vst [vmem:[%s470 + $0x3e8] sm:$0xff] %v721
                  %v723 = vld [vmem:[%s469 + $0x6f0] sm:$0xff]
                  %724 = vst [vmem:[%s470 + $0x3f0] sm:$0xff] %v723
                  %v725 = vld [vmem:[%s469 + $0x6f8] sm:$0xff]
                  %726 = vst [vmem:[%s470 + $0x3f8] sm:$0xff] %v725
                $region64: #{vibro_feat_forward.5} parent=58 // loop_footer
                  %s468 = sadd.s32 1, %s464
                $region65: #{vibro_feat_forward.5} parent=58 // loop_footer_branch
                  %463 = sbr.rel target = $region61
                $region66: #{vibro_feat_forward.5} parent=58 // loop_exit
                  _
              $region59: #{vibro_feat_forward.5} parent=43 // pred_fallthru
                _
              // Predicated region
              $region67: #{vibro_feat_forward.5} parent=43 // pred_check
                _
              $region68: #{vibro_feat_forward.5} parent=43 // pred_check_branch
                %728 = sbr.rel target = $region70
              $region69: #{vibro_feat_forward.5} parent=43 // pred_region
                _
              $region70: #{vibro_feat_forward.5} parent=43 // pred_fallthru
                _
            $region44: #{vibro_feat_forward.5} parent=39 // pred_fallthru
              _
            // Predicated region
            $region45: #{vibro_feat_forward.5} parent=39 // pred_check
              _
            $region46: #{vibro_feat_forward.5} parent=39 // pred_check_branch
              %194 = sbr.rel target = $region48
            $region47: #{vibro_feat_forward.5} parent=39 // pred_region
              %s196 = ssub.s32 256, 1
              loop: start=0, step=1, limit=1
              $region49: #{vibro_feat_forward.5} parent=47 // loop_pre_header
                _
              $region50: #{vibro_feat_forward.5} parent=47 // loop_header
                %s198 = sphi 0, %s202
                %p199 = scmp.ge.s32.totalorder %s198, 1
                %s203 = sphi %s188, %s188
                %s204 = sphi %s184, %s184
              $region51: #{vibro_feat_forward.5} parent=47 // loop_header_branch
                %201 = sbr.rel (%p199) target = $region55
              $region52: #{vibro_feat_forward.5} parent=47 // loop_body
                %v205 = vld [vmem:[%s203] sm:%s196]
                %206 = vst [vmem:[%s204] sm:%s196] %v205
                %v207 = vld [vmem:[%s203 + $0x8] sm:%s196]
                %208 = vst [vmem:[%s204 + $0x8] sm:%s196] %v207
                %v209 = vld [vmem:[%s203 + $0x10] sm:%s196]
                %210 = vst [vmem:[%s204 + $0x10] sm:%s196] %v209
                %v211 = vld [vmem:[%s203 + $0x18] sm:%s196]
                %212 = vst [vmem:[%s204 + $0x18] sm:%s196] %v211
                %v213 = vld [vmem:[%s203 + $0x20] sm:%s196]
                %214 = vst [vmem:[%s204 + $0x20] sm:%s196] %v213
                %v215 = vld [vmem:[%s203 + $0x28] sm:%s196]
                %216 = vst [vmem:[%s204 + $0x28] sm:%s196] %v215
                %v217 = vld [vmem:[%s203 + $0x30] sm:%s196]
                %218 = vst [vmem:[%s204 + $0x30] sm:%s196] %v217
                %v219 = vld [vmem:[%s203 + $0x38] sm:%s196]
                %220 = vst [vmem:[%s204 + $0x38] sm:%s196] %v219
                %v221 = vld [vmem:[%s203 + $0x40] sm:%s196]
                %222 = vst [vmem:[%s204 + $0x40] sm:%s196] %v221
                %v223 = vld [vmem:[%s203 + $0x48] sm:%s196]
                %224 = vst [vmem:[%s204 + $0x48] sm:%s196] %v223
                %v225 = vld [vmem:[%s203 + $0x50] sm:%s196]
                %226 = vst [vmem:[%s204 + $0x50] sm:%s196] %v225
                %v227 = vld [vmem:[%s203 + $0x58] sm:%s196]
                %228 = vst [vmem:[%s204 + $0x58] sm:%s196] %v227
                %v229 = vld [vmem:[%s203 + $0x60] sm:%s196]
                %230 = vst [vmem:[%s204 + $0x60] sm:%s196] %v229
                %v231 = vld [vmem:[%s203 + $0x68] sm:%s196]
                %232 = vst [vmem:[%s204 + $0x68] sm:%s196] %v231
                %v233 = vld [vmem:[%s203 + $0x70] sm:%s196]
                %234 = vst [vmem:[%s204 + $0x70] sm:%s196] %v233
                %v235 = vld [vmem:[%s203 + $0x78] sm:%s196]
                %236 = vst [vmem:[%s204 + $0x78] sm:%s196] %v235
                %v237 = vld [vmem:[%s203 + $0x80] sm:%s196]
                %238 = vst [vmem:[%s204 + $0x80] sm:%s196] %v237
                %v239 = vld [vmem:[%s203 + $0x88] sm:%s196]
                %240 = vst [vmem:[%s204 + $0x88] sm:%s196] %v239
                %v241 = vld [vmem:[%s203 + $0x90] sm:%s196]
                %242 = vst [vmem:[%s204 + $0x90] sm:%s196] %v241
                %v243 = vld [vmem:[%s203 + $0x98] sm:%s196]
                %244 = vst [vmem:[%s204 + $0x98] sm:%s196] %v243
                %v245 = vld [vmem:[%s203 + $0xa0] sm:%s196]
                %246 = vst [vmem:[%s204 + $0xa0] sm:%s196] %v245
                %v247 = vld [vmem:[%s203 + $0xa8] sm:%s196]
                %248 = vst [vmem:[%s204 + $0xa8] sm:%s196] %v247
                %v249 = vld [vmem:[%s203 + $0xb0] sm:%s196]
                %250 = vst [vmem:[%s204 + $0xb0] sm:%s196] %v249
                %v251 = vld [vmem:[%s203 + $0xb8] sm:%s196]
                %252 = vst [vmem:[%s204 + $0xb8] sm:%s196] %v251
                %v253 = vld [vmem:[%s203 + $0xc0] sm:%s196]
                %254 = vst [vmem:[%s204 + $0xc0] sm:%s196] %v253
                %v255 = vld [vmem:[%s203 + $0xc8] sm:%s196]
                %256 = vst [vmem:[%s204 + $0xc8] sm:%s196] %v255
                %v257 = vld [vmem:[%s203 + $0xd0] sm:%s196]
                %258 = vst [vmem:[%s204 + $0xd0] sm:%s196] %v257
                %v259 = vld [vmem:[%s203 + $0xd8] sm:%s196]
                %260 = vst [vmem:[%s204 + $0xd8] sm:%s196] %v259
                %v261 = vld [vmem:[%s203 + $0xe0] sm:%s196]
                %262 = vst [vmem:[%s204 + $0xe0] sm:%s196] %v261
                %v263 = vld [vmem:[%s203 + $0xe8] sm:%s196]
                %264 = vst [vmem:[%s204 + $0xe8] sm:%s196] %v263
                %v265 = vld [vmem:[%s203 + $0xf0] sm:%s196]
                %266 = vst [vmem:[%s204 + $0xf0] sm:%s196] %v265
                %v267 = vld [vmem:[%s203 + $0xf8] sm:%s196]
                %268 = vst [vmem:[%s204 + $0xf8] sm:%s196] %v267
                %v269 = vld [vmem:[%s203 + $0x200] sm:%s196]
                %270 = vst [vmem:[%s204 + $0x100] sm:%s196] %v269
                %v271 = vld [vmem:[%s203 + $0x208] sm:%s196]
                %272 = vst [vmem:[%s204 + $0x108] sm:%s196] %v271
                %v273 = vld [vmem:[%s203 + $0x210] sm:%s196]
                %274 = vst [vmem:[%s204 + $0x110] sm:%s196] %v273
                %v275 = vld [vmem:[%s203 + $0x218] sm:%s196]
                %276 = vst [vmem:[%s204 + $0x118] sm:%s196] %v275
                %v277 = vld [vmem:[%s203 + $0x220] sm:%s196]
                %278 = vst [vmem:[%s204 + $0x120] sm:%s196] %v277
                %v279 = vld [vmem:[%s203 + $0x228] sm:%s196]
                %280 = vst [vmem:[%s204 + $0x128] sm:%s196] %v279
                %v281 = vld [vmem:[%s203 + $0x230] sm:%s196]
                %282 = vst [vmem:[%s204 + $0x130] sm:%s196] %v281
                %v283 = vld [vmem:[%s203 + $0x238] sm:%s196]
                %284 = vst [vmem:[%s204 + $0x138] sm:%s196] %v283
                %v285 = vld [vmem:[%s203 + $0x240] sm:%s196]
                %286 = vst [vmem:[%s204 + $0x140] sm:%s196] %v285
                %v287 = vld [vmem:[%s203 + $0x248] sm:%s196]
                %288 = vst [vmem:[%s204 + $0x148] sm:%s196] %v287
                %v289 = vld [vmem:[%s203 + $0x250] sm:%s196]
                %290 = vst [vmem:[%s204 + $0x150] sm:%s196] %v289
                %v291 = vld [vmem:[%s203 + $0x258] sm:%s196]
                %292 = vst [vmem:[%s204 + $0x158] sm:%s196] %v291
                %v293 = vld [vmem:[%s203 + $0x260] sm:%s196]
                %294 = vst [vmem:[%s204 + $0x160] sm:%s196] %v293
                %v295 = vld [vmem:[%s203 + $0x268] sm:%s196]
                %296 = vst [vmem:[%s204 + $0x168] sm:%s196] %v295
                %v297 = vld [vmem:[%s203 + $0x270] sm:%s196]
                %298 = vst [vmem:[%s204 + $0x170] sm:%s196] %v297
                %v299 = vld [vmem:[%s203 + $0x278] sm:%s196]
                %300 = vst [vmem:[%s204 + $0x178] sm:%s196] %v299
                %v301 = vld [vmem:[%s203 + $0x280] sm:%s196]
                %302 = vst [vmem:[%s204 + $0x180] sm:%s196] %v301
                %v303 = vld [vmem:[%s203 + $0x288] sm:%s196]
                %304 = vst [vmem:[%s204 + $0x188] sm:%s196] %v303
                %v305 = vld [vmem:[%s203 + $0x290] sm:%s196]
                %306 = vst [vmem:[%s204 + $0x190] sm:%s196] %v305
                %v307 = vld [vmem:[%s203 + $0x298] sm:%s196]
                %308 = vst [vmem:[%s204 + $0x198] sm:%s196] %v307
                %v309 = vld [vmem:[%s203 + $0x2a0] sm:%s196]
                %310 = vst [vmem:[%s204 + $0x1a0] sm:%s196] %v309
                %v311 = vld [vmem:[%s203 + $0x2a8] sm:%s196]
                %312 = vst [vmem:[%s204 + $0x1a8] sm:%s196] %v311
                %v313 = vld [vmem:[%s203 + $0x2b0] sm:%s196]
                %314 = vst [vmem:[%s204 + $0x1b0] sm:%s196] %v313
                %v315 = vld [vmem:[%s203 + $0x2b8] sm:%s196]
                %316 = vst [vmem:[%s204 + $0x1b8] sm:%s196] %v315
                %v317 = vld [vmem:[%s203 + $0x2c0] sm:%s196]
                %318 = vst [vmem:[%s204 + $0x1c0] sm:%s196] %v317
                %v319 = vld [vmem:[%s203 + $0x2c8] sm:%s196]
                %320 = vst [vmem:[%s204 + $0x1c8] sm:%s196] %v319
                %v321 = vld [vmem:[%s203 + $0x2d0] sm:%s196]
                %322 = vst [vmem:[%s204 + $0x1d0] sm:%s196] %v321
                %v323 = vld [vmem:[%s203 + $0x2d8] sm:%s196]
                %324 = vst [vmem:[%s204 + $0x1d8] sm:%s196] %v323
                %v325 = vld [vmem:[%s203 + $0x2e0] sm:%s196]
                %326 = vst [vmem:[%s204 + $0x1e0] sm:%s196] %v325
                %v327 = vld [vmem:[%s203 + $0x2e8] sm:%s196]
                %328 = vst [vmem:[%s204 + $0x1e8] sm:%s196] %v327
                %v329 = vld [vmem:[%s203 + $0x2f0] sm:%s196]
                %330 = vst [vmem:[%s204 + $0x1f0] sm:%s196] %v329
                %v331 = vld [vmem:[%s203 + $0x2f8] sm:%s196]
                %332 = vst [vmem:[%s204 + $0x1f8] sm:%s196] %v331
                %v333 = vld [vmem:[%s203 + $0x400] sm:%s196]
                %334 = vst [vmem:[%s204 + $0x200] sm:%s196] %v333
                %v335 = vld [vmem:[%s203 + $0x408] sm:%s196]
                %336 = vst [vmem:[%s204 + $0x208] sm:%s196] %v335
                %v337 = vld [vmem:[%s203 + $0x410] sm:%s196]
                %338 = vst [vmem:[%s204 + $0x210] sm:%s196] %v337
                %v339 = vld [vmem:[%s203 + $0x418] sm:%s196]
                %340 = vst [vmem:[%s204 + $0x218] sm:%s196] %v339
                %v341 = vld [vmem:[%s203 + $0x420] sm:%s196]
                %342 = vst [vmem:[%s204 + $0x220] sm:%s196] %v341
                %v343 = vld [vmem:[%s203 + $0x428] sm:%s196]
                %344 = vst [vmem:[%s204 + $0x228] sm:%s196] %v343
                %v345 = vld [vmem:[%s203 + $0x430] sm:%s196]
                %346 = vst [vmem:[%s204 + $0x230] sm:%s196] %v345
                %v347 = vld [vmem:[%s203 + $0x438] sm:%s196]
                %348 = vst [vmem:[%s204 + $0x238] sm:%s196] %v347
                %v349 = vld [vmem:[%s203 + $0x440] sm:%s196]
                %350 = vst [vmem:[%s204 + $0x240] sm:%s196] %v349
                %v351 = vld [vmem:[%s203 + $0x448] sm:%s196]
                %352 = vst [vmem:[%s204 + $0x248] sm:%s196] %v351
                %v353 = vld [vmem:[%s203 + $0x450] sm:%s196]
                %354 = vst [vmem:[%s204 + $0x250] sm:%s196] %v353
                %v355 = vld [vmem:[%s203 + $0x458] sm:%s196]
                %356 = vst [vmem:[%s204 + $0x258] sm:%s196] %v355
                %v357 = vld [vmem:[%s203 + $0x460] sm:%s196]
                %358 = vst [vmem:[%s204 + $0x260] sm:%s196] %v357
                %v359 = vld [vmem:[%s203 + $0x468] sm:%s196]
                %360 = vst [vmem:[%s204 + $0x268] sm:%s196] %v359
                %v361 = vld [vmem:[%s203 + $0x470] sm:%s196]
                %362 = vst [vmem:[%s204 + $0x270] sm:%s196] %v361
                %v363 = vld [vmem:[%s203 + $0x478] sm:%s196]
                %364 = vst [vmem:[%s204 + $0x278] sm:%s196] %v363
                %v365 = vld [vmem:[%s203 + $0x480] sm:%s196]
                %366 = vst [vmem:[%s204 + $0x280] sm:%s196] %v365
                %v367 = vld [vmem:[%s203 + $0x488] sm:%s196]
                %368 = vst [vmem:[%s204 + $0x288] sm:%s196] %v367
                %v369 = vld [vmem:[%s203 + $0x490] sm:%s196]
                %370 = vst [vmem:[%s204 + $0x290] sm:%s196] %v369
                %v371 = vld [vmem:[%s203 + $0x498] sm:%s196]
                %372 = vst [vmem:[%s204 + $0x298] sm:%s196] %v371
                %v373 = vld [vmem:[%s203 + $0x4a0] sm:%s196]
                %374 = vst [vmem:[%s204 + $0x2a0] sm:%s196] %v373
                %v375 = vld [vmem:[%s203 + $0x4a8] sm:%s196]
                %376 = vst [vmem:[%s204 + $0x2a8] sm:%s196] %v375
                %v377 = vld [vmem:[%s203 + $0x4b0] sm:%s196]
                %378 = vst [vmem:[%s204 + $0x2b0] sm:%s196] %v377
                %v379 = vld [vmem:[%s203 + $0x4b8] sm:%s196]
                %380 = vst [vmem:[%s204 + $0x2b8] sm:%s196] %v379
                %v381 = vld [vmem:[%s203 + $0x4c0] sm:%s196]
                %382 = vst [vmem:[%s204 + $0x2c0] sm:%s196] %v381
                %v383 = vld [vmem:[%s203 + $0x4c8] sm:%s196]
                %384 = vst [vmem:[%s204 + $0x2c8] sm:%s196] %v383
                %v385 = vld [vmem:[%s203 + $0x4d0] sm:%s196]
                %386 = vst [vmem:[%s204 + $0x2d0] sm:%s196] %v385
                %v387 = vld [vmem:[%s203 + $0x4d8] sm:%s196]
                %388 = vst [vmem:[%s204 + $0x2d8] sm:%s196] %v387
                %v389 = vld [vmem:[%s203 + $0x4e0] sm:%s196]
                %390 = vst [vmem:[%s204 + $0x2e0] sm:%s196] %v389
                %v391 = vld [vmem:[%s203 + $0x4e8] sm:%s196]
                %392 = vst [vmem:[%s204 + $0x2e8] sm:%s196] %v391
                %v393 = vld [vmem:[%s203 + $0x4f0] sm:%s196]
                %394 = vst [vmem:[%s204 + $0x2f0] sm:%s196] %v393
                %v395 = vld [vmem:[%s203 + $0x4f8] sm:%s196]
                %396 = vst [vmem:[%s204 + $0x2f8] sm:%s196] %v395
                %v397 = vld [vmem:[%s203 + $0x600] sm:%s196]
                %398 = vst [vmem:[%s204 + $0x300] sm:%s196] %v397
                %v399 = vld [vmem:[%s203 + $0x608] sm:%s196]
                %400 = vst [vmem:[%s204 + $0x308] sm:%s196] %v399
                %v401 = vld [vmem:[%s203 + $0x610] sm:%s196]
                %402 = vst [vmem:[%s204 + $0x310] sm:%s196] %v401
                %v403 = vld [vmem:[%s203 + $0x618] sm:%s196]
                %404 = vst [vmem:[%s204 + $0x318] sm:%s196] %v403
                %v405 = vld [vmem:[%s203 + $0x620] sm:%s196]
                %406 = vst [vmem:[%s204 + $0x320] sm:%s196] %v405
                %v407 = vld [vmem:[%s203 + $0x628] sm:%s196]
                %408 = vst [vmem:[%s204 + $0x328] sm:%s196] %v407
                %v409 = vld [vmem:[%s203 + $0x630] sm:%s196]
                %410 = vst [vmem:[%s204 + $0x330] sm:%s196] %v409
                %v411 = vld [vmem:[%s203 + $0x638] sm:%s196]
                %412 = vst [vmem:[%s204 + $0x338] sm:%s196] %v411
                %v413 = vld [vmem:[%s203 + $0x640] sm:%s196]
                %414 = vst [vmem:[%s204 + $0x340] sm:%s196] %v413
                %v415 = vld [vmem:[%s203 + $0x648] sm:%s196]
                %416 = vst [vmem:[%s204 + $0x348] sm:%s196] %v415
                %v417 = vld [vmem:[%s203 + $0x650] sm:%s196]
                %418 = vst [vmem:[%s204 + $0x350] sm:%s196] %v417
                %v419 = vld [vmem:[%s203 + $0x658] sm:%s196]
                %420 = vst [vmem:[%s204 + $0x358] sm:%s196] %v419
                %v421 = vld [vmem:[%s203 + $0x660] sm:%s196]
                %422 = vst [vmem:[%s204 + $0x360] sm:%s196] %v421
                %v423 = vld [vmem:[%s203 + $0x668] sm:%s196]
                %424 = vst [vmem:[%s204 + $0x368] sm:%s196] %v423
                %v425 = vld [vmem:[%s203 + $0x670] sm:%s196]
                %426 = vst [vmem:[%s204 + $0x370] sm:%s196] %v425
                %v427 = vld [vmem:[%s203 + $0x678] sm:%s196]
                %428 = vst [vmem:[%s204 + $0x378] sm:%s196] %v427
                %v429 = vld [vmem:[%s203 + $0x680] sm:%s196]
                %430 = vst [vmem:[%s204 + $0x380] sm:%s196] %v429
                %v431 = vld [vmem:[%s203 + $0x688] sm:%s196]
                %432 = vst [vmem:[%s204 + $0x388] sm:%s196] %v431
                %v433 = vld [vmem:[%s203 + $0x690] sm:%s196]
                %434 = vst [vmem:[%s204 + $0x390] sm:%s196] %v433
                %v435 = vld [vmem:[%s203 + $0x698] sm:%s196]
                %436 = vst [vmem:[%s204 + $0x398] sm:%s196] %v435
                %v437 = vld [vmem:[%s203 + $0x6a0] sm:%s196]
                %438 = vst [vmem:[%s204 + $0x3a0] sm:%s196] %v437
                %v439 = vld [vmem:[%s203 + $0x6a8] sm:%s196]
                %440 = vst [vmem:[%s204 + $0x3a8] sm:%s196] %v439
                %v441 = vld [vmem:[%s203 + $0x6b0] sm:%s196]
                %442 = vst [vmem:[%s204 + $0x3b0] sm:%s196] %v441
                %v443 = vld [vmem:[%s203 + $0x6b8] sm:%s196]
                %444 = vst [vmem:[%s204 + $0x3b8] sm:%s196] %v443
                %v445 = vld [vmem:[%s203 + $0x6c0] sm:%s196]
                %446 = vst [vmem:[%s204 + $0x3c0] sm:%s196] %v445
                %v447 = vld [vmem:[%s203 + $0x6c8] sm:%s196]
                %448 = vst [vmem:[%s204 + $0x3c8] sm:%s196] %v447
                %v449 = vld [vmem:[%s203 + $0x6d0] sm:%s196]
                %450 = vst [vmem:[%s204 + $0x3d0] sm:%s196] %v449
                %v451 = vld [vmem:[%s203 + $0x6d8] sm:%s196]
                %452 = vst [vmem:[%s204 + $0x3d8] sm:%s196] %v451
                %v453 = vld [vmem:[%s203 + $0x6e0] sm:%s196]
                %454 = vst [vmem:[%s204 + $0x3e0] sm:%s196] %v453
                %v455 = vld [vmem:[%s203 + $0x6e8] sm:%s196]
                %456 = vst [vmem:[%s204 + $0x3e8] sm:%s196] %v455
                %v457 = vld [vmem:[%s203 + $0x6f0] sm:%s196]
                %458 = vst [vmem:[%s204 + $0x3f0] sm:%s196] %v457
                %v459 = vld [vmem:[%s203 + $0x6f8] sm:%s196]
                %460 = vst [vmem:[%s204 + $0x3f8] sm:%s196] %v459
              $region53: #{vibro_feat_forward.5} parent=47 // loop_footer
                %s202 = sadd.s32 1, %s198
              $region54: #{vibro_feat_forward.5} parent=47 // loop_footer_branch
                %197 = sbr.rel target = $region50
              $region55: #{vibro_feat_forward.5} parent=47 // loop_exit
                _
            $region48: #{vibro_feat_forward.5} parent=39 // pred_fallthru
              _
          $region40: #{vibro_feat_forward.5} parent=35 // pred_fallthru
            _
          %729 = vnop
        $region36: #{vibro_feat_forward.5} parent=31 // pred_fallthru
          _
      $region32: #{vibro_feat_forward.5} parent=5 // pred_fallthru
        _
      %p730 = scmp.le.s32.totalorder 1, %s11
      %p731 = scmp.lt.s32.totalorder %s11, 3
      %p732 = pnand %p730, %p731
      %p733 = pneg %p732
      // Predicated region
      $region71: #{vibro_feat_forward.5} parent=5 // pred_check
        _
      $region72: #{vibro_feat_forward.5} parent=5 // pred_check_branch
        %735 = sbr.rel (%p732) target = $region74
      $region73: #{vibro_feat_forward.5} parent=5 // pred_region
        %s736 = ssub.s32 %s11, 1
        %s737 = sand.u32 %s24, 1
        %s738 = sand.u32 %s24, 1
        %s739 = smul.addr %s738, 1024
        %s740 = scalar_lea.vmem [#allocation2], %s739
        // Predicated region
        $region75: #{vibro_feat_forward.5} parent=73 // pred_check
          %p741 = pneg %p37
        $region76: #{vibro_feat_forward.5} parent=73 // pred_check_branch
          %743 = sbr.rel (%p741) target = $region78
        $region77: #{vibro_feat_forward.5} parent=73 // pred_region
          _
        $region78: #{vibro_feat_forward.5} parent=73 // pred_fallthru
          _
        %s744 = sand.u32 %s24, 1
        %s745 = sand.u32 %s24, 1
        %s746 = smul.addr %s745, 1024
        %s747 = scalar_lea.vmem [#allocation2], %s746
        %p748 = pneg %p37
        %p749 = pneg %p34
        %p750 = pneg %p58
        %p751 = pneg %p55
        %p752 = pneg %p79
        %p753 = pneg %p76
        %p754 = pneg %p100
        %p755 = pneg %p97
        %p756 = pneg %p121
        %p757 = pneg %p118
        %p758 = pneg %p147
        %p759 = pneg %p144
        %s760 = smul.u32 32, %s16
        %p761 = scmp.lt.s32.totalorder %s760, 63
        %s762 = scalar_select %p761, %s760, 63
        %s763 = smul.addr %s762, 8
        %s764 = scalar_lea.vmem %s5, %s763
        %s765 = smul.u32 32, %s16
        %s766 = smul.u32 32, %s16
        %p767 = scmp.lt.s32.totalorder %s766, 63
        %s768 = scalar_select %p767, %s766, 63
        %s769 = smul.addr %s768, 8
        %s770 = scalar_lea.vmem %s5, %s769
        %s771 = smul.u32 32, %s16
        %v773 = vld [vmem:[%s1] sm:$0xf]
        %v774 = vld [vmem:[%s1 + $0x4] sm:$0xf]
        %v775 = vld [vmem:[%s1 + $0x8] sm:$0xf]
        %v776 = vld [vmem:[%s1 + $0xc] sm:$0xf]
        %v777 = vld [vmem:[%s1 + $0x10] sm:$0xf]
        %v778 = vld [vmem:[%s1 + $0x14] sm:$0xf]
        %v779 = vld [vmem:[%s1 + $0x18] sm:$0xf]
        %v780 = vld [vmem:[%s1 + $0x1c] sm:$0xf]
        %v781 = vld [vmem:[%s1 + $0x20] sm:$0xf]
        %v782 = vld [vmem:[%s1 + $0x24] sm:$0xf]
        %v783 = vld [vmem:[%s1 + $0x28] sm:$0xf]
        %v784 = vld [vmem:[%s1 + $0x2c] sm:$0xf]
        %v785 = vld [vmem:[%s1 + $0x30] sm:$0xf]
        %v786 = vld [vmem:[%s1 + $0x34] sm:$0xf]
        %v787 = vld [vmem:[%s1 + $0x38] sm:$0xf]
        %v788 = vld [vmem:[%s1 + $0x3c] sm:$0xf]
        %v789 = vld [vmem:[%s1 + $0x40] sm:$0xf]
        %v790 = vld [vmem:[%s1 + $0x44] sm:$0xf]
        %v791 = vld [vmem:[%s2] sm:$0x1]
        %v792 = vld [vmem:[%s3] sm:$0x1]
        %v793 = vld [vmem:[%s4] sm:$0x1]
        %v794 = vld [vmem:[%s740] sm:$0xff]
        %v795 = vld [vmem:[%s740 + $0x8] sm:$0xff]
        %v796 = vld [vmem:[%s740 + $0x10] sm:$0xff]
        %v797 = vld [vmem:[%s740 + $0x18] sm:$0xff]
        %v798 = vld [vmem:[%s740 + $0x20] sm:$0xff]
        %v799 = vld [vmem:[%s740 + $0x28] sm:$0xff]
        %v800 = vld [vmem:[%s740 + $0x30] sm:$0xff]
        %v801 = vld [vmem:[%s740 + $0x38] sm:$0xff]
        %v802 = vld [vmem:[%s740 + $0x40] sm:$0xff]
        %v803 = vld [vmem:[%s740 + $0x48] sm:$0xff]
        %v804 = vld [vmem:[%s740 + $0x50] sm:$0xff]
        %v805 = vld [vmem:[%s740 + $0x58] sm:$0xff]
        %v806 = vld [vmem:[%s740 + $0x60] sm:$0xff]
        %v807 = vld [vmem:[%s740 + $0x68] sm:$0xff]
        %v808 = vld [vmem:[%s740 + $0x70] sm:$0xff]
        %v809 = vld [vmem:[%s740 + $0x78] sm:$0xff]
        %v810 = vld [vmem:[%s740 + $0x80] sm:$0xff]
        %v811 = vld [vmem:[%s740 + $0x88] sm:$0xff]
        %v812 = vld [vmem:[%s740 + $0x90] sm:$0xff]
        %v813 = vld [vmem:[%s740 + $0x98] sm:$0xff]
        %v814 = vld [vmem:[%s740 + $0xa0] sm:$0xff]
        %v815 = vld [vmem:[%s740 + $0xa8] sm:$0xff]
        %v816 = vld [vmem:[%s740 + $0xb0] sm:$0xff]
        %v817 = vld [vmem:[%s740 + $0xb8] sm:$0xff]
        %v818 = vld [vmem:[%s740 + $0xc0] sm:$0xff]
        %v819 = vld [vmem:[%s740 + $0xc8] sm:$0xff]
        %v820 = vld [vmem:[%s740 + $0xd0] sm:$0xff]
        %v821 = vld [vmem:[%s740 + $0xd8] sm:$0xff]
        %v822 = vld [vmem:[%s740 + $0xe0] sm:$0xff]
        %v823 = vld [vmem:[%s740 + $0xe8] sm:$0xff]
        %v824 = vld [vmem:[%s740 + $0xf0] sm:$0xff]
        %v825 = vld [vmem:[%s740 + $0xf8] sm:$0xff]
        %v827 = vlaneseq
        %v828 = vshrl.u32 %v827, 7
        %v829 = vsub.s32 0, %v828
        %v830 = vrot.slane %v791, %v829
        %v864 = vunpack.c.l.b16 %v794
        %v865 = vunpack.c.h.b16 %v794
        %v866 = vunpack.c.l.b16 %v795
        %v867 = vunpack.c.h.b16 %v795
        %v868 = vunpack.c.l.b16 %v796
        %v869 = vunpack.c.h.b16 %v796
        %v870 = vunpack.c.l.b16 %v797
        %v871 = vunpack.c.h.b16 %v797
        %v872 = vunpack.c.l.b16 %v798
        %v873 = vunpack.c.h.b16 %v798
        %v874 = vunpack.c.l.b16 %v799
        %v875 = vunpack.c.h.b16 %v799
        %v876 = vunpack.c.l.b16 %v800
        %v877 = vunpack.c.h.b16 %v800
        %v878 = vunpack.c.l.b16 %v801
        %v879 = vunpack.c.h.b16 %v801
        %v880 = vunpack.c.l.b16 %v802
        %v881 = vunpack.c.h.b16 %v802
        %v882 = vunpack.c.l.b16 %v803
        %v883 = vunpack.c.h.b16 %v803
        %v884 = vunpack.c.l.b16 %v804
        %v885 = vunpack.c.h.b16 %v804
        %v886 = vunpack.c.l.b16 %v805
        %v887 = vunpack.c.h.b16 %v805
        %v888 = vunpack.c.l.b16 %v806
        %v889 = vunpack.c.h.b16 %v806
        %v890 = vunpack.c.l.b16 %v807
        %v891 = vunpack.c.h.b16 %v807
        %v892 = vunpack.c.l.b16 %v808
        %v893 = vunpack.c.h.b16 %v808
        %v894 = vunpack.c.l.b16 %v809
        %v895 = vunpack.c.h.b16 %v809
        %v896 = vunpack.c.l.b16 %v810
        %v897 = vunpack.c.h.b16 %v810
        %v898 = vunpack.c.l.b16 %v811
        %v899 = vunpack.c.h.b16 %v811
        %v900 = vunpack.c.l.b16 %v812
        %v901 = vunpack.c.h.b16 %v812
        %v902 = vunpack.c.l.b16 %v813
        %v903 = vunpack.c.h.b16 %v813
        %v904 = vunpack.c.l.b16 %v814
        %v905 = vunpack.c.h.b16 %v814
        %v906 = vunpack.c.l.b16 %v815
        %v907 = vunpack.c.h.b16 %v815
        %v908 = vunpack.c.l.b16 %v816
        %v909 = vunpack.c.h.b16 %v816
        %v910 = vunpack.c.l.b16 %v817
        %v911 = vunpack.c.h.b16 %v817
        %v912 = vunpack.c.l.b16 %v818
        %v913 = vunpack.c.h.b16 %v818
        %v914 = vunpack.c.l.b16 %v819
        %v915 = vunpack.c.h.b16 %v819
        %v916 = vunpack.c.l.b16 %v820
        %v917 = vunpack.c.h.b16 %v820
        %v918 = vunpack.c.l.b16 %v821
        %v919 = vunpack.c.h.b16 %v821
        %v920 = vunpack.c.l.b16 %v822
        %v921 = vunpack.c.h.b16 %v822
        %v922 = vunpack.c.l.b16 %v823
        %v923 = vunpack.c.h.b16 %v823
        %v924 = vunpack.c.l.b16 %v824
        %v925 = vunpack.c.h.b16 %v824
        %v926 = vunpack.c.l.b16 %v825
        %v927 = vunpack.c.h.b16 %v825
        %v928 = vpack.c.b16 %v866, %v864
        %v929 = vpack.c.b16 %v867, %v865
        %v930 = vpack.c.b16 %v870, %v868
        %v931 = vpack.c.b16 %v871, %v869
        %v932 = vpack.c.b16 %v874, %v872
        %v933 = vpack.c.b16 %v875, %v873
        %v934 = vpack.c.b16 %v878, %v876
        %v935 = vpack.c.b16 %v879, %v877
        %v936 = vpack.c.b16 %v882, %v880
        %v937 = vpack.c.b16 %v883, %v881
        %v938 = vpack.c.b16 %v886, %v884
        %v939 = vpack.c.b16 %v887, %v885
        %v940 = vpack.c.b16 %v890, %v888
        %v941 = vpack.c.b16 %v891, %v889
        %v942 = vpack.c.b16 %v894, %v892
        %v943 = vpack.c.b16 %v895, %v893
        %v944 = vpack.c.b16 %v898, %v896
        %v945 = vpack.c.b16 %v899, %v897
        %v946 = vpack.c.b16 %v902, %v900
        %v947 = vpack.c.b16 %v903, %v901
        %v948 = vpack.c.b16 %v906, %v904
        %v949 = vpack.c.b16 %v907, %v905
        %v950 = vpack.c.b16 %v910, %v908
        %v951 = vpack.c.b16 %v911, %v909
        %v952 = vpack.c.b16 %v914, %v912
        %v953 = vpack.c.b16 %v915, %v913
        %v954 = vpack.c.b16 %v918, %v916
        %v955 = vpack.c.b16 %v919, %v917
        %v956 = vpack.c.b16 %v922, %v920
        %v957 = vpack.c.b16 %v923, %v921
        %v958 = vpack.c.b16 %v926, %v924
        %v959 = vpack.c.b16 %v927, %v925
        %v994 = vunpack.c.l.b16 %v773
        %v995 = vunpack.c.l.b16 %v774
        %v996 = vunpack.c.l.b16 %v775
        %v997 = vunpack.c.l.b16 %v776
        %v998 = vunpack.c.l.b16 %v777
        %v999 = vunpack.c.l.b16 %v778
        %v1000 = vunpack.c.l.b16 %v779
        %v1001 = vunpack.c.l.b16 %v780
        %v1002 = vunpack.c.l.b16 %v781
        %v1003 = vunpack.c.l.b16 %v782
        %v1004 = vunpack.c.l.b16 %v783
        %v1005 = vunpack.c.l.b16 %v784
        %v1006 = vunpack.c.l.b16 %v785
        %v1007 = vunpack.c.l.b16 %v786
        %v1008 = vunpack.c.l.b16 %v787
        %v1009 = vunpack.c.l.b16 %v788
        %v1010 = vunpack.c.l.b16 %v789
        %v1011 = vunpack.c.l.b16 %v790
        %v1012 = vpack.c.b16 %v995, %v994
        %v1013 = vpack.c.b16 %v997, %v996
        %v1014 = vpack.c.b16 %v999, %v998
        %v1015 = vpack.c.b16 %v1001, %v1000
        %v1016 = vpack.c.b16 %v1003, %v1002
        %v1017 = vpack.c.b16 %v1005, %v1004
        %v1018 = vpack.c.b16 %v1007, %v1006
        %v1019 = vpack.c.b16 %v1009, %v1008
        %v1020 = vpack.c.b16 %v1011, %v1010
        %vm1030 = vcmask 130048
        %v1032 = vsel %vm1030, %v929, 0
        %v1035 = vsel %vm1030, %v931, 0
        %v1038 = vsel %vm1030, %v933, 0
        %v1041 = vsel %vm1030, %v935, 0
        %v1044 = vsel %vm1030, %v937, 0
        %v1047 = vsel %vm1030, %v939, 0
        %v1050 = vsel %vm1030, %v941, 0
        %v1053 = vsel %vm1030, %v943, 0
        %v1056 = vsel %vm1030, %v945, 0
        %v1059 = vsel %vm1030, %v947, 0
        %v1062 = vsel %vm1030, %v949, 0
        %v1065 = vsel %vm1030, %v951, 0
        %v1068 = vsel %vm1030, %v953, 0
        %v1071 = vsel %vm1030, %v955, 0
        %v1074 = vsel %vm1030, %v957, 0
        %v1077 = vsel %vm1030, %v959, 0
        %1079 = vmatprep.subr.bf16.mxu0 0
        %1080 = vmatpush1.bf16.msra.mxu0 %v1019
        %1081 = vmatprep.subr.bf16.mxu0 0
        %1082 = vmatpush1.bf16.msra.mxu0 %v1018
        %1083 = vmatprep.subr.bf16.mxu0 0
        %1084 = vmatpush1.bf16.msra.mxu0 %v1017
        %1085 = vmatprep.subr.bf16.mxu0 0
        %1086 = vmatpush1.bf16.msra.mxu0 %v1016
        %1087 = vmatprep.subr.bf16.mxu0 0
        %1088 = vmatpush1.bf16.msra.mxu0 %v1015
        %1089 = vmatprep.subr.bf16.mxu0 0
        %1090 = vmatpush1.bf16.msra.mxu0 %v1014
        %1091 = vmatprep.subr.bf16.mxu0 0
        %1092 = vmatpush1.bf16.msra.mxu0 %v1013
        %1093 = vmatprep.subr.bf16.mxu0 0
        %1094 = vmatpush1.bf16.msra.mxu0 %v1012
        %1095 = vmatprep.subr.bf16.mxu0 0
        %1096 = vmatpush2.bf16.msra.mxu0 0
        %1097 = vmatprep.subr.bf16.mxu0 0
        %1098 = vmatpush2.bf16.msra.mxu0 0
        %1099 = vmatprep.subr.bf16.mxu0 0
        %1100 = vmatpush2.bf16.msra.mxu0 0
        %1101 = vmatprep.subr.bf16.mxu0 0
        %1102 = vmatpush2.bf16.msra.mxu0 0
        %1103 = vmatprep.subr.bf16.mxu0 0
        %1104 = vmatpush2.bf16.msra.mxu0 0
        %1105 = vmatprep.subr.bf16.mxu0 0
        %1106 = vmatpush2.bf16.msra.mxu0 0
        %1107 = vmatprep.subr.bf16.mxu0 0
        %1108 = vmatpush2.bf16.msra.mxu0 0
        %1109 = vmatprep.subr.bf16.mxu0 0
        %1110 = vmatpush2.bf16.msra.mxu0 %v1020
        %1111 = vmatprep.mubr.bf16.mxu0 %v1032
        %1112 = vmatmul.mubr.bf16.gmra.mxu0 %v928
        %v1113 = vpop.f32.mrf.mxu0
        %v1114 = vadd.f32 %v830, %v1113
        %v1115 = vpop.f32.mrf.mxu0
        %v1116 = vpop.f32.mrf.mxu0
        %v1117 = vadd.f32 %v830, %v1116
        %v1118 = vpop.f32.mrf.mxu0
        %1119 = vmatprep.mubr.bf16.mxu0 %v1035
        %1120 = vmatmul.mubr.bf16.gmra.mxu0 %v930
        %v1121 = vpop.f32.mrf.mxu0
        %v1122 = vadd.f32 %v830, %v1121
        %v1123 = vpop.f32.mrf.mxu0
        %v1124 = vpop.f32.mrf.mxu0
        %v1125 = vadd.f32 %v830, %v1124
        %v1126 = vpop.f32.mrf.mxu0
        %1127 = vmatprep.mubr.bf16.mxu0 %v1038
        %1128 = vmatmul.mubr.bf16.gmra.mxu0 %v932
        %v1129 = vpop.f32.mrf.mxu0
        %v1130 = vadd.f32 %v830, %v1129
        %v1131 = vpop.f32.mrf.mxu0
        %v1132 = vpop.f32.mrf.mxu0
        %v1133 = vadd.f32 %v830, %v1132
        %v1134 = vpop.f32.mrf.mxu0
        %1135 = vmatprep.mubr.bf16.mxu0 %v1041
        %1136 = vmatmul.mubr.bf16.gmra.mxu0 %v934
        %v1137 = vpop.f32.mrf.mxu0
        %v1138 = vadd.f32 %v830, %v1137
        %v1139 = vpop.f32.mrf.mxu0
        %v1140 = vpop.f32.mrf.mxu0
        %v1141 = vadd.f32 %v830, %v1140
        %v1142 = vpop.f32.mrf.mxu0
        %1143 = vmatprep.mubr.bf16.mxu0 %v1044
        %1144 = vmatmul.mubr.bf16.gmra.mxu0 %v936
        %v1145 = vpop.f32.mrf.mxu0
        %v1146 = vadd.f32 %v830, %v1145
        %v1147 = vpop.f32.mrf.mxu0
        %v1148 = vpop.f32.mrf.mxu0
        %v1149 = vadd.f32 %v830, %v1148
        %v1150 = vpop.f32.mrf.mxu0
        %1151 = vmatprep.mubr.bf16.mxu0 %v1047
        %1152 = vmatmul.mubr.bf16.gmra.mxu0 %v938
        %v1153 = vpop.f32.mrf.mxu0
        %v1154 = vadd.f32 %v830, %v1153
        %v1155 = vpop.f32.mrf.mxu0
        %v1156 = vpop.f32.mrf.mxu0
        %v1157 = vadd.f32 %v830, %v1156
        %v1158 = vpop.f32.mrf.mxu0
        %1159 = vmatprep.mubr.bf16.mxu0 %v1050
        %1160 = vmatmul.mubr.bf16.gmra.mxu0 %v940
        %v1161 = vpop.f32.mrf.mxu0
        %v1162 = vadd.f32 %v830, %v1161
        %v1163 = vpop.f32.mrf.mxu0
        %v1164 = vpop.f32.mrf.mxu0
        %v1165 = vadd.f32 %v830, %v1164
        %v1166 = vpop.f32.mrf.mxu0
        %1167 = vmatprep.mubr.bf16.mxu0 %v1053
        %1168 = vmatmul.mubr.bf16.gmra.mxu0 %v942
        %v1169 = vpop.f32.mrf.mxu0
        %v1170 = vadd.f32 %v830, %v1169
        %v1171 = vpop.f32.mrf.mxu0
        %v1172 = vpop.f32.mrf.mxu0
        %v1173 = vadd.f32 %v830, %v1172
        %v1174 = vpop.f32.mrf.mxu0
        %1175 = vmatprep.mubr.bf16.mxu0 %v1056
        %1176 = vmatmul.mubr.bf16.gmra.mxu0 %v944
        %v1177 = vpop.f32.mrf.mxu0
        %v1178 = vadd.f32 %v830, %v1177
        %v1179 = vpop.f32.mrf.mxu0
        %v1180 = vpop.f32.mrf.mxu0
        %v1181 = vadd.f32 %v830, %v1180
        %v1182 = vpop.f32.mrf.mxu0
        %1183 = vmatprep.mubr.bf16.mxu0 %v1059
        %1184 = vmatmul.mubr.bf16.gmra.mxu0 %v946
        %v1185 = vpop.f32.mrf.mxu0
        %v1186 = vadd.f32 %v830, %v1185
        %v1187 = vpop.f32.mrf.mxu0
        %v1188 = vpop.f32.mrf.mxu0
        %v1189 = vadd.f32 %v830, %v1188
        %v1190 = vpop.f32.mrf.mxu0
        %1191 = vmatprep.mubr.bf16.mxu0 %v1062
        %1192 = vmatmul.mubr.bf16.gmra.mxu0 %v948
        %v1193 = vpop.f32.mrf.mxu0
        %v1194 = vadd.f32 %v830, %v1193
        %v1195 = vpop.f32.mrf.mxu0
        %v1196 = vpop.f32.mrf.mxu0
        %v1197 = vadd.f32 %v830, %v1196
        %v1198 = vpop.f32.mrf.mxu0
        %1199 = vmatprep.mubr.bf16.mxu0 %v1065
        %1200 = vmatmul.mubr.bf16.gmra.mxu0 %v950
        %v1201 = vpop.f32.mrf.mxu0
        %v1202 = vadd.f32 %v830, %v1201
        %v1203 = vpop.f32.mrf.mxu0
        %v1204 = vpop.f32.mrf.mxu0
        %v1205 = vadd.f32 %v830, %v1204
        %v1206 = vpop.f32.mrf.mxu0
        %1207 = vmatprep.mubr.bf16.mxu0 %v1068
        %1208 = vmatmul.mubr.bf16.gmra.mxu0 %v952
        %v1209 = vpop.f32.mrf.mxu0
        %v1210 = vadd.f32 %v830, %v1209
        %v1211 = vpop.f32.mrf.mxu0
        %v1212 = vpop.f32.mrf.mxu0
        %v1213 = vadd.f32 %v830, %v1212
        %v1214 = vpop.f32.mrf.mxu0
        %1215 = vmatprep.mubr.bf16.mxu0 %v1071
        %1216 = vmatmul.mubr.bf16.gmra.mxu0 %v954
        %v1217 = vpop.f32.mrf.mxu0
        %v1218 = vadd.f32 %v830, %v1217
        %v1219 = vpop.f32.mrf.mxu0
        %v1220 = vpop.f32.mrf.mxu0
        %v1221 = vadd.f32 %v830, %v1220
        %v1222 = vpop.f32.mrf.mxu0
        %1223 = vmatprep.mubr.bf16.mxu0 %v1074
        %1224 = vmatmul.mubr.bf16.gmra.mxu0 %v956
        %v1225 = vpop.f32.mrf.mxu0
        %v1226 = vadd.f32 %v830, %v1225
        %v1227 = vpop.f32.mrf.mxu0
        %v1228 = vpop.f32.mrf.mxu0
        %v1229 = vadd.f32 %v830, %v1228
        %v1230 = vpop.f32.mrf.mxu0
        %1231 = vmatprep.mubr.bf16.mxu0 %v1077
        %1232 = vmatmul.mubr.bf16.gmra.mxu0 %v958
        %v1233 = vpop.f32.mrf.mxu0
        %v1234 = vadd.f32 %v830, %v1233
        %v1235 = vpop.f32.mrf.mxu0
        %v1236 = vpop.f32.mrf.mxu0
        %v1237 = vadd.f32 %v830, %v1236
        %v1238 = vpop.f32.mrf.mxu0
        %1239 = vdwg.mxu0
        %v1240 = vmax.f32 %v1114, 0.0
        %v1241 = vmax.f32 %v1117, 0.0
        %v1242 = vmax.f32 %v1122, 0.0
        %v1243 = vmax.f32 %v1125, 0.0
        %v1244 = vmax.f32 %v1130, 0.0
        %v1245 = vmax.f32 %v1133, 0.0
        %v1246 = vmax.f32 %v1138, 0.0
        %v1247 = vmax.f32 %v1141, 0.0
        %v1248 = vmax.f32 %v1146, 0.0
        %v1249 = vmax.f32 %v1149, 0.0
        %v1250 = vmax.f32 %v1154, 0.0
        %v1251 = vmax.f32 %v1157, 0.0
        %v1252 = vmax.f32 %v1162, 0.0
        %v1253 = vmax.f32 %v1165, 0.0
        %v1254 = vmax.f32 %v1170, 0.0
        %v1255 = vmax.f32 %v1173, 0.0
        %v1256 = vmax.f32 %v1178, 0.0
        %v1257 = vmax.f32 %v1181, 0.0
        %v1258 = vmax.f32 %v1186, 0.0
        %v1259 = vmax.f32 %v1189, 0.0
        %v1260 = vmax.f32 %v1194, 0.0
        %v1261 = vmax.f32 %v1197, 0.0
        %v1262 = vmax.f32 %v1202, 0.0
        %v1263 = vmax.f32 %v1205, 0.0
        %v1264 = vmax.f32 %v1210, 0.0
        %v1265 = vmax.f32 %v1213, 0.0
        %v1266 = vmax.f32 %v1218, 0.0
        %v1267 = vmax.f32 %v1221, 0.0
        %v1268 = vmax.f32 %v1226, 0.0
        %v1269 = vmax.f32 %v1229, 0.0
        %v1270 = vmax.f32 %v1234, 0.0
        %v1271 = vmax.f32 %v1237, 0.0
        %v1273 = vlaneseq
        %v1274 = vshrl.u32 %v1273, 7
        %v1275 = vsub.s32 0, %v1274
        %v1276 = vrot.slane %v792, %v1275
        %v1278 = vmul.f32 %v1240, %v1276
        %v1279 = vmul.f32 %v1241, %v1276
        %v1280 = vmul.f32 %v1242, %v1276
        %v1281 = vmul.f32 %v1243, %v1276
        %v1282 = vmul.f32 %v1244, %v1276
        %v1283 = vmul.f32 %v1245, %v1276
        %v1284 = vmul.f32 %v1246, %v1276
        %v1285 = vmul.f32 %v1247, %v1276
        %v1286 = vmul.f32 %v1248, %v1276
        %v1287 = vmul.f32 %v1249, %v1276
        %v1288 = vmul.f32 %v1250, %v1276
        %v1289 = vmul.f32 %v1251, %v1276
        %v1290 = vmul.f32 %v1252, %v1276
        %v1291 = vmul.f32 %v1253, %v1276
        %v1292 = vmul.f32 %v1254, %v1276
        %v1293 = vmul.f32 %v1255, %v1276
        %v1294 = vmul.f32 %v1256, %v1276
        %v1295 = vmul.f32 %v1257, %v1276
        %v1296 = vmul.f32 %v1258, %v1276
        %v1297 = vmul.f32 %v1259, %v1276
        %v1298 = vmul.f32 %v1260, %v1276
        %v1299 = vmul.f32 %v1261, %v1276
        %v1300 = vmul.f32 %v1262, %v1276
        %v1301 = vmul.f32 %v1263, %v1276
        %v1302 = vmul.f32 %v1264, %v1276
        %v1303 = vmul.f32 %v1265, %v1276
        %v1304 = vmul.f32 %v1266, %v1276
        %v1305 = vmul.f32 %v1267, %v1276
        %v1306 = vmul.f32 %v1268, %v1276
        %v1307 = vmul.f32 %v1269, %v1276
        %v1308 = vmul.f32 %v1270, %v1276
        %v1309 = vmul.f32 %v1271, %v1276
        %v1311 = vlaneseq
        %v1312 = vshrl.u32 %v1311, 7
        %v1313 = vsub.s32 0, %v1312
        %v1314 = vrot.slane %v793, %v1313
        %v1316 = vadd.f32 %v1278, %v1314
        %v1317 = vadd.f32 %v1279, %v1314
        %v1318 = vadd.f32 %v1280, %v1314
        %v1319 = vadd.f32 %v1281, %v1314
        %v1320 = vadd.f32 %v1282, %v1314
        %v1321 = vadd.f32 %v1283, %v1314
        %v1322 = vadd.f32 %v1284, %v1314
        %v1323 = vadd.f32 %v1285, %v1314
        %v1324 = vadd.f32 %v1286, %v1314
        %v1325 = vadd.f32 %v1287, %v1314
        %v1326 = vadd.f32 %v1288, %v1314
        %v1327 = vadd.f32 %v1289, %v1314
        %v1328 = vadd.f32 %v1290, %v1314
        %v1329 = vadd.f32 %v1291, %v1314
        %v1330 = vadd.f32 %v1292, %v1314
        %v1331 = vadd.f32 %v1293, %v1314
        %v1332 = vadd.f32 %v1294, %v1314
        %v1333 = vadd.f32 %v1295, %v1314
        %v1334 = vadd.f32 %v1296, %v1314
        %v1335 = vadd.f32 %v1297, %v1314
        %v1336 = vadd.f32 %v1298, %v1314
        %v1337 = vadd.f32 %v1299, %v1314
        %v1338 = vadd.f32 %v1300, %v1314
        %v1339 = vadd.f32 %v1301, %v1314
        %v1340 = vadd.f32 %v1302, %v1314
        %v1341 = vadd.f32 %v1303, %v1314
        %v1342 = vadd.f32 %v1304, %v1314
        %v1343 = vadd.f32 %v1305, %v1314
        %v1344 = vadd.f32 %v1306, %v1314
        %v1345 = vadd.f32 %v1307, %v1314
        %v1346 = vadd.f32 %v1308, %v1314
        %v1347 = vadd.f32 %v1309, %v1314
        %s1348 = scalar_lea.vmem %s740, 256 [#allocation2]
        %v1349 = vld [vmem:[%s1348] sm:$0xff]
        %v1350 = vld [vmem:[%s1348 + $0x8] sm:$0xff]
        %v1351 = vld [vmem:[%s1348 + $0x10] sm:$0xff]
        %v1352 = vld [vmem:[%s1348 + $0x18] sm:$0xff]
        %v1353 = vld [vmem:[%s1348 + $0x20] sm:$0xff]
        %v1354 = vld [vmem:[%s1348 + $0x28] sm:$0xff]
        %v1355 = vld [vmem:[%s1348 + $0x30] sm:$0xff]
        %v1356 = vld [vmem:[%s1348 + $0x38] sm:$0xff]
        %v1357 = vld [vmem:[%s1348 + $0x40] sm:$0xff]
        %v1358 = vld [vmem:[%s1348 + $0x48] sm:$0xff]
        %v1359 = vld [vmem:[%s1348 + $0x50] sm:$0xff]
        %v1360 = vld [vmem:[%s1348 + $0x58] sm:$0xff]
        %v1361 = vld [vmem:[%s1348 + $0x60] sm:$0xff]
        %v1362 = vld [vmem:[%s1348 + $0x68] sm:$0xff]
        %v1363 = vld [vmem:[%s1348 + $0x70] sm:$0xff]
        %v1364 = vld [vmem:[%s1348 + $0x78] sm:$0xff]
        %v1365 = vld [vmem:[%s1348 + $0x80] sm:$0xff]
        %v1366 = vld [vmem:[%s1348 + $0x88] sm:$0xff]
        %v1367 = vld [vmem:[%s1348 + $0x90] sm:$0xff]
        %v1368 = vld [vmem:[%s1348 + $0x98] sm:$0xff]
        %v1369 = vld [vmem:[%s1348 + $0xa0] sm:$0xff]
        %v1370 = vld [vmem:[%s1348 + $0xa8] sm:$0xff]
        %v1371 = vld [vmem:[%s1348 + $0xb0] sm:$0xff]
        %v1372 = vld [vmem:[%s1348 + $0xb8] sm:$0xff]
        %v1373 = vld [vmem:[%s1348 + $0xc0] sm:$0xff]
        %v1374 = vld [vmem:[%s1348 + $0xc8] sm:$0xff]
        %v1375 = vld [vmem:[%s1348 + $0xd0] sm:$0xff]
        %v1376 = vld [vmem:[%s1348 + $0xd8] sm:$0xff]
        %v1377 = vld [vmem:[%s1348 + $0xe0] sm:$0xff]
        %v1378 = vld [vmem:[%s1348 + $0xe8] sm:$0xff]
        %v1379 = vld [vmem:[%s1348 + $0xf0] sm:$0xff]
        %v1380 = vld [vmem:[%s1348 + $0xf8] sm:$0xff]
        %v1413 = vunpack.c.l.b16 %v1349
        %v1414 = vunpack.c.h.b16 %v1349
        %v1415 = vunpack.c.l.b16 %v1350
        %v1416 = vunpack.c.h.b16 %v1350
        %v1417 = vunpack.c.l.b16 %v1351
        %v1418 = vunpack.c.h.b16 %v1351
        %v1419 = vunpack.c.l.b16 %v1352
        %v1420 = vunpack.c.h.b16 %v1352
        %v1421 = vunpack.c.l.b16 %v1353
        %v1422 = vunpack.c.h.b16 %v1353
        %v1423 = vunpack.c.l.b16 %v1354
        %v1424 = vunpack.c.h.b16 %v1354
        %v1425 = vunpack.c.l.b16 %v1355
        %v1426 = vunpack.c.h.b16 %v1355
        %v1427 = vunpack.c.l.b16 %v1356
        %v1428 = vunpack.c.h.b16 %v1356
        %v1429 = vunpack.c.l.b16 %v1357
        %v1430 = vunpack.c.h.b16 %v1357
        %v1431 = vunpack.c.l.b16 %v1358
        %v1432 = vunpack.c.h.b16 %v1358
        %v1433 = vunpack.c.l.b16 %v1359
        %v1434 = vunpack.c.h.b16 %v1359
        %v1435 = vunpack.c.l.b16 %v1360
        %v1436 = vunpack.c.h.b16 %v1360
        %v1437 = vunpack.c.l.b16 %v1361
        %v1438 = vunpack.c.h.b16 %v1361
        %v1439 = vunpack.c.l.b16 %v1362
        %v1440 = vunpack.c.h.b16 %v1362
        %v1441 = vunpack.c.l.b16 %v1363
        %v1442 = vunpack.c.h.b16 %v1363
        %v1443 = vunpack.c.l.b16 %v1364
        %v1444 = vunpack.c.h.b16 %v1364
        %v1445 = vunpack.c.l.b16 %v1365
        %v1446 = vunpack.c.h.b16 %v1365
        %v1447 = vunpack.c.l.b16 %v1366
        %v1448 = vunpack.c.h.b16 %v1366
        %v1449 = vunpack.c.l.b16 %v1367
        %v1450 = vunpack.c.h.b16 %v1367
        %v1451 = vunpack.c.l.b16 %v1368
        %v1452 = vunpack.c.h.b16 %v1368
        %v1453 = vunpack.c.l.b16 %v1369
        %v1454 = vunpack.c.h.b16 %v1369
        %v1455 = vunpack.c.l.b16 %v1370
        %v1456 = vunpack.c.h.b16 %v1370
        %v1457 = vunpack.c.l.b16 %v1371
        %v1458 = vunpack.c.h.b16 %v1371
        %v1459 = vunpack.c.l.b16 %v1372
        %v1460 = vunpack.c.h.b16 %v1372
        %v1461 = vunpack.c.l.b16 %v1373
        %v1462 = vunpack.c.h.b16 %v1373
        %v1463 = vunpack.c.l.b16 %v1374
        %v1464 = vunpack.c.h.b16 %v1374
        %v1465 = vunpack.c.l.b16 %v1375
        %v1466 = vunpack.c.h.b16 %v1375
        %v1467 = vunpack.c.l.b16 %v1376
        %v1468 = vunpack.c.h.b16 %v1376
        %v1469 = vunpack.c.l.b16 %v1377
        %v1470 = vunpack.c.h.b16 %v1377
        %v1471 = vunpack.c.l.b16 %v1378
        %v1472 = vunpack.c.h.b16 %v1378
        %v1473 = vunpack.c.l.b16 %v1379
        %v1474 = vunpack.c.h.b16 %v1379
        %v1475 = vunpack.c.l.b16 %v1380
        %v1476 = vunpack.c.h.b16 %v1380
        %v1477 = vpack.c.b16 %v1415, %v1413
        %v1478 = vpack.c.b16 %v1416, %v1414
        %v1479 = vpack.c.b16 %v1419, %v1417
        %v1480 = vpack.c.b16 %v1420, %v1418
        %v1481 = vpack.c.b16 %v1423, %v1421
        %v1482 = vpack.c.b16 %v1424, %v1422
        %v1483 = vpack.c.b16 %v1427, %v1425
        %v1484 = vpack.c.b16 %v1428, %v1426
        %v1485 = vpack.c.b16 %v1431, %v1429
        %v1486 = vpack.c.b16 %v1432, %v1430
        %v1487 = vpack.c.b16 %v1435, %v1433
        %v1488 = vpack.c.b16 %v1436, %v1434
        %v1489 = vpack.c.b16 %v1439, %v1437
        %v1490 = vpack.c.b16 %v1440, %v1438
        %v1491 = vpack.c.b16 %v1443, %v1441
        %v1492 = vpack.c.b16 %v1444, %v1442
        %v1493 = vpack.c.b16 %v1447, %v1445
        %v1494 = vpack.c.b16 %v1448, %v1446
        %v1495 = vpack.c.b16 %v1451, %v1449
        %v1496 = vpack.c.b16 %v1452, %v1450
        %v1497 = vpack.c.b16 %v1455, %v1453
        %v1498 = vpack.c.b16 %v1456, %v1454
        %v1499 = vpack.c.b16 %v1459, %v1457
        %v1500 = vpack.c.b16 %v1460, %v1458
        %v1501 = vpack.c.b16 %v1463, %v1461
        %v1502 = vpack.c.b16 %v1464, %v1462
        %v1503 = vpack.c.b16 %v1467, %v1465
        %v1504 = vpack.c.b16 %v1468, %v1466
        %v1505 = vpack.c.b16 %v1471, %v1469
        %v1506 = vpack.c.b16 %v1472, %v1470
        %v1507 = vpack.c.b16 %v1475, %v1473
        %v1508 = vpack.c.b16 %v1476, %v1474
        %v1526 = vsel %vm1030, %v1478, 0
        %v1529 = vsel %vm1030, %v1480, 0
        %v1532 = vsel %vm1030, %v1482, 0
        %v1535 = vsel %vm1030, %v1484, 0
        %v1538 = vsel %vm1030, %v1486, 0
        %v1541 = vsel %vm1030, %v1488, 0
        %v1544 = vsel %vm1030, %v1490, 0
        %v1547 = vsel %vm1030, %v1492, 0
        %v1550 = vsel %vm1030, %v1494, 0
        %v1553 = vsel %vm1030, %v1496, 0
        %v1556 = vsel %vm1030, %v1498, 0
        %v1559 = vsel %vm1030, %v1500, 0
        %v1562 = vsel %vm1030, %v1502, 0
        %v1565 = vsel %vm1030, %v1504, 0
        %v1568 = vsel %vm1030, %v1506, 0
        %v1571 = vsel %vm1030, %v1508, 0
        %1573 = vmatprep.subr.bf16.mxu0 0
        %1574 = vmatpush1.bf16.msra.mxu0 %v1019
        %1575 = vmatprep.subr.bf16.mxu0 0
        %1576 = vmatpush1.bf16.msra.mxu0 %v1018
        %1577 = vmatprep.subr.bf16.mxu0 0
        %1578 = vmatpush1.bf16.msra.mxu0 %v1017
        %1579 = vmatprep.subr.bf16.mxu0 0
        %1580 = vmatpush1.bf16.msra.mxu0 %v1016
        %1581 = vmatprep.subr.bf16.mxu0 0
        %1582 = vmatpush1.bf16.msra.mxu0 %v1015
        %1583 = vmatprep.subr.bf16.mxu0 0
        %1584 = vmatpush1.bf16.msra.mxu0 %v1014
        %1585 = vmatprep.subr.bf16.mxu0 0
        %1586 = vmatpush1.bf16.msra.mxu0 %v1013
        %1587 = vmatprep.subr.bf16.mxu0 0
        %1588 = vmatpush1.bf16.msra.mxu0 %v1012
        %1589 = vmatprep.subr.bf16.mxu0 0
        %1590 = vmatpush2.bf16.msra.mxu0 0
        %1591 = vmatprep.subr.bf16.mxu0 0
        %1592 = vmatpush2.bf16.msra.mxu0 0
        %1593 = vmatprep.subr.bf16.mxu0 0
        %1594 = vmatpush2.bf16.msra.mxu0 0
        %1595 = vmatprep.subr.bf16.mxu0 0
        %1596 = vmatpush2.bf16.msra.mxu0 0
        %1597 = vmatprep.subr.bf16.mxu0 0
        %1598 = vmatpush2.bf16.msra.mxu0 0
        %1599 = vmatprep.subr.bf16.mxu0 0
        %1600 = vmatpush2.bf16.msra.mxu0 0
        %1601 = vmatprep.subr.bf16.mxu0 0
        %1602 = vmatpush2.bf16.msra.mxu0 0
        %1603 = vmatprep.subr.bf16.mxu0 0
        %1604 = vmatpush2.bf16.msra.mxu0 %v1020
        %1605 = vmatprep.mubr.bf16.mxu0 %v1526
        %1606 = vmatmul.mubr.bf16.gmra.mxu0 %v1477
        %v1607 = vpop.f32.mrf.mxu0
        %v1608 = vadd.f32 %v830, %v1607
        %v1609 = vpop.f32.mrf.mxu0
        %v1610 = vpop.f32.mrf.mxu0
        %v1611 = vadd.f32 %v830, %v1610
        %v1612 = vpop.f32.mrf.mxu0
        %1613 = vmatprep.mubr.bf16.mxu0 %v1529
        %1614 = vmatmul.mubr.bf16.gmra.mxu0 %v1479
        %v1615 = vpop.f32.mrf.mxu0
        %v1616 = vadd.f32 %v830, %v1615
        %v1617 = vpop.f32.mrf.mxu0
        %v1618 = vpop.f32.mrf.mxu0
        %v1619 = vadd.f32 %v830, %v1618
        %v1620 = vpop.f32.mrf.mxu0
        %1621 = vmatprep.mubr.bf16.mxu0 %v1532
        %1622 = vmatmul.mubr.bf16.gmra.mxu0 %v1481
        %v1623 = vpop.f32.mrf.mxu0
        %v1624 = vadd.f32 %v830, %v1623
        %v1625 = vpop.f32.mrf.mxu0
        %v1626 = vpop.f32.mrf.mxu0
        %v1627 = vadd.f32 %v830, %v1626
        %v1628 = vpop.f32.mrf.mxu0
        %1629 = vmatprep.mubr.bf16.mxu0 %v1535
        %1630 = vmatmul.mubr.bf16.gmra.mxu0 %v1483
        %v1631 = vpop.f32.mrf.mxu0
        %v1632 = vadd.f32 %v830, %v1631
        %v1633 = vpop.f32.mrf.mxu0
        %v1634 = vpop.f32.mrf.mxu0
        %v1635 = vadd.f32 %v830, %v1634
        %v1636 = vpop.f32.mrf.mxu0
        %1637 = vmatprep.mubr.bf16.mxu0 %v1538
        %1638 = vmatmul.mubr.bf16.gmra.mxu0 %v1485
        %v1639 = vpop.f32.mrf.mxu0
        %v1640 = vadd.f32 %v830, %v1639
        %v1641 = vpop.f32.mrf.mxu0
        %v1642 = vpop.f32.mrf.mxu0
        %v1643 = vadd.f32 %v830, %v1642
        %v1644 = vpop.f32.mrf.mxu0
        %1645 = vmatprep.mubr.bf16.mxu0 %v1541
        %1646 = vmatmul.mubr.bf16.gmra.mxu0 %v1487
        %v1647 = vpop.f32.mrf.mxu0
        %v1648 = vadd.f32 %v830, %v1647
        %v1649 = vpop.f32.mrf.mxu0
        %v1650 = vpop.f32.mrf.mxu0
        %v1651 = vadd.f32 %v830, %v1650
        %v1652 = vpop.f32.mrf.mxu0
        %1653 = vmatprep.mubr.bf16.mxu0 %v1544
        %1654 = vmatmul.mubr.bf16.gmra.mxu0 %v1489
        %v1655 = vpop.f32.mrf.mxu0
        %v1656 = vadd.f32 %v830, %v1655
        %v1657 = vpop.f32.mrf.mxu0
        %v1658 = vpop.f32.mrf.mxu0
        %v1659 = vadd.f32 %v830, %v1658
        %v1660 = vpop.f32.mrf.mxu0
        %1661 = vmatprep.mubr.bf16.mxu0 %v1547
        %1662 = vmatmul.mubr.bf16.gmra.mxu0 %v1491
        %v1663 = vpop.f32.mrf.mxu0
        %v1664 = vadd.f32 %v830, %v1663
        %v1665 = vpop.f32.mrf.mxu0
        %v1666 = vpop.f32.mrf.mxu0
        %v1667 = vadd.f32 %v830, %v1666
        %v1668 = vpop.f32.mrf.mxu0
        %1669 = vmatprep.mubr.bf16.mxu0 %v1550
        %1670 = vmatmul.mubr.bf16.gmra.mxu0 %v1493
        %v1671 = vpop.f32.mrf.mxu0
        %v1672 = vadd.f32 %v830, %v1671
        %v1673 = vpop.f32.mrf.mxu0
        %v1674 = vpop.f32.mrf.mxu0
        %v1675 = vadd.f32 %v830, %v1674
        %v1676 = vpop.f32.mrf.mxu0
        %1677 = vmatprep.mubr.bf16.mxu0 %v1553
        %1678 = vmatmul.mubr.bf16.gmra.mxu0 %v1495
        %v1679 = vpop.f32.mrf.mxu0
        %v1680 = vadd.f32 %v830, %v1679
        %v1681 = vpop.f32.mrf.mxu0
        %v1682 = vpop.f32.mrf.mxu0
        %v1683 = vadd.f32 %v830, %v1682
        %v1684 = vpop.f32.mrf.mxu0
        %1685 = vmatprep.mubr.bf16.mxu0 %v1556
        %1686 = vmatmul.mubr.bf16.gmra.mxu0 %v1497
        %v1687 = vpop.f32.mrf.mxu0
        %v1688 = vadd.f32 %v830, %v1687
        %v1689 = vpop.f32.mrf.mxu0
        %v1690 = vpop.f32.mrf.mxu0
        %v1691 = vadd.f32 %v830, %v1690
        %v1692 = vpop.f32.mrf.mxu0
        %1693 = vmatprep.mubr.bf16.mxu0 %v1559
        %1694 = vmatmul.mubr.bf16.gmra.mxu0 %v1499
        %v1695 = vpop.f32.mrf.mxu0
        %v1696 = vadd.f32 %v830, %v1695
        %v1697 = vpop.f32.mrf.mxu0
        %v1698 = vpop.f32.mrf.mxu0
        %v1699 = vadd.f32 %v830, %v1698
        %v1700 = vpop.f32.mrf.mxu0
        %1701 = vmatprep.mubr.bf16.mxu0 %v1562
        %1702 = vmatmul.mubr.bf16.gmra.mxu0 %v1501
        %v1703 = vpop.f32.mrf.mxu0
        %v1704 = vadd.f32 %v830, %v1703
        %v1705 = vpop.f32.mrf.mxu0
        %v1706 = vpop.f32.mrf.mxu0
        %v1707 = vadd.f32 %v830, %v1706
        %v1708 = vpop.f32.mrf.mxu0
        %1709 = vmatprep.mubr.bf16.mxu0 %v1565
        %1710 = vmatmul.mubr.bf16.gmra.mxu0 %v1503
        %v1711 = vpop.f32.mrf.mxu0
        %v1712 = vadd.f32 %v830, %v1711
        %v1713 = vpop.f32.mrf.mxu0
        %v1714 = vpop.f32.mrf.mxu0
        %v1715 = vadd.f32 %v830, %v1714
        %v1716 = vpop.f32.mrf.mxu0
        %1717 = vmatprep.mubr.bf16.mxu0 %v1568
        %1718 = vmatmul.mubr.bf16.gmra.mxu0 %v1505
        %v1719 = vpop.f32.mrf.mxu0
        %v1720 = vadd.f32 %v830, %v1719
        %v1721 = vpop.f32.mrf.mxu0
        %v1722 = vpop.f32.mrf.mxu0
        %v1723 = vadd.f32 %v830, %v1722
        %v1724 = vpop.f32.mrf.mxu0
        %1725 = vmatprep.mubr.bf16.mxu0 %v1571
        %1726 = vmatmul.mubr.bf16.gmra.mxu0 %v1507
        %v1727 = vpop.f32.mrf.mxu0
        %v1728 = vadd.f32 %v830, %v1727
        %v1729 = vpop.f32.mrf.mxu0
        %v1730 = vpop.f32.mrf.mxu0
        %v1731 = vadd.f32 %v830, %v1730
        %v1732 = vpop.f32.mrf.mxu0
        %1733 = vdwg.mxu0
        %v1734 = vmax.f32 %v1608, 0.0
        %v1735 = vmax.f32 %v1611, 0.0
        %v1736 = vmax.f32 %v1616, 0.0
        %v1737 = vmax.f32 %v1619, 0.0
        %v1738 = vmax.f32 %v1624, 0.0
        %v1739 = vmax.f32 %v1627, 0.0
        %v1740 = vmax.f32 %v1632, 0.0
        %v1741 = vmax.f32 %v1635, 0.0
        %v1742 = vmax.f32 %v1640, 0.0
        %v1743 = vmax.f32 %v1643, 0.0
        %v1744 = vmax.f32 %v1648, 0.0
        %v1745 = vmax.f32 %v1651, 0.0
        %v1746 = vmax.f32 %v1656, 0.0
        %v1747 = vmax.f32 %v1659, 0.0
        %v1748 = vmax.f32 %v1664, 0.0
        %v1749 = vmax.f32 %v1667, 0.0
        %v1750 = vmax.f32 %v1672, 0.0
        %v1751 = vmax.f32 %v1675, 0.0
        %v1752 = vmax.f32 %v1680, 0.0
        %v1753 = vmax.f32 %v1683, 0.0
        %v1754 = vmax.f32 %v1688, 0.0
        %v1755 = vmax.f32 %v1691, 0.0
        %v1756 = vmax.f32 %v1696, 0.0
        %v1757 = vmax.f32 %v1699, 0.0
        %v1758 = vmax.f32 %v1704, 0.0
        %v1759 = vmax.f32 %v1707, 0.0
        %v1760 = vmax.f32 %v1712, 0.0
        %v1761 = vmax.f32 %v1715, 0.0
        %v1762 = vmax.f32 %v1720, 0.0
        %v1763 = vmax.f32 %v1723, 0.0
        %v1764 = vmax.f32 %v1728, 0.0
        %v1765 = vmax.f32 %v1731, 0.0
        %v1766 = vmul.f32 %v1734, %v1276
        %v1767 = vmul.f32 %v1735, %v1276
        %v1768 = vmul.f32 %v1736, %v1276
        %v1769 = vmul.f32 %v1737, %v1276
        %v1770 = vmul.f32 %v1738, %v1276
        %v1771 = vmul.f32 %v1739, %v1276
        %v1772 = vmul.f32 %v1740, %v1276
        %v1773 = vmul.f32 %v1741, %v1276
        %v1774 = vmul.f32 %v1742, %v1276
        %v1775 = vmul.f32 %v1743, %v1276
        %v1776 = vmul.f32 %v1744, %v1276
        %v1777 = vmul.f32 %v1745, %v1276
        %v1778 = vmul.f32 %v1746, %v1276
        %v1779 = vmul.f32 %v1747, %v1276
        %v1780 = vmul.f32 %v1748, %v1276
        %v1781 = vmul.f32 %v1749, %v1276
        %v1782 = vmul.f32 %v1750, %v1276
        %v1783 = vmul.f32 %v1751, %v1276
        %v1784 = vmul.f32 %v1752, %v1276
        %v1785 = vmul.f32 %v1753, %v1276
        %v1786 = vmul.f32 %v1754, %v1276
        %v1787 = vmul.f32 %v1755, %v1276
        %v1788 = vmul.f32 %v1756, %v1276
        %v1789 = vmul.f32 %v1757, %v1276
        %v1790 = vmul.f32 %v1758, %v1276
        %v1791 = vmul.f32 %v1759, %v1276
        %v1792 = vmul.f32 %v1760, %v1276
        %v1793 = vmul.f32 %v1761, %v1276
        %v1794 = vmul.f32 %v1762, %v1276
        %v1795 = vmul.f32 %v1763, %v1276
        %v1796 = vmul.f32 %v1764, %v1276
        %v1797 = vmul.f32 %v1765, %v1276
        %v1798 = vadd.f32 %v1766, %v1314
        %v1799 = vadd.f32 %v1767, %v1314
        %v1800 = vadd.f32 %v1768, %v1314
        %v1801 = vadd.f32 %v1769, %v1314
        %v1802 = vadd.f32 %v1770, %v1314
        %v1803 = vadd.f32 %v1771, %v1314
        %v1804 = vadd.f32 %v1772, %v1314
        %v1805 = vadd.f32 %v1773, %v1314
        %v1806 = vadd.f32 %v1774, %v1314
        %v1807 = vadd.f32 %v1775, %v1314
        %v1808 = vadd.f32 %v1776, %v1314
        %v1809 = vadd.f32 %v1777, %v1314
        %v1810 = vadd.f32 %v1778, %v1314
        %v1811 = vadd.f32 %v1779, %v1314
        %v1812 = vadd.f32 %v1780, %v1314
        %v1813 = vadd.f32 %v1781, %v1314
        %v1814 = vadd.f32 %v1782, %v1314
        %v1815 = vadd.f32 %v1783, %v1314
        %v1816 = vadd.f32 %v1784, %v1314
        %v1817 = vadd.f32 %v1785, %v1314
        %v1818 = vadd.f32 %v1786, %v1314
        %v1819 = vadd.f32 %v1787, %v1314
        %v1820 = vadd.f32 %v1788, %v1314
        %v1821 = vadd.f32 %v1789, %v1314
        %v1822 = vadd.f32 %v1790, %v1314
        %v1823 = vadd.f32 %v1791, %v1314
        %v1824 = vadd.f32 %v1792, %v1314
        %v1825 = vadd.f32 %v1793, %v1314
        %v1826 = vadd.f32 %v1794, %v1314
        %v1827 = vadd.f32 %v1795, %v1314
        %v1828 = vadd.f32 %v1796, %v1314
        %v1829 = vadd.f32 %v1797, %v1314
        %v1830 = vmax.f32 %v1316, %v1798
        %v1831 = vmax.f32 %v1317, %v1799
        %v1832 = vmax.f32 %v1318, %v1800
        %v1833 = vmax.f32 %v1319, %v1801
        %v1834 = vmax.f32 %v1320, %v1802
        %v1835 = vmax.f32 %v1321, %v1803
        %v1836 = vmax.f32 %v1322, %v1804
        %v1837 = vmax.f32 %v1323, %v1805
        %v1838 = vmax.f32 %v1324, %v1806
        %v1839 = vmax.f32 %v1325, %v1807
        %v1840 = vmax.f32 %v1326, %v1808
        %v1841 = vmax.f32 %v1327, %v1809
        %v1842 = vmax.f32 %v1328, %v1810
        %v1843 = vmax.f32 %v1329, %v1811
        %v1844 = vmax.f32 %v1330, %v1812
        %v1845 = vmax.f32 %v1331, %v1813
        %v1846 = vmax.f32 %v1332, %v1814
        %v1847 = vmax.f32 %v1333, %v1815
        %v1848 = vmax.f32 %v1334, %v1816
        %v1849 = vmax.f32 %v1335, %v1817
        %v1850 = vmax.f32 %v1336, %v1818
        %v1851 = vmax.f32 %v1337, %v1819
        %v1852 = vmax.f32 %v1338, %v1820
        %v1853 = vmax.f32 %v1339, %v1821
        %v1854 = vmax.f32 %v1340, %v1822
        %v1855 = vmax.f32 %v1341, %v1823
        %v1856 = vmax.f32 %v1342, %v1824
        %v1857 = vmax.f32 %v1343, %v1825
        %v1858 = vmax.f32 %v1344, %v1826
        %v1859 = vmax.f32 %v1345, %v1827
        %v1860 = vmax.f32 %v1346, %v1828
        %v1861 = vmax.f32 %v1347, %v1829
        %s1862 = scalar_lea.vmem %s740, 512 [#allocation2]
        %v1863 = vld [vmem:[%s1862] sm:$0xff]
        %v1864 = vld [vmem:[%s1862 + $0x8] sm:$0xff]
        %v1865 = vld [vmem:[%s1862 + $0x10] sm:$0xff]
        %v1866 = vld [vmem:[%s1862 + $0x18] sm:$0xff]
        %v1867 = vld [vmem:[%s1862 + $0x20] sm:$0xff]
        %v1868 = vld [vmem:[%s1862 + $0x28] sm:$0xff]
        %v1869 = vld [vmem:[%s1862 + $0x30] sm:$0xff]
        %v1870 = vld [vmem:[%s1862 + $0x38] sm:$0xff]
        %v1871 = vld [vmem:[%s1862 + $0x40] sm:$0xff]
        %v1872 = vld [vmem:[%s1862 + $0x48] sm:$0xff]
        %v1873 = vld [vmem:[%s1862 + $0x50] sm:$0xff]
        %v1874 = vld [vmem:[%s1862 + $0x58] sm:$0xff]
        %v1875 = vld [vmem:[%s1862 + $0x60] sm:$0xff]
        %v1876 = vld [vmem:[%s1862 + $0x68] sm:$0xff]
        %v1877 = vld [vmem:[%s1862 + $0x70] sm:$0xff]
        %v1878 = vld [vmem:[%s1862 + $0x78] sm:$0xff]
        %v1879 = vld [vmem:[%s1862 + $0x80] sm:$0xff]
        %v1880 = vld [vmem:[%s1862 + $0x88] sm:$0xff]
        %v1881 = vld [vmem:[%s1862 + $0x90] sm:$0xff]
        %v1882 = vld [vmem:[%s1862 + $0x98] sm:$0xff]
        %v1883 = vld [vmem:[%s1862 + $0xa0] sm:$0xff]
        %v1884 = vld [vmem:[%s1862 + $0xa8] sm:$0xff]
        %v1885 = vld [vmem:[%s1862 + $0xb0] sm:$0xff]
        %v1886 = vld [vmem:[%s1862 + $0xb8] sm:$0xff]
        %v1887 = vld [vmem:[%s1862 + $0xc0] sm:$0xff]
        %v1888 = vld [vmem:[%s1862 + $0xc8] sm:$0xff]
        %v1889 = vld [vmem:[%s1862 + $0xd0] sm:$0xff]
        %v1890 = vld [vmem:[%s1862 + $0xd8] sm:$0xff]
        %v1891 = vld [vmem:[%s1862 + $0xe0] sm:$0xff]
        %v1892 = vld [vmem:[%s1862 + $0xe8] sm:$0xff]
        %v1893 = vld [vmem:[%s1862 + $0xf0] sm:$0xff]
        %v1894 = vld [vmem:[%s1862 + $0xf8] sm:$0xff]
        %v1927 = vunpack.c.l.b16 %v1863
        %v1928 = vunpack.c.h.b16 %v1863
        %v1929 = vunpack.c.l.b16 %v1864
        %v1930 = vunpack.c.h.b16 %v1864
        %v1931 = vunpack.c.l.b16 %v1865
        %v1932 = vunpack.c.h.b16 %v1865
        %v1933 = vunpack.c.l.b16 %v1866
        %v1934 = vunpack.c.h.b16 %v1866
        %v1935 = vunpack.c.l.b16 %v1867
        %v1936 = vunpack.c.h.b16 %v1867
        %v1937 = vunpack.c.l.b16 %v1868
        %v1938 = vunpack.c.h.b16 %v1868
        %v1939 = vunpack.c.l.b16 %v1869
        %v1940 = vunpack.c.h.b16 %v1869
        %v1941 = vunpack.c.l.b16 %v1870
        %v1942 = vunpack.c.h.b16 %v1870
        %v1943 = vunpack.c.l.b16 %v1871
        %v1944 = vunpack.c.h.b16 %v1871
        %v1945 = vunpack.c.l.b16 %v1872
        %v1946 = vunpack.c.h.b16 %v1872
        %v1947 = vunpack.c.l.b16 %v1873
        %v1948 = vunpack.c.h.b16 %v1873
        %v1949 = vunpack.c.l.b16 %v1874
        %v1950 = vunpack.c.h.b16 %v1874
        %v1951 = vunpack.c.l.b16 %v1875
        %v1952 = vunpack.c.h.b16 %v1875
        %v1953 = vunpack.c.l.b16 %v1876
        %v1954 = vunpack.c.h.b16 %v1876
        %v1955 = vunpack.c.l.b16 %v1877
        %v1956 = vunpack.c.h.b16 %v1877
        %v1957 = vunpack.c.l.b16 %v1878
        %v1958 = vunpack.c.h.b16 %v1878
        %v1959 = vunpack.c.l.b16 %v1879
        %v1960 = vunpack.c.h.b16 %v1879
        %v1961 = vunpack.c.l.b16 %v1880
        %v1962 = vunpack.c.h.b16 %v1880
        %v1963 = vunpack.c.l.b16 %v1881
        %v1964 = vunpack.c.h.b16 %v1881
        %v1965 = vunpack.c.l.b16 %v1882
        %v1966 = vunpack.c.h.b16 %v1882
        %v1967 = vunpack.c.l.b16 %v1883
        %v1968 = vunpack.c.h.b16 %v1883
        %v1969 = vunpack.c.l.b16 %v1884
        %v1970 = vunpack.c.h.b16 %v1884
        %v1971 = vunpack.c.l.b16 %v1885
        %v1972 = vunpack.c.h.b16 %v1885
        %v1973 = vunpack.c.l.b16 %v1886
        %v1974 = vunpack.c.h.b16 %v1886
        %v1975 = vunpack.c.l.b16 %v1887
        %v1976 = vunpack.c.h.b16 %v1887
        %v1977 = vunpack.c.l.b16 %v1888
        %v1978 = vunpack.c.h.b16 %v1888
        %v1979 = vunpack.c.l.b16 %v1889
        %v1980 = vunpack.c.h.b16 %v1889
        %v1981 = vunpack.c.l.b16 %v1890
        %v1982 = vunpack.c.h.b16 %v1890
        %v1983 = vunpack.c.l.b16 %v1891
        %v1984 = vunpack.c.h.b16 %v1891
        %v1985 = vunpack.c.l.b16 %v1892
        %v1986 = vunpack.c.h.b16 %v1892
        %v1987 = vunpack.c.l.b16 %v1893
        %v1988 = vunpack.c.h.b16 %v1893
        %v1989 = vunpack.c.l.b16 %v1894
        %v1990 = vunpack.c.h.b16 %v1894
        %v1991 = vpack.c.b16 %v1929, %v1927
        %v1992 = vpack.c.b16 %v1930, %v1928
        %v1993 = vpack.c.b16 %v1933, %v1931
        %v1994 = vpack.c.b16 %v1934, %v1932
        %v1995 = vpack.c.b16 %v1937, %v1935
        %v1996 = vpack.c.b16 %v1938, %v1936
        %v1997 = vpack.c.b16 %v1941, %v1939
        %v1998 = vpack.c.b16 %v1942, %v1940
        %v1999 = vpack.c.b16 %v1945, %v1943
        %v2000 = vpack.c.b16 %v1946, %v1944
        %v2001 = vpack.c.b16 %v1949, %v1947
        %v2002 = vpack.c.b16 %v1950, %v1948
        %v2003 = vpack.c.b16 %v1953, %v1951
        %v2004 = vpack.c.b16 %v1954, %v1952
        %v2005 = vpack.c.b16 %v1957, %v1955
        %v2006 = vpack.c.b16 %v1958, %v1956
        %v2007 = vpack.c.b16 %v1961, %v1959
        %v2008 = vpack.c.b16 %v1962, %v1960
        %v2009 = vpack.c.b16 %v1965, %v1963
        %v2010 = vpack.c.b16 %v1966, %v1964
        %v2011 = vpack.c.b16 %v1969, %v1967
        %v2012 = vpack.c.b16 %v1970, %v1968
        %v2013 = vpack.c.b16 %v1973, %v1971
        %v2014 = vpack.c.b16 %v1974, %v1972
        %v2015 = vpack.c.b16 %v1977, %v1975
        %v2016 = vpack.c.b16 %v1978, %v1976
        %v2017 = vpack.c.b16 %v1981, %v1979
        %v2018 = vpack.c.b16 %v1982, %v1980
        %v2019 = vpack.c.b16 %v1985, %v1983
        %v2020 = vpack.c.b16 %v1986, %v1984
        %v2021 = vpack.c.b16 %v1989, %v1987
        %v2022 = vpack.c.b16 %v1990, %v1988
        %v2040 = vsel %vm1030, %v1992, 0
        %v2043 = vsel %vm1030, %v1994, 0
        %v2046 = vsel %vm1030, %v1996, 0
        %v2049 = vsel %vm1030, %v1998, 0
        %v2052 = vsel %vm1030, %v2000, 0
        %v2055 = vsel %vm1030, %v2002, 0
        %v2058 = vsel %vm1030, %v2004, 0
        %v2061 = vsel %vm1030, %v2006, 0
        %v2064 = vsel %vm1030, %v2008, 0
        %v2067 = vsel %vm1030, %v2010, 0
        %v2070 = vsel %vm1030, %v2012, 0
        %v2073 = vsel %vm1030, %v2014, 0
        %v2076 = vsel %vm1030, %v2016, 0
        %v2079 = vsel %vm1030, %v2018, 0
        %v2082 = vsel %vm1030, %v2020, 0
        %v2085 = vsel %vm1030, %v2022, 0
        %2087 = vmatprep.subr.bf16.mxu0 0
        %2088 = vmatpush1.bf16.msra.mxu0 %v1019
        %2089 = vmatprep.subr.bf16.mxu0 0
        %2090 = vmatpush1.bf16.msra.mxu0 %v1018
        %2091 = vmatprep.subr.bf16.mxu0 0
        %2092 = vmatpush1.bf16.msra.mxu0 %v1017
        %2093 = vmatprep.subr.bf16.mxu0 0
        %2094 = vmatpush1.bf16.msra.mxu0 %v1016
        %2095 = vmatprep.subr.bf16.mxu0 0
        %2096 = vmatpush1.bf16.msra.mxu0 %v1015
        %2097 = vmatprep.subr.bf16.mxu0 0
        %2098 = vmatpush1.bf16.msra.mxu0 %v1014
        %2099 = vmatprep.subr.bf16.mxu0 0
        %2100 = vmatpush1.bf16.msra.mxu0 %v1013
        %2101 = vmatprep.subr.bf16.mxu0 0
        %2102 = vmatpush1.bf16.msra.mxu0 %v1012
        %2103 = vmatprep.subr.bf16.mxu0 0
        %2104 = vmatpush2.bf16.msra.mxu0 0
        %2105 = vmatprep.subr.bf16.mxu0 0
        %2106 = vmatpush2.bf16.msra.mxu0 0
        %2107 = vmatprep.subr.bf16.mxu0 0
        %2108 = vmatpush2.bf16.msra.mxu0 0
        %2109 = vmatprep.subr.bf16.mxu0 0
        %2110 = vmatpush2.bf16.msra.mxu0 0
        %2111 = vmatprep.subr.bf16.mxu0 0
        %2112 = vmatpush2.bf16.msra.mxu0 0
        %2113 = vmatprep.subr.bf16.mxu0 0
        %2114 = vmatpush2.bf16.msra.mxu0 0
        %2115 = vmatprep.subr.bf16.mxu0 0
        %2116 = vmatpush2.bf16.msra.mxu0 0
        %2117 = vmatprep.subr.bf16.mxu0 0
        %2118 = vmatpush2.bf16.msra.mxu0 %v1020
        %2119 = vmatprep.mubr.bf16.mxu0 %v2040
        %2120 = vmatmul.mubr.bf16.gmra.mxu0 %v1991
        %v2121 = vpop.f32.mrf.mxu0
        %v2122 = vadd.f32 %v830, %v2121
        %v2123 = vpop.f32.mrf.mxu0
        %v2124 = vpop.f32.mrf.mxu0
        %v2125 = vadd.f32 %v830, %v2124
        %v2126 = vpop.f32.mrf.mxu0
        %2127 = vmatprep.mubr.bf16.mxu0 %v2043
        %2128 = vmatmul.mubr.bf16.gmra.mxu0 %v1993
        %v2129 = vpop.f32.mrf.mxu0
        %v2130 = vadd.f32 %v830, %v2129
        %v2131 = vpop.f32.mrf.mxu0
        %v2132 = vpop.f32.mrf.mxu0
        %v2133 = vadd.f32 %v830, %v2132
        %v2134 = vpop.f32.mrf.mxu0
        %2135 = vmatprep.mubr.bf16.mxu0 %v2046
        %2136 = vmatmul.mubr.bf16.gmra.mxu0 %v1995
        %v2137 = vpop.f32.mrf.mxu0
        %v2138 = vadd.f32 %v830, %v2137
        %v2139 = vpop.f32.mrf.mxu0
        %v2140 = vpop.f32.mrf.mxu0
        %v2141 = vadd.f32 %v830, %v2140
        %v2142 = vpop.f32.mrf.mxu0
        %2143 = vmatprep.mubr.bf16.mxu0 %v2049
        %2144 = vmatmul.mubr.bf16.gmra.mxu0 %v1997
        %v2145 = vpop.f32.mrf.mxu0
        %v2146 = vadd.f32 %v830, %v2145
        %v2147 = vpop.f32.mrf.mxu0
        %v2148 = vpop.f32.mrf.mxu0
        %v2149 = vadd.f32 %v830, %v2148
        %v2150 = vpop.f32.mrf.mxu0
        %2151 = vmatprep.mubr.bf16.mxu0 %v2052
        %2152 = vmatmul.mubr.bf16.gmra.mxu0 %v1999
        %v2153 = vpop.f32.mrf.mxu0
        %v2154 = vadd.f32 %v830, %v2153
        %v2155 = vpop.f32.mrf.mxu0
        %v2156 = vpop.f32.mrf.mxu0
        %v2157 = vadd.f32 %v830, %v2156
        %v2158 = vpop.f32.mrf.mxu0
        %2159 = vmatprep.mubr.bf16.mxu0 %v2055
        %2160 = vmatmul.mubr.bf16.gmra.mxu0 %v2001
        %v2161 = vpop.f32.mrf.mxu0
        %v2162 = vadd.f32 %v830, %v2161
        %v2163 = vpop.f32.mrf.mxu0
        %v2164 = vpop.f32.mrf.mxu0
        %v2165 = vadd.f32 %v830, %v2164
        %v2166 = vpop.f32.mrf.mxu0
        %2167 = vmatprep.mubr.bf16.mxu0 %v2058
        %2168 = vmatmul.mubr.bf16.gmra.mxu0 %v2003
        %v2169 = vpop.f32.mrf.mxu0
        %v2170 = vadd.f32 %v830, %v2169
        %v2171 = vpop.f32.mrf.mxu0
        %v2172 = vpop.f32.mrf.mxu0
        %v2173 = vadd.f32 %v830, %v2172
        %v2174 = vpop.f32.mrf.mxu0
        %2175 = vmatprep.mubr.bf16.mxu0 %v2061
        %2176 = vmatmul.mubr.bf16.gmra.mxu0 %v2005
        %v2177 = vpop.f32.mrf.mxu0
        %v2178 = vadd.f32 %v830, %v2177
        %v2179 = vpop.f32.mrf.mxu0
        %v2180 = vpop.f32.mrf.mxu0
        %v2181 = vadd.f32 %v830, %v2180
        %v2182 = vpop.f32.mrf.mxu0
        %2183 = vmatprep.mubr.bf16.mxu0 %v2064
        %2184 = vmatmul.mubr.bf16.gmra.mxu0 %v2007
        %v2185 = vpop.f32.mrf.mxu0
        %v2186 = vadd.f32 %v830, %v2185
        %v2187 = vpop.f32.mrf.mxu0
        %v2188 = vpop.f32.mrf.mxu0
        %v2189 = vadd.f32 %v830, %v2188
        %v2190 = vpop.f32.mrf.mxu0
        %2191 = vmatprep.mubr.bf16.mxu0 %v2067
        %2192 = vmatmul.mubr.bf16.gmra.mxu0 %v2009
        %v2193 = vpop.f32.mrf.mxu0
        %v2194 = vadd.f32 %v830, %v2193
        %v2195 = vpop.f32.mrf.mxu0
        %v2196 = vpop.f32.mrf.mxu0
        %v2197 = vadd.f32 %v830, %v2196
        %v2198 = vpop.f32.mrf.mxu0
        %2199 = vmatprep.mubr.bf16.mxu0 %v2070
        %2200 = vmatmul.mubr.bf16.gmra.mxu0 %v2011
        %v2201 = vpop.f32.mrf.mxu0
        %v2202 = vadd.f32 %v830, %v2201
        %v2203 = vpop.f32.mrf.mxu0
        %v2204 = vpop.f32.mrf.mxu0
        %v2205 = vadd.f32 %v830, %v2204
        %v2206 = vpop.f32.mrf.mxu0
        %2207 = vmatprep.mubr.bf16.mxu0 %v2073
        %2208 = vmatmul.mubr.bf16.gmra.mxu0 %v2013
        %v2209 = vpop.f32.mrf.mxu0
        %v2210 = vadd.f32 %v830, %v2209
        %v2211 = vpop.f32.mrf.mxu0
        %v2212 = vpop.f32.mrf.mxu0
        %v2213 = vadd.f32 %v830, %v2212
        %v2214 = vpop.f32.mrf.mxu0
        %2215 = vmatprep.mubr.bf16.mxu0 %v2076
        %2216 = vmatmul.mubr.bf16.gmra.mxu0 %v2015
        %v2217 = vpop.f32.mrf.mxu0
        %v2218 = vadd.f32 %v830, %v2217
        %v2219 = vpop.f32.mrf.mxu0
        %v2220 = vpop.f32.mrf.mxu0
        %v2221 = vadd.f32 %v830, %v2220
        %v2222 = vpop.f32.mrf.mxu0
        %2223 = vmatprep.mubr.bf16.mxu0 %v2079
        %2224 = vmatmul.mubr.bf16.gmra.mxu0 %v2017
        %v2225 = vpop.f32.mrf.mxu0
        %v2226 = vadd.f32 %v830, %v2225
        %v2227 = vpop.f32.mrf.mxu0
        %v2228 = vpop.f32.mrf.mxu0
        %v2229 = vadd.f32 %v830, %v2228
        %v2230 = vpop.f32.mrf.mxu0
        %2231 = vmatprep.mubr.bf16.mxu0 %v2082
        %2232 = vmatmul.mubr.bf16.gmra.mxu0 %v2019
        %v2233 = vpop.f32.mrf.mxu0
        %v2234 = vadd.f32 %v830, %v2233
        %v2235 = vpop.f32.mrf.mxu0
        %v2236 = vpop.f32.mrf.mxu0
        %v2237 = vadd.f32 %v830, %v2236
        %v2238 = vpop.f32.mrf.mxu0
        %2239 = vmatprep.mubr.bf16.mxu0 %v2085
        %2240 = vmatmul.mubr.bf16.gmra.mxu0 %v2021
        %v2241 = vpop.f32.mrf.mxu0
        %v2242 = vadd.f32 %v830, %v2241
        %v2243 = vpop.f32.mrf.mxu0
        %v2244 = vpop.f32.mrf.mxu0
        %v2245 = vadd.f32 %v830, %v2244
        %v2246 = vpop.f32.mrf.mxu0
        %2247 = vdwg.mxu0
        %v2248 = vmax.f32 %v2122, 0.0
        %v2249 = vmax.f32 %v2125, 0.0
        %v2250 = vmax.f32 %v2130, 0.0
        %v2251 = vmax.f32 %v2133, 0.0
        %v2252 = vmax.f32 %v2138, 0.0
        %v2253 = vmax.f32 %v2141, 0.0
        %v2254 = vmax.f32 %v2146, 0.0
        %v2255 = vmax.f32 %v2149, 0.0
        %v2256 = vmax.f32 %v2154, 0.0
        %v2257 = vmax.f32 %v2157, 0.0
        %v2258 = vmax.f32 %v2162, 0.0
        %v2259 = vmax.f32 %v2165, 0.0
        %v2260 = vmax.f32 %v2170, 0.0
        %v2261 = vmax.f32 %v2173, 0.0
        %v2262 = vmax.f32 %v2178, 0.0
        %v2263 = vmax.f32 %v2181, 0.0
        %v2264 = vmax.f32 %v2186, 0.0
        %v2265 = vmax.f32 %v2189, 0.0
        %v2266 = vmax.f32 %v2194, 0.0
        %v2267 = vmax.f32 %v2197, 0.0
        %v2268 = vmax.f32 %v2202, 0.0
        %v2269 = vmax.f32 %v2205, 0.0
        %v2270 = vmax.f32 %v2210, 0.0
        %v2271 = vmax.f32 %v2213, 0.0
        %v2272 = vmax.f32 %v2218, 0.0
        %v2273 = vmax.f32 %v2221, 0.0
        %v2274 = vmax.f32 %v2226, 0.0
        %v2275 = vmax.f32 %v2229, 0.0
        %v2276 = vmax.f32 %v2234, 0.0
        %v2277 = vmax.f32 %v2237, 0.0
        %v2278 = vmax.f32 %v2242, 0.0
        %v2279 = vmax.f32 %v2245, 0.0
        %v2280 = vmul.f32 %v2248, %v1276
        %v2281 = vmul.f32 %v2249, %v1276
        %v2282 = vmul.f32 %v2250, %v1276
        %v2283 = vmul.f32 %v2251, %v1276
        %v2284 = vmul.f32 %v2252, %v1276
        %v2285 = vmul.f32 %v2253, %v1276
        %v2286 = vmul.f32 %v2254, %v1276
        %v2287 = vmul.f32 %v2255, %v1276
        %v2288 = vmul.f32 %v2256, %v1276
        %v2289 = vmul.f32 %v2257, %v1276
        %v2290 = vmul.f32 %v2258, %v1276
        %v2291 = vmul.f32 %v2259, %v1276
        %v2292 = vmul.f32 %v2260, %v1276
        %v2293 = vmul.f32 %v2261, %v1276
        %v2294 = vmul.f32 %v2262, %v1276
        %v2295 = vmul.f32 %v2263, %v1276
        %v2296 = vmul.f32 %v2264, %v1276
        %v2297 = vmul.f32 %v2265, %v1276
        %v2298 = vmul.f32 %v2266, %v1276
        %v2299 = vmul.f32 %v2267, %v1276
        %v2300 = vmul.f32 %v2268, %v1276
        %v2301 = vmul.f32 %v2269, %v1276
        %v2302 = vmul.f32 %v2270, %v1276
        %v2303 = vmul.f32 %v2271, %v1276
        %v2304 = vmul.f32 %v2272, %v1276
        %v2305 = vmul.f32 %v2273, %v1276
        %v2306 = vmul.f32 %v2274, %v1276
        %v2307 = vmul.f32 %v2275, %v1276
        %v2308 = vmul.f32 %v2276, %v1276
        %v2309 = vmul.f32 %v2277, %v1276
        %v2310 = vmul.f32 %v2278, %v1276
        %v2311 = vmul.f32 %v2279, %v1276
        %v2312 = vadd.f32 %v2280, %v1314
        %v2313 = vadd.f32 %v2281, %v1314
        %v2314 = vadd.f32 %v2282, %v1314
        %v2315 = vadd.f32 %v2283, %v1314
        %v2316 = vadd.f32 %v2284, %v1314
        %v2317 = vadd.f32 %v2285, %v1314
        %v2318 = vadd.f32 %v2286, %v1314
        %v2319 = vadd.f32 %v2287, %v1314
        %v2320 = vadd.f32 %v2288, %v1314
        %v2321 = vadd.f32 %v2289, %v1314
        %v2322 = vadd.f32 %v2290, %v1314
        %v2323 = vadd.f32 %v2291, %v1314
        %v2324 = vadd.f32 %v2292, %v1314
        %v2325 = vadd.f32 %v2293, %v1314
        %v2326 = vadd.f32 %v2294, %v1314
        %v2327 = vadd.f32 %v2295, %v1314
        %v2328 = vadd.f32 %v2296, %v1314
        %v2329 = vadd.f32 %v2297, %v1314
        %v2330 = vadd.f32 %v2298, %v1314
        %v2331 = vadd.f32 %v2299, %v1314
        %v2332 = vadd.f32 %v2300, %v1314
        %v2333 = vadd.f32 %v2301, %v1314
        %v2334 = vadd.f32 %v2302, %v1314
        %v2335 = vadd.f32 %v2303, %v1314
        %v2336 = vadd.f32 %v2304, %v1314
        %v2337 = vadd.f32 %v2305, %v1314
        %v2338 = vadd.f32 %v2306, %v1314
        %v2339 = vadd.f32 %v2307, %v1314
        %v2340 = vadd.f32 %v2308, %v1314
        %v2341 = vadd.f32 %v2309, %v1314
        %v2342 = vadd.f32 %v2310, %v1314
        %v2343 = vadd.f32 %v2311, %v1314
        %s2344 = scalar_lea.vmem %s740, 768 [#allocation2]
        %v2345 = vld [vmem:[%s2344] sm:$0xff]
        %v2346 = vld [vmem:[%s2344 + $0x8] sm:$0xff]
        %v2347 = vld [vmem:[%s2344 + $0x10] sm:$0xff]
        %v2348 = vld [vmem:[%s2344 + $0x18] sm:$0xff]
        %v2349 = vld [vmem:[%s2344 + $0x20] sm:$0xff]
        %v2350 = vld [vmem:[%s2344 + $0x28] sm:$0xff]
        %v2351 = vld [vmem:[%s2344 + $0x30] sm:$0xff]
        %v2352 = vld [vmem:[%s2344 + $0x38] sm:$0xff]
        %v2353 = vld [vmem:[%s2344 + $0x40] sm:$0xff]
        %v2354 = vld [vmem:[%s2344 + $0x48] sm:$0xff]
        %v2355 = vld [vmem:[%s2344 + $0x50] sm:$0xff]
        %v2356 = vld [vmem:[%s2344 + $0x58] sm:$0xff]
        %v2357 = vld [vmem:[%s2344 + $0x60] sm:$0xff]
        %v2358 = vld [vmem:[%s2344 + $0x68] sm:$0xff]
        %v2359 = vld [vmem:[%s2344 + $0x70] sm:$0xff]
        %v2360 = vld [vmem:[%s2344 + $0x78] sm:$0xff]
        %v2361 = vld [vmem:[%s2344 + $0x80] sm:$0xff]
        %v2362 = vld [vmem:[%s2344 + $0x88] sm:$0xff]
        %v2363 = vld [vmem:[%s2344 + $0x90] sm:$0xff]
        %v2364 = vld [vmem:[%s2344 + $0x98] sm:$0xff]
        %v2365 = vld [vmem:[%s2344 + $0xa0] sm:$0xff]
        %v2366 = vld [vmem:[%s2344 + $0xa8] sm:$0xff]
        %v2367 = vld [vmem:[%s2344 + $0xb0] sm:$0xff]
        %v2368 = vld [vmem:[%s2344 + $0xb8] sm:$0xff]
        %v2369 = vld [vmem:[%s2344 + $0xc0] sm:$0xff]
        %v2370 = vld [vmem:[%s2344 + $0xc8] sm:$0xff]
        %v2371 = vld [vmem:[%s2344 + $0xd0] sm:$0xff]
        %v2372 = vld [vmem:[%s2344 + $0xd8] sm:$0xff]
        %v2373 = vld [vmem:[%s2344 + $0xe0] sm:$0xff]
        %v2374 = vld [vmem:[%s2344 + $0xe8] sm:$0xff]
        %v2375 = vld [vmem:[%s2344 + $0xf0] sm:$0xff]
        %v2376 = vld [vmem:[%s2344 + $0xf8] sm:$0xff]
        %v2409 = vunpack.c.l.b16 %v2345
        %v2410 = vunpack.c.h.b16 %v2345
        %v2411 = vunpack.c.l.b16 %v2346
        %v2412 = vunpack.c.h.b16 %v2346
        %v2413 = vunpack.c.l.b16 %v2347
        %v2414 = vunpack.c.h.b16 %v2347
        %v2415 = vunpack.c.l.b16 %v2348
        %v2416 = vunpack.c.h.b16 %v2348
        %v2417 = vunpack.c.l.b16 %v2349
        %v2418 = vunpack.c.h.b16 %v2349
        %v2419 = vunpack.c.l.b16 %v2350
        %v2420 = vunpack.c.h.b16 %v2350
        %v2421 = vunpack.c.l.b16 %v2351
        %v2422 = vunpack.c.h.b16 %v2351
        %v2423 = vunpack.c.l.b16 %v2352
        %v2424 = vunpack.c.h.b16 %v2352
        %v2425 = vunpack.c.l.b16 %v2353
        %v2426 = vunpack.c.h.b16 %v2353
        %v2427 = vunpack.c.l.b16 %v2354
        %v2428 = vunpack.c.h.b16 %v2354
        %v2429 = vunpack.c.l.b16 %v2355
        %v2430 = vunpack.c.h.b16 %v2355
        %v2431 = vunpack.c.l.b16 %v2356
        %v2432 = vunpack.c.h.b16 %v2356
        %v2433 = vunpack.c.l.b16 %v2357
        %v2434 = vunpack.c.h.b16 %v2357
        %v2435 = vunpack.c.l.b16 %v2358
        %v2436 = vunpack.c.h.b16 %v2358
        %v2437 = vunpack.c.l.b16 %v2359
        %v2438 = vunpack.c.h.b16 %v2359
        %v2439 = vunpack.c.l.b16 %v2360
        %v2440 = vunpack.c.h.b16 %v2360
        %v2441 = vunpack.c.l.b16 %v2361
        %v2442 = vunpack.c.h.b16 %v2361
        %v2443 = vunpack.c.l.b16 %v2362
        %v2444 = vunpack.c.h.b16 %v2362
        %v2445 = vunpack.c.l.b16 %v2363
        %v2446 = vunpack.c.h.b16 %v2363
        %v2447 = vunpack.c.l.b16 %v2364
        %v2448 = vunpack.c.h.b16 %v2364
        %v2449 = vunpack.c.l.b16 %v2365
        %v2450 = vunpack.c.h.b16 %v2365
        %v2451 = vunpack.c.l.b16 %v2366
        %v2452 = vunpack.c.h.b16 %v2366
        %v2453 = vunpack.c.l.b16 %v2367
        %v2454 = vunpack.c.h.b16 %v2367
        %v2455 = vunpack.c.l.b16 %v2368
        %v2456 = vunpack.c.h.b16 %v2368
        %v2457 = vunpack.c.l.b16 %v2369
        %v2458 = vunpack.c.h.b16 %v2369
        %v2459 = vunpack.c.l.b16 %v2370
        %v2460 = vunpack.c.h.b16 %v2370
        %v2461 = vunpack.c.l.b16 %v2371
        %v2462 = vunpack.c.h.b16 %v2371
        %v2463 = vunpack.c.l.b16 %v2372
        %v2464 = vunpack.c.h.b16 %v2372
        %v2465 = vunpack.c.l.b16 %v2373
        %v2466 = vunpack.c.h.b16 %v2373
        %v2467 = vunpack.c.l.b16 %v2374
        %v2468 = vunpack.c.h.b16 %v2374
        %v2469 = vunpack.c.l.b16 %v2375
        %v2470 = vunpack.c.h.b16 %v2375
        %v2471 = vunpack.c.l.b16 %v2376
        %v2472 = vunpack.c.h.b16 %v2376
        %v2473 = vpack.c.b16 %v2411, %v2409
        %v2474 = vpack.c.b16 %v2412, %v2410
        %v2475 = vpack.c.b16 %v2415, %v2413
        %v2476 = vpack.c.b16 %v2416, %v2414
        %v2477 = vpack.c.b16 %v2419, %v2417
        %v2478 = vpack.c.b16 %v2420, %v2418
        %v2479 = vpack.c.b16 %v2423, %v2421
        %v2480 = vpack.c.b16 %v2424, %v2422
        %v2481 = vpack.c.b16 %v2427, %v2425
        %v2482 = vpack.c.b16 %v2428, %v2426
        %v2483 = vpack.c.b16 %v2431, %v2429
        %v2484 = vpack.c.b16 %v2432, %v2430
        %v2485 = vpack.c.b16 %v2435, %v2433
        %v2486 = vpack.c.b16 %v2436, %v2434
        %v2487 = vpack.c.b16 %v2439, %v2437
        %v2488 = vpack.c.b16 %v2440, %v2438
        %v2489 = vpack.c.b16 %v2443, %v2441
        %v2490 = vpack.c.b16 %v2444, %v2442
        %v2491 = vpack.c.b16 %v2447, %v2445
        %v2492 = vpack.c.b16 %v2448, %v2446
        %v2493 = vpack.c.b16 %v2451, %v2449
        %v2494 = vpack.c.b16 %v2452, %v2450
        %v2495 = vpack.c.b16 %v2455, %v2453
        %v2496 = vpack.c.b16 %v2456, %v2454
        %v2497 = vpack.c.b16 %v2459, %v2457
        %v2498 = vpack.c.b16 %v2460, %v2458
        %v2499 = vpack.c.b16 %v2463, %v2461
        %v2500 = vpack.c.b16 %v2464, %v2462
        %v2501 = vpack.c.b16 %v2467, %v2465
        %v2502 = vpack.c.b16 %v2468, %v2466
        %v2503 = vpack.c.b16 %v2471, %v2469
        %v2504 = vpack.c.b16 %v2472, %v2470
        %v2522 = vsel %vm1030, %v2474, 0
        %v2525 = vsel %vm1030, %v2476, 0
        %v2528 = vsel %vm1030, %v2478, 0
        %v2531 = vsel %vm1030, %v2480, 0
        %v2534 = vsel %vm1030, %v2482, 0
        %v2537 = vsel %vm1030, %v2484, 0
        %v2540 = vsel %vm1030, %v2486, 0
        %v2543 = vsel %vm1030, %v2488, 0
        %v2546 = vsel %vm1030, %v2490, 0
        %v2549 = vsel %vm1030, %v2492, 0
        %v2552 = vsel %vm1030, %v2494, 0
        %v2555 = vsel %vm1030, %v2496, 0
        %v2558 = vsel %vm1030, %v2498, 0
        %v2561 = vsel %vm1030, %v2500, 0
        %v2564 = vsel %vm1030, %v2502, 0
        %v2567 = vsel %vm1030, %v2504, 0
        %2569 = vmatprep.subr.bf16.mxu0 0
        %2570 = vmatpush1.bf16.msra.mxu0 %v1019
        %2571 = vmatprep.subr.bf16.mxu0 0
        %2572 = vmatpush1.bf16.msra.mxu0 %v1018
        %2573 = vmatprep.subr.bf16.mxu0 0
        %2574 = vmatpush1.bf16.msra.mxu0 %v1017
        %2575 = vmatprep.subr.bf16.mxu0 0
        %2576 = vmatpush1.bf16.msra.mxu0 %v1016
        %2577 = vmatprep.subr.bf16.mxu0 0
        %2578 = vmatpush1.bf16.msra.mxu0 %v1015
        %2579 = vmatprep.subr.bf16.mxu0 0
        %2580 = vmatpush1.bf16.msra.mxu0 %v1014
        %2581 = vmatprep.subr.bf16.mxu0 0
        %2582 = vmatpush1.bf16.msra.mxu0 %v1013
        %2583 = vmatprep.subr.bf16.mxu0 0
        %2584 = vmatpush1.bf16.msra.mxu0 %v1012
        %2585 = vmatprep.subr.bf16.mxu0 0
        %2586 = vmatpush2.bf16.msra.mxu0 0
        %2587 = vmatprep.subr.bf16.mxu0 0
        %2588 = vmatpush2.bf16.msra.mxu0 0
        %2589 = vmatprep.subr.bf16.mxu0 0
        %2590 = vmatpush2.bf16.msra.mxu0 0
        %2591 = vmatprep.subr.bf16.mxu0 0
        %2592 = vmatpush2.bf16.msra.mxu0 0
        %2593 = vmatprep.subr.bf16.mxu0 0
        %2594 = vmatpush2.bf16.msra.mxu0 0
        %2595 = vmatprep.subr.bf16.mxu0 0
        %2596 = vmatpush2.bf16.msra.mxu0 0
        %2597 = vmatprep.subr.bf16.mxu0 0
        %2598 = vmatpush2.bf16.msra.mxu0 0
        %2599 = vmatprep.subr.bf16.mxu0 0
        %2600 = vmatpush2.bf16.msra.mxu0 %v1020
        %2601 = vmatprep.mubr.bf16.mxu0 %v2522
        %2602 = vmatmul.mubr.bf16.gmra.mxu0 %v2473
        %v2603 = vpop.f32.mrf.mxu0
        %v2604 = vadd.f32 %v830, %v2603
        %v2605 = vpop.f32.mrf.mxu0
        %v2606 = vpop.f32.mrf.mxu0
        %v2607 = vadd.f32 %v830, %v2606
        %v2608 = vpop.f32.mrf.mxu0
        %2609 = vmatprep.mubr.bf16.mxu0 %v2525
        %2610 = vmatmul.mubr.bf16.gmra.mxu0 %v2475
        %v2611 = vpop.f32.mrf.mxu0
        %v2612 = vadd.f32 %v830, %v2611
        %v2613 = vpop.f32.mrf.mxu0
        %v2614 = vpop.f32.mrf.mxu0
        %v2615 = vadd.f32 %v830, %v2614
        %v2616 = vpop.f32.mrf.mxu0
        %2617 = vmatprep.mubr.bf16.mxu0 %v2528
        %2618 = vmatmul.mubr.bf16.gmra.mxu0 %v2477
        %v2619 = vpop.f32.mrf.mxu0
        %v2620 = vadd.f32 %v830, %v2619
        %v2621 = vpop.f32.mrf.mxu0
        %v2622 = vpop.f32.mrf.mxu0
        %v2623 = vadd.f32 %v830, %v2622
        %v2624 = vpop.f32.mrf.mxu0
        %2625 = vmatprep.mubr.bf16.mxu0 %v2531
        %2626 = vmatmul.mubr.bf16.gmra.mxu0 %v2479
        %v2627 = vpop.f32.mrf.mxu0
        %v2628 = vadd.f32 %v830, %v2627
        %v2629 = vpop.f32.mrf.mxu0
        %v2630 = vpop.f32.mrf.mxu0
        %v2631 = vadd.f32 %v830, %v2630
        %v2632 = vpop.f32.mrf.mxu0
        %2633 = vmatprep.mubr.bf16.mxu0 %v2534
        %2634 = vmatmul.mubr.bf16.gmra.mxu0 %v2481
        %v2635 = vpop.f32.mrf.mxu0
        %v2636 = vadd.f32 %v830, %v2635
        %v2637 = vpop.f32.mrf.mxu0
        %v2638 = vpop.f32.mrf.mxu0
        %v2639 = vadd.f32 %v830, %v2638
        %v2640 = vpop.f32.mrf.mxu0
        %2641 = vmatprep.mubr.bf16.mxu0 %v2537
        %2642 = vmatmul.mubr.bf16.gmra.mxu0 %v2483
        %v2643 = vpop.f32.mrf.mxu0
        %v2644 = vadd.f32 %v830, %v2643
        %v2645 = vpop.f32.mrf.mxu0
        %v2646 = vpop.f32.mrf.mxu0
        %v2647 = vadd.f32 %v830, %v2646
        %v2648 = vpop.f32.mrf.mxu0
        %2649 = vmatprep.mubr.bf16.mxu0 %v2540
        %2650 = vmatmul.mubr.bf16.gmra.mxu0 %v2485
        %v2651 = vpop.f32.mrf.mxu0
        %v2652 = vadd.f32 %v830, %v2651
        %v2653 = vpop.f32.mrf.mxu0
        %v2654 = vpop.f32.mrf.mxu0
        %v2655 = vadd.f32 %v830, %v2654
        %v2656 = vpop.f32.mrf.mxu0
        %2657 = vmatprep.mubr.bf16.mxu0 %v2543
        %2658 = vmatmul.mubr.bf16.gmra.mxu0 %v2487
        %v2659 = vpop.f32.mrf.mxu0
        %v2660 = vadd.f32 %v830, %v2659
        %v2661 = vpop.f32.mrf.mxu0
        %v2662 = vpop.f32.mrf.mxu0
        %v2663 = vadd.f32 %v830, %v2662
        %v2664 = vpop.f32.mrf.mxu0
        %2665 = vmatprep.mubr.bf16.mxu0 %v2546
        %2666 = vmatmul.mubr.bf16.gmra.mxu0 %v2489
        %v2667 = vpop.f32.mrf.mxu0
        %v2668 = vadd.f32 %v830, %v2667
        %v2669 = vpop.f32.mrf.mxu0
        %v2670 = vpop.f32.mrf.mxu0
        %v2671 = vadd.f32 %v830, %v2670
        %v2672 = vpop.f32.mrf.mxu0
        %2673 = vmatprep.mubr.bf16.mxu0 %v2549
        %2674 = vmatmul.mubr.bf16.gmra.mxu0 %v2491
        %v2675 = vpop.f32.mrf.mxu0
        %v2676 = vadd.f32 %v830, %v2675
        %v2677 = vpop.f32.mrf.mxu0
        %v2678 = vpop.f32.mrf.mxu0
        %v2679 = vadd.f32 %v830, %v2678
        %v2680 = vpop.f32.mrf.mxu0
        %2681 = vmatprep.mubr.bf16.mxu0 %v2552
        %2682 = vmatmul.mubr.bf16.gmra.mxu0 %v2493
        %v2683 = vpop.f32.mrf.mxu0
        %v2684 = vadd.f32 %v830, %v2683
        %v2685 = vpop.f32.mrf.mxu0
        %v2686 = vpop.f32.mrf.mxu0
        %v2687 = vadd.f32 %v830, %v2686
        %v2688 = vpop.f32.mrf.mxu0
        %2689 = vmatprep.mubr.bf16.mxu0 %v2555
        %2690 = vmatmul.mubr.bf16.gmra.mxu0 %v2495
        %v2691 = vpop.f32.mrf.mxu0
        %v2692 = vadd.f32 %v830, %v2691
        %v2693 = vpop.f32.mrf.mxu0
        %v2694 = vpop.f32.mrf.mxu0
        %v2695 = vadd.f32 %v830, %v2694
        %v2696 = vpop.f32.mrf.mxu0
        %2697 = vmatprep.mubr.bf16.mxu0 %v2558
        %2698 = vmatmul.mubr.bf16.gmra.mxu0 %v2497
        %v2699 = vpop.f32.mrf.mxu0
        %v2700 = vadd.f32 %v830, %v2699
        %v2701 = vpop.f32.mrf.mxu0
        %v2702 = vpop.f32.mrf.mxu0
        %v2703 = vadd.f32 %v830, %v2702
        %v2704 = vpop.f32.mrf.mxu0
        %2705 = vmatprep.mubr.bf16.mxu0 %v2561
        %2706 = vmatmul.mubr.bf16.gmra.mxu0 %v2499
        %v2707 = vpop.f32.mrf.mxu0
        %v2708 = vadd.f32 %v830, %v2707
        %v2709 = vpop.f32.mrf.mxu0
        %v2710 = vpop.f32.mrf.mxu0
        %v2711 = vadd.f32 %v830, %v2710
        %v2712 = vpop.f32.mrf.mxu0
        %2713 = vmatprep.mubr.bf16.mxu0 %v2564
        %2714 = vmatmul.mubr.bf16.gmra.mxu0 %v2501
        %v2715 = vpop.f32.mrf.mxu0
        %v2716 = vadd.f32 %v830, %v2715
        %v2717 = vpop.f32.mrf.mxu0
        %v2718 = vpop.f32.mrf.mxu0
        %v2719 = vadd.f32 %v830, %v2718
        %v2720 = vpop.f32.mrf.mxu0
        %2721 = vmatprep.mubr.bf16.mxu0 %v2567
        %2722 = vmatmul.mubr.bf16.gmra.mxu0 %v2503
        %v2723 = vpop.f32.mrf.mxu0
        %v2724 = vadd.f32 %v830, %v2723
        %v2725 = vpop.f32.mrf.mxu0
        %v2726 = vpop.f32.mrf.mxu0
        %v2727 = vadd.f32 %v830, %v2726
        %v2728 = vpop.f32.mrf.mxu0
        %2729 = vdwg.mxu0
        %v2730 = vmax.f32 %v2604, 0.0
        %v2731 = vmax.f32 %v2607, 0.0
        %v2732 = vmax.f32 %v2612, 0.0
        %v2733 = vmax.f32 %v2615, 0.0
        %v2734 = vmax.f32 %v2620, 0.0
        %v2735 = vmax.f32 %v2623, 0.0
        %v2736 = vmax.f32 %v2628, 0.0
        %v2737 = vmax.f32 %v2631, 0.0
        %v2738 = vmax.f32 %v2636, 0.0
        %v2739 = vmax.f32 %v2639, 0.0
        %v2740 = vmax.f32 %v2644, 0.0
        %v2741 = vmax.f32 %v2647, 0.0
        %v2742 = vmax.f32 %v2652, 0.0
        %v2743 = vmax.f32 %v2655, 0.0
        %v2744 = vmax.f32 %v2660, 0.0
        %v2745 = vmax.f32 %v2663, 0.0
        %v2746 = vmax.f32 %v2668, 0.0
        %v2747 = vmax.f32 %v2671, 0.0
        %v2748 = vmax.f32 %v2676, 0.0
        %v2749 = vmax.f32 %v2679, 0.0
        %v2750 = vmax.f32 %v2684, 0.0
        %v2751 = vmax.f32 %v2687, 0.0
        %v2752 = vmax.f32 %v2692, 0.0
        %v2753 = vmax.f32 %v2695, 0.0
        %v2754 = vmax.f32 %v2700, 0.0
        %v2755 = vmax.f32 %v2703, 0.0
        %v2756 = vmax.f32 %v2708, 0.0
        %v2757 = vmax.f32 %v2711, 0.0
        %v2758 = vmax.f32 %v2716, 0.0
        %v2759 = vmax.f32 %v2719, 0.0
        %v2760 = vmax.f32 %v2724, 0.0
        %v2761 = vmax.f32 %v2727, 0.0
        %v2762 = vmul.f32 %v2730, %v1276
        %v2763 = vmul.f32 %v2731, %v1276
        %v2764 = vmul.f32 %v2732, %v1276
        %v2765 = vmul.f32 %v2733, %v1276
        %v2766 = vmul.f32 %v2734, %v1276
        %v2767 = vmul.f32 %v2735, %v1276
        %v2768 = vmul.f32 %v2736, %v1276
        %v2769 = vmul.f32 %v2737, %v1276
        %v2770 = vmul.f32 %v2738, %v1276
        %v2771 = vmul.f32 %v2739, %v1276
        %v2772 = vmul.f32 %v2740, %v1276
        %v2773 = vmul.f32 %v2741, %v1276
        %v2774 = vmul.f32 %v2742, %v1276
        %v2775 = vmul.f32 %v2743, %v1276
        %v2776 = vmul.f32 %v2744, %v1276
        %v2777 = vmul.f32 %v2745, %v1276
        %v2778 = vmul.f32 %v2746, %v1276
        %v2779 = vmul.f32 %v2747, %v1276
        %v2780 = vmul.f32 %v2748, %v1276
        %v2781 = vmul.f32 %v2749, %v1276
        %v2782 = vmul.f32 %v2750, %v1276
        %v2783 = vmul.f32 %v2751, %v1276
        %v2784 = vmul.f32 %v2752, %v1276
        %v2785 = vmul.f32 %v2753, %v1276
        %v2786 = vmul.f32 %v2754, %v1276
        %v2787 = vmul.f32 %v2755, %v1276
        %v2788 = vmul.f32 %v2756, %v1276
        %v2789 = vmul.f32 %v2757, %v1276
        %v2790 = vmul.f32 %v2758, %v1276
        %v2791 = vmul.f32 %v2759, %v1276
        %v2792 = vmul.f32 %v2760, %v1276
        %v2793 = vmul.f32 %v2761, %v1276
        %v2794 = vadd.f32 %v2762, %v1314
        %v2795 = vadd.f32 %v2763, %v1314
        %v2796 = vadd.f32 %v2764, %v1314
        %v2797 = vadd.f32 %v2765, %v1314
        %v2798 = vadd.f32 %v2766, %v1314
        %v2799 = vadd.f32 %v2767, %v1314
        %v2800 = vadd.f32 %v2768, %v1314
        %v2801 = vadd.f32 %v2769, %v1314
        %v2802 = vadd.f32 %v2770, %v1314
        %v2803 = vadd.f32 %v2771, %v1314
        %v2804 = vadd.f32 %v2772, %v1314
        %v2805 = vadd.f32 %v2773, %v1314
        %v2806 = vadd.f32 %v2774, %v1314
        %v2807 = vadd.f32 %v2775, %v1314
        %v2808 = vadd.f32 %v2776, %v1314
        %v2809 = vadd.f32 %v2777, %v1314
        %v2810 = vadd.f32 %v2778, %v1314
        %v2811 = vadd.f32 %v2779, %v1314
        %v2812 = vadd.f32 %v2780, %v1314
        %v2813 = vadd.f32 %v2781, %v1314
        %v2814 = vadd.f32 %v2782, %v1314
        %v2815 = vadd.f32 %v2783, %v1314
        %v2816 = vadd.f32 %v2784, %v1314
        %v2817 = vadd.f32 %v2785, %v1314
        %v2818 = vadd.f32 %v2786, %v1314
        %v2819 = vadd.f32 %v2787, %v1314
        %v2820 = vadd.f32 %v2788, %v1314
        %v2821 = vadd.f32 %v2789, %v1314
        %v2822 = vadd.f32 %v2790, %v1314
        %v2823 = vadd.f32 %v2791, %v1314
        %v2824 = vadd.f32 %v2792, %v1314
        %v2825 = vadd.f32 %v2793, %v1314
        %v2826 = vmax.f32 %v2312, %v2794
        %v2827 = vmax.f32 %v2313, %v2795
        %v2828 = vmax.f32 %v2314, %v2796
        %v2829 = vmax.f32 %v2315, %v2797
        %v2830 = vmax.f32 %v2316, %v2798
        %v2831 = vmax.f32 %v2317, %v2799
        %v2832 = vmax.f32 %v2318, %v2800
        %v2833 = vmax.f32 %v2319, %v2801
        %v2834 = vmax.f32 %v2320, %v2802
        %v2835 = vmax.f32 %v2321, %v2803
        %v2836 = vmax.f32 %v2322, %v2804
        %v2837 = vmax.f32 %v2323, %v2805
        %v2838 = vmax.f32 %v2324, %v2806
        %v2839 = vmax.f32 %v2325, %v2807
        %v2840 = vmax.f32 %v2326, %v2808
        %v2841 = vmax.f32 %v2327, %v2809
        %v2842 = vmax.f32 %v2328, %v2810
        %v2843 = vmax.f32 %v2329, %v2811
        %v2844 = vmax.f32 %v2330, %v2812
        %v2845 = vmax.f32 %v2331, %v2813
        %v2846 = vmax.f32 %v2332, %v2814
        %v2847 = vmax.f32 %v2333, %v2815
        %v2848 = vmax.f32 %v2334, %v2816
        %v2849 = vmax.f32 %v2335, %v2817
        %v2850 = vmax.f32 %v2336, %v2818
        %v2851 = vmax.f32 %v2337, %v2819
        %v2852 = vmax.f32 %v2338, %v2820
        %v2853 = vmax.f32 %v2339, %v2821
        %v2854 = vmax.f32 %v2340, %v2822
        %v2855 = vmax.f32 %v2341, %v2823
        %v2856 = vmax.f32 %v2342, %v2824
        %v2857 = vmax.f32 %v2343, %v2825
        %v2858 = vmax.f32 %v1830, %v2826
        %v2859 = vmax.f32 %v1831, %v2827
        %v2860 = vmax.f32 %v1832, %v2828
        %v2861 = vmax.f32 %v1833, %v2829
        %v2862 = vmax.f32 %v1834, %v2830
        %v2863 = vmax.f32 %v1835, %v2831
        %v2864 = vmax.f32 %v1836, %v2832
        %v2865 = vmax.f32 %v1837, %v2833
        %v2866 = vmax.f32 %v1838, %v2834
        %v2867 = vmax.f32 %v1839, %v2835
        %v2868 = vmax.f32 %v1840, %v2836
        %v2869 = vmax.f32 %v1841, %v2837
        %v2870 = vmax.f32 %v1842, %v2838
        %v2871 = vmax.f32 %v1843, %v2839
        %v2872 = vmax.f32 %v1844, %v2840
        %v2873 = vmax.f32 %v1845, %v2841
        %v2874 = vmax.f32 %v1846, %v2842
        %v2875 = vmax.f32 %v1847, %v2843
        %v2876 = vmax.f32 %v1848, %v2844
        %v2877 = vmax.f32 %v1849, %v2845
        %v2878 = vmax.f32 %v1850, %v2846
        %v2879 = vmax.f32 %v1851, %v2847
        %v2880 = vmax.f32 %v1852, %v2848
        %v2881 = vmax.f32 %v1853, %v2849
        %v2882 = vmax.f32 %v1854, %v2850
        %v2883 = vmax.f32 %v1855, %v2851
        %v2884 = vmax.f32 %v1856, %v2852
        %v2885 = vmax.f32 %v1857, %v2853
        %v2886 = vmax.f32 %v1858, %v2854
        %v2887 = vmax.f32 %v1859, %v2855
        %v2888 = vmax.f32 %v1860, %v2856
        %v2889 = vmax.f32 %v1861, %v2857
        %2890 = vst.msk [vmem:[%s770] sm:$0xff] %vm1030, %v2858
        %2891 = vst.msk [vmem:[%s770 + $0x8] sm:$0xff] %vm1030, %v2859
        %2892 = vst.msk [vmem:[%s770 + $0x10] sm:$0xff] %vm1030, %v2860
        %2893 = vst.msk [vmem:[%s770 + $0x18] sm:$0xff] %vm1030, %v2861
        %2894 = vst.msk [vmem:[%s770 + $0x20] sm:$0xff] %vm1030, %v2862
        %2895 = vst.msk [vmem:[%s770 + $0x28] sm:$0xff] %vm1030, %v2863
        %2896 = vst.msk [vmem:[%s770 + $0x30] sm:$0xff] %vm1030, %v2864
        %2897 = vst.msk [vmem:[%s770 + $0x38] sm:$0xff] %vm1030, %v2865
        %2898 = vst.msk [vmem:[%s770 + $0x40] sm:$0xff] %vm1030, %v2866
        %2899 = vst.msk [vmem:[%s770 + $0x48] sm:$0xff] %vm1030, %v2867
        %2900 = vst.msk [vmem:[%s770 + $0x50] sm:$0xff] %vm1030, %v2868
        %2901 = vst.msk [vmem:[%s770 + $0x58] sm:$0xff] %vm1030, %v2869
        %2902 = vst.msk [vmem:[%s770 + $0x60] sm:$0xff] %vm1030, %v2870
        %2903 = vst.msk [vmem:[%s770 + $0x68] sm:$0xff] %vm1030, %v2871
        %2904 = vst.msk [vmem:[%s770 + $0x70] sm:$0xff] %vm1030, %v2872
        %2905 = vst.msk [vmem:[%s770 + $0x78] sm:$0xff] %vm1030, %v2873
        %2906 = vst.msk [vmem:[%s770 + $0x80] sm:$0xff] %vm1030, %v2874
        %2907 = vst.msk [vmem:[%s770 + $0x88] sm:$0xff] %vm1030, %v2875
        %2908 = vst.msk [vmem:[%s770 + $0x90] sm:$0xff] %vm1030, %v2876
        %2909 = vst.msk [vmem:[%s770 + $0x98] sm:$0xff] %vm1030, %v2877
        %2910 = vst.msk [vmem:[%s770 + $0xa0] sm:$0xff] %vm1030, %v2878
        %2911 = vst.msk [vmem:[%s770 + $0xa8] sm:$0xff] %vm1030, %v2879
        %2912 = vst.msk [vmem:[%s770 + $0xb0] sm:$0xff] %vm1030, %v2880
        %2913 = vst.msk [vmem:[%s770 + $0xb8] sm:$0xff] %vm1030, %v2881
        %2914 = vst.msk [vmem:[%s770 + $0xc0] sm:$0xff] %vm1030, %v2882
        %2915 = vst.msk [vmem:[%s770 + $0xc8] sm:$0xff] %vm1030, %v2883
        %2916 = vst.msk [vmem:[%s770 + $0xd0] sm:$0xff] %vm1030, %v2884
        %2917 = vst.msk [vmem:[%s770 + $0xd8] sm:$0xff] %vm1030, %v2885
        %2918 = vst.msk [vmem:[%s770 + $0xe0] sm:$0xff] %vm1030, %v2886
        %2919 = vst.msk [vmem:[%s770 + $0xe8] sm:$0xff] %vm1030, %v2887
        %2920 = vst.msk [vmem:[%s770 + $0xf0] sm:$0xff] %vm1030, %v2888
        %2921 = vst.msk [vmem:[%s770 + $0xf8] sm:$0xff] %vm1030, %v2889
        %s2922 = smul.u32 32, %s16
        %p2923 = scmp.lt.s32.totalorder %s2922, 63
        %s2924 = scalar_select %p2923, %s2922, 63
        %s2925 = smul.addr %s2924, 8
        %s2926 = scalar_lea.vmem %s5, %s2925
        // Predicated region
        $region79: #{vibro_feat_forward.5} parent=73 // pred_check
          %p2927 = pneg %p144
        $region80: #{vibro_feat_forward.5} parent=73 // pred_check_branch
          %2929 = sbr.rel (%p2927) target = $region82
        $region81: #{vibro_feat_forward.5} parent=73 // pred_region
          %s2930 = smul.u32 32, %s16
        $region82: #{vibro_feat_forward.5} parent=73 // pred_fallthru
          _
      $region74: #{vibro_feat_forward.5} parent=5 // pred_fallthru
        _
      %p2931 = scmp.le.s32.totalorder 2, %s11
      // Predicated region
      $region83: #{vibro_feat_forward.5} parent=5 // pred_check
        %p2932 = pneg %p2931
      $region84: #{vibro_feat_forward.5} parent=5 // pred_check_branch
        %2934 = sbr.rel (%p2932) target = $region86
      $region85: #{vibro_feat_forward.5} parent=5 // pred_region
        %s2935 = ssub.s32 %s11, 2
        // Predicated region
        $region87: #{vibro_feat_forward.5} parent=85 // pred_check
          %p2936 = pneg %p150
        $region88: #{vibro_feat_forward.5} parent=85 // pred_check_branch
          %2938 = sbr.rel (%p2936) target = $region90
        $region89: #{vibro_feat_forward.5} parent=85 // pred_region
          %s2939 = smul.u32 32, %s17
          %p2940 = scmp.lt.s32.totalorder %s2939, 63
          %s2941 = scalar_select %p2940, %s2939, 63
          %s2942 = smul.addr %s2941, 8
          %s2943 = scalar_lea.vmem %s5, %s2942
        $region90: #{vibro_feat_forward.5} parent=85 // pred_fallthru
          _
      $region86: #{vibro_feat_forward.5} parent=5 // pred_fallthru
        _
    $region6: #{vibro_feat_forward.5} parent=1 // loop_footer
      %s15 = sadd.s32 1, %s11
    $region7: #{vibro_feat_forward.5} parent=1 // loop_footer_branch
      %10 = sbr.rel target = $region3
    $region8: #{vibro_feat_forward.5} parent=1 // loop_exit
      _

// kernel: vibro_feat_forward.6
$region0: #{vibro_feat_forward.6}
  #allocation0 [shape = 'u32[]', space=smem, size = 0x4, offset = 0x4, fixed_abs, tag = 'smem constant byte address 0x4 - core index']
  #allocation1 [shape = 'u32[144,128]{1,0:T(1,128)}', space=vmem, size = 0x12000, scoped, tag = 'internal scratch']
  %s0 = inlined_call_operand.vmem [shape: bf16[4,32,144], index: 0, kind: input, shape index: {}]
  %s1 = inlined_call_operand.vmem [shape: bf16[144,8], index: 1, kind: input, shape index: {}]
  %s2 = inlined_call_operand.vmem [shape: f32[1,8], index: 2, kind: input, shape index: {}]
  %s3 = inlined_call_operand.vmem [shape: f32[1,8], index: 3, kind: input, shape index: {}]
  %s4 = inlined_call_operand.vmem [shape: f32[1,8], index: 4, kind: input, shape index: {}]
  %s5 = inlined_call_operand.vmem [shape: f32[32,8], index: 5, kind: output, shape index: {}]
  %s6 = sld [smem:[#allocation0]]
  $region91: #{vibro_feat_forward.6} parent=0
    _
  %s8 = ssub.s32 1, %s6
  %s9 = scalar_select 0, %s8, %s6
  $region1: #{vibro_feat_forward.6} parent=0
    #allocation2 [shape = 'u8[65536]{0}', space=vmem, size = 0x10000, scoped, tag = 'input window, operand 0']
    loop: start=0, step=1, limit=4
    $region2: #{vibro_feat_forward.6} parent=1 // loop_pre_header
      _
    $region3: #{vibro_feat_forward.6} parent=1 // loop_header
      %s11 = sphi 0, %s15
      %p12 = scmp.ge.s32.totalorder %s11, 4
      %s21 = sphi 0, %s23
      %s24 = sphi 0, %s21
      %s25 = sphi 0, %s24
      %s41 = sphi 0, %s25
      %s45 = sphi 0, %s45
      %s47 = sphi 0, %s45
      %s48 = sphi 0, %s47
      %s62 = sphi 0, %s48
      %s66 = sphi 0, %s66
      %s68 = sphi 0, %s66
      %s69 = sphi 0, %s68
      %s83 = sphi 0, %s69
      %s87 = sphi 0, %s87
      %s89 = sphi 0, %s87
      %s90 = sphi 0, %s89
      %s104 = sphi 0, %s90
      %s108 = sphi 0, %s108
      %s110 = sphi 0, %s108
      %s111 = sphi 0, %s110
      %s125 = sphi 0, %s111
      %s131 = sphi 0, %s133
      %s134 = sphi 0, %s131
      %s135 = sphi 0, %s134
      %s151 = sphi 0, %s135
    $region4: #{vibro_feat_forward.6} parent=1 // loop_header_branch
      %14 = sbr.rel (%p12) target = $region8
    $region5: #{vibro_feat_forward.6} parent=1 // loop_body
      %s16 = ssub.s32 %s11, 1
      %s17 = ssub.s32 %s11, 2
      %s18 = sadd.s32 %s11, 1
      %s19 = ssub.s32 %s11, %s18
      %p20 = scmp.eq.s32.totalorder %s19, 0
      %s22 = sadd.s32 %s21, 1
      %s23 = scalar_select %p20, %s21, %s22
      %p26 = pneg %p20
      %p27 = scmp.eq.s32.totalorder %s11, 1
      %p28 = por %p26, %p27
      %p29 = scmp.ne.s32.totalorder %s21, %s24
      %p30 = scmp.eq.s32.totalorder %s11, 0
      %p31 = por %p29, %p30
      %p32 = scmp.ne.s32.totalorder %s21, %s24
      %p33 = scmp.eq.s32.totalorder %s16, 1
      %p34 = por %p32, %p33
      %p35 = scmp.ne.s32.totalorder %s24, %s25
      %p36 = scmp.eq.s32.totalorder %s16, 0
      %p37 = por %p35, %p36
      %p38 = scmp.ne.s32.totalorder %s24, %s25
      %p39 = scmp.eq.s32.totalorder %s17, 1
      %p40 = por %p38, %p39
      %p42 = scmp.ne.s32.totalorder %s25, %s41
      %p43 = scmp.eq.s32.totalorder %s17, 0
      %p44 = por %p42, %p43
      %s46 = sadd.s32 %s45, 1
      %p49 = scmp.eq.s32.totalorder %s11, 1
      %p50 = scmp.ne.s32.totalorder %s45, %s47
      %p51 = scmp.eq.s32.totalorder %s11, 0
      %p52 = por %p50, %p51
      %p53 = scmp.ne.s32.totalorder %s45, %s47
      %p54 = scmp.eq.s32.totalorder %s16, 1
      %p55 = por %p53, %p54
      %p56 = scmp.ne.s32.totalorder %s47, %s48
      %p57 = scmp.eq.s32.totalorder %s16, 0
      %p58 = por %p56, %p57
      %p59 = scmp.ne.s32.totalorder %s47, %s48
      %p60 = scmp.eq.s32.totalorder %s17, 1
      %p61 = por %p59, %p60
      %p63 = scmp.ne.s32.totalorder %s48, %s62
      %p64 = scmp.eq.s32.totalorder %s17, 0
      %p65 = por %p63, %p64
      %s67 = sadd.s32 %s66, 1
      %p70 = scmp.eq.s32.totalorder %s11, 1
      %p71 = scmp.ne.s32.totalorder %s66, %s68
      %p72 = scmp.eq.s32.totalorder %s11, 0
      %p73 = por %p71, %p72
      %p74 = scmp.ne.s32.totalorder %s66, %s68
      %p75 = scmp.eq.s32.totalorder %s16, 1
      %p76 = por %p74, %p75
      %p77 = scmp.ne.s32.totalorder %s68, %s69
      %p78 = scmp.eq.s32.totalorder %s16, 0
      %p79 = por %p77, %p78
      %p80 = scmp.ne.s32.totalorder %s68, %s69
      %p81 = scmp.eq.s32.totalorder %s17, 1
      %p82 = por %p80, %p81
      %p84 = scmp.ne.s32.totalorder %s69, %s83
      %p85 = scmp.eq.s32.totalorder %s17, 0
      %p86 = por %p84, %p85
      %s88 = sadd.s32 %s87, 1
      %p91 = scmp.eq.s32.totalorder %s11, 1
      %p92 = scmp.ne.s32.totalorder %s87, %s89
      %p93 = scmp.eq.s32.totalorder %s11, 0
      %p94 = por %p92, %p93
      %p95 = scmp.ne.s32.totalorder %s87, %s89
      %p96 = scmp.eq.s32.totalorder %s16, 1
      %p97 = por %p95, %p96
      %p98 = scmp.ne.s32.totalorder %s89, %s90
      %p99 = scmp.eq.s32.totalorder %s16, 0
      %p100 = por %p98, %p99
      %p101 = scmp.ne.s32.totalorder %s89, %s90
      %p102 = scmp.eq.s32.totalorder %s17, 1
      %p103 = por %p101, %p102
      %p105 = scmp.ne.s32.totalorder %s90, %s104
      %p106 = scmp.eq.s32.totalorder %s17, 0
      %p107 = por %p105, %p106
      %s109 = sadd.s32 %s108, 1
      %p112 = scmp.eq.s32.totalorder %s11, 1
      %p113 = scmp.ne.s32.totalorder %s108, %s110
      %p114 = scmp.eq.s32.totalorder %s11, 0
      %p115 = por %p113, %p114
      %p116 = scmp.ne.s32.totalorder %s108, %s110
      %p117 = scmp.eq.s32.totalorder %s16, 1
      %p118 = por %p116, %p117
      %p119 = scmp.ne.s32.totalorder %s110, %s111
      %p120 = scmp.eq.s32.totalorder %s16, 0
      %p121 = por %p119, %p120
      %p122 = scmp.ne.s32.totalorder %s110, %s111
      %p123 = scmp.eq.s32.totalorder %s17, 1
      %p124 = por %p122, %p123
      %p126 = scmp.ne.s32.totalorder %s111, %s125
      %p127 = scmp.eq.s32.totalorder %s17, 0
      %p128 = por %p126, %p127
      %s129 = ssub.s32 %s11, %s18
      %p130 = scmp.eq.s32.totalorder %s129, 0
      %s132 = sadd.s32 %s131, 1
      %s133 = scalar_select %p130, %s131, %s132
      %p136 = pneg %p130
      %p137 = scmp.eq.s32.totalorder %s11, 1
      %p138 = por %p136, %p137
      %p139 = scmp.ne.s32.totalorder %s131, %s134
      %p140 = scmp.eq.s32.totalorder %s11, 0
      %p141 = por %p139, %p140
      %p142 = scmp.ne.s32.totalorder %s131, %s134
      %p143 = scmp.eq.s32.totalorder %s16, 1
      %p144 = por %p142, %p143
      %p145 = scmp.ne.s32.totalorder %s134, %s135
      %p146 = scmp.eq.s32.totalorder %s16, 0
      %p147 = por %p145, %p146
      %p148 = scmp.ne.s32.totalorder %s134, %s135
      %p149 = scmp.eq.s32.totalorder %s17, 1
      %p150 = por %p148, %p149
      %p152 = scmp.ne.s32.totalorder %s135, %s151
      %p153 = scmp.eq.s32.totalorder %s17, 0
      %p154 = por %p152, %p153
      %p155 = scmp.le.s32.totalorder 1, %s11
      %p156 = scmp.lt.s32.totalorder %s11, 3
      %p157 = pnand %p155, %p156
      %p158 = pneg %p157
      // Predicated region
      $region9: #{vibro_feat_forward.6} parent=5 // pred_check
        _
      $region10: #{vibro_feat_forward.6} parent=5 // pred_check_branch
        %160 = sbr.rel (%p157) target = $region12
      $region11: #{vibro_feat_forward.6} parent=5 // pred_region
        %s161 = ssub.s32 %s11, 1
        // Predicated region
        $region13: #{vibro_feat_forward.6} parent=11 // pred_check
          %p162 = pneg %p58
        $region14: #{vibro_feat_forward.6} parent=11 // pred_check_branch
          %164 = sbr.rel (%p162) target = $region16
        $region15: #{vibro_feat_forward.6} parent=11 // pred_region
          _
        $region16: #{vibro_feat_forward.6} parent=11 // pred_fallthru
          _
        // Predicated region
        $region17: #{vibro_feat_forward.6} parent=11 // pred_check
          %p165 = pneg %p79
        $region18: #{vibro_feat_forward.6} parent=11 // pred_check_branch
          %167 = sbr.rel (%p165) target = $region20
        $region19: #{vibro_feat_forward.6} parent=11 // pred_region
          _
        $region20: #{vibro_feat_forward.6} parent=11 // pred_fallthru
          _
        // Predicated region
        $region21: #{vibro_feat_forward.6} parent=11 // pred_check
          %p168 = pneg %p100
        $region22: #{vibro_feat_forward.6} parent=11 // pred_check_branch
          %170 = sbr.rel (%p168) target = $region24
        $region23: #{vibro_feat_forward.6} parent=11 // pred_region
          _
        $region24: #{vibro_feat_forward.6} parent=11 // pred_fallthru
          _
        // Predicated region
        $region25: #{vibro_feat_forward.6} parent=11 // pred_check
          %p171 = pneg %p121
        $region26: #{vibro_feat_forward.6} parent=11 // pred_check_branch
          %173 = sbr.rel (%p171) target = $region28
        $region27: #{vibro_feat_forward.6} parent=11 // pred_region
          _
        $region28: #{vibro_feat_forward.6} parent=11 // pred_fallthru
          _
      $region12: #{vibro_feat_forward.6} parent=5 // pred_fallthru
        _
      %p174 = scmp.lt.s32.totalorder %s11, 2
      // Predicated region
      $region29: #{vibro_feat_forward.6} parent=5 // pred_check
        %p175 = pneg %p174
      $region30: #{vibro_feat_forward.6} parent=5 // pred_check_branch
        %177 = sbr.rel (%p175) target = $region32
      $region31: #{vibro_feat_forward.6} parent=5 // pred_region
        // Predicated region
        $region33: #{vibro_feat_forward.6} parent=31 // pred_check
          %p178 = pneg %p31
        $region34: #{vibro_feat_forward.6} parent=31 // pred_check_branch
          %180 = sbr.rel (%p178) target = $region36
        $region35: #{vibro_feat_forward.6} parent=31 // pred_region
          %s181 = sand.u32 %s21, 1
          %s182 = sand.u32 %s21, 1
          %s183 = smul.addr %s182, 64
          %s184 = scalar_lea.vmem [#allocation2], %s183
          %s185 = smul.u32 2, %s11
          %s186 = smul.addr %s185, 2
          %s187 = smul.addr %s186, 4
          %s188 = scalar_lea.vmem %s0, %s187
          // Predicated region
          $region37: #{vibro_feat_forward.6} parent=35 // pred_check
            _
          $region38: #{vibro_feat_forward.6} parent=35 // pred_check_branch
            %190 = sbr.rel (0) target = $region40
          $region39: #{vibro_feat_forward.6} parent=35 // pred_region
            // Predicated region
            $region41: #{vibro_feat_forward.6} parent=39 // pred_check
              _
            $region42: #{vibro_feat_forward.6} parent=39 // pred_check_branch
              %192 = sbr.rel (0) target = $region44
            $region43: #{vibro_feat_forward.6} parent=39 // pred_region
              // Predicated region
              $region56: #{vibro_feat_forward.6} parent=43 // pred_check
                _
              $region57: #{vibro_feat_forward.6} parent=43 // pred_check_branch
                %222 = sbr.rel (0) target = $region59
              $region58: #{vibro_feat_forward.6} parent=43 // pred_region
                loop: start=0, step=1, limit=1
                $region60: #{vibro_feat_forward.6} parent=58 // loop_pre_header
                  _
                $region61: #{vibro_feat_forward.6} parent=58 // loop_header
                  %s224 = sphi 0, %s228
                  %p225 = scmp.ge.s32.totalorder %s224, 1
                  %s229 = sphi %s188, %s188
                  %s230 = sphi %s184, %s184
                $region62: #{vibro_feat_forward.6} parent=58 // loop_header_branch
                  %227 = sbr.rel (%p225) target = $region66
                $region63: #{vibro_feat_forward.6} parent=58 // loop_body
                  %v231 = vld [vmem:[%s229] sm:$0xff]
                  %232 = vst [vmem:[%s230] sm:$0xff] %v231
                  %v233 = vld [vmem:[%s229 + $0x8] sm:$0xff]
                  %234 = vst [vmem:[%s230 + $0x8] sm:$0xff] %v233
                  %v235 = vld [vmem:[%s229 + $0x20] sm:$0xff]
                  %236 = vst [vmem:[%s230 + $0x10] sm:$0xff] %v235
                  %v237 = vld [vmem:[%s229 + $0x28] sm:$0xff]
                  %238 = vst [vmem:[%s230 + $0x18] sm:$0xff] %v237
                  %v239 = vld [vmem:[%s229 + $0x40] sm:$0xff]
                  %240 = vst [vmem:[%s230 + $0x20] sm:$0xff] %v239
                  %v241 = vld [vmem:[%s229 + $0x48] sm:$0xff]
                  %242 = vst [vmem:[%s230 + $0x28] sm:$0xff] %v241
                  %v243 = vld [vmem:[%s229 + $0x60] sm:$0xff]
                  %244 = vst [vmem:[%s230 + $0x30] sm:$0xff] %v243
                  %v245 = vld [vmem:[%s229 + $0x68] sm:$0xff]
                  %246 = vst [vmem:[%s230 + $0x38] sm:$0xff] %v245
                $region64: #{vibro_feat_forward.6} parent=58 // loop_footer
                  %s228 = sadd.s32 1, %s224
                $region65: #{vibro_feat_forward.6} parent=58 // loop_footer_branch
                  %223 = sbr.rel target = $region61
                $region66: #{vibro_feat_forward.6} parent=58 // loop_exit
                  _
              $region59: #{vibro_feat_forward.6} parent=43 // pred_fallthru
                _
              // Predicated region
              $region67: #{vibro_feat_forward.6} parent=43 // pred_check
                _
              $region68: #{vibro_feat_forward.6} parent=43 // pred_check_branch
                %248 = sbr.rel target = $region70
              $region69: #{vibro_feat_forward.6} parent=43 // pred_region
                _
              $region70: #{vibro_feat_forward.6} parent=43 // pred_fallthru
                _
            $region44: #{vibro_feat_forward.6} parent=39 // pred_fallthru
              _
            // Predicated region
            $region45: #{vibro_feat_forward.6} parent=39 // pred_check
              _
            $region46: #{vibro_feat_forward.6} parent=39 // pred_check_branch
              %194 = sbr.rel target = $region48
            $region47: #{vibro_feat_forward.6} parent=39 // pred_region
              %s196 = ssub.s32 256, 1
              loop: start=0, step=1, limit=1
              $region49: #{vibro_feat_forward.6} parent=47 // loop_pre_header
                _
              $region50: #{vibro_feat_forward.6} parent=47 // loop_header
                %s198 = sphi 0, %s202
                %p199 = scmp.ge.s32.totalorder %s198, 1
                %s203 = sphi %s188, %s188
                %s204 = sphi %s184, %s184
              $region51: #{vibro_feat_forward.6} parent=47 // loop_header_branch
                %201 = sbr.rel (%p199) target = $region55
              $region52: #{vibro_feat_forward.6} parent=47 // loop_body
                %v205 = vld [vmem:[%s203] sm:%s196]
                %206 = vst [vmem:[%s204] sm:%s196] %v205
                %v207 = vld [vmem:[%s203 + $0x8] sm:%s196]
                %208 = vst [vmem:[%s204 + $0x8] sm:%s196] %v207
                %v209 = vld [vmem:[%s203 + $0x20] sm:%s196]
                %210 = vst [vmem:[%s204 + $0x10] sm:%s196] %v209
                %v211 = vld [vmem:[%s203 + $0x28] sm:%s196]
                %212 = vst [vmem:[%s204 + $0x18] sm:%s196] %v211
                %v213 = vld [vmem:[%s203 + $0x40] sm:%s196]
                %214 = vst [vmem:[%s204 + $0x20] sm:%s196] %v213
                %v215 = vld [vmem:[%s203 + $0x48] sm:%s196]
                %216 = vst [vmem:[%s204 + $0x28] sm:%s196] %v215
                %v217 = vld [vmem:[%s203 + $0x60] sm:%s196]
                %218 = vst [vmem:[%s204 + $0x30] sm:%s196] %v217
                %v219 = vld [vmem:[%s203 + $0x68] sm:%s196]
                %220 = vst [vmem:[%s204 + $0x38] sm:%s196] %v219
              $region53: #{vibro_feat_forward.6} parent=47 // loop_footer
                %s202 = sadd.s32 1, %s198
              $region54: #{vibro_feat_forward.6} parent=47 // loop_footer_branch
                %197 = sbr.rel target = $region50
              $region55: #{vibro_feat_forward.6} parent=47 // loop_exit
                _
            $region48: #{vibro_feat_forward.6} parent=39 // pred_fallthru
              _
          $region40: #{vibro_feat_forward.6} parent=35 // pred_fallthru
            _
          %249 = vnop
        $region36: #{vibro_feat_forward.6} parent=31 // pred_fallthru
          _
      $region32: #{vibro_feat_forward.6} parent=5 // pred_fallthru
        _
      %p250 = scmp.le.s32.totalorder 1, %s11
      %p251 = scmp.lt.s32.totalorder %s11, 3
      %p252 = pnand %p250, %p251
      %p253 = pneg %p252
      // Predicated region
      $region71: #{vibro_feat_forward.6} parent=5 // pred_check
        _
      $region72: #{vibro_feat_forward.6} parent=5 // pred_check_branch
        %255 = sbr.rel (%p252) target = $region74
      $region73: #{vibro_feat_forward.6} parent=5 // pred_region
        %s256 = ssub.s32 %s11, 1
        %s257 = sand.u32 %s24, 1
        %s258 = sand.u32 %s24, 1
        %s259 = smul.addr %s258, 64
        %s260 = scalar_lea.vmem [#allocation2], %s259
        // Predicated region
        $region75: #{vibro_feat_forward.6} parent=73 // pred_check
          %p261 = pneg %p37
        $region76: #{vibro_feat_forward.6} parent=73 // pred_check_branch
          %263 = sbr.rel (%p261) target = $region78
        $region77: #{vibro_feat_forward.6} parent=73 // pred_region
          _
        $region78: #{vibro_feat_forward.6} parent=73 // pred_fallthru
          _
        %s264 = sand.u32 %s24, 1
        %s265 = sand.u32 %s24, 1
        %s266 = smul.addr %s265, 64
        %s267 = scalar_lea.vmem [#allocation2], %s266
        %p268 = pneg %p37
        %p269 = pneg %p34
        %p270 = pneg %p58
        %p271 = pneg %p55
        %p272 = pneg %p79
        %p273 = pneg %p76
        %p274 = pneg %p100
        %p275 = pneg %p97
        %p276 = pneg %p121
        %p277 = pneg %p118
        %p278 = pneg %p147
        %p279 = pneg %p144
        %s280 = smul.u32 2, %s16
        %p281 = scmp.lt.s32.totalorder %s280, 3
        %s282 = scalar_select %p281, %s280, 3
        %s283 = smul.addr %s282, 8
        %s284 = scalar_lea.vmem %s5, %s283
        %s285 = smul.u32 2, %s16
        %s286 = smul.u32 2, %s16
        %p287 = scmp.lt.s32.totalorder %s286, 3
        %s288 = scalar_select %p287, %s286, 3
        %s289 = smul.addr %s288, 8
        %s290 = scalar_lea.vmem %s5, %s289
        %s291 = smul.u32 2, %s16
        %v293 = vld [vmem:[%s1] sm:$0xf]
        %v294 = vld [vmem:[%s1 + $0x4] sm:$0xf]
        %v295 = vld [vmem:[%s1 + $0x8] sm:$0xf]
        %v296 = vld [vmem:[%s1 + $0xc] sm:$0xf]
        %v297 = vld [vmem:[%s1 + $0x10] sm:$0xf]
        %v298 = vld [vmem:[%s1 + $0x14] sm:$0xf]
        %v299 = vld [vmem:[%s1 + $0x18] sm:$0xf]
        %v300 = vld [vmem:[%s1 + $0x1c] sm:$0xf]
        %v301 = vld [vmem:[%s1 + $0x20] sm:$0xf]
        %v302 = vld [vmem:[%s1 + $0x24] sm:$0xf]
        %v303 = vld [vmem:[%s1 + $0x28] sm:$0xf]
        %v304 = vld [vmem:[%s1 + $0x2c] sm:$0xf]
        %v305 = vld [vmem:[%s1 + $0x30] sm:$0xf]
        %v306 = vld [vmem:[%s1 + $0x34] sm:$0xf]
        %v307 = vld [vmem:[%s1 + $0x38] sm:$0xf]
        %v308 = vld [vmem:[%s1 + $0x3c] sm:$0xf]
        %v309 = vld [vmem:[%s1 + $0x40] sm:$0xf]
        %v310 = vld [vmem:[%s1 + $0x44] sm:$0xf]
        %v311 = vld [vmem:[%s2] sm:$0x1]
        %v312 = vld [vmem:[%s3] sm:$0x1]
        %v313 = vld [vmem:[%s4] sm:$0x1]
        %v314 = vld [vmem:[%s260] sm:$0xff]
        %v315 = vld [vmem:[%s260 + $0x8] sm:$0xff]
        %v317 = vlaneseq
        %v318 = vshrl.u32 %v317, 7
        %v319 = vsub.s32 0, %v318
        %v320 = vrot.slane %v311, %v319
        %v324 = vunpack.c.l.b16 %v314
        %v325 = vunpack.c.h.b16 %v314
        %v326 = vunpack.c.l.b16 %v315
        %v327 = vunpack.c.h.b16 %v315
        %v328 = vpack.c.b16 %v326, %v324
        %v329 = vpack.c.b16 %v327, %v325
        %v349 = vunpack.c.l.b16 %v293
        %v350 = vunpack.c.l.b16 %v294
        %v351 = vunpack.c.l.b16 %v295
        %v352 = vunpack.c.l.b16 %v296
        %v353 = vunpack.c.l.b16 %v297
        %v354 = vunpack.c.l.b16 %v298
        %v355 = vunpack.c.l.b16 %v299
        %v356 = vunpack.c.l.b16 %v300
        %v357 = vunpack.c.l.b16 %v301
        %v358 = vunpack.c.l.b16 %v302
        %v359 = vunpack.c.l.b16 %v303
        %v360 = vunpack.c.l.b16 %v304
        %v361 = vunpack.c.l.b16 %v305
        %v362 = vunpack.c.l.b16 %v306
        %v363 = vunpack.c.l.b16 %v307
        %v364 = vunpack.c.l.b16 %v308
        %v365 = vunpack.c.l.b16 %v309
        %v366 = vunpack.c.l.b16 %v310
        %v367 = vpack.c.b16 %v350, %v349
        %v368 = vpack.c.b16 %v352, %v351
        %v369 = vpack.c.b16 %v354, %v353
        %v370 = vpack.c.b16 %v356, %v355
        %v371 = vpack.c.b16 %v358, %v357
        %v372 = vpack.c.b16 %v360, %v359
        %v373 = vpack.c.b16 %v362, %v361
        %v374 = vpack.c.b16 %v364, %v363
        %v375 = vpack.c.b16 %v366, %v365
        %vm385 = vcmask 130048
        %v387 = vsel %vm385, %v329, 0
        %389 = vmatprep.subr.bf16.mxu0 0
        %390 = vmatpush1.bf16.msra.mxu0 %v374
        %391 = vmatprep.subr.bf16.mxu0 0
        %392 = vmatpush1.bf16.msra.mxu0 %v373
        %393 = vmatprep.subr.bf16.mxu0 0
        %394 = vmatpush1.bf16.msra.mxu0 %v372
        %395 = vmatprep.subr.bf16.mxu0 0
        %396 = vmatpush1.bf16.msra.mxu0 %v371
        %397 = vmatprep.subr.bf16.mxu0 0
        %398 = vmatpush1.bf16.msra.mxu0 %v370
        %399 = vmatprep.subr.bf16.mxu0 0
        %400 = vmatpush1.bf16.msra.mxu0 %v369
        %401 = vmatprep.subr.bf16.mxu0 0
        %402 = vmatpush1.bf16.msra.mxu0 %v368
        %403 = vmatprep.subr.bf16.mxu0 0
        %404 = vmatpush1.bf16.msra.mxu0 %v367
        %405 = vmatprep.subr.bf16.mxu0 0
        %406 = vmatpush2.bf16.msra.mxu0 0
        %407 = vmatprep.subr.bf16.mxu0 0
        %408 = vmatpush2.bf16.msra.mxu0 0
        %409 = vmatprep.subr.bf16.mxu0 0
        %410 = vmatpush2.bf16.msra.mxu0 0
        %411 = vmatprep.subr.bf16.mxu0 0
        %412 = vmatpush2.bf16.msra.mxu0 0
        %413 = vmatprep.subr.bf16.mxu0 0
        %414 = vmatpush2.bf16.msra.mxu0 0
        %415 = vmatprep.subr.bf16.mxu0 0
        %416 = vmatpush2.bf16.msra.mxu0 0
        %417 = vmatprep.subr.bf16.mxu0 0
        %418 = vmatpush2.bf16.msra.mxu0 0
        %419 = vmatprep.subr.bf16.mxu0 0
        %420 = vmatpush2.bf16.msra.mxu0 %v375
        %421 = vmatprep.mubr.bf16.mxu0 %v387
        %422 = vmatmul.mubr.bf16.gmra.mxu0 %v328
        %v423 = vpop.f32.mrf.mxu0
        %v424 = vadd.f32 %v320, %v423
        %v425 = vpop.f32.mrf.mxu0
        %v426 = vpop.f32.mrf.mxu0
        %v427 = vadd.f32 %v320, %v426
        %v428 = vpop.f32.mrf.mxu0
        %429 = vdwg.mxu0
        %v430 = vmax.f32 %v424, 0.0
        %v431 = vmax.f32 %v427, 0.0
        %v433 = vlaneseq
        %v434 = vshrl.u32 %v433, 7
        %v435 = vsub.s32 0, %v434
        %v436 = vrot.slane %v312, %v435
        %v438 = vmul.f32 %v430, %v436
        %v439 = vmul.f32 %v431, %v436
        %v441 = vlaneseq
        %v442 = vshrl.u32 %v441, 7
        %v443 = vsub.s32 0, %v442
        %v444 = vrot.slane %v313, %v443
        %v446 = vadd.f32 %v438, %v444
        %v447 = vadd.f32 %v439, %v444
        %s448 = scalar_lea.vmem %s260, 16 [#allocation2]
        %v449 = vld [vmem:[%s448] sm:$0xff]
        %v450 = vld [vmem:[%s448 + $0x8] sm:$0xff]
        %v453 = vunpack.c.l.b16 %v449
        %v454 = vunpack.c.h.b16 %v449
        %v455 = vunpack.c.l.b16 %v450
        %v456 = vunpack.c.h.b16 %v450
        %v457 = vpack.c.b16 %v455, %v453
        %v458 = vpack.c.b16 %v456, %v454
        %v461 = vsel %vm385, %v458, 0
        %463 = vmatprep.subr.bf16.mxu0 0
        %464 = vmatpush1.bf16.msra.mxu0 %v374
        %465 = vmatprep.subr.bf16.mxu0 0
        %466 = vmatpush1.bf16.msra.mxu0 %v373
        %467 = vmatprep.subr.bf16.mxu0 0
        %468 = vmatpush1.bf16.msra.mxu0 %v372
        %469 = vmatprep.subr.bf16.mxu0 0
        %470 = vmatpush1.bf16.msra.mxu0 %v371
        %471 = vmatprep.subr.bf16.mxu0 0
        %472 = vmatpush1.bf16.msra.mxu0 %v370
        %473 = vmatprep.subr.bf16.mxu0 0
        %474 = vmatpush1.bf16.msra.mxu0 %v369
        %475 = vmatprep.subr.bf16.mxu0 0
        %476 = vmatpush1.bf16.msra.mxu0 %v368
        %477 = vmatprep.subr.bf16.mxu0 0
        %478 = vmatpush1.bf16.msra.mxu0 %v367
        %479 = vmatprep.subr.bf16.mxu0 0
        %480 = vmatpush2.bf16.msra.mxu0 0
        %481 = vmatprep.subr.bf16.mxu0 0
        %482 = vmatpush2.bf16.msra.mxu0 0
        %483 = vmatprep.subr.bf16.mxu0 0
        %484 = vmatpush2.bf16.msra.mxu0 0
        %485 = vmatprep.subr.bf16.mxu0 0
        %486 = vmatpush2.bf16.msra.mxu0 0
        %487 = vmatprep.subr.bf16.mxu0 0
        %488 = vmatpush2.bf16.msra.mxu0 0
        %489 = vmatprep.subr.bf16.mxu0 0
        %490 = vmatpush2.bf16.msra.mxu0 0
        %491 = vmatprep.subr.bf16.mxu0 0
        %492 = vmatpush2.bf16.msra.mxu0 0
        %493 = vmatprep.subr.bf16.mxu0 0
        %494 = vmatpush2.bf16.msra.mxu0 %v375
        %495 = vmatprep.mubr.bf16.mxu0 %v461
        %496 = vmatmul.mubr.bf16.gmra.mxu0 %v457
        %v497 = vpop.f32.mrf.mxu0
        %v498 = vadd.f32 %v320, %v497
        %v499 = vpop.f32.mrf.mxu0
        %v500 = vpop.f32.mrf.mxu0
        %v501 = vadd.f32 %v320, %v500
        %v502 = vpop.f32.mrf.mxu0
        %503 = vdwg.mxu0
        %v504 = vmax.f32 %v498, 0.0
        %v505 = vmax.f32 %v501, 0.0
        %v506 = vmul.f32 %v504, %v436
        %v507 = vmul.f32 %v505, %v436
        %v508 = vadd.f32 %v506, %v444
        %v509 = vadd.f32 %v507, %v444
        %v510 = vmax.f32 %v446, %v508
        %v511 = vmax.f32 %v447, %v509
        %s512 = scalar_lea.vmem %s260, 32 [#allocation2]
        %v513 = vld [vmem:[%s512] sm:$0xff]
        %v514 = vld [vmem:[%s512 + $0x8] sm:$0xff]
        %v517 = vunpack.c.l.b16 %v513
        %v518 = vunpack.c.h.b16 %v513
        %v519 = vunpack.c.l.b16 %v514
        %v520 = vunpack.c.h.b16 %v514
        %v521 = vpack.c.b16 %v519, %v517
        %v522 = vpack.c.b16 %v520, %v518
        %v525 = vsel %vm385, %v522, 0
        %527 = vmatprep.subr.bf16.mxu0 0
        %528 = vmatpush1.bf16.msra.mxu0 %v374
        %529 = vmatprep.subr.bf16.mxu0 0
        %530 = vmatpush1.bf16.msra.mxu0 %v373
        %531 = vmatprep.subr.bf16.mxu0 0
        %532 = vmatpush1.bf16.msra.mxu0 %v372
        %533 = vmatprep.subr.bf16.mxu0 0
        %534 = vmatpush1.bf16.msra.mxu0 %v371
        %535 = vmatprep.subr.bf16.mxu0 0
        %536 = vmatpush1.bf16.msra.mxu0 %v370
        %537 = vmatprep.subr.bf16.mxu0 0
        %538 = vmatpush1.bf16.msra.mxu0 %v369
        %539 = vmatprep.subr.bf16.mxu0 0
        %540 = vmatpush1.bf16.msra.mxu0 %v368
        %541 = vmatprep.subr.bf16.mxu0 0
        %542 = vmatpush1.bf16.msra.mxu0 %v367
        %543 = vmatprep.subr.bf16.mxu0 0
        %544 = vmatpush2.bf16.msra.mxu0 0
        %545 = vmatprep.subr.bf16.mxu0 0
        %546 = vmatpush2.bf16.msra.mxu0 0
        %547 = vmatprep.subr.bf16.mxu0 0
        %548 = vmatpush2.bf16.msra.mxu0 0
        %549 = vmatprep.subr.bf16.mxu0 0
        %550 = vmatpush2.bf16.msra.mxu0 0
        %551 = vmatprep.subr.bf16.mxu0 0
        %552 = vmatpush2.bf16.msra.mxu0 0
        %553 = vmatprep.subr.bf16.mxu0 0
        %554 = vmatpush2.bf16.msra.mxu0 0
        %555 = vmatprep.subr.bf16.mxu0 0
        %556 = vmatpush2.bf16.msra.mxu0 0
        %557 = vmatprep.subr.bf16.mxu0 0
        %558 = vmatpush2.bf16.msra.mxu0 %v375
        %559 = vmatprep.mubr.bf16.mxu0 %v525
        %560 = vmatmul.mubr.bf16.gmra.mxu0 %v521
        %v561 = vpop.f32.mrf.mxu0
        %v562 = vadd.f32 %v320, %v561
        %v563 = vpop.f32.mrf.mxu0
        %v564 = vpop.f32.mrf.mxu0
        %v565 = vadd.f32 %v320, %v564
        %v566 = vpop.f32.mrf.mxu0
        %567 = vdwg.mxu0
        %v568 = vmax.f32 %v562, 0.0
        %v569 = vmax.f32 %v565, 0.0
        %v570 = vmul.f32 %v568, %v436
        %v571 = vmul.f32 %v569, %v436
        %v572 = vadd.f32 %v570, %v444
        %v573 = vadd.f32 %v571, %v444
        %s574 = scalar_lea.vmem %s260, 48 [#allocation2]
        %v575 = vld [vmem:[%s574] sm:$0xff]
        %v576 = vld [vmem:[%s574 + $0x8] sm:$0xff]
        %v579 = vunpack.c.l.b16 %v575
        %v580 = vunpack.c.h.b16 %v575
        %v581 = vunpack.c.l.b16 %v576
        %v582 = vunpack.c.h.b16 %v576
        %v583 = vpack.c.b16 %v581, %v579
        %v584 = vpack.c.b16 %v582, %v580
        %v587 = vsel %vm385, %v584, 0
        %589 = vmatprep.subr.bf16.mxu0 0
        %590 = vmatpush1.bf16.msra.mxu0 %v374
        %591 = vmatprep.subr.bf16.mxu0 0
        %592 = vmatpush1.bf16.msra.mxu0 %v373
        %593 = vmatprep.subr.bf16.mxu0 0
        %594 = vmatpush1.bf16.msra.mxu0 %v372
        %595 = vmatprep.subr.bf16.mxu0 0
        %596 = vmatpush1.bf16.msra.mxu0 %v371
        %597 = vmatprep.subr.bf16.mxu0 0
        %598 = vmatpush1.bf16.msra.mxu0 %v370
        %599 = vmatprep.subr.bf16.mxu0 0
        %600 = vmatpush1.bf16.msra.mxu0 %v369
        %601 = vmatprep.subr.bf16.mxu0 0
        %602 = vmatpush1.bf16.msra.mxu0 %v368
        %603 = vmatprep.subr.bf16.mxu0 0
        %604 = vmatpush1.bf16.msra.mxu0 %v367
        %605 = vmatprep.subr.bf16.mxu0 0
        %606 = vmatpush2.bf16.msra.mxu0 0
        %607 = vmatprep.subr.bf16.mxu0 0
        %608 = vmatpush2.bf16.msra.mxu0 0
        %609 = vmatprep.subr.bf16.mxu0 0
        %610 = vmatpush2.bf16.msra.mxu0 0
        %611 = vmatprep.subr.bf16.mxu0 0
        %612 = vmatpush2.bf16.msra.mxu0 0
        %613 = vmatprep.subr.bf16.mxu0 0
        %614 = vmatpush2.bf16.msra.mxu0 0
        %615 = vmatprep.subr.bf16.mxu0 0
        %616 = vmatpush2.bf16.msra.mxu0 0
        %617 = vmatprep.subr.bf16.mxu0 0
        %618 = vmatpush2.bf16.msra.mxu0 0
        %619 = vmatprep.subr.bf16.mxu0 0
        %620 = vmatpush2.bf16.msra.mxu0 %v375
        %621 = vmatprep.mubr.bf16.mxu0 %v587
        %622 = vmatmul.mubr.bf16.gmra.mxu0 %v583
        %v623 = vpop.f32.mrf.mxu0
        %v624 = vadd.f32 %v320, %v623
        %v625 = vpop.f32.mrf.mxu0
        %v626 = vpop.f32.mrf.mxu0
        %v627 = vadd.f32 %v320, %v626
        %v628 = vpop.f32.mrf.mxu0
        %629 = vdwg.mxu0
        %v630 = vmax.f32 %v624, 0.0
        %v631 = vmax.f32 %v627, 0.0
        %v632 = vmul.f32 %v630, %v436
        %v633 = vmul.f32 %v631, %v436
        %v634 = vadd.f32 %v632, %v444
        %v635 = vadd.f32 %v633, %v444
        %v636 = vmax.f32 %v572, %v634
        %v637 = vmax.f32 %v573, %v635
        %v638 = vmax.f32 %v510, %v636
        %v639 = vmax.f32 %v511, %v637
        %vm640 = vcmask 64512
        %641 = vst.msk [vmem:[%s290] sm:$0xff] %vm640, %v638
        %642 = vst.msk [vmem:[%s290 + $0x8] sm:$0xff] %vm640, %v639
        %s643 = smul.u32 2, %s16
        %p644 = scmp.lt.s32.totalorder %s643, 3
        %s645 = scalar_select %p644, %s643, 3
        %s646 = smul.addr %s645, 8
        %s647 = scalar_lea.vmem %s5, %s646
        // Predicated region
        $region79: #{vibro_feat_forward.6} parent=73 // pred_check
          %p648 = pneg %p144
        $region80: #{vibro_feat_forward.6} parent=73 // pred_check_branch
          %650 = sbr.rel (%p648) target = $region82
        $region81: #{vibro_feat_forward.6} parent=73 // pred_region
          %s651 = smul.u32 2, %s16
        $region82: #{vibro_feat_forward.6} parent=73 // pred_fallthru
          _
      $region74: #{vibro_feat_forward.6} parent=5 // pred_fallthru
        _
      %p652 = scmp.le.s32.totalorder 2, %s11
      // Predicated region
      $region83: #{vibro_feat_forward.6} parent=5 // pred_check
        %p653 = pneg %p652
      $region84: #{vibro_feat_forward.6} parent=5 // pred_check_branch
        %655 = sbr.rel (%p653) target = $region86
      $region85: #{vibro_feat_forward.6} parent=5 // pred_region
        %s656 = ssub.s32 %s11, 2
        // Predicated region
        $region87: #{vibro_feat_forward.6} parent=85 // pred_check
          %p657 = pneg %p150
        $region88: #{vibro_feat_forward.6} parent=85 // pred_check_branch
          %659 = sbr.rel (%p657) target = $region90
        $region89: #{vibro_feat_forward.6} parent=85 // pred_region
          %s660 = smul.u32 2, %s17
          %p661 = scmp.lt.s32.totalorder %s660, 3
          %s662 = scalar_select %p661, %s660, 3
          %s663 = smul.addr %s662, 8
          %s664 = scalar_lea.vmem %s5, %s663
        $region90: #{vibro_feat_forward.6} parent=85 // pred_fallthru
          _
      $region86: #{vibro_feat_forward.6} parent=5 // pred_fallthru
        _
    $region6: #{vibro_feat_forward.6} parent=1 // loop_footer
      %s15 = sadd.s32 1, %s11
    $region7: #{vibro_feat_forward.6} parent=1 // loop_footer_branch
      %10 = sbr.rel target = $region3
    $region8: #{vibro_feat_forward.6} parent=1 // loop_exit
      _

// kernel: vibro_feat_forward.7
$region0: #{vibro_feat_forward.7}
  #allocation0 [shape = 'u32[]', space=smem, size = 0x4, offset = 0x4, fixed_abs, tag = 'smem constant byte address 0x4 - core index']
  #allocation1 [shape = 'u32[144,128]{1,0:T(1,128)}', space=vmem, size = 0x12000, scoped, tag = 'internal scratch']
  %s0 = inlined_call_operand.vmem [shape: bf16[32,400], index: 0, kind: input, shape index: {}]
  %s1 = inlined_call_operand.vmem [shape: bf16[400,8], index: 1, kind: input, shape index: {}]
  %s2 = inlined_call_operand.vmem [shape: bf16[400,8], index: 2, kind: input, shape index: {}]
  %s3 = inlined_call_operand.vmem [shape: bf16[400,8], index: 3, kind: input, shape index: {}]
  %s4 = inlined_call_operand.vmem [shape: bf16[400,8], index: 4, kind: input, shape index: {}]
  %s5 = inlined_call_operand.vmem [shape: f32[1,8], index: 5, kind: input, shape index: {}]
  %s6 = inlined_call_operand.vmem [shape: f32[1,8], index: 6, kind: input, shape index: {}]
  %s7 = inlined_call_operand.vmem [shape: f32[1,8], index: 7, kind: input, shape index: {}]
  %s8 = inlined_call_operand.vmem [shape: f32[1,8], index: 8, kind: input, shape index: {}]
  %s9 = inlined_call_operand.vmem [shape: f32[32,8], index: 9, kind: input, shape index: {}]
  %s10 = inlined_call_operand.vmem [shape: f32[32,8], index: 10, kind: output, shape index: {0}]
  %s11 = inlined_call_operand.vmem [shape: f32[32,8], index: 11, kind: output, shape index: {1}]
  %12 = xla_tuple %s10, %s11
  %s13 = sld [smem:[#allocation0]]
  $region81: #{vibro_feat_forward.7} parent=0
    _
  %s15 = ssub.s32 1, %s13
  %s16 = scalar_select 0, %s15, %s13
  loop: start=0, step=1, limit=4
  $region2: #{vibro_feat_forward.7} parent=0 // loop_pre_header
    _
  $region3: #{vibro_feat_forward.7} parent=0 // loop_header
    %s18 = sphi 0, %s22
    %p19 = scmp.ge.s32.totalorder %s18, 4
    %s28 = sphi 0, %s30
    %s31 = sphi 0, %s28
    %s32 = sphi 0, %s31
    %s48 = sphi 0, %s32
    %s52 = sphi 0, %s52
    %s54 = sphi 0, %s52
    %s55 = sphi 0, %s54
    %s69 = sphi 0, %s55
    %s73 = sphi 0, %s73
    %s75 = sphi 0, %s73
    %s76 = sphi 0, %s75
    %s90 = sphi 0, %s76
    %s94 = sphi 0, %s94
    %s96 = sphi 0, %s94
    %s97 = sphi 0, %s96
    %s111 = sphi 0, %s97
    %s115 = sphi 0, %s115
    %s117 = sphi 0, %s115
    %s118 = sphi 0, %s117
    %s132 = sphi 0, %s118
    %s136 = sphi 0, %s136
    %s138 = sphi 0, %s136
    %s139 = sphi 0, %s138
    %s153 = sphi 0, %s139
    %s157 = sphi 0, %s157
    %s159 = sphi 0, %s157
    %s160 = sphi 0, %s159
    %s174 = sphi 0, %s160
    %s178 = sphi 0, %s178
    %s180 = sphi 0, %s178
    %s181 = sphi 0, %s180
    %s195 = sphi 0, %s181
    %s199 = sphi 0, %s199
    %s201 = sphi 0, %s199
    %s202 = sphi 0, %s201
    %s216 = sphi 0, %s202
    %s222 = sphi 0, %s224
    %s225 = sphi 0, %s222
    %s226 = sphi 0, %s225
    %s242 = sphi 0, %s226
    %s248 = sphi 0, %s250
    %s251 = sphi 0, %s248
    %s252 = sphi 0, %s251
    %s268 = sphi 0, %s252
    %s274 = sphi 0, %s276
    %s277 = sphi 0, %s274
    %s278 = sphi 0, %s277
    %s294 = sphi 0, %s278
  $region4: #{vibro_feat_forward.7} parent=0 // loop_header_branch
    %21 = sbr.rel (%p19) target = $region8
  $region5: #{vibro_feat_forward.7} parent=0 // loop_body
    %s23 = ssub.s32 %s18, 1
    %s24 = ssub.s32 %s18, 2
    %s25 = sadd.s32 %s18, 1
    %s26 = ssub.s32 %s18, %s25
    %p27 = scmp.eq.s32.totalorder %s26, 0
    %s29 = sadd.s32 %s28, 1
    %s30 = scalar_select %p27, %s28, %s29
    %p33 = pneg %p27
    %p34 = scmp.eq.s32.totalorder %s18, 1
    %p35 = por %p33, %p34
    %p36 = scmp.ne.s32.totalorder %s28, %s31
    %p37 = scmp.eq.s32.totalorder %s18, 0
    %p38 = por %p36, %p37
    %p39 = scmp.ne.s32.totalorder %s28, %s31
    %p40 = scmp.eq.s32.totalorder %s23, 1
    %p41 = por %p39, %p40
    %p42 = scmp.ne.s32.totalorder %s31, %s32
    %p43 = scmp.eq.s32.totalorder %s23, 0
    %p44 = por %p42, %p43
    %p45 = scmp.ne.s32.totalorder %s31, %s32
    %p46 = scmp.eq.s32.totalorder %s24, 1
    %p47 = por %p45, %p46
    %p49 = scmp.ne.s32.totalorder %s32, %s48
    %p50 = scmp.eq.s32.totalorder %s24, 0
    %p51 = por %p49, %p50
    %s53 = sadd.s32 %s52, 1
    %p56 = scmp.eq.s32.totalorder %s18, 1
    %p57 = scmp.ne.s32.totalorder %s52, %s54
    %p58 = scmp.eq.s32.totalorder %s18, 0
    %p59 = por %p57, %p58
    %p60 = scmp.ne.s32.totalorder %s52, %s54
    %p61 = scmp.eq.s32.totalorder %s23, 1
    %p62 = por %p60, %p61
    %p63 = scmp.ne.s32.totalorder %s54, %s55
    %p64 = scmp.eq.s32.totalorder %s23, 0
    %p65 = por %p63, %p64
    %p66 = scmp.ne.s32.totalorder %s54, %s55
    %p67 = scmp.eq.s32.totalorder %s24, 1
    %p68 = por %p66, %p67
    %p70 = scmp.ne.s32.totalorder %s55, %s69
    %p71 = scmp.eq.s32.totalorder %s24, 0
    %p72 = por %p70, %p71
    %s74 = sadd.s32 %s73, 1
    %p77 = scmp.eq.s32.totalorder %s18, 1
    %p78 = scmp.ne.s32.totalorder %s73, %s75
    %p79 = scmp.eq.s32.totalorder %s18, 0
    %p80 = por %p78, %p79
    %p81 = scmp.ne.s32.totalorder %s73, %s75
    %p82 = scmp.eq.s32.totalorder %s23, 1
    %p83 = por %p81, %p82
    %p84 = scmp.ne.s32.totalorder %s75, %s76
    %p85 = scmp.eq.s32.totalorder %s23, 0
    %p86 = por %p84, %p85
    %p87 = scmp.ne.s32.totalorder %s75, %s76
    %p88 = scmp.eq.s32.totalorder %s24, 1
    %p89 = por %p87, %p88
    %p91 = scmp.ne.s32.totalorder %s76, %s90
    %p92 = scmp.eq.s32.totalorder %s24, 0
    %p93 = por %p91, %p92
    %s95 = sadd.s32 %s94, 1
    %p98 = scmp.eq.s32.totalorder %s18, 1
    %p99 = scmp.ne.s32.totalorder %s94, %s96
    %p100 = scmp.eq.s32.totalorder %s18, 0
    %p101 = por %p99, %p100
    %p102 = scmp.ne.s32.totalorder %s94, %s96
    %p103 = scmp.eq.s32.totalorder %s23, 1
    %p104 = por %p102, %p103
    %p105 = scmp.ne.s32.totalorder %s96, %s97
    %p106 = scmp.eq.s32.totalorder %s23, 0
    %p107 = por %p105, %p106
    %p108 = scmp.ne.s32.totalorder %s96, %s97
    %p109 = scmp.eq.s32.totalorder %s24, 1
    %p110 = por %p108, %p109
    %p112 = scmp.ne.s32.totalorder %s97, %s111
    %p113 = scmp.eq.s32.totalorder %s24, 0
    %p114 = por %p112, %p113
    %s116 = sadd.s32 %s115, 1
    %p119 = scmp.eq.s32.totalorder %s18, 1
    %p120 = scmp.ne.s32.totalorder %s115, %s117
    %p121 = scmp.eq.s32.totalorder %s18, 0
    %p122 = por %p120, %p121
    %p123 = scmp.ne.s32.totalorder %s115, %s117
    %p124 = scmp.eq.s32.totalorder %s23, 1
    %p125 = por %p123, %p124
    %p126 = scmp.ne.s32.totalorder %s117, %s118
    %p127 = scmp.eq.s32.totalorder %s23, 0
    %p128 = por %p126, %p127
    %p129 = scmp.ne.s32.totalorder %s117, %s118
    %p130 = scmp.eq.s32.totalorder %s24, 1
    %p131 = por %p129, %p130
    %p133 = scmp.ne.s32.totalorder %s118, %s132
    %p134 = scmp.eq.s32.totalorder %s24, 0
    %p135 = por %p133, %p134
    %s137 = sadd.s32 %s136, 1
    %p140 = scmp.eq.s32.totalorder %s18, 1
    %p141 = scmp.ne.s32.totalorder %s136, %s138
    %p142 = scmp.eq.s32.totalorder %s18, 0
    %p143 = por %p141, %p142
    %p144 = scmp.ne.s32.totalorder %s136, %s138
    %p145 = scmp.eq.s32.totalorder %s23, 1
    %p146 = por %p144, %p145
    %p147 = scmp.ne.s32.totalorder %s138, %s139
    %p148 = scmp.eq.s32.totalorder %s23, 0
    %p149 = por %p147, %p148
    %p150 = scmp.ne.s32.totalorder %s138, %s139
    %p151 = scmp.eq.s32.totalorder %s24, 1
    %p152 = por %p150, %p151
    %p154 = scmp.ne.s32.totalorder %s139, %s153
    %p155 = scmp.eq.s32.totalorder %s24, 0
    %p156 = por %p154, %p155
    %s158 = sadd.s32 %s157, 1
    %p161 = scmp.eq.s32.totalorder %s18, 1
    %p162 = scmp.ne.s32.totalorder %s157, %s159
    %p163 = scmp.eq.s32.totalorder %s18, 0
    %p164 = por %p162, %p163
    %p165 = scmp.ne.s32.totalorder %s157, %s159
    %p166 = scmp.eq.s32.totalorder %s23, 1
    %p167 = por %p165, %p166
    %p168 = scmp.ne.s32.totalorder %s159, %s160
    %p169 = scmp.eq.s32.totalorder %s23, 0
    %p170 = por %p168, %p169
    %p171 = scmp.ne.s32.totalorder %s159, %s160
    %p172 = scmp.eq.s32.totalorder %s24, 1
    %p173 = por %p171, %p172
    %p175 = scmp.ne.s32.totalorder %s160, %s174
    %p176 = scmp.eq.s32.totalorder %s24, 0
    %p177 = por %p175, %p176
    %s179 = sadd.s32 %s178, 1
    %p182 = scmp.eq.s32.totalorder %s18, 1
    %p183 = scmp.ne.s32.totalorder %s178, %s180
    %p184 = scmp.eq.s32.totalorder %s18, 0
    %p185 = por %p183, %p184
    %p186 = scmp.ne.s32.totalorder %s178, %s180
    %p187 = scmp.eq.s32.totalorder %s23, 1
    %p188 = por %p186, %p187
    %p189 = scmp.ne.s32.totalorder %s180, %s181
    %p190 = scmp.eq.s32.totalorder %s23, 0
    %p191 = por %p189, %p190
    %p192 = scmp.ne.s32.totalorder %s180, %s181
    %p193 = scmp.eq.s32.totalorder %s24, 1
    %p194 = por %p192, %p193
    %p196 = scmp.ne.s32.totalorder %s181, %s195
    %p197 = scmp.eq.s32.totalorder %s24, 0
    %p198 = por %p196, %p197
    %s200 = sadd.s32 %s199, 1
    %p203 = scmp.eq.s32.totalorder %s18, 1
    %p204 = scmp.ne.s32.totalorder %s199, %s201
    %p205 = scmp.eq.s32.totalorder %s18, 0
    %p206 = por %p204, %p205
    %p207 = scmp.ne.s32.totalorder %s199, %s201
    %p208 = scmp.eq.s32.totalorder %s23, 1
    %p209 = por %p207, %p208
    %p210 = scmp.ne.s32.totalorder %s201, %s202
    %p211 = scmp.eq.s32.totalorder %s23, 0
    %p212 = por %p210, %p211
    %p213 = scmp.ne.s32.totalorder %s201, %s202
    %p214 = scmp.eq.s32.totalorder %s24, 1
    %p215 = por %p213, %p214
    %p217 = scmp.ne.s32.totalorder %s202, %s216
    %p218 = scmp.eq.s32.totalorder %s24, 0
    %p219 = por %p217, %p218
    %s220 = ssub.s32 %s18, %s25
    %p221 = scmp.eq.s32.totalorder %s220, 0
    %s223 = sadd.s32 %s222, 1
    %s224 = scalar_select %p221, %s222, %s223
    %p227 = pneg %p221
    %p228 = scmp.eq.s32.totalorder %s18, 1
    %p229 = por %p227, %p228
    %p230 = scmp.ne.s32.totalorder %s222, %s225
    %p231 = scmp.eq.s32.totalorder %s18, 0
    %p232 = por %p230, %p231
    %p233 = scmp.ne.s32.totalorder %s222, %s225
    %p234 = scmp.eq.s32.totalorder %s23, 1
    %p235 = por %p233, %p234
    %p236 = scmp.ne.s32.totalorder %s225, %s226
    %p237 = scmp.eq.s32.totalorder %s23, 0
    %p238 = por %p236, %p237
    %p239 = scmp.ne.s32.totalorder %s225, %s226
    %p240 = scmp.eq.s32.totalorder %s24, 1
    %p241 = por %p239, %p240
    %p243 = scmp.ne.s32.totalorder %s226, %s242
    %p244 = scmp.eq.s32.totalorder %s24, 0
    %p245 = por %p243, %p244
    %s246 = ssub.s32 %s18, %s25
    %p247 = scmp.eq.s32.totalorder %s246, 0
    %s249 = sadd.s32 %s248, 1
    %s250 = scalar_select %p247, %s248, %s249
    %p253 = pneg %p247
    %p254 = scmp.eq.s32.totalorder %s18, 1
    %p255 = por %p253, %p254
    %p256 = scmp.ne.s32.totalorder %s248, %s251
    %p257 = scmp.eq.s32.totalorder %s18, 0
    %p258 = por %p256, %p257
    %p259 = scmp.ne.s32.totalorder %s248, %s251
    %p260 = scmp.eq.s32.totalorder %s23, 1
    %p261 = por %p259, %p260
    %p262 = scmp.ne.s32.totalorder %s251, %s252
    %p263 = scmp.eq.s32.totalorder %s23, 0
    %p264 = por %p262, %p263
    %p265 = scmp.ne.s32.totalorder %s251, %s252
    %p266 = scmp.eq.s32.totalorder %s24, 1
    %p267 = por %p265, %p266
    %p269 = scmp.ne.s32.totalorder %s252, %s268
    %p270 = scmp.eq.s32.totalorder %s24, 0
    %p271 = por %p269, %p270
    %s272 = ssub.s32 %s18, %s25
    %p273 = scmp.eq.s32.totalorder %s272, 0
    %s275 = sadd.s32 %s274, 1
    %s276 = scalar_select %p273, %s274, %s275
    %p279 = pneg %p273
    %p280 = scmp.eq.s32.totalorder %s18, 1
    %p281 = por %p279, %p280
    %p282 = scmp.ne.s32.totalorder %s274, %s277
    %p283 = scmp.eq.s32.totalorder %s18, 0
    %p284 = por %p282, %p283
    %p285 = scmp.ne.s32.totalorder %s274, %s277
    %p286 = scmp.eq.s32.totalorder %s23, 1
    %p287 = por %p285, %p286
    %p288 = scmp.ne.s32.totalorder %s277, %s278
    %p289 = scmp.eq.s32.totalorder %s23, 0
    %p290 = por %p288, %p289
    %p291 = scmp.ne.s32.totalorder %s277, %s278
    %p292 = scmp.eq.s32.totalorder %s24, 1
    %p293 = por %p291, %p292
    %p295 = scmp.ne.s32.totalorder %s278, %s294
    %p296 = scmp.eq.s32.totalorder %s24, 0
    %p297 = por %p295, %p296
    %p298 = scmp.le.s32.totalorder 1, %s18
    %p299 = scmp.lt.s32.totalorder %s18, 3
    %p300 = pnand %p298, %p299
    %p301 = pneg %p300
    // Predicated region
    $region9: #{vibro_feat_forward.7} parent=5 // pred_check
      _
    $region10: #{vibro_feat_forward.7} parent=5 // pred_check_branch
      %303 = sbr.rel (%p300) target = $region12
    $region11: #{vibro_feat_forward.7} parent=5 // pred_region
      %s304 = ssub.s32 %s18, 1
      // Predicated region
      $region13: #{vibro_feat_forward.7} parent=11 // pred_check
        %p305 = pneg %p65
      $region14: #{vibro_feat_forward.7} parent=11 // pred_check_branch
        %307 = sbr.rel (%p305) target = $region16
      $region15: #{vibro_feat_forward.7} parent=11 // pred_region
        _
      $region16: #{vibro_feat_forward.7} parent=11 // pred_fallthru
        _
      // Predicated region
      $region17: #{vibro_feat_forward.7} parent=11 // pred_check
        %p308 = pneg %p86
      $region18: #{vibro_feat_forward.7} parent=11 // pred_check_branch
        %310 = sbr.rel (%p308) target = $region20
      $region19: #{vibro_feat_forward.7} parent=11 // pred_region
        _
      $region20: #{vibro_feat_forward.7} parent=11 // pred_fallthru
        _
      // Predicated region
      $region21: #{vibro_feat_forward.7} parent=11 // pred_check
        %p311 = pneg %p107
      $region22: #{vibro_feat_forward.7} parent=11 // pred_check_branch
        %313 = sbr.rel (%p311) target = $region24
      $region23: #{vibro_feat_forward.7} parent=11 // pred_region
        _
      $region24: #{vibro_feat_forward.7} parent=11 // pred_fallthru
        _
      // Predicated region
      $region25: #{vibro_feat_forward.7} parent=11 // pred_check
        %p314 = pneg %p128
      $region26: #{vibro_feat_forward.7} parent=11 // pred_check_branch
        %316 = sbr.rel (%p314) target = $region28
      $region27: #{vibro_feat_forward.7} parent=11 // pred_region
        _
      $region28: #{vibro_feat_forward.7} parent=11 // pred_fallthru
        _
      // Predicated region
      $region29: #{vibro_feat_forward.7} parent=11 // pred_check
        %p317 = pneg %p149
      $region30: #{vibro_feat_forward.7} parent=11 // pred_check_branch
        %319 = sbr.rel (%p317) target = $region32
      $region31: #{vibro_feat_forward.7} parent=11 // pred_region
        _
      $region32: #{vibro_feat_forward.7} parent=11 // pred_fallthru
        _
      // Predicated region
      $region33: #{vibro_feat_forward.7} parent=11 // pred_check
        %p320 = pneg %p170
      $region34: #{vibro_feat_forward.7} parent=11 // pred_check_branch
        %322 = sbr.rel (%p320) target = $region36
      $region35: #{vibro_feat_forward.7} parent=11 // pred_region
        _
      $region36: #{vibro_feat_forward.7} parent=11 // pred_fallthru
        _
      // Predicated region
      $region37: #{vibro_feat_forward.7} parent=11 // pred_check
        %p323 = pneg %p191
      $region38: #{vibro_feat_forward.7} parent=11 // pred_check_branch
        %325 = sbr.rel (%p323) target = $region40
      $region39: #{vibro_feat_forward.7} parent=11 // pred_region
        _
      $region40: #{vibro_feat_forward.7} parent=11 // pred_fallthru
        _
      // Predicated region
      $region41: #{vibro_feat_forward.7} parent=11 // pred_check
        %p326 = pneg %p212
      $region42: #{vibro_feat_forward.7} parent=11 // pred_check_branch
        %328 = sbr.rel (%p326) target = $region44
      $region43: #{vibro_feat_forward.7} parent=11 // pred_region
        _
      $region44: #{vibro_feat_forward.7} parent=11 // pred_fallthru
        _
    $region12: #{vibro_feat_forward.7} parent=5 // pred_fallthru
      _
    %p329 = scmp.lt.s32.totalorder %s18, 2
    // Predicated region
    $region45: #{vibro_feat_forward.7} parent=5 // pred_check
      %p330 = pneg %p329
    $region46: #{vibro_feat_forward.7} parent=5 // pred_check_branch
      %332 = sbr.rel (%p330) target = $region48
    $region47: #{vibro_feat_forward.7} parent=5 // pred_region
      // Predicated region
      $region49: #{vibro_feat_forward.7} parent=47 // pred_check
        %p333 = pneg %p38
      $region50: #{vibro_feat_forward.7} parent=47 // pred_check_branch
        %335 = sbr.rel (%p333) target = $region52
      $region51: #{vibro_feat_forward.7} parent=47 // pred_region
        %s336 = smul.u32 2, %s18
        %p337 = scmp.lt.s32.totalorder %s336, 3
        %s338 = scalar_select %p337, %s336, 3
        %s339 = smul.addr %s338, 4
        %s340 = smul.addr %s339, 4
        %s341 = scalar_lea.vmem %s0, %s340
        %s342 = smul.u32 2, %s18
      $region52: #{vibro_feat_forward.7} parent=47 // pred_fallthru
        _
      // Predicated region
      $region53: #{vibro_feat_forward.7} parent=47 // pred_check
        %p343 = pneg %p232
      $region54: #{vibro_feat_forward.7} parent=47 // pred_check_branch
        %345 = sbr.rel (%p343) target = $region56
      $region55: #{vibro_feat_forward.7} parent=47 // pred_region
        %s346 = smul.u32 2, %s18
        %p347 = scmp.lt.s32.totalorder %s346, 3
        %s348 = scalar_select %p347, %s346, 3
        %s349 = smul.addr %s348, 8
        %s350 = scalar_lea.vmem %s9, %s349
        %s351 = smul.u32 2, %s18
      $region56: #{vibro_feat_forward.7} parent=47 // pred_fallthru
        _
    $region48: #{vibro_feat_forward.7} parent=5 // pred_fallthru
      _
    %p352 = scmp.le.s32.totalorder 1, %s18
    %p353 = scmp.lt.s32.totalorder %s18, 3
    %p354 = pnand %p352, %p353
    %p355 = pneg %p354
    // Predicated region
    $region57: #{vibro_feat_forward.7} parent=5 // pred_check
      _
    $region58: #{vibro_feat_forward.7} parent=5 // pred_check_branch
      %357 = sbr.rel (%p354) target = $region60
    $region59: #{vibro_feat_forward.7} parent=5 // pred_region
      %s358 = ssub.s32 %s18, 1
      %s359 = smul.u32 2, %s23
      %p360 = scmp.lt.s32.totalorder %s359, 3
      %s361 = scalar_select %p360, %s359, 3
      %s362 = smul.addr %s361, 4
      %s363 = smul.addr %s362, 4
      %s364 = scalar_lea.vmem %s0, %s363
      %p365 = pneg %p44
      %p366 = pneg %p41
      %p367 = pneg %p65
      %p368 = pneg %p62
      %p369 = pneg %p86
      %p370 = pneg %p83
      %p371 = pneg %p107
      %p372 = pneg %p104
      %p373 = pneg %p128
      %p374 = pneg %p125
      %p375 = pneg %p149
      %p376 = pneg %p146
      %p377 = pneg %p170
      %p378 = pneg %p167
      %p379 = pneg %p191
      %p380 = pneg %p188
      %p381 = pneg %p212
      %p382 = pneg %p209
      %s383 = smul.u32 2, %s23
      %p384 = scmp.lt.s32.totalorder %s383, 3
      %s385 = scalar_select %p384, %s383, 3
      %s386 = smul.addr %s385, 8
      %s387 = scalar_lea.vmem %s9, %s386
      %p388 = pneg %p238
      %p389 = pneg %p235
      %p390 = pneg %p264
      %p391 = pneg %p261
      %s392 = smul.u32 2, %s23
      %p393 = scmp.lt.s32.totalorder %s392, 3
      %s394 = scalar_select %p393, %s392, 3
      %s395 = smul.addr %s394, 8
      %s396 = scalar_lea.vmem %s10, %s395
      %p397 = pneg %p290
      %p398 = pneg %p287
      %s399 = smul.u32 2, %s23
      %p400 = scmp.lt.s32.totalorder %s399, 3
      %s401 = scalar_select %p400, %s399, 3
      %s402 = smul.addr %s401, 8
      %s403 = scalar_lea.vmem %s11, %s402
      %s404 = smul.u32 2, %s23
      %p405 = scmp.lt.s32.totalorder %s404, 3
      %s406 = scalar_select %p405, %s404, 3
      %s407 = smul.addr %s406, 4
      %s408 = smul.addr %s407, 4
      %s409 = scalar_lea.vmem %s0, %s408
      %s410 = smul.u32 2, %s23
      %s411 = smul.u32 2, %s23
      %p412 = scmp.lt.s32.totalorder %s411, 3
      %s413 = scalar_select %p412, %s411, 3
      %s414 = smul.addr %s413, 8
      %s415 = scalar_lea.vmem %s9, %s414
      %s416 = smul.u32 2, %s23
      %s417 = smul.u32 2, %s23
      %p418 = scmp.lt.s32.totalorder %s417, 3
      %s419 = scalar_select %p418, %s417, 3
      %s420 = smul.addr %s419, 8
      %s421 = scalar_lea.vmem %s10, %s420
      %s422 = smul.u32 2, %s23
      %s423 = smul.u32 2, %s23
      %p424 = scmp.lt.s32.totalorder %s423, 3
      %s425 = scalar_select %p424, %s423, 3
      %s426 = smul.addr %s425, 8
      %s427 = scalar_lea.vmem %s11, %s426
      %s428 = smul.u32 2, %s23
      %v430 = vld [vmem:[%s409] sm:$0xff]
      %v431 = vld [vmem:[%s409 + $0x8] sm:$0xff]
      %v432 = vld [vmem:[%s409 + $0x10] sm:$0xff]
      %v433 = vld [vmem:[%s409 + $0x18] sm:$0xff]
      %v434 = vld [vmem:[%s1] sm:$0xf]
      %v435 = vld [vmem:[%s1 + $0x4] sm:$0xf]
      %v436 = vld [vmem:[%s1 + $0x8] sm:$0xf]
      %v437 = vld [vmem:[%s1 + $0xc] sm:$0xf]
      %v438 = vld [vmem:[%s1 + $0x10] sm:$0xf]
      %v439 = vld [vmem:[%s1 + $0x14] sm:$0xf]
      %v440 = vld [vmem:[%s1 + $0x18] sm:$0xf]
      %v441 = vld [vmem:[%s1 + $0x1c] sm:$0xf]
      %v442 = vld [vmem:[%s1 + $0x20] sm:$0xf]
      %v443 = vld [vmem:[%s1 + $0x24] sm:$0xf]
      %v444 = vld [vmem:[%s1 + $0x28] sm:$0xf]
      %v445 = vld [vmem:[%s1 + $0x2c] sm:$0xf]
      %v446 = vld [vmem:[%s1 + $0x30] sm:$0xf]
      %v447 = vld [vmem:[%s1 + $0x34] sm:$0xf]
      %v448 = vld [vmem:[%s1 + $0x38] sm:$0xf]
      %v449 = vld [vmem:[%s1 + $0x3c] sm:$0xf]
      %v450 = vld [vmem:[%s1 + $0x40] sm:$0xf]
      %v451 = vld [vmem:[%s1 + $0x44] sm:$0xf]
      %v452 = vld [vmem:[%s1 + $0x48] sm:$0xf]
      %v453 = vld [vmem:[%s1 + $0x4c] sm:$0xf]
      %v454 = vld [vmem:[%s1 + $0x50] sm:$0xf]
      %v455 = vld [vmem:[%s1 + $0x54] sm:$0xf]
      %v456 = vld [vmem:[%s1 + $0x58] sm:$0xf]
      %v457 = vld [vmem:[%s1 + $0x5c] sm:$0xf]
      %v458 = vld [vmem:[%s1 + $0x60] sm:$0xf]
      %v459 = vld [vmem:[%s1 + $0x64] sm:$0xf]
      %v460 = vld [vmem:[%s1 + $0x68] sm:$0xf]
      %v461 = vld [vmem:[%s1 + $0x6c] sm:$0xf]
      %v462 = vld [vmem:[%s1 + $0x70] sm:$0xf]
      %v463 = vld [vmem:[%s1 + $0x74] sm:$0xf]
      %v464 = vld [vmem:[%s1 + $0x78] sm:$0xf]
      %v465 = vld [vmem:[%s1 + $0x7c] sm:$0xf]
      %v466 = vld [vmem:[%s1 + $0x80] sm:$0xf]
      %v467 = vld [vmem:[%s1 + $0x84] sm:$0xf]
      %v468 = vld [vmem:[%s1 + $0x88] sm:$0xf]
      %v469 = vld [vmem:[%s1 + $0x8c] sm:$0xf]
      %v470 = vld [vmem:[%s1 + $0x90] sm:$0xf]
      %v471 = vld [vmem:[%s1 + $0x94] sm:$0xf]
      %v472 = vld [vmem:[%s1 + $0x98] sm:$0xf]
      %v473 = vld [vmem:[%s1 + $0x9c] sm:$0xf]
      %v474 = vld [vmem:[%s1 + $0xa0] sm:$0xf]
      %v475 = vld [vmem:[%s1 + $0xa4] sm:$0xf]
      %v476 = vld [vmem:[%s1 + $0xa8] sm:$0xf]
      %v477 = vld [vmem:[%s1 + $0xac] sm:$0xf]
      %v478 = vld [vmem:[%s1 + $0xb0] sm:$0xf]
      %v479 = vld [vmem:[%s1 + $0xb4] sm:$0xf]
      %v480 = vld [vmem:[%s1 + $0xb8] sm:$0xf]
      %v481 = vld [vmem:[%s1 + $0xbc] sm:$0xf]
      %v482 = vld [vmem:[%s1 + $0xc0] sm:$0xf]
      %v483 = vld [vmem:[%s1 + $0xc4] sm:$0xf]
      %v484 = vld [vmem:[%s5] sm:$0x1]
      %v486 = vlaneseq
      %v487 = vshrl.u32 %v486, 7
      %v488 = vsub.s32 0, %v487
      %v489 = vrot.slane %v484, %v488
      %v495 = vunpack.c.l.b16 %v430
      %v496 = vunpack.c.h.b16 %v430
      %v497 = vunpack.c.l.b16 %v431
      %v498 = vunpack.c.h.b16 %v431
      %v499 = vunpack.c.l.b16 %v432
      %v500 = vunpack.c.h.b16 %v432
      %v501 = vunpack.c.l.b16 %v433
      %v502 = vunpack.c.h.b16 %v433
      %v503 = vpack.c.b16 %v499, %v495
      %v504 = vpack.c.b16 %v500, %v496
      %v505 = vpack.c.b16 %v501, %v497
      %v506 = vpack.c.b16 %v502, %v498
      %v560 = vunpack.c.l.b16 %v434
      %v561 = vunpack.c.l.b16 %v435
      %v562 = vunpack.c.l.b16 %v436
      %v563 = vunpack.c.l.b16 %v437
      %v564 = vunpack.c.l.b16 %v438
      %v565 = vunpack.c.l.b16 %v439
      %v566 = vunpack.c.l.b16 %v440
      %v567 = vunpack.c.l.b16 %v441
      %v568 = vunpack.c.l.b16 %v442
      %v569 = vunpack.c.l.b16 %v443
      %v570 = vunpack.c.l.b16 %v444
      %v571 = vunpack.c.l.b16 %v445
      %v572 = vunpack.c.l.b16 %v446
      %v573 = vunpack.c.l.b16 %v447
      %v574 = vunpack.c.l.b16 %v448
      %v575 = vunpack.c.l.b16 %v449
      %v576 = vunpack.c.l.b16 %v450
      %v577 = vunpack.c.l.b16 %v451
      %v578 = vunpack.c.l.b16 %v452
      %v579 = vunpack.c.l.b16 %v453
      %v580 = vunpack.c.l.b16 %v454
      %v581 = vunpack.c.l.b16 %v455
      %v582 = vunpack.c.l.b16 %v456
      %v583 = vunpack.c.l.b16 %v457
      %v584 = vunpack.c.l.b16 %v458
      %v585 = vunpack.c.l.b16 %v459
      %v586 = vunpack.c.l.b16 %v460
      %v587 = vunpack.c.l.b16 %v461
      %v588 = vunpack.c.l.b16 %v462
      %v589 = vunpack.c.l.b16 %v463
      %v590 = vunpack.c.l.b16 %v464
      %v591 = vunpack.c.l.b16 %v465
      %v592 = vunpack.c.l.b16 %v466
      %v593 = vunpack.c.l.b16 %v467
      %v594 = vunpack.c.l.b16 %v468
      %v595 = vunpack.c.l.b16 %v469
      %v596 = vunpack.c.l.b16 %v470
      %v597 = vunpack.c.l.b16 %v471
      %v598 = vunpack.c.l.b16 %v472
      %v599 = vunpack.c.l.b16 %v473
      %v600 = vunpack.c.l.b16 %v474
      %v601 = vunpack.c.l.b16 %v475
      %v602 = vunpack.c.l.b16 %v476
      %v603 = vunpack.c.l.b16 %v477
      %v604 = vunpack.c.l.b16 %v478
      %v605 = vunpack.c.l.b16 %v479
      %v606 = vunpack.c.l.b16 %v480
      %v607 = vunpack.c.l.b16 %v481
      %v608 = vunpack.c.l.b16 %v482
      %v609 = vunpack.c.l.b16 %v483
      %v610 = vpack.c.b16 %v561, %v560
      %v611 = vpack.c.b16 %v563, %v562
      %v612 = vpack.c.b16 %v565, %v564
      %v613 = vpack.c.b16 %v567, %v566
      %v614 = vpack.c.b16 %v569, %v568
      %v615 = vpack.c.b16 %v571, %v570
      %v616 = vpack.c.b16 %v573, %v572
      %v617 = vpack.c.b16 %v575, %v574
      %v618 = vpack.c.b16 %v577, %v576
      %v619 = vpack.c.b16 %v579, %v578
      %v620 = vpack.c.b16 %v581, %v580
      %v621 = vpack.c.b16 %v583, %v582
      %v622 = vpack.c.b16 %v585, %v584
      %v623 = vpack.c.b16 %v587, %v586
      %v624 = vpack.c.b16 %v589, %v588
      %v625 = vpack.c.b16 %v591, %v590
      %v626 = vpack.c.b16 %v593, %v592
      %v627 = vpack.c.b16 %v595, %v594
      %v628 = vpack.c.b16 %v597, %v596
      %v629 = vpack.c.b16 %v599, %v598
      %v630 = vpack.c.b16 %v601, %v600
      %v631 = vpack.c.b16 %v603, %v602
      %v632 = vpack.c.b16 %v605, %v604
      %v633 = vpack.c.b16 %v607, %v606
      %v634 = vpack.c.b16 %v609, %v608
      %vm660 = vcmask 130048
      %v662 = vsel %vm660, %v506, 0
      %664 = vmatprep.subr.bf16.mxu0 0
      %665 = vmatpush1.bf16.msra.mxu0 %v617
      %666 = vmatprep.subr.bf16.mxu0 0
      %667 = vmatpush1.bf16.msra.mxu0 %v616
      %668 = vmatprep.subr.bf16.mxu0 0
      %669 = vmatpush1.bf16.msra.mxu0 %v615
      %670 = vmatprep.subr.bf16.mxu0 0
      %671 = vmatpush1.bf16.msra.mxu0 %v614
      %672 = vmatprep.subr.bf16.mxu0 0
      %673 = vmatpush1.bf16.msra.mxu0 %v613
      %674 = vmatprep.subr.bf16.mxu0 0
      %675 = vmatpush1.bf16.msra.mxu0 %v612
      %676 = vmatprep.subr.bf16.mxu0 0
      %677 = vmatpush1.bf16.msra.mxu0 %v611
      %678 = vmatprep.subr.bf16.mxu0 0
      %679 = vmatpush1.bf16.msra.mxu0 %v610
      %680 = vmatprep.subr.bf16.mxu0 0
      %681 = vmatpush2.bf16.msra.mxu0 %v625
      %682 = vmatprep.subr.bf16.mxu0 0
      %683 = vmatpush2.bf16.msra.mxu0 %v624
      %684 = vmatprep.subr.bf16.mxu0 0
      %685 = vmatpush2.bf16.msra.mxu0 %v623
      %686 = vmatprep.subr.bf16.mxu0 0
      %687 = vmatpush2.bf16.msra.mxu0 %v622
      %688 = vmatprep.subr.bf16.mxu0 0
      %689 = vmatpush2.bf16.msra.mxu0 %v621
      %690 = vmatprep.subr.bf16.mxu0 0
      %691 = vmatpush2.bf16.msra.mxu0 %v620
      %692 = vmatprep.subr.bf16.mxu0 0
      %693 = vmatpush2.bf16.msra.mxu0 %v619
      %694 = vmatprep.subr.bf16.mxu0 0
      %695 = vmatpush2.bf16.msra.mxu0 %v618
      %696 = vmatprep.mubr.bf16.mxu0 %v504
      %697 = vmatmul.mubr.bf16.gmra.mxu0 %v503
      %v698 = vpop.f32.mrf.mxu0
      %v699 = vadd.f32 %v489, %v698
      %v700 = vpop.f32.mrf.mxu0
      %v701 = vpop.f32.mrf.mxu0
      %v702 = vadd.f32 %v489, %v701
      %v703 = vpop.f32.mrf.mxu0
      %704 = vdwg.mxu0
      %705 = vmatprep.subr.bf16.mxu0 0
      %706 = vmatpush1.bf16.msra.mxu0 %v633
      %707 = vmatprep.subr.bf16.mxu0 0
      %708 = vmatpush1.bf16.msra.mxu0 %v632
      %709 = vmatprep.subr.bf16.mxu0 0
      %710 = vmatpush1.bf16.msra.mxu0 %v631
      %711 = vmatprep.subr.bf16.mxu0 0
      %712 = vmatpush1.bf16.msra.mxu0 %v630
      %713 = vmatprep.subr.bf16.mxu0 0
      %714 = vmatpush1.bf16.msra.mxu0 %v629
      %715 = vmatprep.subr.bf16.mxu0 0
      %716 = vmatpush1.bf16.msra.mxu0 %v628
      %717 = vmatprep.subr.bf16.mxu0 0
      %718 = vmatpush1.bf16.msra.mxu0 %v627
      %719 = vmatprep.subr.bf16.mxu0 0
      %720 = vmatpush1.bf16.msra.mxu0 %v626
      %721 = vmatprep.subr.bf16.mxu0 0
      %722 = vmatpush2.bf16.msra.mxu0 0
      %723 = vmatprep.subr.bf16.mxu0 0
      %724 = vmatpush2.bf16.msra.mxu0 0
      %725 = vmatprep.subr.bf16.mxu0 0
      %726 = vmatpush2.bf16.msra.mxu0 0
      %727 = vmatprep.subr.bf16.mxu0 0
      %728 = vmatpush2.bf16.msra.mxu0 0
      %729 = vmatprep.subr.bf16.mxu0 0
      %730 = vmatpush2.bf16.msra.mxu0 0
      %731 = vmatprep.subr.bf16.mxu0 0
      %732 = vmatpush2.bf16.msra.mxu0 0
      %733 = vmatprep.subr.bf16.mxu0 0
      %734 = vmatpush2.bf16.msra.mxu0 0
      %735 = vmatprep.subr.bf16.mxu0 0
      %736 = vmatpush2.bf16.msra.mxu0 %v634
      %737 = vmatprep.mubr.bf16.mxu0 %v662
      %738 = vmatmul.mubr.bf16.gmra.mxu0 %v505
      %v739 = vpop.f32.mrf.mxu0
      %v740 = vadd.f32 %v699, %v739
      %v741 = vpop.f32.mrf.mxu0
      %v742 = vpop.f32.mrf.mxu0
      %v743 = vadd.f32 %v702, %v742
      %v744 = vpop.f32.mrf.mxu0
      %745 = vdwg.mxu0
      %v746 = vld [vmem:[%s2] sm:$0xf]
      %v747 = vld [vmem:[%s2 + $0x4] sm:$0xf]
      %v748 = vld [vmem:[%s2 + $0x8] sm:$0xf]
      %v749 = vld [vmem:[%s2 + $0xc] sm:$0xf]
      %v750 = vld [vmem:[%s2 + $0x10] sm:$0xf]
      %v751 = vld [vmem:[%s2 + $0x14] sm:$0xf]
      %v752 = vld [vmem:[%s2 + $0x18] sm:$0xf]
      %v753 = vld [vmem:[%s2 + $0x1c] sm:$0xf]
      %v754 = vld [vmem:[%s2 + $0x20] sm:$0xf]
      %v755 = vld [vmem:[%s2 + $0x24] sm:$0xf]
      %v756 = vld [vmem:[%s2 + $0x28] sm:$0xf]
      %v757 = vld [vmem:[%s2 + $0x2c] sm:$0xf]
      %v758 = vld [vmem:[%s2 + $0x30] sm:$0xf]
      %v759 = vld [vmem:[%s2 + $0x34] sm:$0xf]
      %v760 = vld [vmem:[%s2 + $0x38] sm:$0xf]
      %v761 = vld [vmem:[%s2 + $0x3c] sm:$0xf]
      %v762 = vld [vmem:[%s2 + $0x40] sm:$0xf]
      %v763 = vld [vmem:[%s2 + $0x44] sm:$0xf]
      %v764 = vld [vmem:[%s2 + $0x48] sm:$0xf]
      %v765 = vld [vmem:[%s2 + $0x4c] sm:$0xf]
      %v766 = vld [vmem:[%s2 + $0x50] sm:$0xf]
      %v767 = vld [vmem:[%s2 + $0x54] sm:$0xf]
      %v768 = vld [vmem:[%s2 + $0x58] sm:$0xf]
      %v769 = vld [vmem:[%s2 + $0x5c] sm:$0xf]
      %v770 = vld [vmem:[%s2 + $0x60] sm:$0xf]
      %v771 = vld [vmem:[%s2 + $0x64] sm:$0xf]
      %v772 = vld [vmem:[%s2 + $0x68] sm:$0xf]
      %v773 = vld [vmem:[%s2 + $0x6c] sm:$0xf]
      %v774 = vld [vmem:[%s2 + $0x70] sm:$0xf]
      %v775 = vld [vmem:[%s2 + $0x74] sm:$0xf]
      %v776 = vld [vmem:[%s2 + $0x78] sm:$0xf]
      %v777 = vld [vmem:[%s2 + $0x7c] sm:$0xf]
      %v778 = vld [vmem:[%s2 + $0x80] sm:$0xf]
      %v779 = vld [vmem:[%s2 + $0x84] sm:$0xf]
      %v780 = vld [vmem:[%s2 + $0x88] sm:$0xf]
      %v781 = vld [vmem:[%s2 + $0x8c] sm:$0xf]
      %v782 = vld [vmem:[%s2 + $0x90] sm:$0xf]
      %v783 = vld [vmem:[%s2 + $0x94] sm:$0xf]
      %v784 = vld [vmem:[%s2 + $0x98] sm:$0xf]
      %v785 = vld [vmem:[%s2 + $0x9c] sm:$0xf]
      %v786 = vld [vmem:[%s2 + $0xa0] sm:$0xf]
      %v787 = vld [vmem:[%s2 + $0xa4] sm:$0xf]
      %v788 = vld [vmem:[%s2 + $0xa8] sm:$0xf]
      %v789 = vld [vmem:[%s2 + $0xac] sm:$0xf]
      %v790 = vld [vmem:[%s2 + $0xb0] sm:$0xf]
      %v791 = vld [vmem:[%s2 + $0xb4] sm:$0xf]
      %v792 = vld [vmem:[%s2 + $0xb8] sm:$0xf]
      %v793 = vld [vmem:[%s2 + $0xbc] sm:$0xf]
      %v794 = vld [vmem:[%s2 + $0xc0] sm:$0xf]
      %v795 = vld [vmem:[%s2 + $0xc4] sm:$0xf]
      %v796 = vld [vmem:[%s6] sm:$0x1]
      %v798 = vlaneseq
      %v799 = vshrl.u32 %v798, 7
      %v800 = vsub.s32 0, %v799
      %v801 = vrot.slane %v796, %v800
      %v853 = vunpack.c.l.b16 %v746
      %v854 = vunpack.c.l.b16 %v747
      %v855 = vunpack.c.l.b16 %v748
      %v856 = vunpack.c.l.b16 %v749
      %v857 = vunpack.c.l.b16 %v750
      %v858 = vunpack.c.l.b16 %v751
      %v859 = vunpack.c.l.b16 %v752
      %v860 = vunpack.c.l.b16 %v753
      %v861 = vunpack.c.l.b16 %v754
      %v862 = vunpack.c.l.b16 %v755
      %v863 = vunpack.c.l.b16 %v756
      %v864 = vunpack.c.l.b16 %v757
      %v865 = vunpack.c.l.b16 %v758
      %v866 = vunpack.c.l.b16 %v759
      %v867 = vunpack.c.l.b16 %v760
      %v868 = vunpack.c.l.b16 %v761
      %v869 = vunpack.c.l.b16 %v762
      %v870 = vunpack.c.l.b16 %v763
      %v871 = vunpack.c.l.b16 %v764
      %v872 = vunpack.c.l.b16 %v765
      %v873 = vunpack.c.l.b16 %v766
      %v874 = vunpack.c.l.b16 %v767
      %v875 = vunpack.c.l.b16 %v768
      %v876 = vunpack.c.l.b16 %v769
      %v877 = vunpack.c.l.b16 %v770
      %v878 = vunpack.c.l.b16 %v771
      %v879 = vunpack.c.l.b16 %v772
      %v880 = vunpack.c.l.b16 %v773
      %v881 = vunpack.c.l.b16 %v774
      %v882 = vunpack.c.l.b16 %v775
      %v883 = vunpack.c.l.b16 %v776
      %v884 = vunpack.c.l.b16 %v777
      %v885 = vunpack.c.l.b16 %v778
      %v886 = vunpack.c.l.b16 %v779
      %v887 = vunpack.c.l.b16 %v780
      %v888 = vunpack.c.l.b16 %v781
      %v889 = vunpack.c.l.b16 %v782
      %v890 = vunpack.c.l.b16 %v783
      %v891 = vunpack.c.l.b16 %v784
      %v892 = vunpack.c.l.b16 %v785
      %v893 = vunpack.c.l.b16 %v786
      %v894 = vunpack.c.l.b16 %v787
      %v895 = vunpack.c.l.b16 %v788
      %v896 = vunpack.c.l.b16 %v789
      %v897 = vunpack.c.l.b16 %v790
      %v898 = vunpack.c.l.b16 %v791
      %v899 = vunpack.c.l.b16 %v792
      %v900 = vunpack.c.l.b16 %v793
      %v901 = vunpack.c.l.b16 %v794
      %v902 = vunpack.c.l.b16 %v795
      %v903 = vpack.c.b16 %v854, %v853
      %v904 = vpack.c.b16 %v856, %v855
      %v905 = vpack.c.b16 %v858, %v857
      %v906 = vpack.c.b16 %v860, %v859
      %v907 = vpack.c.b16 %v862, %v861
      %v908 = vpack.c.b16 %v864, %v863
      %v909 = vpack.c.b16 %v866, %v865
      %v910 = vpack.c.b16 %v868, %v867
      %v911 = vpack.c.b16 %v870, %v869
      %v912 = vpack.c.b16 %v872, %v871
      %v913 = vpack.c.b16 %v874, %v873
      %v914 = vpack.c.b16 %v876, %v875
      %v915 = vpack.c.b16 %v878, %v877
      %v916 = vpack.c.b16 %v880, %v879
      %v917 = vpack.c.b16 %v882, %v881
      %v918 = vpack.c.b16 %v884, %v883
      %v919 = vpack.c.b16 %v886, %v885
      %v920 = vpack.c.b16 %v888, %v887
      %v921 = vpack.c.b16 %v890, %v889
      %v922 = vpack.c.b16 %v892, %v891
      %v923 = vpack.c.b16 %v894, %v893
      %v924 = vpack.c.b16 %v896, %v895
      %v925 = vpack.c.b16 %v898, %v897
      %v926 = vpack.c.b16 %v900, %v899
      %v927 = vpack.c.b16 %v902, %v901
      %953 = vmatprep.subr.bf16.mxu0 0
      %954 = vmatpush1.bf16.msra.mxu0 %v910
      %955 = vmatprep.subr.bf16.mxu0 0
      %956 = vmatpush1.bf16.msra.mxu0 %v909
      %957 = vmatprep.subr.bf16.mxu0 0
      %958 = vmatpush1.bf16.msra.mxu0 %v908
      %959 = vmatprep.subr.bf16.mxu0 0
      %960 = vmatpush1.bf16.msra.mxu0 %v907
      %961 = vmatprep.subr.bf16.mxu0 0
      %962 = vmatpush1.bf16.msra.mxu0 %v906
      %963 = vmatprep.subr.bf16.mxu0 0
      %964 = vmatpush1.bf16.msra.mxu0 %v905
      %965 = vmatprep.subr.bf16.mxu0 0
      %966 = vmatpush1.bf16.msra.mxu0 %v904
      %967 = vmatprep.subr.bf16.mxu0 0
      %968 = vmatpush1.bf16.msra.mxu0 %v903
      %969 = vmatprep.subr.bf16.mxu0 0
      %970 = vmatpush2.bf16.msra.mxu0 %v918
      %971 = vmatprep.subr.bf16.mxu0 0
      %972 = vmatpush2.bf16.msra.mxu0 %v917
      %973 = vmatprep.subr.bf16.mxu0 0
      %974 = vmatpush2.bf16.msra.mxu0 %v916
      %975 = vmatprep.subr.bf16.mxu0 0
      %976 = vmatpush2.bf16.msra.mxu0 %v915
      %977 = vmatprep.subr.bf16.mxu0 0
      %978 = vmatpush2.bf16.msra.mxu0 %v914
      %979 = vmatprep.subr.bf16.mxu0 0
      %980 = vmatpush2.bf16.msra.mxu0 %v913
      %981 = vmatprep.subr.bf16.mxu0 0
      %982 = vmatpush2.bf16.msra.mxu0 %v912
      %983 = vmatprep.subr.bf16.mxu0 0
      %984 = vmatpush2.bf16.msra.mxu0 %v911
      %985 = vmatprep.mubr.bf16.mxu0 %v504
      %986 = vmatmul.mubr.bf16.gmra.mxu0 %v503
      %v987 = vpop.f32.mrf.mxu0
      %v988 = vadd.f32 %v801, %v987
      %v989 = vpop.f32.mrf.mxu0
      %v990 = vpop.f32.mrf.mxu0
      %v991 = vadd.f32 %v801, %v990
      %v992 = vpop.f32.mrf.mxu0
      %993 = vdwg.mxu0
      %994 = vmatprep.subr.bf16.mxu0 0
      %995 = vmatpush1.bf16.msra.mxu0 %v926
      %996 = vmatprep.subr.bf16.mxu0 0
      %997 = vmatpush1.bf16.msra.mxu0 %v925
      %998 = vmatprep.subr.bf16.mxu0 0
      %999 = vmatpush1.bf16.msra.mxu0 %v924
      %1000 = vmatprep.subr.bf16.mxu0 0
      %1001 = vmatpush1.bf16.msra.mxu0 %v923
      %1002 = vmatprep.subr.bf16.mxu0 0
      %1003 = vmatpush1.bf16.msra.mxu0 %v922
      %1004 = vmatprep.subr.bf16.mxu0 0
      %1005 = vmatpush1.bf16.msra.mxu0 %v921
      %1006 = vmatprep.subr.bf16.mxu0 0
      %1007 = vmatpush1.bf16.msra.mxu0 %v920
      %1008 = vmatprep.subr.bf16.mxu0 0
      %1009 = vmatpush1.bf16.msra.mxu0 %v919
      %1010 = vmatprep.subr.bf16.mxu0 0
      %1011 = vmatpush2.bf16.msra.mxu0 0
      %1012 = vmatprep.subr.bf16.mxu0 0
      %1013 = vmatpush2.bf16.msra.mxu0 0
      %1014 = vmatprep.subr.bf16.mxu0 0
      %1015 = vmatpush2.bf16.msra.mxu0 0
      %1016 = vmatprep.subr.bf16.mxu0 0
      %1017 = vmatpush2.bf16.msra.mxu0 0
      %1018 = vmatprep.subr.bf16.mxu0 0
      %1019 = vmatpush2.bf16.msra.mxu0 0
      %1020 = vmatprep.subr.bf16.mxu0 0
      %1021 = vmatpush2.bf16.msra.mxu0 0
      %1022 = vmatprep.subr.bf16.mxu0 0
      %1023 = vmatpush2.bf16.msra.mxu0 0
      %1024 = vmatprep.subr.bf16.mxu0 0
      %1025 = vmatpush2.bf16.msra.mxu0 %v927
      %1026 = vmatprep.mubr.bf16.mxu0 %v662
      %1027 = vmatmul.mubr.bf16.gmra.mxu0 %v505
      %v1028 = vpop.f32.mrf.mxu0
      %v1029 = vadd.f32 %v988, %v1028
      %v1030 = vpop.f32.mrf.mxu0
      %v1031 = vpop.f32.mrf.mxu0
      %v1032 = vadd.f32 %v991, %v1031
      %v1033 = vpop.f32.mrf.mxu0
      %1034 = vdwg.mxu0
      %v1035 = vld [vmem:[%s3] sm:$0xf]
      %v1036 = vld [vmem:[%s3 + $0x4] sm:$0xf]
      %v1037 = vld [vmem:[%s3 + $0x8] sm:$0xf]
      %v1038 = vld [vmem:[%s3 + $0xc] sm:$0xf]
      %v1039 = vld [vmem:[%s3 + $0x10] sm:$0xf]
      %v1040 = vld [vmem:[%s3 + $0x14] sm:$0xf]
      %v1041 = vld [vmem:[%s3 + $0x18] sm:$0xf]
      %v1042 = vld [vmem:[%s3 + $0x1c] sm:$0xf]
      %v1043 = vld [vmem:[%s3 + $0x20] sm:$0xf]
      %v1044 = vld [vmem:[%s3 + $0x24] sm:$0xf]
      %v1045 = vld [vmem:[%s3 + $0x28] sm:$0xf]
      %v1046 = vld [vmem:[%s3 + $0x2c] sm:$0xf]
      %v1047 = vld [vmem:[%s3 + $0x30] sm:$0xf]
      %v1048 = vld [vmem:[%s3 + $0x34] sm:$0xf]
      %v1049 = vld [vmem:[%s3 + $0x38] sm:$0xf]
      %v1050 = vld [vmem:[%s3 + $0x3c] sm:$0xf]
      %v1051 = vld [vmem:[%s3 + $0x40] sm:$0xf]
      %v1052 = vld [vmem:[%s3 + $0x44] sm:$0xf]
      %v1053 = vld [vmem:[%s3 + $0x48] sm:$0xf]
      %v1054 = vld [vmem:[%s3 + $0x4c] sm:$0xf]
      %v1055 = vld [vmem:[%s3 + $0x50] sm:$0xf]
      %v1056 = vld [vmem:[%s3 + $0x54] sm:$0xf]
      %v1057 = vld [vmem:[%s3 + $0x58] sm:$0xf]
      %v1058 = vld [vmem:[%s3 + $0x5c] sm:$0xf]
      %v1059 = vld [vmem:[%s3 + $0x60] sm:$0xf]
      %v1060 = vld [vmem:[%s3 + $0x64] sm:$0xf]
      %v1061 = vld [vmem:[%s3 + $0x68] sm:$0xf]
      %v1062 = vld [vmem:[%s3 + $0x6c] sm:$0xf]
      %v1063 = vld [vmem:[%s3 + $0x70] sm:$0xf]
      %v1064 = vld [vmem:[%s3 + $0x74] sm:$0xf]
      %v1065 = vld [vmem:[%s3 + $0x78] sm:$0xf]
      %v1066 = vld [vmem:[%s3 + $0x7c] sm:$0xf]
      %v1067 = vld [vmem:[%s3 + $0x80] sm:$0xf]
      %v1068 = vld [vmem:[%s3 + $0x84] sm:$0xf]
      %v1069 = vld [vmem:[%s3 + $0x88] sm:$0xf]
      %v1070 = vld [vmem:[%s3 + $0x8c] sm:$0xf]
      %v1071 = vld [vmem:[%s3 + $0x90] sm:$0xf]
      %v1072 = vld [vmem:[%s3 + $0x94] sm:$0xf]
      %v1073 = vld [vmem:[%s3 + $0x98] sm:$0xf]
      %v1074 = vld [vmem:[%s3 + $0x9c] sm:$0xf]
      %v1075 = vld [vmem:[%s3 + $0xa0] sm:$0xf]
      %v1076 = vld [vmem:[%s3 + $0xa4] sm:$0xf]
      %v1077 = vld [vmem:[%s3 + $0xa8] sm:$0xf]
      %v1078 = vld [vmem:[%s3 + $0xac] sm:$0xf]
      %v1079 = vld [vmem:[%s3 + $0xb0] sm:$0xf]
      %v1080 = vld [vmem:[%s3 + $0xb4] sm:$0xf]
      %v1081 = vld [vmem:[%s3 + $0xb8] sm:$0xf]
      %v1082 = vld [vmem:[%s3 + $0xbc] sm:$0xf]
      %v1083 = vld [vmem:[%s3 + $0xc0] sm:$0xf]
      %v1084 = vld [vmem:[%s3 + $0xc4] sm:$0xf]
      %v1085 = vld [vmem:[%s7] sm:$0x1]
      %v1087 = vlaneseq
      %v1088 = vshrl.u32 %v1087, 7
      %v1089 = vsub.s32 0, %v1088
      %v1090 = vrot.slane %v1085, %v1089
      %v1142 = vunpack.c.l.b16 %v1035
      %v1143 = vunpack.c.l.b16 %v1036
      %v1144 = vunpack.c.l.b16 %v1037
      %v1145 = vunpack.c.l.b16 %v1038
      %v1146 = vunpack.c.l.b16 %v1039
      %v1147 = vunpack.c.l.b16 %v1040
      %v1148 = vunpack.c.l.b16 %v1041
      %v1149 = vunpack.c.l.b16 %v1042
      %v1150 = vunpack.c.l.b16 %v1043
      %v1151 = vunpack.c.l.b16 %v1044
      %v1152 = vunpack.c.l.b16 %v1045
      %v1153 = vunpack.c.l.b16 %v1046
      %v1154 = vunpack.c.l.b16 %v1047
      %v1155 = vunpack.c.l.b16 %v1048
      %v1156 = vunpack.c.l.b16 %v1049
      %v1157 = vunpack.c.l.b16 %v1050
      %v1158 = vunpack.c.l.b16 %v1051
      %v1159 = vunpack.c.l.b16 %v1052
      %v1160 = vunpack.c.l.b16 %v1053
      %v1161 = vunpack.c.l.b16 %v1054
      %v1162 = vunpack.c.l.b16 %v1055
      %v1163 = vunpack.c.l.b16 %v1056
      %v1164 = vunpack.c.l.b16 %v1057
      %v1165 = vunpack.c.l.b16 %v1058
      %v1166 = vunpack.c.l.b16 %v1059
      %v1167 = vunpack.c.l.b16 %v1060
      %v1168 = vunpack.c.l.b16 %v1061
      %v1169 = vunpack.c.l.b16 %v1062
      %v1170 = vunpack.c.l.b16 %v1063
      %v1171 = vunpack.c.l.b16 %v1064
      %v1172 = vunpack.c.l.b16 %v1065
      %v1173 = vunpack.c.l.b16 %v1066
      %v1174 = vunpack.c.l.b16 %v1067
      %v1175 = vunpack.c.l.b16 %v1068
      %v1176 = vunpack.c.l.b16 %v1069
      %v1177 = vunpack.c.l.b16 %v1070
      %v1178 = vunpack.c.l.b16 %v1071
      %v1179 = vunpack.c.l.b16 %v1072
      %v1180 = vunpack.c.l.b16 %v1073
      %v1181 = vunpack.c.l.b16 %v1074
      %v1182 = vunpack.c.l.b16 %v1075
      %v1183 = vunpack.c.l.b16 %v1076
      %v1184 = vunpack.c.l.b16 %v1077
      %v1185 = vunpack.c.l.b16 %v1078
      %v1186 = vunpack.c.l.b16 %v1079
      %v1187 = vunpack.c.l.b16 %v1080
      %v1188 = vunpack.c.l.b16 %v1081
      %v1189 = vunpack.c.l.b16 %v1082
      %v1190 = vunpack.c.l.b16 %v1083
      %v1191 = vunpack.c.l.b16 %v1084
      %v1192 = vpack.c.b16 %v1143, %v1142
      %v1193 = vpack.c.b16 %v1145, %v1144
      %v1194 = vpack.c.b16 %v1147, %v1146
      %v1195 = vpack.c.b16 %v1149, %v1148
      %v1196 = vpack.c.b16 %v1151, %v1150
      %v1197 = vpack.c.b16 %v1153, %v1152
      %v1198 = vpack.c.b16 %v1155, %v1154
      %v1199 = vpack.c.b16 %v1157, %v1156
      %v1200 = vpack.c.b16 %v1159, %v1158
      %v1201 = vpack.c.b16 %v1161, %v1160
      %v1202 = vpack.c.b16 %v1163, %v1162
      %v1203 = vpack.c.b16 %v1165, %v1164
      %v1204 = vpack.c.b16 %v1167, %v1166
      %v1205 = vpack.c.b16 %v1169, %v1168
      %v1206 = vpack.c.b16 %v1171, %v1170
      %v1207 = vpack.c.b16 %v1173, %v1172
      %v1208 = vpack.c.b16 %v1175, %v1174
      %v1209 = vpack.c.b16 %v1177, %v1176
      %v1210 = vpack.c.b16 %v1179, %v1178
      %v1211 = vpack.c.b16 %v1181, %v1180
      %v1212 = vpack.c.b16 %v1183, %v1182
      %v1213 = vpack.c.b16 %v1185, %v1184
      %v1214 = vpack.c.b16 %v1187, %v1186
      %v1215 = vpack.c.b16 %v1189, %v1188
      %v1216 = vpack.c.b16 %v1191, %v1190
      %1242 = vmatprep.subr.bf16.mxu0 0
      %1243 = vmatpush1.bf16.msra.mxu0 %v1199
      %1244 = vmatprep.subr.bf16.mxu0 0
      %1245 = vmatpush1.bf16.msra.mxu0 %v1198
      %1246 = vmatprep.subr.bf16.mxu0 0
      %1247 = vmatpush1.bf16.msra.mxu0 %v1197
      %1248 = vmatprep.subr.bf16.mxu0 0
      %1249 = vmatpush1.bf16.msra.mxu0 %v1196
      %1250 = vmatprep.subr.bf16.mxu0 0
      %1251 = vmatpush1.bf16.msra.mxu0 %v1195
      %1252 = vmatprep.subr.bf16.mxu0 0
      %1253 = vmatpush1.bf16.msra.mxu0 %v1194
      %1254 = vmatprep.subr.bf16.mxu0 0
      %1255 = vmatpush1.bf16.msra.mxu0 %v1193
      %1256 = vmatprep.subr.bf16.mxu0 0
      %1257 = vmatpush1.bf16.msra.mxu0 %v1192
      %1258 = vmatprep.subr.bf16.mxu0 0
      %1259 = vmatpush2.bf16.msra.mxu0 %v1207
      %1260 = vmatprep.subr.bf16.mxu0 0
      %1261 = vmatpush2.bf16.msra.mxu0 %v1206
      %1262 = vmatprep.subr.bf16.mxu0 0
      %1263 = vmatpush2.bf16.msra.mxu0 %v1205
      %1264 = vmatprep.subr.bf16.mxu0 0
      %1265 = vmatpush2.bf16.msra.mxu0 %v1204
      %1266 = vmatprep.subr.bf16.mxu0 0
      %1267 = vmatpush2.bf16.msra.mxu0 %v1203
      %1268 = vmatprep.subr.bf16.mxu0 0
      %1269 = vmatpush2.bf16.msra.mxu0 %v1202
      %1270 = vmatprep.subr.bf16.mxu0 0
      %1271 = vmatpush2.bf16.msra.mxu0 %v1201
      %1272 = vmatprep.subr.bf16.mxu0 0
      %1273 = vmatpush2.bf16.msra.mxu0 %v1200
      %1274 = vmatprep.mubr.bf16.mxu0 %v504
      %1275 = vmatmul.mubr.bf16.gmra.mxu0 %v503
      %v1276 = vpop.f32.mrf.mxu0
      %v1277 = vadd.f32 %v1090, %v1276
      %v1278 = vpop.f32.mrf.mxu0
      %v1279 = vpop.f32.mrf.mxu0
      %v1280 = vadd.f32 %v1090, %v1279
      %v1281 = vpop.f32.mrf.mxu0
      %1282 = vdwg.mxu0
      %1283 = vmatprep.subr.bf16.mxu0 0
      %1284 = vmatpush1.bf16.msra.mxu0 %v1215
      %1285 = vmatprep.subr.bf16.mxu0 0
      %1286 = vmatpush1.bf16.msra.mxu0 %v1214
      %1287 = vmatprep.subr.bf16.mxu0 0
      %1288 = vmatpush1.bf16.msra.mxu0 %v1213
      %1289 = vmatprep.subr.bf16.mxu0 0
      %1290 = vmatpush1.bf16.msra.mxu0 %v1212
      %1291 = vmatprep.subr.bf16.mxu0 0
      %1292 = vmatpush1.bf16.msra.mxu0 %v1211
      %1293 = vmatprep.subr.bf16.mxu0 0
      %1294 = vmatpush1.bf16.msra.mxu0 %v1210
      %1295 = vmatprep.subr.bf16.mxu0 0
      %1296 = vmatpush1.bf16.msra.mxu0 %v1209
      %1297 = vmatprep.subr.bf16.mxu0 0
      %1298 = vmatpush1.bf16.msra.mxu0 %v1208
      %1299 = vmatprep.subr.bf16.mxu0 0
      %1300 = vmatpush2.bf16.msra.mxu0 0
      %1301 = vmatprep.subr.bf16.mxu0 0
      %1302 = vmatpush2.bf16.msra.mxu0 0
      %1303 = vmatprep.subr.bf16.mxu0 0
      %1304 = vmatpush2.bf16.msra.mxu0 0
      %1305 = vmatprep.subr.bf16.mxu0 0
      %1306 = vmatpush2.bf16.msra.mxu0 0
      %1307 = vmatprep.subr.bf16.mxu0 0
      %1308 = vmatpush2.bf16.msra.mxu0 0
      %1309 = vmatprep.subr.bf16.mxu0 0
      %1310 = vmatpush2.bf16.msra.mxu0 0
      %1311 = vmatprep.subr.bf16.mxu0 0
      %1312 = vmatpush2.bf16.msra.mxu0 0
      %1313 = vmatprep.subr.bf16.mxu0 0
      %1314 = vmatpush2.bf16.msra.mxu0 %v1216
      %1315 = vmatprep.mubr.bf16.mxu0 %v662
      %1316 = vmatmul.mubr.bf16.gmra.mxu0 %v505
      %v1317 = vpop.f32.mrf.mxu0
      %v1318 = vadd.f32 %v1277, %v1317
      %v1319 = vpop.f32.mrf.mxu0
      %v1320 = vpop.f32.mrf.mxu0
      %v1321 = vadd.f32 %v1280, %v1320
      %v1322 = vpop.f32.mrf.mxu0
      %1323 = vdwg.mxu0
      %v1324 = vld [vmem:[%s4] sm:$0xf]
      %v1325 = vld [vmem:[%s4 + $0x4] sm:$0xf]
      %v1326 = vld [vmem:[%s4 + $0x8] sm:$0xf]
      %v1327 = vld [vmem:[%s4 + $0xc] sm:$0xf]
      %v1328 = vld [vmem:[%s4 + $0x10] sm:$0xf]
      %v1329 = vld [vmem:[%s4 + $0x14] sm:$0xf]
      %v1330 = vld [vmem:[%s4 + $0x18] sm:$0xf]
      %v1331 = vld [vmem:[%s4 + $0x1c] sm:$0xf]
      %v1332 = vld [vmem:[%s4 + $0x20] sm:$0xf]
      %v1333 = vld [vmem:[%s4 + $0x24] sm:$0xf]
      %v1334 = vld [vmem:[%s4 + $0x28] sm:$0xf]
      %v1335 = vld [vmem:[%s4 + $0x2c] sm:$0xf]
      %v1336 = vld [vmem:[%s4 + $0x30] sm:$0xf]
      %v1337 = vld [vmem:[%s4 + $0x34] sm:$0xf]
      %v1338 = vld [vmem:[%s4 + $0x38] sm:$0xf]
      %v1339 = vld [vmem:[%s4 + $0x3c] sm:$0xf]
      %v1340 = vld [vmem:[%s4 + $0x40] sm:$0xf]
      %v1341 = vld [vmem:[%s4 + $0x44] sm:$0xf]
      %v1342 = vld [vmem:[%s4 + $0x48] sm:$0xf]
      %v1343 = vld [vmem:[%s4 + $0x4c] sm:$0xf]
      %v1344 = vld [vmem:[%s4 + $0x50] sm:$0xf]
      %v1345 = vld [vmem:[%s4 + $0x54] sm:$0xf]
      %v1346 = vld [vmem:[%s4 + $0x58] sm:$0xf]
      %v1347 = vld [vmem:[%s4 + $0x5c] sm:$0xf]
      %v1348 = vld [vmem:[%s4 + $0x60] sm:$0xf]
      %v1349 = vld [vmem:[%s4 + $0x64] sm:$0xf]
      %v1350 = vld [vmem:[%s4 + $0x68] sm:$0xf]
      %v1351 = vld [vmem:[%s4 + $0x6c] sm:$0xf]
      %v1352 = vld [vmem:[%s4 + $0x70] sm:$0xf]
      %v1353 = vld [vmem:[%s4 + $0x74] sm:$0xf]
      %v1354 = vld [vmem:[%s4 + $0x78] sm:$0xf]
      %v1355 = vld [vmem:[%s4 + $0x7c] sm:$0xf]
      %v1356 = vld [vmem:[%s4 + $0x80] sm:$0xf]
      %v1357 = vld [vmem:[%s4 + $0x84] sm:$0xf]
      %v1358 = vld [vmem:[%s4 + $0x88] sm:$0xf]
      %v1359 = vld [vmem:[%s4 + $0x8c] sm:$0xf]
      %v1360 = vld [vmem:[%s4 + $0x90] sm:$0xf]
      %v1361 = vld [vmem:[%s4 + $0x94] sm:$0xf]
      %v1362 = vld [vmem:[%s4 + $0x98] sm:$0xf]
      %v1363 = vld [vmem:[%s4 + $0x9c] sm:$0xf]
      %v1364 = vld [vmem:[%s4 + $0xa0] sm:$0xf]
      %v1365 = vld [vmem:[%s4 + $0xa4] sm:$0xf]
      %v1366 = vld [vmem:[%s4 + $0xa8] sm:$0xf]
      %v1367 = vld [vmem:[%s4 + $0xac] sm:$0xf]
      %v1368 = vld [vmem:[%s4 + $0xb0] sm:$0xf]
      %v1369 = vld [vmem:[%s4 + $0xb4] sm:$0xf]
      %v1370 = vld [vmem:[%s4 + $0xb8] sm:$0xf]
      %v1371 = vld [vmem:[%s4 + $0xbc] sm:$0xf]
      %v1372 = vld [vmem:[%s4 + $0xc0] sm:$0xf]
      %v1373 = vld [vmem:[%s4 + $0xc4] sm:$0xf]
      %v1374 = vld [vmem:[%s8] sm:$0x1]
      %v1376 = vlaneseq
      %v1377 = vshrl.u32 %v1376, 7
      %v1378 = vsub.s32 0, %v1377
      %v1379 = vrot.slane %v1374, %v1378
      %v1431 = vunpack.c.l.b16 %v1324
      %v1432 = vunpack.c.l.b16 %v1325
      %v1433 = vunpack.c.l.b16 %v1326
      %v1434 = vunpack.c.l.b16 %v1327
      %v1435 = vunpack.c.l.b16 %v1328
      %v1436 = vunpack.c.l.b16 %v1329
      %v1437 = vunpack.c.l.b16 %v1330
      %v1438 = vunpack.c.l.b16 %v1331
      %v1439 = vunpack.c.l.b16 %v1332
      %v1440 = vunpack.c.l.b16 %v1333
      %v1441 = vunpack.c.l.b16 %v1334
      %v1442 = vunpack.c.l.b16 %v1335
      %v1443 = vunpack.c.l.b16 %v1336
      %v1444 = vunpack.c.l.b16 %v1337
      %v1445 = vunpack.c.l.b16 %v1338
      %v1446 = vunpack.c.l.b16 %v1339
      %v1447 = vunpack.c.l.b16 %v1340
      %v1448 = vunpack.c.l.b16 %v1341
      %v1449 = vunpack.c.l.b16 %v1342
      %v1450 = vunpack.c.l.b16 %v1343
      %v1451 = vunpack.c.l.b16 %v1344
      %v1452 = vunpack.c.l.b16 %v1345
      %v1453 = vunpack.c.l.b16 %v1346
      %v1454 = vunpack.c.l.b16 %v1347
      %v1455 = vunpack.c.l.b16 %v1348
      %v1456 = vunpack.c.l.b16 %v1349
      %v1457 = vunpack.c.l.b16 %v1350
      %v1458 = vunpack.c.l.b16 %v1351
      %v1459 = vunpack.c.l.b16 %v1352
      %v1460 = vunpack.c.l.b16 %v1353
      %v1461 = vunpack.c.l.b16 %v1354
      %v1462 = vunpack.c.l.b16 %v1355
      %v1463 = vunpack.c.l.b16 %v1356
      %v1464 = vunpack.c.l.b16 %v1357
      %v1465 = vunpack.c.l.b16 %v1358
      %v1466 = vunpack.c.l.b16 %v1359
      %v1467 = vunpack.c.l.b16 %v1360
      %v1468 = vunpack.c.l.b16 %v1361
      %v1469 = vunpack.c.l.b16 %v1362
      %v1470 = vunpack.c.l.b16 %v1363
      %v1471 = vunpack.c.l.b16 %v1364
      %v1472 = vunpack.c.l.b16 %v1365
      %v1473 = vunpack.c.l.b16 %v1366
      %v1474 = vunpack.c.l.b16 %v1367
      %v1475 = vunpack.c.l.b16 %v1368
      %v1476 = vunpack.c.l.b16 %v1369
      %v1477 = vunpack.c.l.b16 %v1370
      %v1478 = vunpack.c.l.b16 %v1371
      %v1479 = vunpack.c.l.b16 %v1372
      %v1480 = vunpack.c.l.b16 %v1373
      %v1481 = vpack.c.b16 %v1432, %v1431
      %v1482 = vpack.c.b16 %v1434, %v1433
      %v1483 = vpack.c.b16 %v1436, %v1435
      %v1484 = vpack.c.b16 %v1438, %v1437
      %v1485 = vpack.c.b16 %v1440, %v1439
      %v1486 = vpack.c.b16 %v1442, %v1441
      %v1487 = vpack.c.b16 %v1444, %v1443
      %v1488 = vpack.c.b16 %v1446, %v1445
      %v1489 = vpack.c.b16 %v1448, %v1447
      %v1490 = vpack.c.b16 %v1450, %v1449
      %v1491 = vpack.c.b16 %v1452, %v1451
      %v1492 = vpack.c.b16 %v1454, %v1453
      %v1493 = vpack.c.b16 %v1456, %v1455
      %v1494 = vpack.c.b16 %v1458, %v1457
      %v1495 = vpack.c.b16 %v1460, %v1459
      %v1496 = vpack.c.b16 %v1462, %v1461
      %v1497 = vpack.c.b16 %v1464, %v1463
      %v1498 = vpack.c.b16 %v1466, %v1465
      %v1499 = vpack.c.b16 %v1468, %v1467
      %v1500 = vpack.c.b16 %v1470, %v1469
      %v1501 = vpack.c.b16 %v1472, %v1471
      %v1502 = vpack.c.b16 %v1474, %v1473
      %v1503 = vpack.c.b16 %v1476, %v1475
      %v1504 = vpack.c.b16 %v1478, %v1477
      %v1505 = vpack.c.b16 %v1480, %v1479
      %1531 = vmatprep.subr.bf16.mxu0 0
      %1532 = vmatpush1.bf16.msra.mxu0 %v1488
      %1533 = vmatprep.subr.bf16.mxu0 0
      %1534 = vmatpush1.bf16.msra.mxu0 %v1487
      %1535 = vmatprep.subr.bf16.mxu0 0
      %1536 = vmatpush1.bf16.msra.mxu0 %v1486
      %1537 = vmatprep.subr.bf16.mxu0 0
      %1538 = vmatpush1.bf16.msra.mxu0 %v1485
      %1539 = vmatprep.subr.bf16.mxu0 0
      %1540 = vmatpush1.bf16.msra.mxu0 %v1484
      %1541 = vmatprep.subr.bf16.mxu0 0
      %1542 = vmatpush1.bf16.msra.mxu0 %v1483
      %1543 = vmatprep.subr.bf16.mxu0 0
      %1544 = vmatpush1.bf16.msra.mxu0 %v1482
      %1545 = vmatprep.subr.bf16.mxu0 0
      %1546 = vmatpush1.bf16.msra.mxu0 %v1481
      %1547 = vmatprep.subr.bf16.mxu0 0
      %1548 = vmatpush2.bf16.msra.mxu0 %v1496
      %1549 = vmatprep.subr.bf16.mxu0 0
      %1550 = vmatpush2.bf16.msra.mxu0 %v1495
      %1551 = vmatprep.subr.bf16.mxu0 0
      %1552 = vmatpush2.bf16.msra.mxu0 %v1494
      %1553 = vmatprep.subr.bf16.mxu0 0
      %1554 = vmatpush2.bf16.msra.mxu0 %v1493
      %1555 = vmatprep.subr.bf16.mxu0 0
      %1556 = vmatpush2.bf16.msra.mxu0 %v1492
      %1557 = vmatprep.subr.bf16.mxu0 0
      %1558 = vmatpush2.bf16.msra.mxu0 %v1491
      %1559 = vmatprep.subr.bf16.mxu0 0
      %1560 = vmatpush2.bf16.msra.mxu0 %v1490
      %1561 = vmatprep.subr.bf16.mxu0 0
      %1562 = vmatpush2.bf16.msra.mxu0 %v1489
      %1563 = vmatprep.mubr.bf16.mxu0 %v504
      %1564 = vmatmul.mubr.bf16.gmra.mxu0 %v503
      %v1565 = vpop.f32.mrf.mxu0
      %v1566 = vadd.f32 %v1379, %v1565
      %v1567 = vpop.f32.mrf.mxu0
      %v1568 = vpop.f32.mrf.mxu0
      %v1569 = vadd.f32 %v1379, %v1568
      %v1570 = vpop.f32.mrf.mxu0
      %1571 = vdwg.mxu0
      %1572 = vmatprep.subr.bf16.mxu0 0
      %1573 = vmatpush1.bf16.msra.mxu0 %v1504
      %1574 = vmatprep.subr.bf16.mxu0 0
      %1575 = vmatpush1.bf16.msra.mxu0 %v1503
      %1576 = vmatprep.subr.bf16.mxu0 0
      %1577 = vmatpush1.bf16.msra.mxu0 %v1502
      %1578 = vmatprep.subr.bf16.mxu0 0
      %1579 = vmatpush1.bf16.msra.mxu0 %v1501
      %1580 = vmatprep.subr.bf16.mxu0 0
      %1581 = vmatpush1.bf16.msra.mxu0 %v1500
      %1582 = vmatprep.subr.bf16.mxu0 0
      %1583 = vmatpush1.bf16.msra.mxu0 %v1499
      %1584 = vmatprep.subr.bf16.mxu0 0
      %1585 = vmatpush1.bf16.msra.mxu0 %v1498
      %1586 = vmatprep.subr.bf16.mxu0 0
      %1587 = vmatpush1.bf16.msra.mxu0 %v1497
      %1588 = vmatprep.subr.bf16.mxu0 0
      %1589 = vmatpush2.bf16.msra.mxu0 0
      %1590 = vmatprep.subr.bf16.mxu0 0
      %1591 = vmatpush2.bf16.msra.mxu0 0
      %1592 = vmatprep.subr.bf16.mxu0 0
      %1593 = vmatpush2.bf16.msra.mxu0 0
      %1594 = vmatprep.subr.bf16.mxu0 0
      %1595 = vmatpush2.bf16.msra.mxu0 0
      %1596 = vmatprep.subr.bf16.mxu0 0
      %1597 = vmatpush2.bf16.msra.mxu0 0
      %1598 = vmatprep.subr.bf16.mxu0 0
      %1599 = vmatpush2.bf16.msra.mxu0 0
      %1600 = vmatprep.subr.bf16.mxu0 0
      %1601 = vmatpush2.bf16.msra.mxu0 0
      %1602 = vmatprep.subr.bf16.mxu0 0
      %1603 = vmatpush2.bf16.msra.mxu0 %v1505
      %1604 = vmatprep.mubr.bf16.mxu0 %v662
      %1605 = vmatmul.mubr.bf16.gmra.mxu0 %v505
      %v1606 = vpop.f32.mrf.mxu0
      %v1607 = vadd.f32 %v1566, %v1606
      %v1608 = vpop.f32.mrf.mxu0
      %v1609 = vpop.f32.mrf.mxu0
      %v1610 = vadd.f32 %v1569, %v1609
      %v1611 = vpop.f32.mrf.mxu0
      %1612 = vdwg.mxu0
      %v1613 = vld [vmem:[%s415] sm:$0xff]
      %v1614 = vld [vmem:[%s415 + $0x8] sm:$0xff]
      %v1615 = vadd.f32 %v1318, 1.0
      %v1616 = vadd.f32 %v1321, 1.0
      %v1617 = vxor.u32 %v1615, 2147483648
      %v1618 = vxor.u32 %v1616, 2147483648
      %v1619 = vmul.f32 %v1617, 1.442695
      %v1620 = vpow.pop %v1619
      %v1621 = vmul.f32 %v1618, 1.442695
      %v1622 = vpow.pop %v1621
      %v1623 = vadd.f32 %v1620, 1.0
      %v1624 = vadd.f32 %v1622, 1.0
      %v1625 = vrcp.pop %v1623
      %v1626 = vmul.f32 1.0, %v1625
      %v1627 = vrcp.pop %v1624
      %v1628 = vmul.f32 1.0, %v1627
      %v1629 = vmul.f32 %v1613, %v1626
      %v1630 = vmul.f32 %v1614, %v1628
      %v1631 = vxor.u32 %v740, 2147483648
      %v1632 = vxor.u32 %v743, 2147483648
      %v1633 = vmul.f32 %v1631, 1.442695
      %v1634 = vpow.pop %v1633
      %v1635 = vmul.f32 %v1632, 1.442695
      %v1636 = vpow.pop %v1635
      %v1637 = vadd.f32 %v1634, 1.0
      %v1638 = vadd.f32 %v1636, 1.0
      %v1639 = vrcp.pop %v1637
      %v1640 = vmul.f32 1.0, %v1639
      %v1641 = vrcp.pop %v1638
      %v1642 = vmul.f32 1.0, %v1641
      %v1643 = vtanh.pop %v1029
      %v1644 = vtanh.pop %v1032
      %v1645 = vmul.f32 %v1640, %v1643
      %v1646 = vmul.f32 %v1642, %v1644
      %v1647 = vadd.f32 %v1629, %v1645
      %v1648 = vadd.f32 %v1630, %v1646
      %vm1649 = vcmask 64512
      %1650 = vst.msk [vmem:[%s421] sm:$0xff] %vm1649, %v1647
      %1651 = vst.msk [vmem:[%s421 + $0x8] sm:$0xff] %vm1649, %v1648
      %v1652 = vtanh.pop %v1647
      %v1653 = vtanh.pop %v1648
      %v1654 = vxor.u32 %v1607, 2147483648
      %v1655 = vxor.u32 %v1610, 2147483648
      %v1656 = vmul.f32 %v1654, 1.442695
      %v1657 = vpow.pop %v1656
      %v1658 = vmul.f32 %v1655, 1.442695
      %v1659 = vpow.pop %v1658
      %v1660 = vadd.f32 %v1657, 1.0
      %v1661 = vadd.f32 %v1659, 1.0
      %v1662 = vrcp.pop %v1660
      %v1663 = vmul.f32 1.0, %v1662
      %v1664 = vrcp.pop %v1661
      %v1665 = vmul.f32 1.0, %v1664
      %v1666 = vmul.f32 %v1652, %v1663
      %v1667 = vmul.f32 %v1653, %v1665
      %1668 = vst.msk [vmem:[%s427] sm:$0xff] %vm1649, %v1666
      %1669 = vst.msk [vmem:[%s427 + $0x8] sm:$0xff] %vm1649, %v1667
      %s1670 = smul.u32 2, %s23
      %p1671 = scmp.lt.s32.totalorder %s1670, 3
      %s1672 = scalar_select %p1671, %s1670, 3
      %s1673 = smul.addr %s1672, 8
      %s1674 = scalar_lea.vmem %s10, %s1673
      %s1675 = smul.u32 2, %s23
      %p1676 = scmp.lt.s32.totalorder %s1675, 3
      %s1677 = scalar_select %p1676, %s1675, 3
      %s1678 = smul.addr %s1677, 8
      %s1679 = scalar_lea.vmem %s11, %s1678
      // Predicated region
      $region61: #{vibro_feat_forward.7} parent=59 // pred_check
        %p1680 = pneg %p261
      $region62: #{vibro_feat_forward.7} parent=59 // pred_check_branch
        %1682 = sbr.rel (%p1680) target = $region64
      $region63: #{vibro_feat_forward.7} parent=59 // pred_region
        %s1683 = smul.u32 2, %s23
      $region64: #{vibro_feat_forward.7} parent=59 // pred_fallthru
        _
      // Predicated region
      $region65: #{vibro_feat_forward.7} parent=59 // pred_check
        %p1684 = pneg %p287
      $region66: #{vibro_feat_forward.7} parent=59 // pred_check_branch
        %1686 = sbr.rel (%p1684) target = $region68
      $region67: #{vibro_feat_forward.7} parent=59 // pred_region
        %s1687 = smul.u32 2, %s23
      $region68: #{vibro_feat_forward.7} parent=59 // pred_fallthru
        _
    $region60: #{vibro_feat_forward.7} parent=5 // pred_fallthru
      _
    %p1688 = scmp.le.s32.totalorder 2, %s18
    // Predicated region
    $region69: #{vibro_feat_forward.7} parent=5 // pred_check
      %p1689 = pneg %p1688
    $region70: #{vibro_feat_forward.7} parent=5 // pred_check_branch
      %1691 = sbr.rel (%p1689) target = $region72
    $region71: #{vibro_feat_forward.7} parent=5 // pred_region
      %s1692 = ssub.s32 %s18, 2
      // Predicated region
      $region73: #{vibro_feat_forward.7} parent=71 // pred_check
        %p1693 = pneg %p267
      $region74: #{vibro_feat_forward.7} parent=71 // pred_check_branch
        %1695 = sbr.rel (%p1693) target = $region76
      $region75: #{vibro_feat_forward.7} parent=71 // pred_region
        %s1696 = smul.u32 2, %s24
        %p1697 = scmp.lt.s32.totalorder %s1696, 3
        %s1698 = scalar_select %p1697, %s1696, 3
        %s1699 = smul.addr %s1698, 8
        %s1700 = scalar_lea.vmem %s10, %s1699
      $region76: #{vibro_feat_forward.7} parent=71 // pred_fallthru
        _
      // Predicated region
      $region77: #{vibro_feat_forward.7} parent=71 // pred_check
        %p1701 = pneg %p293
      $region78: #{vibro_feat_forward.7} parent=71 // pred_check_branch
        %1703 = sbr.rel (%p1701) target = $region80
      $region79: #{vibro_feat_forward.7} parent=71 // pred_region
        %s1704 = smul.u32 2, %s24
        %p1705 = scmp.lt.s32.totalorder %s1704, 3
        %s1706 = scalar_select %p1705, %s1704, 3
        %s1707 = smul.addr %s1706, 8
        %s1708 = scalar_lea.vmem %s11, %s1707
      $region80: #{vibro_feat_forward.7} parent=71 // pred_fallthru
        _
    $region72: #{vibro_feat_forward.7} parent=5 // pred_fallthru
      _
  $region6: #{vibro_feat_forward.7} parent=0 // loop_footer
    %s22 = sadd.s32 1, %s18
  $region7: #{vibro_feat_forward.7} parent=0 // loop_footer_branch
    %17 = sbr.rel target = $region3
  $region8: #{vibro_feat_forward.7} parent=0 // loop_exit
    _

</llo_original>
